<compile_context>
chip_gen: v7x
topology: tpu7x:2x2x1
jax: 0.10.0
libtpu: 0.0.40
codegen_flags: <defaults>
</compile_context>

<pallas_src>
import functools

import numpy as np

import jax
import jax.numpy as jnp
from jax.experimental import pallas as pl
from jax.experimental.pallas import tpu as pltpu


def _const_map(*args, n):
    return (0,) * n


# ----------------------------------------------------------------------------
# Fused kernel: ConvLSTM stack recurrence + (at t == T-1) pool/flatten/linear.
# ----------------------------------------------------------------------------
def _make_stack_kernel(Bb, H, W, cos, KH, num_classes):
    ph = KH // 2
    nl = len(cos)
    Ho = H // 2
    M = Bb * H

    def kernel(x_ref, *args):
        nw = 5 * nl
        w_refs = args[:nw]
        wh_ref = args[nw]            # [Ho, W*Co_last, NC] classifier (pool folded in)
        bh_ref = args[nw + 1]        # [1, NC]
        out_ref = args[nw + 2]       # [Bb, NC]
        scratch = args[nw + 3:]      # x0_pad, then (h_pad, c_pad) per layer
        x0_pad = scratch[0]
        hc = scratch[1:]
        t = pl.program_id(1)

        @pl.when(t == 0)
        def _init():
            # zero initial h/c state and all H-halo rows once per batch block
            for s in scratch:
                s[...] = jnp.zeros(s.shape, s.dtype)

        # stage x_t into the padded layer-0 input buffer (halo rows stay zero)
        x0_pad[:, ph:ph + H, :] = x_ref[0]

        def conv_rows(src_ref, w_ref):
            # "same" conv as KH row-shifted banded matmuls over the lane-merged
            # (W*C) axis.  Operands are lane-dense slices of the state buffer;
            # output columns are lane-dense (gate-major) -- no im2col, no concat.
            acc = None
            for dy in range(KH):
                slab = src_ref[:, dy:dy + H, :].reshape(M, -1)
                part = jnp.dot(slab.astype(w_ref.dtype), w_ref[dy],
                               preferred_element_type=jnp.float32)
                acc = part if acc is None else acc + part
            return acc

        in_pad = x0_pad
        h_last = None
        for l in range(nl):
            Co = cos[l]
            WCo = W * Co
            w_x, w_h, w_cif, w_co, b_all = w_refs[5 * l:5 * l + 5]
            h_pad = hc[2 * l]
            c_pad = hc[2 * l + 1]

            # all x|h gate pre-activations [i | f | g | o]; N = 4*W*Co lane-dense
            pre = conv_rows(in_pad, w_x) + conv_rows(h_pad, w_h) + b_all[...]
            pre_cif = conv_rows(c_pad, w_cif)            # conv on c_{t-1} (i,f)

            c_old = c_pad[:, ph:ph + H, :].reshape(M, WCo)
            i_g = jax.nn.sigmoid(pre[:, 0 * WCo:1 * WCo] + pre_cif[:, :WCo])
            f_g = jax.nn.sigmoid(pre[:, 1 * WCo:2 * WCo] + pre_cif[:, WCo:])
            g_g = jnp.tanh(pre[:, 2 * WCo:3 * WCo])
            c_new = f_g * c_old + i_g * g_g
            c_pad[:, ph:ph + H, :] = c_new.reshape(Bb, H, WCo)

            pre_o = conv_rows(c_pad, w_co)               # conv on c_t (o gate)
            o_g = jax.nn.sigmoid(pre[:, 3 * WCo:] + pre_o)
            h_new = o_g * jnp.tanh(c_new)
            h_pad[:, ph:ph + H, :] = h_new.reshape(Bb, H, WCo)

            in_pad = h_pad           # next layer's (already padded) input buffer
            h_last = h_new

        # fused MaxPool2d(5,5,stride=2,pad=2) + Flatten + Linear, last step only
        @pl.when(t == pl.num_programs(1) - 1)
        def _head():
            Co = cos[-1]
            WCo = W * Co
            hl = h_last.reshape(Bb, H, WCo)
            lane_pad = jnp.full((Bb, 2 * Co), -1e30, jnp.float32)
            acc = jnp.broadcast_to(bh_ref[...], (Bb, num_classes))
            for ho in range(Ho):
                r0 = max(0, 2 * ho - 2)
                r1 = min(H, 2 * ho + 3)
                vrow = hl[:, r0, :]
                for r in range(r0 + 1, r1):               # vertical pool max
                    vrow = jnp.maximum(vrow, hl[:, r, :])
                wrow = jnp.concatenate([lane_pad, vrow, lane_pad], axis=-1)
                mrow = wrow[:, :WCo]
                for dj in range(1, 5):                    # horizontal pool max
                    mrow = jnp.maximum(mrow, wrow[:, dj * Co:dj * Co + WCo])
                # stride-2 subsample + NCHW flatten order are folded into wh_ref
                acc = acc + jnp.dot(mrow, wh_ref[ho],
                                    preferred_element_type=jnp.float32)
            out_ref[...] = acc

    return kernel


# ----------------------------------------------------------------------------
# Full ConvLSTMKTH forward.
# ----------------------------------------------------------------------------
def convlstm_kth_forward(x_btchw, params, labels=None, batch_block=None):
    """x: [B, T, C, H, W] (torch batch_first) -> logits [B, num_classes]."""
    x_seq = jnp.transpose(x_btchw, (1, 0, 3, 4, 2)).astype(jnp.float32)
    T, B, H, W, Cin = x_seq.shape
    x_seq = x_seq.reshape(T, B, H, W * Cin)          # lane-merged (W, C) input

    layer_params = params["layers"]
    cos = [int(lp["b_all"].shape[-1]) // (4 * W) for lp in layer_params]
    KH = int(layer_params[0]["w_x"].shape[0])
    ph = KH // 2
    NC = int(params["b_head"].shape[-1])
    Bb = B if batch_block is None else batch_block   # v5e/v6e: B; v7x: B//2
    assert B % Bb == 0

    kernel = _make_stack_kernel(Bb, H, W, cos, KH, NC)

    weights = []
    for lp in layer_params:
        weights += [lp["w_x"], lp["w_h"], lp["w_cif"], lp["w_co"], lp["b_all"]]
    weights += [params["w_head"], params["b_head"]]

    in_specs = [pl.BlockSpec((1, Bb, H, W * Cin), lambda b, t: (t, b, 0, 0))]
    for wgt in weights:
        in_specs.append(
            pl.BlockSpec(wgt.shape, functools.partial(_const_map, n=wgt.ndim)))

    scratch = [pltpu.VMEM((Bb, H + 2 * ph, W * Cin), jnp.float32)]
    for Col in cos:
        scratch += [pltpu.VMEM((Bb, H + 2 * ph, W * Col), jnp.float32),
                    pltpu.VMEM((Bb, H + 2 * ph, W * Col), jnp.float32)]

    logits = pl.pallas_call(
        kernel,
        grid=(B // Bb, T),
        in_specs=in_specs,
        out_specs=pl.BlockSpec((Bb, NC), lambda b, t: (b, 0)),
        out_shape=jax.ShapeDtypeStruct((B, NC), jnp.float32),
        scratch_shapes=scratch,
        compiler_params=pltpu.CompilerParams(
            dimension_semantics=("parallel", "arbitrary")),
    )(x_seq, *weights)

    if labels is None:
        return logits
    # CrossEntropyLoss(reduction='mean') branch, plain JAX (tiny).
    logp = jax.nn.log_softmax(logits, axis=-1)
    loss = -jnp.mean(jnp.take_along_axis(logp, labels[:, None], axis=1))
    return loss, logits


# ----------------------------------------------------------------------------
# Parameter init (same tensor shapes as the PyTorch module) + host-side repack
# into the banded / lane-merged layouts the kernel expects.
# ----------------------------------------------------------------------------
def init_params(key, in_channels, out_channels_list, kh, kw, H, W, num_classes,
                matmul_dtype=jnp.bfloat16):
    assert H % 2 == 0 and W % 2 == 0
    layers = []
    cin = in_channels
    for Co in out_channels_list:
        key, k1, k2, k3, k4, k5, k6 = jax.random.split(key, 7)
        # torch Conv2d weight layout: [O, I, KH, KW]
        w1 = 0.1 * jax.random.normal(k1, (2 * Co, cin + 2 * Co, kh, kw), jnp.float32)
        b1 = 0.1 * jax.random.normal(k2, (2 * Co,), jnp.float32)
        w2 = 0.1 * jax.random.normal(k3, (Co, cin + Co, kh, kw), jnp.float32)
        b2 = 0.1 * jax.random.normal(k4, (Co,), jnp.float32)
        w3 = 0.1 * jax.random.normal(k5, (Co, cin + 2 * Co, kh, kw), jnp.float32)
        b3 = 0.1 * jax.random.normal(k6, (Co,), jnp.float32)

        w1n, w2n, w3n = np.asarray(w1), np.asarray(w2), np.asarray(w3)
        b1n, b2n, b3n = np.asarray(b1), np.asarray(b2), np.asarray(b3)
        WCo = W * Co
        w_x = np.zeros((kh, W * cin, 4 * WCo), np.float32)
        w_h = np.zeros((kh, WCo, 4 * WCo), np.float32)
        w_cif = np.zeros((kh, WCo, 2 * WCo), np.float32)
        w_co = np.zeros((kh, WCo, WCo), np.float32)

        def place(dst, w_part, col_off):
            # banded matrix: input lane (w_in*I + ci) -> output col (col_off +
            # w_out*O + o); W-direction zero padding = band truncation at edges.
            O, I = w_part.shape[0], w_part.shape[1]
            pw = kw // 2
            for dy in range(kh):
                for dx in range(kw):
                    blk = w_part[:, :, dy, dx].T             # [I, O]
                    for wo in range(W):
                        wi = wo + dx - pw
                        if 0 <= wi < W:
                            dst[dy, wi * I:(wi + 1) * I,
                                col_off + wo * O:col_off + (wo + 1) * O] = blk

        w1_i, w1_f = w1n[:Co], w1n[Co:]
        # x parts -> gates i | f | g | o (gate-major output columns)
        place(w_x, w1_i[:, :cin], 0 * WCo)
        place(w_x, w1_f[:, :cin], 1 * WCo)
        place(w_x, w2n[:, :cin], 2 * WCo)
        place(w_x, w3n[:, :cin], 3 * WCo)
        # h parts
        place(w_h, w1_i[:, cin:cin + Co], 0 * WCo)
        place(w_h, w1_f[:, cin:cin + Co], 1 * WCo)
        place(w_h, w2n[:, cin:cin + Co], 2 * WCo)
        place(w_h, w3n[:, cin:cin + Co], 3 * WCo)
        # c parts (the c_{t-1} / c_t terms of conv1 / conv3)
        place(w_cif, w1_i[:, cin + Co:], 0 * WCo)
        place(w_cif, w1_f[:, cin + Co:], 1 * WCo)
        place(w_co, w3n[:, cin + Co:], 0)

        b_all = np.concatenate([np.tile(b1n[:Co], W), np.tile(b1n[Co:], W),
                                np.tile(b2n, W), np.tile(b3n, W)]
                               ).reshape(1, 4 * WCo).astype(np.float32)

        def hwio(w):
            return jnp.transpose(w, (2, 3, 1, 0))            # OIHW -> HWIO

        layers.append({
            "w_x": jnp.asarray(w_x, matmul_dtype),
            "w_h": jnp.asarray(w_h, matmul_dtype),
            "w_cif": jnp.asarray(w_cif, matmul_dtype),
            "w_co": jnp.asarray(w_co, matmul_dtype),
            "b_all": jnp.asarray(b_all, jnp.float32),
            # full conv weights kept only for the pure-JAX reference
            "_ref": {"w1": hwio(w1), "b1": b1, "w2": hwio(w2), "b2": b2,
                     "w3": hwio(w3), "b3": b3},
        })
        cin = Co

    Co = out_channels_list[-1]
    Ho, Wo = H // 2, W // 2
    hidden = Ho * Wo * Co
    key, k1, k2 = jax.random.split(key, 3)
    wl = 0.1 * jax.random.normal(k1, (num_classes, hidden), jnp.float32)
    bl = 0.1 * jax.random.normal(k2, (num_classes,), jnp.float32)

    # Classifier repack: rows indexed by (ho, w, c) of the lane-merged pooled
    # map; only even-w rows (the stride-2 pool centres) are populated, in
    # torch's NCHW flatten order (c*Ho + ho)*Wo + wo.
    wl_np = np.asarray(wl)
    w4 = np.zeros((Ho, W, Co, num_classes), np.float32)
    w4[:, 0::2, :, :] = wl_np.T.reshape(Co, Ho, Wo, num_classes).transpose(1, 2, 0, 3)
    w_head = w4.reshape(Ho, W * Co, num_classes)

    return {"layers": layers,
            "w_head": jnp.asarray(w_head, jnp.float32),
            "b_head": jnp.asarray(bl, jnp.float32).reshape(1, num_classes),
            "wl_t": wl.T, "bl": bl.reshape(1, num_classes)}


# ----------------------------------------------------------------------------
# Pure-JAX reference of the PyTorch forward (for correctness check).
# ----------------------------------------------------------------------------
def _conv_same_ref(x, w, b):
    out = jax.lax.conv_general_dilated(
        x, w, window_strides=(1, 1),
        padding=((w.shape[0] // 2,) * 2, (w.shape[1] // 2,) * 2),
        dimension_numbers=("NHWC", "HWIO", "NHWC"),
        precision=jax.lax.Precision.HIGHEST)
    return out + b


def reference_forward(x_btchw, params):
    x_seq = jnp.transpose(x_btchw, (1, 0, 3, 4, 2)).astype(jnp.float32)
    T, B, H, W, _ = x_seq.shape
    cur = x_seq
    for lp in params["layers"]:
        r = lp["_ref"]
        Co = r["w2"].shape[-1]
        h = jnp.zeros((B, H, W, Co), jnp.float32)
        c = jnp.zeros((B, H, W, Co), jnp.float32)
        outs = []
        for t in range(T):
            xt = cur[t]
            cc = _conv_same_ref(jnp.concatenate([xt, h, c], -1), r["w1"], r["b1"])
            i = jax.nn.sigmoid(cc[..., :Co])
            f = jax.nn.sigmoid(cc[..., Co:])
            g = jnp.tanh(_conv_same_ref(jnp.concatenate([xt, h], -1), r["w2"], r["b2"]))
            c = f * c + i * g
            o = jax.nn.sigmoid(_conv_same_ref(jnp.concatenate([xt, h, c], -1), r["w3"], r["b3"]))
            h = o * jnp.tanh(c)
            outs.append(h)
        cur = jnp.stack(outs, 0)
    h_last = cur[-1]
    pooled = jax.lax.reduce_window(
        h_last, -jnp.inf, jax.lax.max,
        window_dimensions=(1, 5, 5, 1), window_strides=(1, 2, 2, 1),
        padding=((0, 0), (2, 2), (2, 2), (0, 0)))
    Bn = h_last.shape[0]
    flat = jnp.transpose(pooled, (0, 3, 1, 2)).reshape(Bn, -1)
    return flat @ params["wl_t"] + params["bl"]


if __name__ == "__main__":
    B, T, Cin, H, W = 2, 4, 3, 16, 16
    out_channels = [8, 8]          # num_layers = 2; W*Co = 128 = one vreg row
    num_classes = 6

    key = jax.random.PRNGKey(0)
    key, kx, kp = jax.random.split(key, 3)
    x = jax.random.normal(kx, (B, T, Cin, H, W), jnp.float32)
    params = init_params(kp, Cin, out_channels, 3, 3, H, W, num_classes)

    logits = jax.jit(convlstm_kth_forward)(x, params)
    logits = jax.block_until_ready(logits)
    assert logits.shape == (B, num_classes)

    ref = jax.block_until_ready(reference_forward(x, params))
    max_err = float(jnp.max(jnp.abs(logits - ref)))
    # bf16 MXU operands over the T-step recurrence vs. an f32 HIGHEST-precision
    # reference: tolerance loosened deliberately (per perf review).
    if not jnp.allclose(logits, ref, atol=1e-1, rtol=5e-2):
        raise AssertionError(f"mismatch vs reference, max abs err = {max_err}")

    print("KERNEL_OK")
</pallas_src>

<mosaic_0001>
module attributes {stable_mosaic.version = 11 : i64} {
  func.func @kernel(%arg0: i32, %arg1: i32, %arg2: memref<1x2x16x48xf32, #tpu.memory_space<vmem>>, %arg3: memref<3x48x512xbf16, #tpu.memory_space<vmem>>, %arg4: memref<3x128x512xbf16, #tpu.memory_space<vmem>>, %arg5: memref<3x128x256xbf16, #tpu.memory_space<vmem>>, %arg6: memref<3x128x128xbf16, #tpu.memory_space<vmem>>, %arg7: memref<1x512xf32, #tpu.memory_space<vmem>>, %arg8: memref<3x128x512xbf16, #tpu.memory_space<vmem>>, %arg9: memref<3x128x512xbf16, #tpu.memory_space<vmem>>, %arg10: memref<3x128x256xbf16, #tpu.memory_space<vmem>>, %arg11: memref<3x128x128xbf16, #tpu.memory_space<vmem>>, %arg12: memref<1x512xf32, #tpu.memory_space<vmem>>, %arg13: memref<8x128x6xf32, #tpu.memory_space<vmem>>, %arg14: memref<1x6xf32, #tpu.memory_space<vmem>>, %arg15: memref<2x6xf32, #tpu.memory_space<vmem>>, %arg16: memref<2x18x48xf32, #tpu.memory_space<vmem>>, %arg17: memref<2x18x128xf32, #tpu.memory_space<vmem>>, %arg18: memref<2x18x128xf32, #tpu.memory_space<vmem>>, %arg19: memref<2x18x128xf32, #tpu.memory_space<vmem>>, %arg20: memref<2x18x128xf32, #tpu.memory_space<vmem>>) attributes {dimension_semantics = [#tpu.dimension_semantics<parallel>, #tpu.dimension_semantics<arbitrary>], iteration_bounds = array<i64: 1, 4>, scalar_prefetch = 0 : i64, scratch_operands = 5 : i64, tpu.core_type = #tpu.core_type<tc>, window_params = [{transform_indices = @transform_0, window_bounds = array<i64: 1, 2, 16, 48>}, {pipeline_mode = #tpu.pipeline_mode<synchronous>, transform_indices = @transform_1, window_bounds = array<i64: 3, 48, 512>}, {pipeline_mode = #tpu.pipeline_mode<synchronous>, transform_indices = @transform_2, window_bounds = array<i64: 3, 128, 512>}, {pipeline_mode = #tpu.pipeline_mode<synchronous>, transform_indices = @transform_3, window_bounds = array<i64: 3, 128, 256>}, {pipeline_mode = #tpu.pipeline_mode<synchronous>, transform_indices = @transform_4, window_bounds = array<i64: 3, 128, 128>}, {pipeline_mode = #tpu.pipeline_mode<synchronous>, transform_indices = @transform_5, window_bounds = array<i64: 1, 512>}, {pipeline_mode = #tpu.pipeline_mode<synchronous>, transform_indices = @transform_6, window_bounds = array<i64: 3, 128, 512>}, {pipeline_mode = #tpu.pipeline_mode<synchronous>, transform_indices = @transform_7, window_bounds = array<i64: 3, 128, 512>}, {pipeline_mode = #tpu.pipeline_mode<synchronous>, transform_indices = @transform_8, window_bounds = array<i64: 3, 128, 256>}, {pipeline_mode = #tpu.pipeline_mode<synchronous>, transform_indices = @transform_9, window_bounds = array<i64: 3, 128, 128>}, {pipeline_mode = #tpu.pipeline_mode<synchronous>, transform_indices = @transform_10, window_bounds = array<i64: 1, 512>}, {pipeline_mode = #tpu.pipeline_mode<synchronous>, transform_indices = @transform_11, window_bounds = array<i64: 8, 128, 6>}, {pipeline_mode = #tpu.pipeline_mode<synchronous>, transform_indices = @transform_12, window_bounds = array<i64: 1, 6>}, {transform_indices = @transform_13, window_bounds = array<i64: 2, 6>}]} {
    %c0_i32 = arith.constant 0 : i32
    %0 = arith.cmpi eq, %arg1, %c0_i32 : i32
    %1 = arith.extui %0 : i1 to i32
    %c0_i32_0 = arith.constant 0 : i32
    %2 = arith.cmpi ne, %1, %c0_i32_0 : i32
    scf.if %2 {
      %cst_201 = arith.constant 0.000000e+00 : f32
      %249 = vector.broadcast %cst_201 : f32 to vector<2x18x48xf32>
      %c0_202 = arith.constant 0 : index
      %c0_203 = arith.constant 0 : index
      %c0_204 = arith.constant 0 : index
      %250 = vector.load %arg16[%c0_202, %c0_203, %c0_204] : memref<2x18x48xf32, #tpu.memory_space<vmem>>, vector<2x18x48xf32>
      tpu.vector_store %arg16[%c0_202, %c0_203, %c0_204], %249 {strides = array<i32>} : memref<2x18x48xf32, #tpu.memory_space<vmem>>, vector<2x18x48xf32>,
      %cst_205 = arith.constant 0.000000e+00 : f32
      %251 = vector.broadcast %cst_205 : f32 to vector<2x18x128xf32>
      %c0_206 = arith.constant 0 : index
      %c0_207 = arith.constant 0 : index
      %c0_208 = arith.constant 0 : index
      %252 = vector.load %arg17[%c0_206, %c0_207, %c0_208] : memref<2x18x128xf32, #tpu.memory_space<vmem>>, vector<2x18x128xf32>
      tpu.vector_store %arg17[%c0_206, %c0_207, %c0_208], %251 {strides = array<i32>} : memref<2x18x128xf32, #tpu.memory_space<vmem>>, vector<2x18x128xf32>,
      %cst_209 = arith.constant 0.000000e+00 : f32
      %253 = vector.broadcast %cst_209 : f32 to vector<2x18x128xf32>
      %c0_210 = arith.constant 0 : index
      %c0_211 = arith.constant 0 : index
      %c0_212 = arith.constant 0 : index
      %254 = vector.load %arg18[%c0_210, %c0_211, %c0_212] : memref<2x18x128xf32, #tpu.memory_space<vmem>>, vector<2x18x128xf32>
      tpu.vector_store %arg18[%c0_210, %c0_211, %c0_212], %253 {strides = array<i32>} : memref<2x18x128xf32, #tpu.memory_space<vmem>>, vector<2x18x128xf32>,
      %cst_213 = arith.constant 0.000000e+00 : f32
      %255 = vector.broadcast %cst_213 : f32 to vector<2x18x128xf32>
      %c0_214 = arith.constant 0 : index
      %c0_215 = arith.constant 0 : index
      %c0_216 = arith.constant 0 : index
      %256 = vector.load %arg19[%c0_214, %c0_215, %c0_216] : memref<2x18x128xf32, #tpu.memory_space<vmem>>, vector<2x18x128xf32>
      tpu.vector_store %arg19[%c0_214, %c0_215, %c0_216], %255 {strides = array<i32>} : memref<2x18x128xf32, #tpu.memory_space<vmem>>, vector<2x18x128xf32>,
      %cst_217 = arith.constant 0.000000e+00 : f32
      %257 = vector.broadcast %cst_217 : f32 to vector<2x18x128xf32>
      %c0_218 = arith.constant 0 : index
      %c0_219 = arith.constant 0 : index
      %c0_220 = arith.constant 0 : index
      %258 = vector.load %arg20[%c0_218, %c0_219, %c0_220] : memref<2x18x128xf32, #tpu.memory_space<vmem>>, vector<2x18x128xf32>
      tpu.vector_store %arg20[%c0_218, %c0_219, %c0_220], %257 {strides = array<i32>} : memref<2x18x128xf32, #tpu.memory_space<vmem>>, vector<2x18x128xf32>,
    } else {
    }
    %c0 = arith.constant 0 : index
    %c0_1 = arith.constant 0 : index
    %c0_2 = arith.constant 0 : index
    %c0_3 = arith.constant 0 : index
    %3 = vector.load %arg2[%c0, %c0_1, %c0_2, %c0_3] : memref<1x2x16x48xf32, #tpu.memory_space<vmem>>, vector<1x2x16x48xf32>
    %4 = vector.shape_cast %3 : vector<1x2x16x48xf32> to vector<2x16x48xf32>
    %c0_4 = arith.constant 0 : index
    %c1 = arith.constant 1 : index
    %c0_5 = arith.constant 0 : index
    %5 = vector.load %arg16[%c0_4, %c1, %c0_5] : memref<2x18x48xf32, #tpu.memory_space<vmem>>, vector<2x16x48xf32>
    tpu.vector_store %arg16[%c0_4, %c1, %c0_5], %4 {strides = array<i32>} : memref<2x18x48xf32, #tpu.memory_space<vmem>>, vector<2x16x48xf32>,
    %c0_6 = arith.constant 0 : index
    %c0_7 = arith.constant 0 : index
    %c0_8 = arith.constant 0 : index
    %6 = vector.load %arg16[%c0_6, %c0_7, %c0_8] : memref<2x18x48xf32, #tpu.memory_space<vmem>>, vector<2x16x48xf32>
    %7 = vector.shape_cast %6 : vector<2x16x48xf32> to vector<32x48xf32>
    %8 = arith.truncf %7 : vector<32x48xf32> to vector<32x48xbf16>
    %c0_9 = arith.constant 0 : index
    %c0_10 = arith.constant 0 : index
    %c0_11 = arith.constant 0 : index
    %9 = vector.load %arg3[%c0_9, %c0_10, %c0_11] : memref<3x48x512xbf16, #tpu.memory_space<vmem>>, vector<1x48x512xbf16>
    %10 = vector.shape_cast %9 : vector<1x48x512xbf16> to vector<48x512xbf16>
    %cst = arith.constant dense<0.000000e+00> : vector<32x512xf32>
    %11 = tpu.matmul %8, %10, %cst {dimension_numbers = #tpu.dot_dimension_numbers<[1], [0], [0], [1], [0, 0, 1, 1], [], []>} : vector<32x48xbf16>, vector<48x512xbf16>, vector<32x512xf32> -> vector<32x512xf32>
    %c0_12 = arith.constant 0 : index
    %c1_13 = arith.constant 1 : index
    %c0_14 = arith.constant 0 : index
    %12 = vector.load %arg16[%c0_12, %c1_13, %c0_14] : memref<2x18x48xf32, #tpu.memory_space<vmem>>, vector<2x16x48xf32>
    %13 = vector.shape_cast %12 : vector<2x16x48xf32> to vector<32x48xf32>
    %14 = arith.truncf %13 : vector<32x48xf32> to vector<32x48xbf16>
    %c1_15 = arith.constant 1 : index
    %c0_16 = arith.constant 0 : index
    %c0_17 = arith.constant 0 : index
    %15 = vector.load %arg3[%c1_15, %c0_16, %c0_17] : memref<3x48x512xbf16, #tpu.memory_space<vmem>>, vector<1x48x512xbf16>
    %16 = vector.shape_cast %15 : vector<1x48x512xbf16> to vector<48x512xbf16>
    %cst_18 = arith.constant dense<0.000000e+00> : vector<32x512xf32>
    %17 = tpu.matmul %14, %16, %cst_18 {dimension_numbers = #tpu.dot_dimension_numbers<[1], [0], [0], [1], [0, 0, 1, 1], [], []>} : vector<32x48xbf16>, vector<48x512xbf16>, vector<32x512xf32> -> vector<32x512xf32>
    %18 = arith.addf %11, %17 : vector<32x512xf32>
    %c0_19 = arith.constant 0 : index
    %c2 = arith.constant 2 : index
    %c0_20 = arith.constant 0 : index
    %19 = vector.load %arg16[%c0_19, %c2, %c0_20] : memref<2x18x48xf32, #tpu.memory_space<vmem>>, vector<2x16x48xf32>
    %20 = vector.shape_cast %19 : vector<2x16x48xf32> to vector<32x48xf32>
    %21 = arith.truncf %20 : vector<32x48xf32> to vector<32x48xbf16>
    %c2_21 = arith.constant 2 : index
    %c0_22 = arith.constant 0 : index
    %c0_23 = arith.constant 0 : index
    %22 = vector.load %arg3[%c2_21, %c0_22, %c0_23] : memref<3x48x512xbf16, #tpu.memory_space<vmem>>, vector<1x48x512xbf16>
    %23 = vector.shape_cast %22 : vector<1x48x512xbf16> to vector<48x512xbf16>
    %cst_24 = arith.constant dense<0.000000e+00> : vector<32x512xf32>
    %24 = tpu.matmul %21, %23, %cst_24 {dimension_numbers = #tpu.dot_dimension_numbers<[1], [0], [0], [1], [0, 0, 1, 1], [], []>} : vector<32x48xbf16>, vector<48x512xbf16>, vector<32x512xf32> -> vector<32x512xf32>
    %25 = arith.addf %18, %24 : vector<32x512xf32>
    %c0_25 = arith.constant 0 : index
    %c0_26 = arith.constant 0 : index
    %c0_27 = arith.constant 0 : index
    %26 = vector.load %arg17[%c0_25, %c0_26, %c0_27] : memref<2x18x128xf32, #tpu.memory_space<vmem>>, vector<2x16x128xf32>
    %27 = vector.shape_cast %26 : vector<2x16x128xf32> to vector<32x128xf32>
    %28 = arith.truncf %27 : vector<32x128xf32> to vector<32x128xbf16>
    %c0_28 = arith.constant 0 : index
    %c0_29 = arith.constant 0 : index
    %c0_30 = arith.constant 0 : index
    %29 = vector.load %arg4[%c0_28, %c0_29, %c0_30] : memref<3x128x512xbf16, #tpu.memory_space<vmem>>, vector<1x128x512xbf16>
    %30 = vector.shape_cast %29 : vector<1x128x512xbf16> to vector<128x512xbf16>
    %cst_31 = arith.constant dense<0.000000e+00> : vector<32x512xf32>
    %31 = tpu.matmul %28, %30, %cst_31 {dimension_numbers = #tpu.dot_dimension_numbers<[1], [0], [0], [1], [0, 0, 1, 1], [], []>} : vector<32x128xbf16>, vector<128x512xbf16>, vector<32x512xf32> -> vector<32x512xf32>
    %c0_32 = arith.constant 0 : index
    %c1_33 = arith.constant 1 : index
    %c0_34 = arith.constant 0 : index
    %32 = vector.load %arg17[%c0_32, %c1_33, %c0_34] : memref<2x18x128xf32, #tpu.memory_space<vmem>>, vector<2x16x128xf32>
    %33 = vector.shape_cast %32 : vector<2x16x128xf32> to vector<32x128xf32>
    %34 = arith.truncf %33 : vector<32x128xf32> to vector<32x128xbf16>
    %c1_35 = arith.constant 1 : index
    %c0_36 = arith.constant 0 : index
    %c0_37 = arith.constant 0 : index
    %35 = vector.load %arg4[%c1_35, %c0_36, %c0_37] : memref<3x128x512xbf16, #tpu.memory_space<vmem>>, vector<1x128x512xbf16>
    %36 = vector.shape_cast %35 : vector<1x128x512xbf16> to vector<128x512xbf16>
    %cst_38 = arith.constant dense<0.000000e+00> : vector<32x512xf32>
    %37 = tpu.matmul %34, %36, %cst_38 {dimension_numbers = #tpu.dot_dimension_numbers<[1], [0], [0], [1], [0, 0, 1, 1], [], []>} : vector<32x128xbf16>, vector<128x512xbf16>, vector<32x512xf32> -> vector<32x512xf32>
    %38 = arith.addf %31, %37 : vector<32x512xf32>
    %c0_39 = arith.constant 0 : index
    %c2_40 = arith.constant 2 : index
    %c0_41 = arith.constant 0 : index
    %39 = vector.load %arg17[%c0_39, %c2_40, %c0_41] : memref<2x18x128xf32, #tpu.memory_space<vmem>>, vector<2x16x128xf32>
    %40 = vector.shape_cast %39 : vector<2x16x128xf32> to vector<32x128xf32>
    %41 = arith.truncf %40 : vector<32x128xf32> to vector<32x128xbf16>
    %c2_42 = arith.constant 2 : index
    %c0_43 = arith.constant 0 : index
    %c0_44 = arith.constant 0 : index
    %42 = vector.load %arg4[%c2_42, %c0_43, %c0_44] : memref<3x128x512xbf16, #tpu.memory_space<vmem>>, vector<1x128x512xbf16>
    %43 = vector.shape_cast %42 : vector<1x128x512xbf16> to vector<128x512xbf16>
    %cst_45 = arith.constant dense<0.000000e+00> : vector<32x512xf32>
    %44 = tpu.matmul %41, %43, %cst_45 {dimension_numbers = #tpu.dot_dimension_numbers<[1], [0], [0], [1], [0, 0, 1, 1], [], []>} : vector<32x128xbf16>, vector<128x512xbf16>, vector<32x512xf32> -> vector<32x512xf32>
    %45 = arith.addf %38, %44 : vector<32x512xf32>
    %46 = arith.addf %25, %45 : vector<32x512xf32>
    %c0_46 = arith.constant 0 : index
    %c0_47 = arith.constant 0 : index
    %47 = vector.load %arg7[%c0_46, %c0_47] : memref<1x512xf32, #tpu.memory_space<vmem>>, vector<1x512xf32>
    %48 = vector.broadcast %47 : vector<1x512xf32> to vector<32x512xf32>
    %49 = arith.addf %46, %48 : vector<32x512xf32>
    %c0_48 = arith.constant 0 : index
    %c0_49 = arith.constant 0 : index
    %c0_50 = arith.constant 0 : index
    %50 = vector.load %arg18[%c0_48, %c0_49, %c0_50] : memref<2x18x128xf32, #tpu.memory_space<vmem>>, vector<2x16x128xf32>
    %51 = vector.shape_cast %50 : vector<2x16x128xf32> to vector<32x128xf32>
    %52 = arith.truncf %51 : vector<32x128xf32> to vector<32x128xbf16>
    %c0_51 = arith.constant 0 : index
    %c0_52 = arith.constant 0 : index
    %c0_53 = arith.constant 0 : index
    %53 = vector.load %arg5[%c0_51, %c0_52, %c0_53] : memref<3x128x256xbf16, #tpu.memory_space<vmem>>, vector<1x128x256xbf16>
    %54 = vector.shape_cast %53 : vector<1x128x256xbf16> to vector<128x256xbf16>
    %cst_54 = arith.constant dense<0.000000e+00> : vector<32x256xf32>
    %55 = tpu.matmul %52, %54, %cst_54 {dimension_numbers = #tpu.dot_dimension_numbers<[1], [0], [0], [1], [0, 0, 1, 1], [], []>} : vector<32x128xbf16>, vector<128x256xbf16>, vector<32x256xf32> -> vector<32x256xf32>
    %c0_55 = arith.constant 0 : index
    %c1_56 = arith.constant 1 : index
    %c0_57 = arith.constant 0 : index
    %56 = vector.load %arg18[%c0_55, %c1_56, %c0_57] : memref<2x18x128xf32, #tpu.memory_space<vmem>>, vector<2x16x128xf32>
    %57 = vector.shape_cast %56 : vector<2x16x128xf32> to vector<32x128xf32>
    %58 = arith.truncf %57 : vector<32x128xf32> to vector<32x128xbf16>
    %c1_58 = arith.constant 1 : index
    %c0_59 = arith.constant 0 : index
    %c0_60 = arith.constant 0 : index
    %59 = vector.load %arg5[%c1_58, %c0_59, %c0_60] : memref<3x128x256xbf16, #tpu.memory_space<vmem>>, vector<1x128x256xbf16>
    %60 = vector.shape_cast %59 : vector<1x128x256xbf16> to vector<128x256xbf16>
    %cst_61 = arith.constant dense<0.000000e+00> : vector<32x256xf32>
    %61 = tpu.matmul %58, %60, %cst_61 {dimension_numbers = #tpu.dot_dimension_numbers<[1], [0], [0], [1], [0, 0, 1, 1], [], []>} : vector<32x128xbf16>, vector<128x256xbf16>, vector<32x256xf32> -> vector<32x256xf32>
    %62 = arith.addf %55, %61 : vector<32x256xf32>
    %c0_62 = arith.constant 0 : index
    %c2_63 = arith.constant 2 : index
    %c0_64 = arith.constant 0 : index
    %63 = vector.load %arg18[%c0_62, %c2_63, %c0_64] : memref<2x18x128xf32, #tpu.memory_space<vmem>>, vector<2x16x128xf32>
    %64 = vector.shape_cast %63 : vector<2x16x128xf32> to vector<32x128xf32>
    %65 = arith.truncf %64 : vector<32x128xf32> to vector<32x128xbf16>
    %c2_65 = arith.constant 2 : index
    %c0_66 = arith.constant 0 : index
    %c0_67 = arith.constant 0 : index
    %66 = vector.load %arg5[%c2_65, %c0_66, %c0_67] : memref<3x128x256xbf16, #tpu.memory_space<vmem>>, vector<1x128x256xbf16>
    %67 = vector.shape_cast %66 : vector<1x128x256xbf16> to vector<128x256xbf16>
    %cst_68 = arith.constant dense<0.000000e+00> : vector<32x256xf32>
    %68 = tpu.matmul %65, %67, %cst_68 {dimension_numbers = #tpu.dot_dimension_numbers<[1], [0], [0], [1], [0, 0, 1, 1], [], []>} : vector<32x128xbf16>, vector<128x256xbf16>, vector<32x256xf32> -> vector<32x256xf32>
    %69 = arith.addf %62, %68 : vector<32x256xf32>
    %c0_69 = arith.constant 0 : index
    %c1_70 = arith.constant 1 : index
    %c0_71 = arith.constant 0 : index
    %70 = vector.load %arg18[%c0_69, %c1_70, %c0_71] : memref<2x18x128xf32, #tpu.memory_space<vmem>>, vector<2x16x128xf32>
    %71 = vector.shape_cast %70 : vector<2x16x128xf32> to vector<32x128xf32>
    %72 = vector.extract_strided_slice %49 {offsets = [0, 0], sizes = [32, 128], strides = [1, 1]} : vector<32x512xf32> to vector<32x128xf32>
    %73 = vector.extract_strided_slice %69 {offsets = [0, 0], sizes = [32, 128], strides = [1, 1]} : vector<32x256xf32> to vector<32x128xf32>
    %74 = arith.addf %72, %73 : vector<32x128xf32>
    %75 = arith.negf %74 : vector<32x128xf32>
    %76 = math.exp %75 : vector<32x128xf32>
    %cst_72 = arith.constant 1.000000e+00 : f32
    %77 = vector.broadcast %cst_72 : f32 to vector<32x128xf32>
    %78 = arith.addf %77, %76 : vector<32x128xf32>
    %79 = arith.divf %77, %78 : vector<32x128xf32>
    %80 = vector.extract_strided_slice %49 {offsets = [0, 128], sizes = [32, 128], strides = [1, 1]} : vector<32x512xf32> to vector<32x128xf32>
    %81 = vector.extract_strided_slice %69 {offsets = [0, 128], sizes = [32, 128], strides = [1, 1]} : vector<32x256xf32> to vector<32x128xf32>
    %82 = arith.addf %80, %81 : vector<32x128xf32>
    %83 = arith.negf %82 : vector<32x128xf32>
    %84 = math.exp %83 : vector<32x128xf32>
    %cst_73 = arith.constant 1.000000e+00 : f32
    %85 = vector.broadcast %cst_73 : f32 to vector<32x128xf32>
    %86 = arith.addf %85, %84 : vector<32x128xf32>
    %87 = arith.divf %85, %86 : vector<32x128xf32>
    %88 = vector.extract_strided_slice %49 {offsets = [0, 256], sizes = [32, 128], strides = [1, 1]} : vector<32x512xf32> to vector<32x128xf32>
    %89 = math.tanh %88 : vector<32x128xf32>
    %90 = arith.mulf %87, %71 : vector<32x128xf32>
    %91 = arith.mulf %79, %89 : vector<32x128xf32>
    %92 = arith.addf %90, %91 : vector<32x128xf32>
    %93 = vector.shape_cast %92 : vector<32x128xf32> to vector<2x16x128xf32>
    %c0_74 = arith.constant 0 : index
    %c1_75 = arith.constant 1 : index
    %c0_76 = arith.constant 0 : index
    %94 = vector.load %arg18[%c0_74, %c1_75, %c0_76] : memref<2x18x128xf32, #tpu.memory_space<vmem>>, vector<2x16x128xf32>
    tpu.vector_store %arg18[%c0_74, %c1_75, %c0_76], %93 {strides = array<i32>} : memref<2x18x128xf32, #tpu.memory_space<vmem>>, vector<2x16x128xf32>,
    %c0_77 = arith.constant 0 : index
    %c0_78 = arith.constant 0 : index
    %c0_79 = arith.constant 0 : index
    %95 = vector.load %arg18[%c0_77, %c0_78, %c0_79] : memref<2x18x128xf32, #tpu.memory_space<vmem>>, vector<2x16x128xf32>
    %96 = vector.shape_cast %95 : vector<2x16x128xf32> to vector<32x128xf32>
    %97 = arith.truncf %96 : vector<32x128xf32> to vector<32x128xbf16>
    %c0_80 = arith.constant 0 : index
    %c0_81 = arith.constant 0 : index
    %c0_82 = arith.constant 0 : index
    %98 = vector.load %arg6[%c0_80, %c0_81, %c0_82] : memref<3x128x128xbf16, #tpu.memory_space<vmem>>, vector<1x128x128xbf16>
    %99 = vector.shape_cast %98 : vector<1x128x128xbf16> to vector<128x128xbf16>
    %cst_83 = arith.constant dense<0.000000e+00> : vector<32x128xf32>
    %100 = tpu.matmul %97, %99, %cst_83 {dimension_numbers = #tpu.dot_dimension_numbers<[1], [0], [0], [1], [0, 0, 1, 1], [], []>} : vector<32x128xbf16>, vector<128x128xbf16>, vector<32x128xf32> -> vector<32x128xf32>
    %c0_84 = arith.constant 0 : index
    %c1_85 = arith.constant 1 : index
    %c0_86 = arith.constant 0 : index
    %101 = vector.load %arg18[%c0_84, %c1_85, %c0_86] : memref<2x18x128xf32, #tpu.memory_space<vmem>>, vector<2x16x128xf32>
    %102 = vector.shape_cast %101 : vector<2x16x128xf32> to vector<32x128xf32>
    %103 = arith.truncf %102 : vector<32x128xf32> to vector<32x128xbf16>
    %c1_87 = arith.constant 1 : index
    %c0_88 = arith.constant 0 : index
    %c0_89 = arith.constant 0 : index
    %104 = vector.load %arg6[%c1_87, %c0_88, %c0_89] : memref<3x128x128xbf16, #tpu.memory_space<vmem>>, vector<1x128x128xbf16>
    %105 = vector.shape_cast %104 : vector<1x128x128xbf16> to vector<128x128xbf16>
    %cst_90 = arith.constant dense<0.000000e+00> : vector<32x128xf32>
    %106 = tpu.matmul %103, %105, %cst_90 {dimension_numbers = #tpu.dot_dimension_numbers<[1], [0], [0], [1], [0, 0, 1, 1], [], []>} : vector<32x128xbf16>, vector<128x128xbf16>, vector<32x128xf32> -> vector<32x128xf32>
    %107 = arith.addf %100, %106 : vector<32x128xf32>
    %c0_91 = arith.constant 0 : index
    %c2_92 = arith.constant 2 : index
    %c0_93 = arith.constant 0 : index
    %108 = vector.load %arg18[%c0_91, %c2_92, %c0_93] : memref<2x18x128xf32, #tpu.memory_space<vmem>>, vector<2x16x128xf32>
    %109 = vector.shape_cast %108 : vector<2x16x128xf32> to vector<32x128xf32>
    %110 = arith.truncf %109 : vector<32x128xf32> to vector<32x128xbf16>
    %c2_94 = arith.constant 2 : index
    %c0_95 = arith.constant 0 : index
    %c0_96 = arith.constant 0 : index
    %111 = vector.load %arg6[%c2_94, %c0_95, %c0_96] : memref<3x128x128xbf16, #tpu.memory_space<vmem>>, vector<1x128x128xbf16>
    %112 = vector.shape_cast %111 : vector<1x128x128xbf16> to vector<128x128xbf16>
    %cst_97 = arith.constant dense<0.000000e+00> : vector<32x128xf32>
    %113 = tpu.matmul %110, %112, %cst_97 {dimension_numbers = #tpu.dot_dimension_numbers<[1], [0], [0], [1], [0, 0, 1, 1], [], []>} : vector<32x128xbf16>, vector<128x128xbf16>, vector<32x128xf32> -> vector<32x128xf32>
    %114 = arith.addf %107, %113 : vector<32x128xf32>
    %115 = vector.extract_strided_slice %49 {offsets = [0, 384], sizes = [32, 128], strides = [1, 1]} : vector<32x512xf32> to vector<32x128xf32>
    %116 = arith.addf %115, %114 : vector<32x128xf32>
    %117 = arith.negf %116 : vector<32x128xf32>
    %118 = math.exp %117 : vector<32x128xf32>
    %cst_98 = arith.constant 1.000000e+00 : f32
    %119 = vector.broadcast %cst_98 : f32 to vector<32x128xf32>
    %120 = arith.addf %119, %118 : vector<32x128xf32>
    %121 = arith.divf %119, %120 : vector<32x128xf32>
    %122 = math.tanh %92 : vector<32x128xf32>
    %123 = arith.mulf %121, %122 : vector<32x128xf32>
    %124 = vector.shape_cast %123 : vector<32x128xf32> to vector<2x16x128xf32>
    %c0_99 = arith.constant 0 : index
    %c1_100 = arith.constant 1 : index
    %c0_101 = arith.constant 0 : index
    %125 = vector.load %arg17[%c0_99, %c1_100, %c0_101] : memref<2x18x128xf32, #tpu.memory_space<vmem>>, vector<2x16x128xf32>
    tpu.vector_store %arg17[%c0_99, %c1_100, %c0_101], %124 {strides = array<i32>} : memref<2x18x128xf32, #tpu.memory_space<vmem>>, vector<2x16x128xf32>,
    %c0_102 = arith.constant 0 : index
    %c0_103 = arith.constant 0 : index
    %c0_104 = arith.constant 0 : index
    %126 = vector.load %arg17[%c0_102, %c0_103, %c0_104] : memref<2x18x128xf32, #tpu.memory_space<vmem>>, vector<2x16x128xf32>
    %127 = vector.shape_cast %126 : vector<2x16x128xf32> to vector<32x128xf32>
    %128 = arith.truncf %127 : vector<32x128xf32> to vector<32x128xbf16>
    %c0_105 = arith.constant 0 : index
    %c0_106 = arith.constant 0 : index
    %c0_107 = arith.constant 0 : index
    %129 = vector.load %arg8[%c0_105, %c0_106, %c0_107] : memref<3x128x512xbf16, #tpu.memory_space<vmem>>, vector<1x128x512xbf16>
    %130 = vector.shape_cast %129 : vector<1x128x512xbf16> to vector<128x512xbf16>
    %cst_108 = arith.constant dense<0.000000e+00> : vector<32x512xf32>
    %131 = tpu.matmul %128, %130, %cst_108 {dimension_numbers = #tpu.dot_dimension_numbers<[1], [0], [0], [1], [0, 0, 1, 1], [], []>} : vector<32x128xbf16>, vector<128x512xbf16>, vector<32x512xf32> -> vector<32x512xf32>
    %c0_109 = arith.constant 0 : index
    %c1_110 = arith.constant 1 : index
    %c0_111 = arith.constant 0 : index
    %132 = vector.load %arg17[%c0_109, %c1_110, %c0_111] : memref<2x18x128xf32, #tpu.memory_space<vmem>>, vector<2x16x128xf32>
    %133 = vector.shape_cast %132 : vector<2x16x128xf32> to vector<32x128xf32>
    %134 = arith.truncf %133 : vector<32x128xf32> to vector<32x128xbf16>
    %c1_112 = arith.constant 1 : index
    %c0_113 = arith.constant 0 : index
    %c0_114 = arith.constant 0 : index
    %135 = vector.load %arg8[%c1_112, %c0_113, %c0_114] : memref<3x128x512xbf16, #tpu.memory_space<vmem>>, vector<1x128x512xbf16>
    %136 = vector.shape_cast %135 : vector<1x128x512xbf16> to vector<128x512xbf16>
    %cst_115 = arith.constant dense<0.000000e+00> : vector<32x512xf32>
    %137 = tpu.matmul %134, %136, %cst_115 {dimension_numbers = #tpu.dot_dimension_numbers<[1], [0], [0], [1], [0, 0, 1, 1], [], []>} : vector<32x128xbf16>, vector<128x512xbf16>, vector<32x512xf32> -> vector<32x512xf32>
    %138 = arith.addf %131, %137 : vector<32x512xf32>
    %c0_116 = arith.constant 0 : index
    %c2_117 = arith.constant 2 : index
    %c0_118 = arith.constant 0 : index
    %139 = vector.load %arg17[%c0_116, %c2_117, %c0_118] : memref<2x18x128xf32, #tpu.memory_space<vmem>>, vector<2x16x128xf32>
    %140 = vector.shape_cast %139 : vector<2x16x128xf32> to vector<32x128xf32>
    %141 = arith.truncf %140 : vector<32x128xf32> to vector<32x128xbf16>
    %c2_119 = arith.constant 2 : index
    %c0_120 = arith.constant 0 : index
    %c0_121 = arith.constant 0 : index
    %142 = vector.load %arg8[%c2_119, %c0_120, %c0_121] : memref<3x128x512xbf16, #tpu.memory_space<vmem>>, vector<1x128x512xbf16>
    %143 = vector.shape_cast %142 : vector<1x128x512xbf16> to vector<128x512xbf16>
    %cst_122 = arith.constant dense<0.000000e+00> : vector<32x512xf32>
    %144 = tpu.matmul %141, %143, %cst_122 {dimension_numbers = #tpu.dot_dimension_numbers<[1], [0], [0], [1], [0, 0, 1, 1], [], []>} : vector<32x128xbf16>, vector<128x512xbf16>, vector<32x512xf32> -> vector<32x512xf32>
    %145 = arith.addf %138, %144 : vector<32x512xf32>
    %c0_123 = arith.constant 0 : index
    %c0_124 = arith.constant 0 : index
    %c0_125 = arith.constant 0 : index
    %146 = vector.load %arg19[%c0_123, %c0_124, %c0_125] : memref<2x18x128xf32, #tpu.memory_space<vmem>>, vector<2x16x128xf32>
    %147 = vector.shape_cast %146 : vector<2x16x128xf32> to vector<32x128xf32>
    %148 = arith.truncf %147 : vector<32x128xf32> to vector<32x128xbf16>
    %c0_126 = arith.constant 0 : index
    %c0_127 = arith.constant 0 : index
    %c0_128 = arith.constant 0 : index
    %149 = vector.load %arg9[%c0_126, %c0_127, %c0_128] : memref<3x128x512xbf16, #tpu.memory_space<vmem>>, vector<1x128x512xbf16>
    %150 = vector.shape_cast %149 : vector<1x128x512xbf16> to vector<128x512xbf16>
    %cst_129 = arith.constant dense<0.000000e+00> : vector<32x512xf32>
    %151 = tpu.matmul %148, %150, %cst_129 {dimension_numbers = #tpu.dot_dimension_numbers<[1], [0], [0], [1], [0, 0, 1, 1], [], []>} : vector<32x128xbf16>, vector<128x512xbf16>, vector<32x512xf32> -> vector<32x512xf32>
    %c0_130 = arith.constant 0 : index
    %c1_131 = arith.constant 1 : index
    %c0_132 = arith.constant 0 : index
    %152 = vector.load %arg19[%c0_130, %c1_131, %c0_132] : memref<2x18x128xf32, #tpu.memory_space<vmem>>, vector<2x16x128xf32>
    %153 = vector.shape_cast %152 : vector<2x16x128xf32> to vector<32x128xf32>
    %154 = arith.truncf %153 : vector<32x128xf32> to vector<32x128xbf16>
    %c1_133 = arith.constant 1 : index
    %c0_134 = arith.constant 0 : index
    %c0_135 = arith.constant 0 : index
    %155 = vector.load %arg9[%c1_133, %c0_134, %c0_135] : memref<3x128x512xbf16, #tpu.memory_space<vmem>>, vector<1x128x512xbf16>
    %156 = vector.shape_cast %155 : vector<1x128x512xbf16> to vector<128x512xbf16>
    %cst_136 = arith.constant dense<0.000000e+00> : vector<32x512xf32>
    %157 = tpu.matmul %154, %156, %cst_136 {dimension_numbers = #tpu.dot_dimension_numbers<[1], [0], [0], [1], [0, 0, 1, 1], [], []>} : vector<32x128xbf16>, vector<128x512xbf16>, vector<32x512xf32> -> vector<32x512xf32>
    %158 = arith.addf %151, %157 : vector<32x512xf32>
    %c0_137 = arith.constant 0 : index
    %c2_138 = arith.constant 2 : index
    %c0_139 = arith.constant 0 : index
    %159 = vector.load %arg19[%c0_137, %c2_138, %c0_139] : memref<2x18x128xf32, #tpu.memory_space<vmem>>, vector<2x16x128xf32>
    %160 = vector.shape_cast %159 : vector<2x16x128xf32> to vector<32x128xf32>
    %161 = arith.truncf %160 : vector<32x128xf32> to vector<32x128xbf16>
    %c2_140 = arith.constant 2 : index
    %c0_141 = arith.constant 0 : index
    %c0_142 = arith.constant 0 : index
    %162 = vector.load %arg9[%c2_140, %c0_141, %c0_142] : memref<3x128x512xbf16, #tpu.memory_space<vmem>>, vector<1x128x512xbf16>
    %163 = vector.shape_cast %162 : vector<1x128x512xbf16> to vector<128x512xbf16>
    %cst_143 = arith.constant dense<0.000000e+00> : vector<32x512xf32>
    %164 = tpu.matmul %161, %163, %cst_143 {dimension_numbers = #tpu.dot_dimension_numbers<[1], [0], [0], [1], [0, 0, 1, 1], [], []>} : vector<32x128xbf16>, vector<128x512xbf16>, vector<32x512xf32> -> vector<32x512xf32>
    %165 = arith.addf %158, %164 : vector<32x512xf32>
    %166 = arith.addf %145, %165 : vector<32x512xf32>
    %c0_144 = arith.constant 0 : index
    %c0_145 = arith.constant 0 : index
    %167 = vector.load %arg12[%c0_144, %c0_145] : memref<1x512xf32, #tpu.memory_space<vmem>>, vector<1x512xf32>
    %168 = vector.broadcast %167 : vector<1x512xf32> to vector<32x512xf32>
    %169 = arith.addf %166, %168 : vector<32x512xf32>
    %c0_146 = arith.constant 0 : index
    %c0_147 = arith.constant 0 : index
    %c0_148 = arith.constant 0 : index
    %170 = vector.load %arg20[%c0_146, %c0_147, %c0_148] : memref<2x18x128xf32, #tpu.memory_space<vmem>>, vector<2x16x128xf32>
    %171 = vector.shape_cast %170 : vector<2x16x128xf32> to vector<32x128xf32>
    %172 = arith.truncf %171 : vector<32x128xf32> to vector<32x128xbf16>
    %c0_149 = arith.constant 0 : index
    %c0_150 = arith.constant 0 : index
    %c0_151 = arith.constant 0 : index
    %173 = vector.load %arg10[%c0_149, %c0_150, %c0_151] : memref<3x128x256xbf16, #tpu.memory_space<vmem>>, vector<1x128x256xbf16>
    %174 = vector.shape_cast %173 : vector<1x128x256xbf16> to vector<128x256xbf16>
    %cst_152 = arith.constant dense<0.000000e+00> : vector<32x256xf32>
    %175 = tpu.matmul %172, %174, %cst_152 {dimension_numbers = #tpu.dot_dimension_numbers<[1], [0], [0], [1], [0, 0, 1, 1], [], []>} : vector<32x128xbf16>, vector<128x256xbf16>, vector<32x256xf32> -> vector<32x256xf32>
    %c0_153 = arith.constant 0 : index
    %c1_154 = arith.constant 1 : index
    %c0_155 = arith.constant 0 : index
    %176 = vector.load %arg20[%c0_153, %c1_154, %c0_155] : memref<2x18x128xf32, #tpu.memory_space<vmem>>, vector<2x16x128xf32>
    %177 = vector.shape_cast %176 : vector<2x16x128xf32> to vector<32x128xf32>
    %178 = arith.truncf %177 : vector<32x128xf32> to vector<32x128xbf16>
    %c1_156 = arith.constant 1 : index
    %c0_157 = arith.constant 0 : index
    %c0_158 = arith.constant 0 : index
    %179 = vector.load %arg10[%c1_156, %c0_157, %c0_158] : memref<3x128x256xbf16, #tpu.memory_space<vmem>>, vector<1x128x256xbf16>
    %180 = vector.shape_cast %179 : vector<1x128x256xbf16> to vector<128x256xbf16>
    %cst_159 = arith.constant dense<0.000000e+00> : vector<32x256xf32>
    %181 = tpu.matmul %178, %180, %cst_159 {dimension_numbers = #tpu.dot_dimension_numbers<[1], [0], [0], [1], [0, 0, 1, 1], [], []>} : vector<32x128xbf16>, vector<128x256xbf16>, vector<32x256xf32> -> vector<32x256xf32>
    %182 = arith.addf %175, %181 : vector<32x256xf32>
    %c0_160 = arith.constant 0 : index
    %c2_161 = arith.constant 2 : index
    %c0_162 = arith.constant 0 : index
    %183 = vector.load %arg20[%c0_160, %c2_161, %c0_162] : memref<2x18x128xf32, #tpu.memory_space<vmem>>, vector<2x16x128xf32>
    %184 = vector.shape_cast %183 : vector<2x16x128xf32> to vector<32x128xf32>
    %185 = arith.truncf %184 : vector<32x128xf32> to vector<32x128xbf16>
    %c2_163 = arith.constant 2 : index
    %c0_164 = arith.constant 0 : index
    %c0_165 = arith.constant 0 : index
    %186 = vector.load %arg10[%c2_163, %c0_164, %c0_165] : memref<3x128x256xbf16, #tpu.memory_space<vmem>>, vector<1x128x256xbf16>
    %187 = vector.shape_cast %186 : vector<1x128x256xbf16> to vector<128x256xbf16>
    %cst_166 = arith.constant dense<0.000000e+00> : vector<32x256xf32>
    %188 = tpu.matmul %185, %187, %cst_166 {dimension_numbers = #tpu.dot_dimension_numbers<[1], [0], [0], [1], [0, 0, 1, 1], [], []>} : vector<32x128xbf16>, vector<128x256xbf16>, vector<32x256xf32> -> vector<32x256xf32>
    %189 = arith.addf %182, %188 : vector<32x256xf32>
    %c0_167 = arith.constant 0 : index
    %c1_168 = arith.constant 1 : index
    %c0_169 = arith.constant 0 : index
    %190 = vector.load %arg20[%c0_167, %c1_168, %c0_169] : memref<2x18x128xf32, #tpu.memory_space<vmem>>, vector<2x16x128xf32>
    %191 = vector.shape_cast %190 : vector<2x16x128xf32> to vector<32x128xf32>
    %192 = vector.extract_strided_slice %169 {offsets = [0, 0], sizes = [32, 128], strides = [1, 1]} : vector<32x512xf32> to vector<32x128xf32>
    %193 = vector.extract_strided_slice %189 {offsets = [0, 0], sizes = [32, 128], strides = [1, 1]} : vector<32x256xf32> to vector<32x128xf32>
    %194 = arith.addf %192, %193 : vector<32x128xf32>
    %195 = arith.negf %194 : vector<32x128xf32>
    %196 = math.exp %195 : vector<32x128xf32>
    %cst_170 = arith.constant 1.000000e+00 : f32
    %197 = vector.broadcast %cst_170 : f32 to vector<32x128xf32>
    %198 = arith.addf %197, %196 : vector<32x128xf32>
    %199 = arith.divf %197, %198 : vector<32x128xf32>
    %200 = vector.extract_strided_slice %169 {offsets = [0, 128], sizes = [32, 128], strides = [1, 1]} : vector<32x512xf32> to vector<32x128xf32>
    %201 = vector.extract_strided_slice %189 {offsets = [0, 128], sizes = [32, 128], strides = [1, 1]} : vector<32x256xf32> to vector<32x128xf32>
    %202 = arith.addf %200, %201 : vector<32x128xf32>
    %203 = arith.negf %202 : vector<32x128xf32>
    %204 = math.exp %203 : vector<32x128xf32>
    %cst_171 = arith.constant 1.000000e+00 : f32
    %205 = vector.broadcast %cst_171 : f32 to vector<32x128xf32>
    %206 = arith.addf %205, %204 : vector<32x128xf32>
    %207 = arith.divf %205, %206 : vector<32x128xf32>
    %208 = vector.extract_strided_slice %169 {offsets = [0, 256], sizes = [32, 128], strides = [1, 1]} : vector<32x512xf32> to vector<32x128xf32>
    %209 = math.tanh %208 : vector<32x128xf32>
    %210 = arith.mulf %207, %191 : vector<32x128xf32>
    %211 = arith.mulf %199, %209 : vector<32x128xf32>
    %212 = arith.addf %210, %211 : vector<32x128xf32>
    %213 = vector.shape_cast %212 : vector<32x128xf32> to vector<2x16x128xf32>
    %c0_172 = arith.constant 0 : index
    %c1_173 = arith.constant 1 : index
    %c0_174 = arith.constant 0 : index
    %214 = vector.load %arg20[%c0_172, %c1_173, %c0_174] : memref<2x18x128xf32, #tpu.memory_space<vmem>>, vector<2x16x128xf32>
    tpu.vector_store %arg20[%c0_172, %c1_173, %c0_174], %213 {strides = array<i32>} : memref<2x18x128xf32, #tpu.memory_space<vmem>>, vector<2x16x128xf32>,
    %c0_175 = arith.constant 0 : index
    %c0_176 = arith.constant 0 : index
    %c0_177 = arith.constant 0 : index
    %215 = vector.load %arg20[%c0_175, %c0_176, %c0_177] : memref<2x18x128xf32, #tpu.memory_space<vmem>>, vector<2x16x128xf32>
    %216 = vector.shape_cast %215 : vector<2x16x128xf32> to vector<32x128xf32>
    %217 = arith.truncf %216 : vector<32x128xf32> to vector<32x128xbf16>
    %c0_178 = arith.constant 0 : index
    %c0_179 = arith.constant 0 : index
    %c0_180 = arith.constant 0 : index
    %218 = vector.load %arg11[%c0_178, %c0_179, %c0_180] : memref<3x128x128xbf16, #tpu.memory_space<vmem>>, vector<1x128x128xbf16>
    %219 = vector.shape_cast %218 : vector<1x128x128xbf16> to vector<128x128xbf16>
    %cst_181 = arith.constant dense<0.000000e+00> : vector<32x128xf32>
    %220 = tpu.matmul %217, %219, %cst_181 {dimension_numbers = #tpu.dot_dimension_numbers<[1], [0], [0], [1], [0, 0, 1, 1], [], []>} : vector<32x128xbf16>, vector<128x128xbf16>, vector<32x128xf32> -> vector<32x128xf32>
    %c0_182 = arith.constant 0 : index
    %c1_183 = arith.constant 1 : index
    %c0_184 = arith.constant 0 : index
    %221 = vector.load %arg20[%c0_182, %c1_183, %c0_184] : memref<2x18x128xf32, #tpu.memory_space<vmem>>, vector<2x16x128xf32>
    %222 = vector.shape_cast %221 : vector<2x16x128xf32> to vector<32x128xf32>
    %223 = arith.truncf %222 : vector<32x128xf32> to vector<32x128xbf16>
    %c1_185 = arith.constant 1 : index
    %c0_186 = arith.constant 0 : index
    %c0_187 = arith.constant 0 : index
    %224 = vector.load %arg11[%c1_185, %c0_186, %c0_187] : memref<3x128x128xbf16, #tpu.memory_space<vmem>>, vector<1x128x128xbf16>
    %225 = vector.shape_cast %224 : vector<1x128x128xbf16> to vector<128x128xbf16>
    %cst_188 = arith.constant dense<0.000000e+00> : vector<32x128xf32>
    %226 = tpu.matmul %223, %225, %cst_188 {dimension_numbers = #tpu.dot_dimension_numbers<[1], [0], [0], [1], [0, 0, 1, 1], [], []>} : vector<32x128xbf16>, vector<128x128xbf16>, vector<32x128xf32> -> vector<32x128xf32>
    %227 = arith.addf %220, %226 : vector<32x128xf32>
    %c0_189 = arith.constant 0 : index
    %c2_190 = arith.constant 2 : index
    %c0_191 = arith.constant 0 : index
    %228 = vector.load %arg20[%c0_189, %c2_190, %c0_191] : memref<2x18x128xf32, #tpu.memory_space<vmem>>, vector<2x16x128xf32>
    %229 = vector.shape_cast %228 : vector<2x16x128xf32> to vector<32x128xf32>
    %230 = arith.truncf %229 : vector<32x128xf32> to vector<32x128xbf16>
    %c2_192 = arith.constant 2 : index
    %c0_193 = arith.constant 0 : index
    %c0_194 = arith.constant 0 : index
    %231 = vector.load %arg11[%c2_192, %c0_193, %c0_194] : memref<3x128x128xbf16, #tpu.memory_space<vmem>>, vector<1x128x128xbf16>
    %232 = vector.shape_cast %231 : vector<1x128x128xbf16> to vector<128x128xbf16>
    %cst_195 = arith.constant dense<0.000000e+00> : vector<32x128xf32>
    %233 = tpu.matmul %230, %232, %cst_195 {dimension_numbers = #tpu.dot_dimension_numbers<[1], [0], [0], [1], [0, 0, 1, 1], [], []>} : vector<32x128xbf16>, vector<128x128xbf16>, vector<32x128xf32> -> vector<32x128xf32>
    %234 = arith.addf %227, %233 : vector<32x128xf32>
    %235 = vector.extract_strided_slice %169 {offsets = [0, 384], sizes = [32, 128], strides = [1, 1]} : vector<32x512xf32> to vector<32x128xf32>
    %236 = arith.addf %235, %234 : vector<32x128xf32>
    %237 = arith.negf %236 : vector<32x128xf32>
    %238 = math.exp %237 : vector<32x128xf32>
    %cst_196 = arith.constant 1.000000e+00 : f32
    %239 = vector.broadcast %cst_196 : f32 to vector<32x128xf32>
    %240 = arith.addf %239, %238 : vector<32x128xf32>
    %241 = arith.divf %239, %240 : vector<32x128xf32>
    %242 = math.tanh %212 : vector<32x128xf32>
    %243 = arith.mulf %241, %242 : vector<32x128xf32>
    %244 = vector.shape_cast %243 : vector<32x128xf32> to vector<2x16x128xf32>
    %c0_197 = arith.constant 0 : index
    %c1_198 = arith.constant 1 : index
    %c0_199 = arith.constant 0 : index
    %245 = vector.load %arg19[%c0_197, %c1_198, %c0_199] : memref<2x18x128xf32, #tpu.memory_space<vmem>>, vector<2x16x128xf32>
    tpu.vector_store %arg19[%c0_197, %c1_198, %c0_199], %244 {strides = array<i32>} : memref<2x18x128xf32, #tpu.memory_space<vmem>>, vector<2x16x128xf32>,
    %c3_i32 = arith.constant 3 : i32
    %246 = arith.cmpi eq, %arg1, %c3_i32 : i32
    %247 = arith.extui %246 : i1 to i32
    %c0_i32_200 = arith.constant 0 : i32
    %248 = arith.cmpi ne, %247, %c0_i32_200 : i32
    scf.if %248 {
      %249 = vector.shape_cast %243 : vector<32x128xf32> to vector<2x16x128xf32>
      %cst_201 = arith.constant -1.000000e+30 : f32
      %250 = vector.broadcast %cst_201 : f32 to vector<2x16xf32>
      %c0_202 = arith.constant 0 : index
      %c0_203 = arith.constant 0 : index
      %251 = vector.load %arg14[%c0_202, %c0_203] : memref<1x6xf32, #tpu.memory_space<vmem>>, vector<1x6xf32>
      %252 = vector.shape_cast %251 : vector<1x6xf32> to vector<1x6xf32>
      %253 = vector.broadcast %252 : vector<1x6xf32> to vector<2x6xf32>
      %254 = vector.extract_strided_slice %249 {offsets = [0, 0, 0], sizes = [2, 1, 128], strides = [1, 1, 1]} : vector<2x16x128xf32> to vector<2x1x128xf32>
      %255 = vector.shape_cast %254 : vector<2x1x128xf32> to vector<2x128xf32>
      %256 = vector.extract_strided_slice %249 {offsets = [0, 1, 0], sizes = [2, 1, 128], strides = [1, 1, 1]} : vector<2x16x128xf32> to vector<2x1x128xf32>
      %257 = vector.shape_cast %256 : vector<2x1x128xf32> to vector<2x128xf32>
      %258 = arith.maximumf %255, %257 : vector<2x128xf32>
      %259 = vector.extract_strided_slice %249 {offsets = [0, 2, 0], sizes = [2, 1, 128], strides = [1, 1, 1]} : vector<2x16x128xf32> to vector<2x1x128xf32>
      %260 = vector.shape_cast %259 : vector<2x1x128xf32> to vector<2x128xf32>
      %261 = arith.maximumf %258, %260 : vector<2x128xf32>
      %262 = tpu.concatenate %250, %261, %250 in 1 : vector<2x16xf32>, vector<2x128xf32>, vector<2x16xf32> -> vector<2x160xf32>
      %263 = vector.extract_strided_slice %262 {offsets = [0, 0], sizes = [2, 128], strides = [1, 1]} : vector<2x160xf32> to vector<2x128xf32>
      %264 = vector.extract_strided_slice %262 {offsets = [0, 8], sizes = [2, 128], strides = [1, 1]} : vector<2x160xf32> to vector<2x128xf32>
      %265 = arith.maximumf %263, %264 : vector<2x128xf32>
      %266 = vector.extract_strided_slice %262 {offsets = [0, 16], sizes = [2, 128], strides = [1, 1]} : vector<2x160xf32> to vector<2x128xf32>
      %267 = arith.maximumf %265, %266 : vector<2x128xf32>
      %268 = vector.extract_strided_slice %262 {offsets = [0, 24], sizes = [2, 128], strides = [1, 1]} : vector<2x160xf32> to vector<2x128xf32>
      %269 = arith.maximumf %267, %268 : vector<2x128xf32>
      %270 = vector.extract_strided_slice %262 {offsets = [0, 32], sizes = [2, 128], strides = [1, 1]} : vector<2x160xf32> to vector<2x128xf32>
      %271 = arith.maximumf %269, %270 : vector<2x128xf32>
      %c0_204 = arith.constant 0 : index
      %c0_205 = arith.constant 0 : index
      %c0_206 = arith.constant 0 : index
      %272 = vector.load %arg13[%c0_204, %c0_205, %c0_206] : memref<8x128x6xf32, #tpu.memory_space<vmem>>, vector<1x128x6xf32>
      %273 = vector.shape_cast %272 : vector<1x128x6xf32> to vector<128x6xf32>
      %cst_207 = arith.constant dense<0.000000e+00> : vector<2x6xf32>
      %274 = tpu.matmul %271, %273, %cst_207 {dimension_numbers = #tpu.dot_dimension_numbers<[1], [0], [0], [1], [0, 0, 1, 1], [], []>} : vector<2x128xf32>, vector<128x6xf32>, vector<2x6xf32> -> vector<2x6xf32>
      %275 = arith.addf %253, %274 : vector<2x6xf32>
      %276 = vector.extract_strided_slice %249 {offsets = [0, 0, 0], sizes = [2, 1, 128], strides = [1, 1, 1]} : vector<2x16x128xf32> to vector<2x1x128xf32>
      %277 = vector.shape_cast %276 : vector<2x1x128xf32> to vector<2x128xf32>
      %278 = vector.extract_strided_slice %249 {offsets = [0, 1, 0], sizes = [2, 1, 128], strides = [1, 1, 1]} : vector<2x16x128xf32> to vector<2x1x128xf32>
      %279 = vector.shape_cast %278 : vector<2x1x128xf32> to vector<2x128xf32>
      %280 = arith.maximumf %277, %279 : vector<2x128xf32>
      %281 = vector.extract_strided_slice %249 {offsets = [0, 2, 0], sizes = [2, 1, 128], strides = [1, 1, 1]} : vector<2x16x128xf32> to vector<2x1x128xf32>
      %282 = vector.shape_cast %281 : vector<2x1x128xf32> to vector<2x128xf32>
      %283 = arith.maximumf %280, %282 : vector<2x128xf32>
      %284 = vector.extract_strided_slice %249 {offsets = [0, 3, 0], sizes = [2, 1, 128], strides = [1, 1, 1]} : vector<2x16x128xf32> to vector<2x1x128xf32>
      %285 = vector.shape_cast %284 : vector<2x1x128xf32> to vector<2x128xf32>
      %286 = arith.maximumf %283, %285 : vector<2x128xf32>
      %287 = vector.extract_strided_slice %249 {offsets = [0, 4, 0], sizes = [2, 1, 128], strides = [1, 1, 1]} : vector<2x16x128xf32> to vector<2x1x128xf32>
      %288 = vector.shape_cast %287 : vector<2x1x128xf32> to vector<2x128xf32>
      %289 = arith.maximumf %286, %288 : vector<2x128xf32>
      %290 = tpu.concatenate %250, %289, %250 in 1 : vector<2x16xf32>, vector<2x128xf32>, vector<2x16xf32> -> vector<2x160xf32>
      %291 = vector.extract_strided_slice %290 {offsets = [0, 0], sizes = [2, 128], strides = [1, 1]} : vector<2x160xf32> to vector<2x128xf32>
      %292 = vector.extract_strided_slice %290 {offsets = [0, 8], sizes = [2, 128], strides = [1, 1]} : vector<2x160xf32> to vector<2x128xf32>
      %293 = arith.maximumf %291, %292 : vector<2x128xf32>
      %294 = vector.extract_strided_slice %290 {offsets = [0, 16], sizes = [2, 128], strides = [1, 1]} : vector<2x160xf32> to vector<2x128xf32>
      %295 = arith.maximumf %293, %294 : vector<2x128xf32>
      %296 = vector.extract_strided_slice %290 {offsets = [0, 24], sizes = [2, 128], strides = [1, 1]} : vector<2x160xf32> to vector<2x128xf32>
      %297 = arith.maximumf %295, %296 : vector<2x128xf32>
      %298 = vector.extract_strided_slice %290 {offsets = [0, 32], sizes = [2, 128], strides = [1, 1]} : vector<2x160xf32> to vector<2x128xf32>
      %299 = arith.maximumf %297, %298 : vector<2x128xf32>
      %c1_208 = arith.constant 1 : index
      %c0_209 = arith.constant 0 : index
      %c0_210 = arith.constant 0 : index
      %300 = vector.load %arg13[%c1_208, %c0_209, %c0_210] : memref<8x128x6xf32, #tpu.memory_space<vmem>>, vector<1x128x6xf32>
      %301 = vector.shape_cast %300 : vector<1x128x6xf32> to vector<128x6xf32>
      %cst_211 = arith.constant dense<0.000000e+00> : vector<2x6xf32>
      %302 = tpu.matmul %299, %301, %cst_211 {dimension_numbers = #tpu.dot_dimension_numbers<[1], [0], [0], [1], [0, 0, 1, 1], [], []>} : vector<2x128xf32>, vector<128x6xf32>, vector<2x6xf32> -> vector<2x6xf32>
      %303 = arith.addf %275, %302 : vector<2x6xf32>
      %304 = vector.extract_strided_slice %249 {offsets = [0, 2, 0], sizes = [2, 1, 128], strides = [1, 1, 1]} : vector<2x16x128xf32> to vector<2x1x128xf32>
      %305 = vector.shape_cast %304 : vector<2x1x128xf32> to vector<2x128xf32>
      %306 = vector.extract_strided_slice %249 {offsets = [0, 3, 0], sizes = [2, 1, 128], strides = [1, 1, 1]} : vector<2x16x128xf32> to vector<2x1x128xf32>
      %307 = vector.shape_cast %306 : vector<2x1x128xf32> to vector<2x128xf32>
      %308 = arith.maximumf %305, %307 : vector<2x128xf32>
      %309 = vector.extract_strided_slice %249 {offsets = [0, 4, 0], sizes = [2, 1, 128], strides = [1, 1, 1]} : vector<2x16x128xf32> to vector<2x1x128xf32>
      %310 = vector.shape_cast %309 : vector<2x1x128xf32> to vector<2x128xf32>
      %311 = arith.maximumf %308, %310 : vector<2x128xf32>
      %312 = vector.extract_strided_slice %249 {offsets = [0, 5, 0], sizes = [2, 1, 128], strides = [1, 1, 1]} : vector<2x16x128xf32> to vector<2x1x128xf32>
      %313 = vector.shape_cast %312 : vector<2x1x128xf32> to vector<2x128xf32>
      %314 = arith.maximumf %311, %313 : vector<2x128xf32>
      %315 = vector.extract_strided_slice %249 {offsets = [0, 6, 0], sizes = [2, 1, 128], strides = [1, 1, 1]} : vector<2x16x128xf32> to vector<2x1x128xf32>
      %316 = vector.shape_cast %315 : vector<2x1x128xf32> to vector<2x128xf32>
      %317 = arith.maximumf %314, %316 : vector<2x128xf32>
      %318 = tpu.concatenate %250, %317, %250 in 1 : vector<2x16xf32>, vector<2x128xf32>, vector<2x16xf32> -> vector<2x160xf32>
      %319 = vector.extract_strided_slice %318 {offsets = [0, 0], sizes = [2, 128], strides = [1, 1]} : vector<2x160xf32> to vector<2x128xf32>
      %320 = vector.extract_strided_slice %318 {offsets = [0, 8], sizes = [2, 128], strides = [1, 1]} : vector<2x160xf32> to vector<2x128xf32>
      %321 = arith.maximumf %319, %320 : vector<2x128xf32>
      %322 = vector.extract_strided_slice %318 {offsets = [0, 16], sizes = [2, 128], strides = [1, 1]} : vector<2x160xf32> to vector<2x128xf32>
      %323 = arith.maximumf %321, %322 : vector<2x128xf32>
      %324 = vector.extract_strided_slice %318 {offsets = [0, 24], sizes = [2, 128], strides = [1, 1]} : vector<2x160xf32> to vector<2x128xf32>
      %325 = arith.maximumf %323, %324 : vector<2x128xf32>
      %326 = vector.extract_strided_slice %318 {offsets = [0, 32], sizes = [2, 128], strides = [1, 1]} : vector<2x160xf32> to vector<2x128xf32>
      %327 = arith.maximumf %325, %326 : vector<2x128xf32>
      %c2_212 = arith.constant 2 : index
      %c0_213 = arith.constant 0 : index
      %c0_214 = arith.constant 0 : index
      %328 = vector.load %arg13[%c2_212, %c0_213, %c0_214] : memref<8x128x6xf32, #tpu.memory_space<vmem>>, vector<1x128x6xf32>
      %329 = vector.shape_cast %328 : vector<1x128x6xf32> to vector<128x6xf32>
      %cst_215 = arith.constant dense<0.000000e+00> : vector<2x6xf32>
      %330 = tpu.matmul %327, %329, %cst_215 {dimension_numbers = #tpu.dot_dimension_numbers<[1], [0], [0], [1], [0, 0, 1, 1], [], []>} : vector<2x128xf32>, vector<128x6xf32>, vector<2x6xf32> -> vector<2x6xf32>
      %331 = arith.addf %303, %330 : vector<2x6xf32>
      %332 = vector.extract_strided_slice %249 {offsets = [0, 4, 0], sizes = [2, 1, 128], strides = [1, 1, 1]} : vector<2x16x128xf32> to vector<2x1x128xf32>
      %333 = vector.shape_cast %332 : vector<2x1x128xf32> to vector<2x128xf32>
      %334 = vector.extract_strided_slice %249 {offsets = [0, 5, 0], sizes = [2, 1, 128], strides = [1, 1, 1]} : vector<2x16x128xf32> to vector<2x1x128xf32>
      %335 = vector.shape_cast %334 : vector<2x1x128xf32> to vector<2x128xf32>
      %336 = arith.maximumf %333, %335 : vector<2x128xf32>
      %337 = vector.extract_strided_slice %249 {offsets = [0, 6, 0], sizes = [2, 1, 128], strides = [1, 1, 1]} : vector<2x16x128xf32> to vector<2x1x128xf32>
      %338 = vector.shape_cast %337 : vector<2x1x128xf32> to vector<2x128xf32>
      %339 = arith.maximumf %336, %338 : vector<2x128xf32>
      %340 = vector.extract_strided_slice %249 {offsets = [0, 7, 0], sizes = [2, 1, 128], strides = [1, 1, 1]} : vector<2x16x128xf32> to vector<2x1x128xf32>
      %341 = vector.shape_cast %340 : vector<2x1x128xf32> to vector<2x128xf32>
      %342 = arith.maximumf %339, %341 : vector<2x128xf32>
      %343 = vector.extract_strided_slice %249 {offsets = [0, 8, 0], sizes = [2, 1, 128], strides = [1, 1, 1]} : vector<2x16x128xf32> to vector<2x1x128xf32>
      %344 = vector.shape_cast %343 : vector<2x1x128xf32> to vector<2x128xf32>
      %345 = arith.maximumf %342, %344 : vector<2x128xf32>
      %346 = tpu.concatenate %250, %345, %250 in 1 : vector<2x16xf32>, vector<2x128xf32>, vector<2x16xf32> -> vector<2x160xf32>
      %347 = vector.extract_strided_slice %346 {offsets = [0, 0], sizes = [2, 128], strides = [1, 1]} : vector<2x160xf32> to vector<2x128xf32>
      %348 = vector.extract_strided_slice %346 {offsets = [0, 8], sizes = [2, 128], strides = [1, 1]} : vector<2x160xf32> to vector<2x128xf32>
      %349 = arith.maximumf %347, %348 : vector<2x128xf32>
      %350 = vector.extract_strided_slice %346 {offsets = [0, 16], sizes = [2, 128], strides = [1, 1]} : vector<2x160xf32> to vector<2x128xf32>
      %351 = arith.maximumf %349, %350 : vector<2x128xf32>
      %352 = vector.extract_strided_slice %346 {offsets = [0, 24], sizes = [2, 128], strides = [1, 1]} : vector<2x160xf32> to vector<2x128xf32>
      %353 = arith.maximumf %351, %352 : vector<2x128xf32>
      %354 = vector.extract_strided_slice %346 {offsets = [0, 32], sizes = [2, 128], strides = [1, 1]} : vector<2x160xf32> to vector<2x128xf32>
      %355 = arith.maximumf %353, %354 : vector<2x128xf32>
      %c3 = arith.constant 3 : index
      %c0_216 = arith.constant 0 : index
      %c0_217 = arith.constant 0 : index
      %356 = vector.load %arg13[%c3, %c0_216, %c0_217] : memref<8x128x6xf32, #tpu.memory_space<vmem>>, vector<1x128x6xf32>
      %357 = vector.shape_cast %356 : vector<1x128x6xf32> to vector<128x6xf32>
      %cst_218 = arith.constant dense<0.000000e+00> : vector<2x6xf32>
      %358 = tpu.matmul %355, %357, %cst_218 {dimension_numbers = #tpu.dot_dimension_numbers<[1], [0], [0], [1], [0, 0, 1, 1], [], []>} : vector<2x128xf32>, vector<128x6xf32>, vector<2x6xf32> -> vector<2x6xf32>
      %359 = arith.addf %331, %358 : vector<2x6xf32>
      %360 = vector.extract_strided_slice %249 {offsets = [0, 6, 0], sizes = [2, 1, 128], strides = [1, 1, 1]} : vector<2x16x128xf32> to vector<2x1x128xf32>
      %361 = vector.shape_cast %360 : vector<2x1x128xf32> to vector<2x128xf32>
      %362 = vector.extract_strided_slice %249 {offsets = [0, 7, 0], sizes = [2, 1, 128], strides = [1, 1, 1]} : vector<2x16x128xf32> to vector<2x1x128xf32>
      %363 = vector.shape_cast %362 : vector<2x1x128xf32> to vector<2x128xf32>
      %364 = arith.maximumf %361, %363 : vector<2x128xf32>
      %365 = vector.extract_strided_slice %249 {offsets = [0, 8, 0], sizes = [2, 1, 128], strides = [1, 1, 1]} : vector<2x16x128xf32> to vector<2x1x128xf32>
      %366 = vector.shape_cast %365 : vector<2x1x128xf32> to vector<2x128xf32>
      %367 = arith.maximumf %364, %366 : vector<2x128xf32>
      %368 = vector.extract_strided_slice %249 {offsets = [0, 9, 0], sizes = [2, 1, 128], strides = [1, 1, 1]} : vector<2x16x128xf32> to vector<2x1x128xf32>
      %369 = vector.shape_cast %368 : vector<2x1x128xf32> to vector<2x128xf32>
      %370 = arith.maximumf %367, %369 : vector<2x128xf32>
      %371 = vector.extract_strided_slice %249 {offsets = [0, 10, 0], sizes = [2, 1, 128], strides = [1, 1, 1]} : vector<2x16x128xf32> to vector<2x1x128xf32>
      %372 = vector.shape_cast %371 : vector<2x1x128xf32> to vector<2x128xf32>
      %373 = arith.maximumf %370, %372 : vector<2x128xf32>
      %374 = tpu.concatenate %250, %373, %250 in 1 : vector<2x16xf32>, vector<2x128xf32>, vector<2x16xf32> -> vector<2x160xf32>
      %375 = vector.extract_strided_slice %374 {offsets = [0, 0], sizes = [2, 128], strides = [1, 1]} : vector<2x160xf32> to vector<2x128xf32>
      %376 = vector.extract_strided_slice %374 {offsets = [0, 8], sizes = [2, 128], strides = [1, 1]} : vector<2x160xf32> to vector<2x128xf32>
      %377 = arith.maximumf %375, %376 : vector<2x128xf32>
      %378 = vector.extract_strided_slice %374 {offsets = [0, 16], sizes = [2, 128], strides = [1, 1]} : vector<2x160xf32> to vector<2x128xf32>
      %379 = arith.maximumf %377, %378 : vector<2x128xf32>
      %380 = vector.extract_strided_slice %374 {offsets = [0, 24], sizes = [2, 128], strides = [1, 1]} : vector<2x160xf32> to vector<2x128xf32>
      %381 = arith.maximumf %379, %380 : vector<2x128xf32>
      %382 = vector.extract_strided_slice %374 {offsets = [0, 32], sizes = [2, 128], strides = [1, 1]} : vector<2x160xf32> to vector<2x128xf32>
      %383 = arith.maximumf %381, %382 : vector<2x128xf32>
      %c4 = arith.constant 4 : index
      %c0_219 = arith.constant 0 : index
      %c0_220 = arith.constant 0 : index
      %384 = vector.load %arg13[%c4, %c0_219, %c0_220] : memref<8x128x6xf32, #tpu.memory_space<vmem>>, vector<1x128x6xf32>
      %385 = vector.shape_cast %384 : vector<1x128x6xf32> to vector<128x6xf32>
      %cst_221 = arith.constant dense<0.000000e+00> : vector<2x6xf32>
      %386 = tpu.matmul %383, %385, %cst_221 {dimension_numbers = #tpu.dot_dimension_numbers<[1], [0], [0], [1], [0, 0, 1, 1], [], []>} : vector<2x128xf32>, vector<128x6xf32>, vector<2x6xf32> -> vector<2x6xf32>
      %387 = arith.addf %359, %386 : vector<2x6xf32>
      %388 = vector.extract_strided_slice %249 {offsets = [0, 8, 0], sizes = [2, 1, 128], strides = [1, 1, 1]} : vector<2x16x128xf32> to vector<2x1x128xf32>
      %389 = vector.shape_cast %388 : vector<2x1x128xf32> to vector<2x128xf32>
      %390 = vector.extract_strided_slice %249 {offsets = [0, 9, 0], sizes = [2, 1, 128], strides = [1, 1, 1]} : vector<2x16x128xf32> to vector<2x1x128xf32>
      %391 = vector.shape_cast %390 : vector<2x1x128xf32> to vector<2x128xf32>
      %392 = arith.maximumf %389, %391 : vector<2x128xf32>
      %393 = vector.extract_strided_slice %249 {offsets = [0, 10, 0], sizes = [2, 1, 128], strides = [1, 1, 1]} : vector<2x16x128xf32> to vector<2x1x128xf32>
      %394 = vector.shape_cast %393 : vector<2x1x128xf32> to vector<2x128xf32>
      %395 = arith.maximumf %392, %394 : vector<2x128xf32>
      %396 = vector.extract_strided_slice %249 {offsets = [0, 11, 0], sizes = [2, 1, 128], strides = [1, 1, 1]} : vector<2x16x128xf32> to vector<2x1x128xf32>
      %397 = vector.shape_cast %396 : vector<2x1x128xf32> to vector<2x128xf32>
      %398 = arith.maximumf %395, %397 : vector<2x128xf32>
      %399 = vector.extract_strided_slice %249 {offsets = [0, 12, 0], sizes = [2, 1, 128], strides = [1, 1, 1]} : vector<2x16x128xf32> to vector<2x1x128xf32>
      %400 = vector.shape_cast %399 : vector<2x1x128xf32> to vector<2x128xf32>
      %401 = arith.maximumf %398, %400 : vector<2x128xf32>
      %402 = tpu.concatenate %250, %401, %250 in 1 : vector<2x16xf32>, vector<2x128xf32>, vector<2x16xf32> -> vector<2x160xf32>
      %403 = vector.extract_strided_slice %402 {offsets = [0, 0], sizes = [2, 128], strides = [1, 1]} : vector<2x160xf32> to vector<2x128xf32>
      %404 = vector.extract_strided_slice %402 {offsets = [0, 8], sizes = [2, 128], strides = [1, 1]} : vector<2x160xf32> to vector<2x128xf32>
      %405 = arith.maximumf %403, %404 : vector<2x128xf32>
      %406 = vector.extract_strided_slice %402 {offsets = [0, 16], sizes = [2, 128], strides = [1, 1]} : vector<2x160xf32> to vector<2x128xf32>
      %407 = arith.maximumf %405, %406 : vector<2x128xf32>
      %408 = vector.extract_strided_slice %402 {offsets = [0, 24], sizes = [2, 128], strides = [1, 1]} : vector<2x160xf32> to vector<2x128xf32>
      %409 = arith.maximumf %407, %408 : vector<2x128xf32>
      %410 = vector.extract_strided_slice %402 {offsets = [0, 32], sizes = [2, 128], strides = [1, 1]} : vector<2x160xf32> to vector<2x128xf32>
      %411 = arith.maximumf %409, %410 : vector<2x128xf32>
      %c5 = arith.constant 5 : index
      %c0_222 = arith.constant 0 : index
      %c0_223 = arith.constant 0 : index
      %412 = vector.load %arg13[%c5, %c0_222, %c0_223] : memref<8x128x6xf32, #tpu.memory_space<vmem>>, vector<1x128x6xf32>
      %413 = vector.shape_cast %412 : vector<1x128x6xf32> to vector<128x6xf32>
      %cst_224 = arith.constant dense<0.000000e+00> : vector<2x6xf32>
      %414 = tpu.matmul %411, %413, %cst_224 {dimension_numbers = #tpu.dot_dimension_numbers<[1], [0], [0], [1], [0, 0, 1, 1], [], []>} : vector<2x128xf32>, vector<128x6xf32>, vector<2x6xf32> -> vector<2x6xf32>
      %415 = arith.addf %387, %414 : vector<2x6xf32>
      %416 = vector.extract_strided_slice %249 {offsets = [0, 10, 0], sizes = [2, 1, 128], strides = [1, 1, 1]} : vector<2x16x128xf32> to vector<2x1x128xf32>
      %417 = vector.shape_cast %416 : vector<2x1x128xf32> to vector<2x128xf32>
      %418 = vector.extract_strided_slice %249 {offsets = [0, 11, 0], sizes = [2, 1, 128], strides = [1, 1, 1]} : vector<2x16x128xf32> to vector<2x1x128xf32>
      %419 = vector.shape_cast %418 : vector<2x1x128xf32> to vector<2x128xf32>
      %420 = arith.maximumf %417, %419 : vector<2x128xf32>
      %421 = vector.extract_strided_slice %249 {offsets = [0, 12, 0], sizes = [2, 1, 128], strides = [1, 1, 1]} : vector<2x16x128xf32> to vector<2x1x128xf32>
      %422 = vector.shape_cast %421 : vector<2x1x128xf32> to vector<2x128xf32>
      %423 = arith.maximumf %420, %422 : vector<2x128xf32>
      %424 = vector.extract_strided_slice %249 {offsets = [0, 13, 0], sizes = [2, 1, 128], strides = [1, 1, 1]} : vector<2x16x128xf32> to vector<2x1x128xf32>
      %425 = vector.shape_cast %424 : vector<2x1x128xf32> to vector<2x128xf32>
      %426 = arith.maximumf %423, %425 : vector<2x128xf32>
      %427 = vector.extract_strided_slice %249 {offsets = [0, 14, 0], sizes = [2, 1, 128], strides = [1, 1, 1]} : vector<2x16x128xf32> to vector<2x1x128xf32>
      %428 = vector.shape_cast %427 : vector<2x1x128xf32> to vector<2x128xf32>
      %429 = arith.maximumf %426, %428 : vector<2x128xf32>
      %430 = tpu.concatenate %250, %429, %250 in 1 : vector<2x16xf32>, vector<2x128xf32>, vector<2x16xf32> -> vector<2x160xf32>
      %431 = vector.extract_strided_slice %430 {offsets = [0, 0], sizes = [2, 128], strides = [1, 1]} : vector<2x160xf32> to vector<2x128xf32>
      %432 = vector.extract_strided_slice %430 {offsets = [0, 8], sizes = [2, 128], strides = [1, 1]} : vector<2x160xf32> to vector<2x128xf32>
      %433 = arith.maximumf %431, %432 : vector<2x128xf32>
      %434 = vector.extract_strided_slice %430 {offsets = [0, 16], sizes = [2, 128], strides = [1, 1]} : vector<2x160xf32> to vector<2x128xf32>
      %435 = arith.maximumf %433, %434 : vector<2x128xf32>
      %436 = vector.extract_strided_slice %430 {offsets = [0, 24], sizes = [2, 128], strides = [1, 1]} : vector<2x160xf32> to vector<2x128xf32>
      %437 = arith.maximumf %435, %436 : vector<2x128xf32>
      %438 = vector.extract_strided_slice %430 {offsets = [0, 32], sizes = [2, 128], strides = [1, 1]} : vector<2x160xf32> to vector<2x128xf32>
      %439 = arith.maximumf %437, %438 : vector<2x128xf32>
      %c6 = arith.constant 6 : index
      %c0_225 = arith.constant 0 : index
      %c0_226 = arith.constant 0 : index
      %440 = vector.load %arg13[%c6, %c0_225, %c0_226] : memref<8x128x6xf32, #tpu.memory_space<vmem>>, vector<1x128x6xf32>
      %441 = vector.shape_cast %440 : vector<1x128x6xf32> to vector<128x6xf32>
      %cst_227 = arith.constant dense<0.000000e+00> : vector<2x6xf32>
      %442 = tpu.matmul %439, %441, %cst_227 {dimension_numbers = #tpu.dot_dimension_numbers<[1], [0], [0], [1], [0, 0, 1, 1], [], []>} : vector<2x128xf32>, vector<128x6xf32>, vector<2x6xf32> -> vector<2x6xf32>
      %443 = arith.addf %415, %442 : vector<2x6xf32>
      %444 = vector.extract_strided_slice %249 {offsets = [0, 12, 0], sizes = [2, 1, 128], strides = [1, 1, 1]} : vector<2x16x128xf32> to vector<2x1x128xf32>
      %445 = vector.shape_cast %444 : vector<2x1x128xf32> to vector<2x128xf32>
      %446 = vector.extract_strided_slice %249 {offsets = [0, 13, 0], sizes = [2, 1, 128], strides = [1, 1, 1]} : vector<2x16x128xf32> to vector<2x1x128xf32>
      %447 = vector.shape_cast %446 : vector<2x1x128xf32> to vector<2x128xf32>
      %448 = arith.maximumf %445, %447 : vector<2x128xf32>
      %449 = vector.extract_strided_slice %249 {offsets = [0, 14, 0], sizes = [2, 1, 128], strides = [1, 1, 1]} : vector<2x16x128xf32> to vector<2x1x128xf32>
      %450 = vector.shape_cast %449 : vector<2x1x128xf32> to vector<2x128xf32>
      %451 = arith.maximumf %448, %450 : vector<2x128xf32>
      %452 = vector.extract_strided_slice %249 {offsets = [0, 15, 0], sizes = [2, 1, 128], strides = [1, 1, 1]} : vector<2x16x128xf32> to vector<2x1x128xf32>
      %453 = vector.shape_cast %452 : vector<2x1x128xf32> to vector<2x128xf32>
      %454 = arith.maximumf %451, %453 : vector<2x128xf32>
      %455 = tpu.concatenate %250, %454, %250 in 1 : vector<2x16xf32>, vector<2x128xf32>, vector<2x16xf32> -> vector<2x160xf32>
      %456 = vector.extract_strided_slice %455 {offsets = [0, 0], sizes = [2, 128], strides = [1, 1]} : vector<2x160xf32> to vector<2x128xf32>
      %457 = vector.extract_strided_slice %455 {offsets = [0, 8], sizes = [2, 128], strides = [1, 1]} : vector<2x160xf32> to vector<2x128xf32>
      %458 = arith.maximumf %456, %457 : vector<2x128xf32>
      %459 = vector.extract_strided_slice %455 {offsets = [0, 16], sizes = [2, 128], strides = [1, 1]} : vector<2x160xf32> to vector<2x128xf32>
      %460 = arith.maximumf %458, %459 : vector<2x128xf32>
      %461 = vector.extract_strided_slice %455 {offsets = [0, 24], sizes = [2, 128], strides = [1, 1]} : vector<2x160xf32> to vector<2x128xf32>
      %462 = arith.maximumf %460, %461 : vector<2x128xf32>
      %463 = vector.extract_strided_slice %455 {offsets = [0, 32], sizes = [2, 128], strides = [1, 1]} : vector<2x160xf32> to vector<2x128xf32>
      %464 = arith.maximumf %462, %463 : vector<2x128xf32>
      %c7 = arith.constant 7 : index
      %c0_228 = arith.constant 0 : index
      %c0_229 = arith.constant 0 : index
      %465 = vector.load %arg13[%c7, %c0_228, %c0_229] : memref<8x128x6xf32, #tpu.memory_space<vmem>>, vector<1x128x6xf32>
      %466 = vector.shape_cast %465 : vector<1x128x6xf32> to vector<128x6xf32>
      %cst_230 = arith.constant dense<0.000000e+00> : vector<2x6xf32>
      %467 = tpu.matmul %464, %466, %cst_230 {dimension_numbers = #tpu.dot_dimension_numbers<[1], [0], [0], [1], [0, 0, 1, 1], [], []>} : vector<2x128xf32>, vector<128x6xf32>, vector<2x6xf32> -> vector<2x6xf32>
      %468 = arith.addf %443, %467 : vector<2x6xf32>
      %c0_231 = arith.constant 0 : index
      %c0_232 = arith.constant 0 : index
      %469 = vector.load %arg15[%c0_231, %c0_232] : memref<2x6xf32, #tpu.memory_space<vmem>>, vector<2x6xf32>
      tpu.vector_store %arg15[%c0_231, %c0_232], %468 {strides = array<i32>} : memref<2x6xf32, #tpu.memory_space<vmem>>, vector<2x6xf32>,
    } else {
    }
    return
  }
  func.func @transform_0(%arg0: i32, %arg1: i32) -> (i32, i32, i32, i32) {
    %c0_i32 = arith.constant 0 : i32
    %c0_i32_0 = arith.constant 0 : i32
    %c0_i32_1 = arith.constant 0 : i32
    return %arg1, %arg0, %c0_i32, %c0_i32_0 : i32, i32, i32, i32
  }
  func.func @transform_1(%arg0: i32, %arg1: i32) -> (i32, i32, i32) {
    %c0_i32 = arith.constant 0 : i32
    %c0_i32_0 = arith.constant 0 : i32
    %c0_i32_1 = arith.constant 0 : i32
    %c0_i32_2 = arith.constant 0 : i32
    return %c0_i32, %c0_i32_0, %c0_i32_1 : i32, i32, i32
  }
  func.func @transform_2(%arg0: i32, %arg1: i32) -> (i32, i32, i32) {
    %c0_i32 = arith.constant 0 : i32
    %c0_i32_0 = arith.constant 0 : i32
    %c0_i32_1 = arith.constant 0 : i32
    %c0_i32_2 = arith.constant 0 : i32
    return %c0_i32, %c0_i32_0, %c0_i32_1 : i32, i32, i32
  }
  func.func @transform_3(%arg0: i32, %arg1: i32) -> (i32, i32, i32) {
    %c0_i32 = arith.constant 0 : i32
    %c0_i32_0 = arith.constant 0 : i32
    %c0_i32_1 = arith.constant 0 : i32
    %c0_i32_2 = arith.constant 0 : i32
    return %c0_i32, %c0_i32_0, %c0_i32_1 : i32, i32, i32
  }
  func.func @transform_4(%arg0: i32, %arg1: i32) -> (i32, i32, i32) {
    %c0_i32 = arith.constant 0 : i32
    %c0_i32_0 = arith.constant 0 : i32
    %c0_i32_1 = arith.constant 0 : i32
    %c0_i32_2 = arith.constant 0 : i32
    return %c0_i32, %c0_i32_0, %c0_i32_1 : i32, i32, i32
  }
  func.func @transform_5(%arg0: i32, %arg1: i32) -> (i32, i32) {
    %c0_i32 = arith.constant 0 : i32
    %c0_i32_0 = arith.constant 0 : i32
    %c0_i32_1 = arith.constant 0 : i32
    return %c0_i32, %c0_i32_0 : i32, i32
  }
  func.func @transform_6(%arg0: i32, %arg1: i32) -> (i32, i32, i32) {
    %c0_i32 = arith.constant 0 : i32
    %c0_i32_0 = arith.constant 0 : i32
    %c0_i32_1 = arith.constant 0 : i32
    %c0_i32_2 = arith.constant 0 : i32
    return %c0_i32, %c0_i32_0, %c0_i32_1 : i32, i32, i32
  }
  func.func @transform_7(%arg0: i32, %arg1: i32) -> (i32, i32, i32) {
    %c0_i32 = arith.constant 0 : i32
    %c0_i32_0 = arith.constant 0 : i32
    %c0_i32_1 = arith.constant 0 : i32
    %c0_i32_2 = arith.constant 0 : i32
    return %c0_i32, %c0_i32_0, %c0_i32_1 : i32, i32, i32
  }
  func.func @transform_8(%arg0: i32, %arg1: i32) -> (i32, i32, i32) {
    %c0_i32 = arith.constant 0 : i32
    %c0_i32_0 = arith.constant 0 : i32
    %c0_i32_1 = arith.constant 0 : i32
    %c0_i32_2 = arith.constant 0 : i32
    return %c0_i32, %c0_i32_0, %c0_i32_1 : i32, i32, i32
  }
  func.func @transform_9(%arg0: i32, %arg1: i32) -> (i32, i32, i32) {
    %c0_i32 = arith.constant 0 : i32
    %c0_i32_0 = arith.constant 0 : i32
    %c0_i32_1 = arith.constant 0 : i32
    %c0_i32_2 = arith.constant 0 : i32
    return %c0_i32, %c0_i32_0, %c0_i32_1 : i32, i32, i32
  }
  func.func @transform_10(%arg0: i32, %arg1: i32) -> (i32, i32) {
    %c0_i32 = arith.constant 0 : i32
    %c0_i32_0 = arith.constant 0 : i32
    %c0_i32_1 = arith.constant 0 : i32
    return %c0_i32, %c0_i32_0 : i32, i32
  }
  func.func @transform_11(%arg0: i32, %arg1: i32) -> (i32, i32, i32) {
    %c0_i32 = arith.constant 0 : i32
    %c0_i32_0 = arith.constant 0 : i32
    %c0_i32_1 = arith.constant 0 : i32
    %c0_i32_2 = arith.constant 0 : i32
    return %c0_i32, %c0_i32_0, %c0_i32_1 : i32, i32, i32
  }
  func.func @transform_12(%arg0: i32, %arg1: i32) -> (i32, i32) {
    %c0_i32 = arith.constant 0 : i32
    %c0_i32_0 = arith.constant 0 : i32
    %c0_i32_1 = arith.constant 0 : i32
    return %c0_i32, %c0_i32_0 : i32, i32
  }
  func.func @transform_13(%arg0: i32, %arg1: i32) -> (i32, i32) {
    %c0_i32 = arith.constant 0 : i32
    %c0_i32_0 = arith.constant 0 : i32
    return %arg0, %c0_i32 : i32, i32
  }
}

</mosaic_0001>

<llo_original>
// kernel: convlstm_kth_forward.1
$region0: #{convlstm_kth_forward.1}
  #allocation0 [shape = 'u32[]', space=smem, size = 0x4, offset = 0x4, fixed_abs, tag = 'smem constant byte address 0x4 - core index']
  #allocation1 [shape = 'u32[144,128]{1,0:T(1,128)}', space=vmem, size = 0x12000, scoped, tag = 'internal scratch']
  #allocation2 [shape = 'f32[2,18,48]{2,1,0:T(8,128)}', space=vmem, size = 0x6000, scoped, tag = 'scratch operand']
  #allocation3 [shape = 'f32[2,18,128]{2,1,0:T(8,128)}', space=vmem, size = 0x6000, scoped, tag = 'scratch operand']
  #allocation4 [shape = 'f32[2,18,128]{2,1,0:T(8,128)}', space=vmem, size = 0x6000, scoped, tag = 'scratch operand']
  #allocation5 [shape = 'f32[2,18,128]{2,1,0:T(8,128)}', space=vmem, size = 0x6000, scoped, tag = 'scratch operand']
  #allocation6 [shape = 'f32[2,18,128]{2,1,0:T(8,128)}', space=vmem, size = 0x6000, scoped, tag = 'scratch operand']
  %s0 = inlined_call_operand.vmem [shape: f32[4,2,16,48], index: 0, kind: input, shape index: {}]
  %s1 = inlined_call_operand.hbm [shape: bf16[3,48,512], index: 1, kind: input, shape index: {}]
  %s2 = inlined_call_operand.vmem [shape: bf16[3,128,512], index: 2, kind: input, shape index: {}]
  %s3 = inlined_call_operand.hbm [shape: bf16[3,128,256], index: 3, kind: input, shape index: {}]
  %s4 = inlined_call_operand.hbm [shape: bf16[3,128,128], index: 4, kind: input, shape index: {}]
  %s5 = inlined_call_operand.hbm [shape: f32[1,512], index: 5, kind: input, shape index: {}]
  %s6 = inlined_call_operand.vmem [shape: bf16[3,128,512], index: 6, kind: input, shape index: {}]
  %s7 = inlined_call_operand.vmem [shape: bf16[3,128,512], index: 7, kind: input, shape index: {}]
  %s8 = inlined_call_operand.hbm [shape: bf16[3,128,256], index: 8, kind: input, shape index: {}]
  %s9 = inlined_call_operand.hbm [shape: bf16[3,128,128], index: 9, kind: input, shape index: {}]
  %s10 = inlined_call_operand.vmem [shape: f32[1,512], index: 10, kind: input, shape index: {}]
  %s11 = inlined_call_operand.vmem [shape: f32[8,128,6], index: 11, kind: input, shape index: {}]
  %s12 = inlined_call_operand.vmem [shape: f32[1,6], index: 12, kind: input, shape index: {}]
  %s13 = inlined_call_operand.hbm [shape: f32[2,6], index: 13, kind: output, shape index: {}]
  %s14 = sld [smem:[#allocation0]]
  $region117: #{convlstm_kth_forward.1} parent=0
    _
  %s16 = ssub.s32 1, %s14
  %s17 = scalar_select 0, %s16, %s14
  $region1: #{convlstm_kth_forward.1} parent=0
    #allocation7 [shape = 'u8[147456]{0}', space=vmem, size = 0x24000, scoped, tag = 'input window, operand 1, single buffered']
    #allocation8 [shape = 's32[2]{0}', space=sflag, size = 0x8, scoped, tag = 'scoped memory for convlstm_kth_forward.1']
    #allocation9 [shape = 's32[2]{0}', space=sflag, size = 0x8, scoped, tag = 'scoped memory for convlstm_kth_forward.1']
    #allocation10 [shape = 'u8[196608]{0}', space=vmem, size = 0x30000, scoped, tag = 'input window, operand 3, single buffered']
    #allocation11 [shape = 's32[1]{0}', space=sflag, size = 0x4, scoped, tag = 'scoped memory for convlstm_kth_forward.1']
    #allocation12 [shape = 'u8[98304]{0}', space=vmem, size = 0x18000, scoped, tag = 'input window, operand 4, single buffered']
    #allocation13 [shape = 'u8[2048]{0}', space=vmem, size = 0x800, scoped, tag = 'input window, operand 5, single buffered']
    #allocation14 [shape = 's32[1]{0}', space=sflag, size = 0x4, scoped, tag = 'scoped memory for convlstm_kth_forward.1']
    #allocation15 [shape = 'u8[196608]{0}', space=vmem, size = 0x30000, scoped, tag = 'input window, operand 8, single buffered']
    #allocation16 [shape = 'u8[98304]{0}', space=vmem, size = 0x18000, scoped, tag = 'input window, operand 9, single buffered']
    #allocation17 [shape = 's32[1]{0}', space=sflag, size = 0x4, scoped, tag = 'scoped memory for convlstm_kth_forward.1']
    #allocation18 [shape = 'u8[1024]{0}', space=vmem, size = 0x400, scoped, tag = 'output window, operand 0, single buffered']
    %18 = vsyncpa [#allocation8], 0
    %19 = vsyncpa [#allocation11], 0
    %20 = vsyncpa [#allocation14], 0
    %21 = vsyncpa [#allocation17], 0
    %22 = vsyncpa [#allocation9], 0
    loop: start=0, step=1, limit=6
    $region2: #{convlstm_kth_forward.1} parent=1 // loop_pre_header
      _
    $region3: #{convlstm_kth_forward.1} parent=1 // loop_header
      %s24 = sphi 0, %s28
      %p25 = scmp.ge.s32.totalorder %s24, 6
      %s31 = sphi 0, %s43
      %s32 = sphi 0, %s39
      %s33 = sphi 0, %s31
      %s34 = sphi 0, %s32
      %s35 = sphi 0, %s33
      %s36 = sphi 0, %s34
      %s48 = sphi 0, %s50
      %s51 = sphi 0, %s48
      %s52 = sphi 0, %s51
      %s68 = sphi 0, %s52
      %s72 = sphi 0, %s72
      %s74 = sphi 0, %s72
      %s75 = sphi 0, %s74
      %s89 = sphi 0, %s75
      %s93 = sphi 0, %s93
      %s95 = sphi 0, %s93
      %s96 = sphi 0, %s95
      %s110 = sphi 0, %s96
      %s114 = sphi 0, %s114
      %s116 = sphi 0, %s114
      %s117 = sphi 0, %s116
      %s131 = sphi 0, %s117
      %s135 = sphi 0, %s135
      %s137 = sphi 0, %s135
      %s138 = sphi 0, %s137
      %s152 = sphi 0, %s138
      %s156 = sphi 0, %s156
      %s158 = sphi 0, %s156
      %s159 = sphi 0, %s158
      %s173 = sphi 0, %s159
      %s177 = sphi 0, %s177
      %s179 = sphi 0, %s177
      %s180 = sphi 0, %s179
      %s194 = sphi 0, %s180
      %s198 = sphi 0, %s198
      %s200 = sphi 0, %s198
      %s201 = sphi 0, %s200
      %s215 = sphi 0, %s201
      %s219 = sphi 0, %s219
      %s221 = sphi 0, %s219
      %s222 = sphi 0, %s221
      %s236 = sphi 0, %s222
      %s240 = sphi 0, %s240
      %s242 = sphi 0, %s240
      %s243 = sphi 0, %s242
      %s257 = sphi 0, %s243
      %s261 = sphi 0, %s261
      %s263 = sphi 0, %s261
      %s264 = sphi 0, %s263
      %s278 = sphi 0, %s264
      %s282 = sphi 0, %s282
      %s284 = sphi 0, %s282
      %s285 = sphi 0, %s284
      %s299 = sphi 0, %s285
      %s303 = sphi 0, %s303
      %s305 = sphi 0, %s303
      %s306 = sphi 0, %s305
      %s320 = sphi 0, %s306
      %s326 = sphi 0, %s328
      %s329 = sphi 0, %s326
      %s330 = sphi 0, %s329
      %s346 = sphi 0, %s330
    $region4: #{convlstm_kth_forward.1} parent=1 // loop_header_branch
      %27 = sbr.rel (%p25) target = $region8
    $region5: #{convlstm_kth_forward.1} parent=1 // loop_body
      %s29 = ssub.s32 %s24, 1
      %s30 = ssub.s32 %s24, 2
      %s37 = sadd.s32 1, %s32
      %p38 = scmp.ge.s32.totalorder %s37, 4
      %s39 = scalar_select %p38, 0, %s37
      %s40 = sadd.s32 1, %s31
      %s41 = scalar_select %p38, %s40, %s31
      %p42 = scmp.ge.s32.totalorder %s41, 1
      %s43 = scalar_select %p42, 0, %s41
      %s44 = ssub.s32 %s32, %s39
      %s45 = ssub.s32 %s31, %s43
      %s46 = sor.u32 %s44, %s45
      %p47 = scmp.eq.s32.totalorder %s46, 0
      %s49 = sadd.s32 %s48, 1
      %s50 = scalar_select %p47, %s48, %s49
      %p53 = pneg %p47
      %p54 = scmp.eq.s32.totalorder %s24, 3
      %p55 = por %p53, %p54
      %p56 = scmp.ne.s32.totalorder %s48, %s51
      %p57 = scmp.eq.s32.totalorder %s24, 0
      %p58 = por %p56, %p57
      %p59 = scmp.ne.s32.totalorder %s48, %s51
      %p60 = scmp.eq.s32.totalorder %s29, 3
      %p61 = por %p59, %p60
      %p62 = scmp.ne.s32.totalorder %s51, %s52
      %p63 = scmp.eq.s32.totalorder %s29, 0
      %p64 = por %p62, %p63
      %p65 = scmp.ne.s32.totalorder %s51, %s52
      %p66 = scmp.eq.s32.totalorder %s30, 3
      %p67 = por %p65, %p66
      %p69 = scmp.ne.s32.totalorder %s52, %s68
      %p70 = scmp.eq.s32.totalorder %s30, 0
      %p71 = por %p69, %p70
      %s73 = sadd.s32 %s72, 1
      %p76 = scmp.eq.s32.totalorder %s24, 3
      %p77 = scmp.ne.s32.totalorder %s72, %s74
      %p78 = scmp.eq.s32.totalorder %s24, 0
      %p79 = por %p77, %p78
      %p80 = scmp.ne.s32.totalorder %s72, %s74
      %p81 = scmp.eq.s32.totalorder %s29, 3
      %p82 = por %p80, %p81
      %p83 = scmp.ne.s32.totalorder %s74, %s75
      %p84 = scmp.eq.s32.totalorder %s29, 0
      %p85 = por %p83, %p84
      %p86 = scmp.ne.s32.totalorder %s74, %s75
      %p87 = scmp.eq.s32.totalorder %s30, 3
      %p88 = por %p86, %p87
      %p90 = scmp.ne.s32.totalorder %s75, %s89
      %p91 = scmp.eq.s32.totalorder %s30, 0
      %p92 = por %p90, %p91
      %s94 = sadd.s32 %s93, 1
      %p97 = scmp.eq.s32.totalorder %s24, 3
      %p98 = scmp.ne.s32.totalorder %s93, %s95
      %p99 = scmp.eq.s32.totalorder %s24, 0
      %p100 = por %p98, %p99
      %p101 = scmp.ne.s32.totalorder %s93, %s95
      %p102 = scmp.eq.s32.totalorder %s29, 3
      %p103 = por %p101, %p102
      %p104 = scmp.ne.s32.totalorder %s95, %s96
      %p105 = scmp.eq.s32.totalorder %s29, 0
      %p106 = por %p104, %p105
      %p107 = scmp.ne.s32.totalorder %s95, %s96
      %p108 = scmp.eq.s32.totalorder %s30, 3
      %p109 = por %p107, %p108
      %p111 = scmp.ne.s32.totalorder %s96, %s110
      %p112 = scmp.eq.s32.totalorder %s30, 0
      %p113 = por %p111, %p112
      %s115 = sadd.s32 %s114, 1
      %p118 = scmp.eq.s32.totalorder %s24, 3
      %p119 = scmp.ne.s32.totalorder %s114, %s116
      %p120 = scmp.eq.s32.totalorder %s24, 0
      %p121 = por %p119, %p120
      %p122 = scmp.ne.s32.totalorder %s114, %s116
      %p123 = scmp.eq.s32.totalorder %s29, 3
      %p124 = por %p122, %p123
      %p125 = scmp.ne.s32.totalorder %s116, %s117
      %p126 = scmp.eq.s32.totalorder %s29, 0
      %p127 = por %p125, %p126
      %p128 = scmp.ne.s32.totalorder %s116, %s117
      %p129 = scmp.eq.s32.totalorder %s30, 3
      %p130 = por %p128, %p129
      %p132 = scmp.ne.s32.totalorder %s117, %s131
      %p133 = scmp.eq.s32.totalorder %s30, 0
      %p134 = por %p132, %p133
      %s136 = sadd.s32 %s135, 1
      %p139 = scmp.eq.s32.totalorder %s24, 3
      %p140 = scmp.ne.s32.totalorder %s135, %s137
      %p141 = scmp.eq.s32.totalorder %s24, 0
      %p142 = por %p140, %p141
      %p143 = scmp.ne.s32.totalorder %s135, %s137
      %p144 = scmp.eq.s32.totalorder %s29, 3
      %p145 = por %p143, %p144
      %p146 = scmp.ne.s32.totalorder %s137, %s138
      %p147 = scmp.eq.s32.totalorder %s29, 0
      %p148 = por %p146, %p147
      %p149 = scmp.ne.s32.totalorder %s137, %s138
      %p150 = scmp.eq.s32.totalorder %s30, 3
      %p151 = por %p149, %p150
      %p153 = scmp.ne.s32.totalorder %s138, %s152
      %p154 = scmp.eq.s32.totalorder %s30, 0
      %p155 = por %p153, %p154
      %s157 = sadd.s32 %s156, 1
      %p160 = scmp.eq.s32.totalorder %s24, 3
      %p161 = scmp.ne.s32.totalorder %s156, %s158
      %p162 = scmp.eq.s32.totalorder %s24, 0
      %p163 = por %p161, %p162
      %p164 = scmp.ne.s32.totalorder %s156, %s158
      %p165 = scmp.eq.s32.totalorder %s29, 3
      %p166 = por %p164, %p165
      %p167 = scmp.ne.s32.totalorder %s158, %s159
      %p168 = scmp.eq.s32.totalorder %s29, 0
      %p169 = por %p167, %p168
      %p170 = scmp.ne.s32.totalorder %s158, %s159
      %p171 = scmp.eq.s32.totalorder %s30, 3
      %p172 = por %p170, %p171
      %p174 = scmp.ne.s32.totalorder %s159, %s173
      %p175 = scmp.eq.s32.totalorder %s30, 0
      %p176 = por %p174, %p175
      %s178 = sadd.s32 %s177, 1
      %p181 = scmp.eq.s32.totalorder %s24, 3
      %p182 = scmp.ne.s32.totalorder %s177, %s179
      %p183 = scmp.eq.s32.totalorder %s24, 0
      %p184 = por %p182, %p183
      %p185 = scmp.ne.s32.totalorder %s177, %s179
      %p186 = scmp.eq.s32.totalorder %s29, 3
      %p187 = por %p185, %p186
      %p188 = scmp.ne.s32.totalorder %s179, %s180
      %p189 = scmp.eq.s32.totalorder %s29, 0
      %p190 = por %p188, %p189
      %p191 = scmp.ne.s32.totalorder %s179, %s180
      %p192 = scmp.eq.s32.totalorder %s30, 3
      %p193 = por %p191, %p192
      %p195 = scmp.ne.s32.totalorder %s180, %s194
      %p196 = scmp.eq.s32.totalorder %s30, 0
      %p197 = por %p195, %p196
      %s199 = sadd.s32 %s198, 1
      %p202 = scmp.eq.s32.totalorder %s24, 3
      %p203 = scmp.ne.s32.totalorder %s198, %s200
      %p204 = scmp.eq.s32.totalorder %s24, 0
      %p205 = por %p203, %p204
      %p206 = scmp.ne.s32.totalorder %s198, %s200
      %p207 = scmp.eq.s32.totalorder %s29, 3
      %p208 = por %p206, %p207
      %p209 = scmp.ne.s32.totalorder %s200, %s201
      %p210 = scmp.eq.s32.totalorder %s29, 0
      %p211 = por %p209, %p210
      %p212 = scmp.ne.s32.totalorder %s200, %s201
      %p213 = scmp.eq.s32.totalorder %s30, 3
      %p214 = por %p212, %p213
      %p216 = scmp.ne.s32.totalorder %s201, %s215
      %p217 = scmp.eq.s32.totalorder %s30, 0
      %p218 = por %p216, %p217
      %s220 = sadd.s32 %s219, 1
      %p223 = scmp.eq.s32.totalorder %s24, 3
      %p224 = scmp.ne.s32.totalorder %s219, %s221
      %p225 = scmp.eq.s32.totalorder %s24, 0
      %p226 = por %p224, %p225
      %p227 = scmp.ne.s32.totalorder %s219, %s221
      %p228 = scmp.eq.s32.totalorder %s29, 3
      %p229 = por %p227, %p228
      %p230 = scmp.ne.s32.totalorder %s221, %s222
      %p231 = scmp.eq.s32.totalorder %s29, 0
      %p232 = por %p230, %p231
      %p233 = scmp.ne.s32.totalorder %s221, %s222
      %p234 = scmp.eq.s32.totalorder %s30, 3
      %p235 = por %p233, %p234
      %p237 = scmp.ne.s32.totalorder %s222, %s236
      %p238 = scmp.eq.s32.totalorder %s30, 0
      %p239 = por %p237, %p238
      %s241 = sadd.s32 %s240, 1
      %p244 = scmp.eq.s32.totalorder %s24, 3
      %p245 = scmp.ne.s32.totalorder %s240, %s242
      %p246 = scmp.eq.s32.totalorder %s24, 0
      %p247 = por %p245, %p246
      %p248 = scmp.ne.s32.totalorder %s240, %s242
      %p249 = scmp.eq.s32.totalorder %s29, 3
      %p250 = por %p248, %p249
      %p251 = scmp.ne.s32.totalorder %s242, %s243
      %p252 = scmp.eq.s32.totalorder %s29, 0
      %p253 = por %p251, %p252
      %p254 = scmp.ne.s32.totalorder %s242, %s243
      %p255 = scmp.eq.s32.totalorder %s30, 3
      %p256 = por %p254, %p255
      %p258 = scmp.ne.s32.totalorder %s243, %s257
      %p259 = scmp.eq.s32.totalorder %s30, 0
      %p260 = por %p258, %p259
      %s262 = sadd.s32 %s261, 1
      %p265 = scmp.eq.s32.totalorder %s24, 3
      %p266 = scmp.ne.s32.totalorder %s261, %s263
      %p267 = scmp.eq.s32.totalorder %s24, 0
      %p268 = por %p266, %p267
      %p269 = scmp.ne.s32.totalorder %s261, %s263
      %p270 = scmp.eq.s32.totalorder %s29, 3
      %p271 = por %p269, %p270
      %p272 = scmp.ne.s32.totalorder %s263, %s264
      %p273 = scmp.eq.s32.totalorder %s29, 0
      %p274 = por %p272, %p273
      %p275 = scmp.ne.s32.totalorder %s263, %s264
      %p276 = scmp.eq.s32.totalorder %s30, 3
      %p277 = por %p275, %p276
      %p279 = scmp.ne.s32.totalorder %s264, %s278
      %p280 = scmp.eq.s32.totalorder %s30, 0
      %p281 = por %p279, %p280
      %s283 = sadd.s32 %s282, 1
      %p286 = scmp.eq.s32.totalorder %s24, 3
      %p287 = scmp.ne.s32.totalorder %s282, %s284
      %p288 = scmp.eq.s32.totalorder %s24, 0
      %p289 = por %p287, %p288
      %p290 = scmp.ne.s32.totalorder %s282, %s284
      %p291 = scmp.eq.s32.totalorder %s29, 3
      %p292 = por %p290, %p291
      %p293 = scmp.ne.s32.totalorder %s284, %s285
      %p294 = scmp.eq.s32.totalorder %s29, 0
      %p295 = por %p293, %p294
      %p296 = scmp.ne.s32.totalorder %s284, %s285
      %p297 = scmp.eq.s32.totalorder %s30, 3
      %p298 = por %p296, %p297
      %p300 = scmp.ne.s32.totalorder %s285, %s299
      %p301 = scmp.eq.s32.totalorder %s30, 0
      %p302 = por %p300, %p301
      %s304 = sadd.s32 %s303, 1
      %p307 = scmp.eq.s32.totalorder %s24, 3
      %p308 = scmp.ne.s32.totalorder %s303, %s305
      %p309 = scmp.eq.s32.totalorder %s24, 0
      %p310 = por %p308, %p309
      %p311 = scmp.ne.s32.totalorder %s303, %s305
      %p312 = scmp.eq.s32.totalorder %s29, 3
      %p313 = por %p311, %p312
      %p314 = scmp.ne.s32.totalorder %s305, %s306
      %p315 = scmp.eq.s32.totalorder %s29, 0
      %p316 = por %p314, %p315
      %p317 = scmp.ne.s32.totalorder %s305, %s306
      %p318 = scmp.eq.s32.totalorder %s30, 3
      %p319 = por %p317, %p318
      %p321 = scmp.ne.s32.totalorder %s306, %s320
      %p322 = scmp.eq.s32.totalorder %s30, 0
      %p323 = por %p321, %p322
      %s324 = ssub.s32 %s31, %s43
      %p325 = scmp.eq.s32.totalorder %s324, 0
      %s327 = sadd.s32 %s326, 1
      %s328 = scalar_select %p325, %s326, %s327
      %p331 = pneg %p325
      %p332 = scmp.eq.s32.totalorder %s24, 3
      %p333 = por %p331, %p332
      %p334 = scmp.ne.s32.totalorder %s326, %s329
      %p335 = scmp.eq.s32.totalorder %s24, 0
      %p336 = por %p334, %p335
      %p337 = scmp.ne.s32.totalorder %s326, %s329
      %p338 = scmp.eq.s32.totalorder %s29, 3
      %p339 = por %p337, %p338
      %p340 = scmp.ne.s32.totalorder %s329, %s330
      %p341 = scmp.eq.s32.totalorder %s29, 0
      %p342 = por %p340, %p341
      %p343 = scmp.ne.s32.totalorder %s329, %s330
      %p344 = scmp.eq.s32.totalorder %s30, 3
      %p345 = por %p343, %p344
      %p347 = scmp.ne.s32.totalorder %s330, %s346
      %p348 = scmp.eq.s32.totalorder %s30, 0
      %p349 = por %p347, %p348
      %p350 = scmp.le.s32.totalorder 1, %s24
      %p351 = scmp.lt.s32.totalorder %s24, 5
      %p352 = pnand %p350, %p351
      %p353 = pneg %p352
      // Predicated region
      $region9: #{convlstm_kth_forward.1} parent=5 // pred_check
        _
      $region10: #{convlstm_kth_forward.1} parent=5 // pred_check_branch
        %355 = sbr.rel (%p352) target = $region12
      $region11: #{convlstm_kth_forward.1} parent=5 // pred_region
        %s356 = ssub.s32 %s24, 1
        // Predicated region
        $region13: #{convlstm_kth_forward.1} parent=11 // pred_check
          %p357 = pneg %p85
        $region14: #{convlstm_kth_forward.1} parent=11 // pred_check_branch
          %359 = sbr.rel (%p357) target = $region16
        $region15: #{convlstm_kth_forward.1} parent=11 // pred_region
          %s361 = ssub.s32 4608, 4608
          %362 = vsyncadd [#allocation8], %s361
          %s363 = sshll.u32 [#allocation7], 4
          %s364 = int_to_ptr.vmem [resolvable:$true] %s363
          %369 = dma.hbm_to_vmem [thread:$0]  %s1, 4608, %s364, [#allocation8], 256, 256, 16
        $region16: #{convlstm_kth_forward.1} parent=11 // pred_fallthru
          _
        // Predicated region
        $region17: #{convlstm_kth_forward.1} parent=11 // pred_check
          %p370 = pneg %p106
        $region18: #{convlstm_kth_forward.1} parent=11 // pred_check_branch
          %372 = sbr.rel (%p370) target = $region20
        $region19: #{convlstm_kth_forward.1} parent=11 // pred_region
          _
        $region20: #{convlstm_kth_forward.1} parent=11 // pred_fallthru
          _
        // Predicated region
        $region21: #{convlstm_kth_forward.1} parent=11 // pred_check
          %p373 = pneg %p127
        $region22: #{convlstm_kth_forward.1} parent=11 // pred_check_branch
          %375 = sbr.rel (%p373) target = $region24
        $region23: #{convlstm_kth_forward.1} parent=11 // pred_region
          %s377 = ssub.s32 6144, 6144
          %378 = vsyncadd [#allocation11], %s377
          %s379 = sshll.u32 [#allocation10], 4
          %s380 = int_to_ptr.vmem [resolvable:$true] %s379
          %385 = dma.hbm_to_vmem [thread:$0]  %s3, 6144, %s380, [#allocation11], 128, 128, 8
        $region24: #{convlstm_kth_forward.1} parent=11 // pred_fallthru
          _
        // Predicated region
        $region25: #{convlstm_kth_forward.1} parent=11 // pred_check
          %p386 = pneg %p148
        $region26: #{convlstm_kth_forward.1} parent=11 // pred_check_branch
          %388 = sbr.rel (%p386) target = $region28
        $region27: #{convlstm_kth_forward.1} parent=11 // pred_region
          %s390 = ssub.s32 3072, 3072
          %391 = vsyncadd [#allocation11], %s390
          %s392 = sshll.u32 [#allocation12], 4
          %s393 = int_to_ptr.vmem [resolvable:$true] %s392
          %398 = dma.hbm_to_vmem [thread:$0]  %s4, 3072, %s393, [#allocation11], 64, 64, 4
        $region28: #{convlstm_kth_forward.1} parent=11 // pred_fallthru
          _
        // Predicated region
        $region29: #{convlstm_kth_forward.1} parent=11 // pred_check
          %p399 = pneg %p169
        $region30: #{convlstm_kth_forward.1} parent=11 // pred_check_branch
          %401 = sbr.rel (%p399) target = $region32
        $region31: #{convlstm_kth_forward.1} parent=11 // pred_region
          %s403 = ssub.s32 64, 64
          %404 = vsyncadd [#allocation14], %s403
          %s406 = sshll.u32 [#allocation13], 4
          %s407 = int_to_ptr.vmem [resolvable:$true] %s406
          %409 = dma.hbm_to_vmem [thread:$0]  %s5, 64, %s407, [#allocation14]
        $region32: #{convlstm_kth_forward.1} parent=11 // pred_fallthru
          _
        // Predicated region
        $region33: #{convlstm_kth_forward.1} parent=11 // pred_check
          %p410 = pneg %p190
        $region34: #{convlstm_kth_forward.1} parent=11 // pred_check_branch
          %412 = sbr.rel (%p410) target = $region36
        $region35: #{convlstm_kth_forward.1} parent=11 // pred_region
          _
        $region36: #{convlstm_kth_forward.1} parent=11 // pred_fallthru
          _
        // Predicated region
        $region37: #{convlstm_kth_forward.1} parent=11 // pred_check
          %p413 = pneg %p211
        $region38: #{convlstm_kth_forward.1} parent=11 // pred_check_branch
          %415 = sbr.rel (%p413) target = $region40
        $region39: #{convlstm_kth_forward.1} parent=11 // pred_region
          _
        $region40: #{convlstm_kth_forward.1} parent=11 // pred_fallthru
          _
        // Predicated region
        $region41: #{convlstm_kth_forward.1} parent=11 // pred_check
          %p416 = pneg %p232
        $region42: #{convlstm_kth_forward.1} parent=11 // pred_check_branch
          %418 = sbr.rel (%p416) target = $region44
        $region43: #{convlstm_kth_forward.1} parent=11 // pred_region
          %s420 = ssub.s32 6144, 6144
          %421 = vsyncadd [#allocation14], %s420
          %s422 = sshll.u32 [#allocation15], 4
          %s423 = int_to_ptr.vmem [resolvable:$true] %s422
          %428 = dma.hbm_to_vmem [thread:$0]  %s8, 6144, %s423, [#allocation14], 128, 128, 8
        $region44: #{convlstm_kth_forward.1} parent=11 // pred_fallthru
          _
        // Predicated region
        $region45: #{convlstm_kth_forward.1} parent=11 // pred_check
          %p429 = pneg %p253
        $region46: #{convlstm_kth_forward.1} parent=11 // pred_check_branch
          %431 = sbr.rel (%p429) target = $region48
        $region47: #{convlstm_kth_forward.1} parent=11 // pred_region
          %s433 = ssub.s32 3072, 3072
          %434 = vsyncadd [#allocation17], %s433
          %s435 = sshll.u32 [#allocation16], 4
          %s436 = int_to_ptr.vmem [resolvable:$true] %s435
          %441 = dma.hbm_to_vmem [thread:$0]  %s9, 3072, %s436, [#allocation17], 64, 64, 4
        $region48: #{convlstm_kth_forward.1} parent=11 // pred_fallthru
          _
        // Predicated region
        $region49: #{convlstm_kth_forward.1} parent=11 // pred_check
          %p442 = pneg %p274
        $region50: #{convlstm_kth_forward.1} parent=11 // pred_check_branch
          %444 = sbr.rel (%p442) target = $region52
        $region51: #{convlstm_kth_forward.1} parent=11 // pred_region
          _
        $region52: #{convlstm_kth_forward.1} parent=11 // pred_fallthru
          _
        // Predicated region
        $region53: #{convlstm_kth_forward.1} parent=11 // pred_check
          %p445 = pneg %p295
        $region54: #{convlstm_kth_forward.1} parent=11 // pred_check_branch
          %447 = sbr.rel (%p445) target = $region56
        $region55: #{convlstm_kth_forward.1} parent=11 // pred_region
          _
        $region56: #{convlstm_kth_forward.1} parent=11 // pred_fallthru
          _
        // Predicated region
        $region57: #{convlstm_kth_forward.1} parent=11 // pred_check
          %p448 = pneg %p316
        $region58: #{convlstm_kth_forward.1} parent=11 // pred_check_branch
          %450 = sbr.rel (%p448) target = $region60
        $region59: #{convlstm_kth_forward.1} parent=11 // pred_region
          _
        $region60: #{convlstm_kth_forward.1} parent=11 // pred_fallthru
          _
      $region12: #{convlstm_kth_forward.1} parent=5 // pred_fallthru
        _
      %p451 = scmp.lt.s32.totalorder %s24, 4
      // Predicated region
      $region61: #{convlstm_kth_forward.1} parent=5 // pred_check
        %p452 = pneg %p451
      $region62: #{convlstm_kth_forward.1} parent=5 // pred_check_branch
        %454 = sbr.rel (%p452) target = $region64
      $region63: #{convlstm_kth_forward.1} parent=5 // pred_region
        // Predicated region
        $region65: #{convlstm_kth_forward.1} parent=63 // pred_check
          %p455 = pneg %p58
        $region66: #{convlstm_kth_forward.1} parent=63 // pred_check_branch
          %457 = sbr.rel (%p455) target = $region68
        $region67: #{convlstm_kth_forward.1} parent=63 // pred_region
          %s458 = smul.u32 2, %s31
          %p459 = scmp.lt.s32.totalorder %s32, 3
          %s460 = scalar_select %p459, %s32, 3
          %p461 = scmp.lt.s32.totalorder %s458, 1
          %s462 = scalar_select %p461, %s458, 1
          %s463 = smul.addr %s462, 2
          %s464 = smul.addr %s460, 4
          %s465 = sadd.s32 %s463, %s464
          %s466 = smul.addr %s465, 8
          %s467 = scalar_lea.vmem %s0, %s466
          %s468 = smul.u32 2, %s31
        $region68: #{convlstm_kth_forward.1} parent=63 // pred_fallthru
          _
      $region64: #{convlstm_kth_forward.1} parent=5 // pred_fallthru
        _
      %p469 = scmp.le.s32.totalorder 1, %s24
      %p470 = scmp.lt.s32.totalorder %s24, 5
      %p471 = pnand %p469, %p470
      %p472 = pneg %p471
      // Predicated region
      $region69: #{convlstm_kth_forward.1} parent=5 // pred_check
        _
      $region70: #{convlstm_kth_forward.1} parent=5 // pred_check_branch
        %474 = sbr.rel (%p471) target = $region72
      $region71: #{convlstm_kth_forward.1} parent=5 // pred_region
        %s475 = ssub.s32 %s24, 1
        // Predicated region
        $region73: #{convlstm_kth_forward.1} parent=71 // pred_check
          %p476 = pneg %p85
        $region74: #{convlstm_kth_forward.1} parent=71 // pred_check_branch
          %478 = sbr.rel (%p476) target = $region76
        $region75: #{convlstm_kth_forward.1} parent=71 // pred_region
          %479 = dma.done [#allocation8], 4608
        $region76: #{convlstm_kth_forward.1} parent=71 // pred_fallthru
          _
        // Predicated region
        $region77: #{convlstm_kth_forward.1} parent=71 // pred_check
          %p480 = pneg %p127
        $region78: #{convlstm_kth_forward.1} parent=71 // pred_check_branch
          %482 = sbr.rel (%p480) target = $region80
        $region79: #{convlstm_kth_forward.1} parent=71 // pred_region
          %483 = dma.done [#allocation11], 6144
        $region80: #{convlstm_kth_forward.1} parent=71 // pred_fallthru
          _
        // Predicated region
        $region81: #{convlstm_kth_forward.1} parent=71 // pred_check
          %p484 = pneg %p148
        $region82: #{convlstm_kth_forward.1} parent=71 // pred_check_branch
          %486 = sbr.rel (%p484) target = $region84
        $region83: #{convlstm_kth_forward.1} parent=71 // pred_region
          %487 = dma.done [#allocation11], 3072
        $region84: #{convlstm_kth_forward.1} parent=71 // pred_fallthru
          _
        // Predicated region
        $region85: #{convlstm_kth_forward.1} parent=71 // pred_check
          %p488 = pneg %p169
        $region86: #{convlstm_kth_forward.1} parent=71 // pred_check_branch
          %490 = sbr.rel (%p488) target = $region88
        $region87: #{convlstm_kth_forward.1} parent=71 // pred_region
          %491 = dma.done [#allocation14], 64
        $region88: #{convlstm_kth_forward.1} parent=71 // pred_fallthru
          _
        // Predicated region
        $region89: #{convlstm_kth_forward.1} parent=71 // pred_check
          %p492 = pneg %p232
        $region90: #{convlstm_kth_forward.1} parent=71 // pred_check_branch
          %494 = sbr.rel (%p492) target = $region92
        $region91: #{convlstm_kth_forward.1} parent=71 // pred_region
          %495 = dma.done [#allocation14], 6144
        $region92: #{convlstm_kth_forward.1} parent=71 // pred_fallthru
          _
        // Predicated region
        $region93: #{convlstm_kth_forward.1} parent=71 // pred_check
          %p496 = pneg %p253
        $region94: #{convlstm_kth_forward.1} parent=71 // pred_check_branch
          %498 = sbr.rel (%p496) target = $region96
        $region95: #{convlstm_kth_forward.1} parent=71 // pred_region
          %499 = dma.done [#allocation17], 3072
        $region96: #{convlstm_kth_forward.1} parent=71 // pred_fallthru
          _
        %s500 = smul.u32 2, %s33
        %p501 = scmp.lt.s32.totalorder %s34, 3
        %s502 = scalar_select %p501, %s34, 3
        %p503 = scmp.lt.s32.totalorder %s500, 1
        %s504 = scalar_select %p503, %s500, 1
        %s505 = smul.addr %s504, 2
        %s506 = smul.addr %s502, 4
        %s507 = sadd.s32 %s505, %s506
        %s508 = smul.addr %s507, 8
        %s509 = scalar_lea.vmem %s0, %s508
        %p510 = pneg %p64
        %p511 = pneg %p61
        %p512 = pneg %p85
        %p513 = pneg %p82
        %p514 = pneg %p106
        %p515 = pneg %p103
        %p516 = pneg %p127
        %p517 = pneg %p124
        %p518 = pneg %p148
        %p519 = pneg %p145
        %p520 = pneg %p169
        %p521 = pneg %p166
        %p522 = pneg %p190
        %p523 = pneg %p187
        %p524 = pneg %p211
        %p525 = pneg %p208
        %p526 = pneg %p232
        %p527 = pneg %p229
        %p528 = pneg %p253
        %p529 = pneg %p250
        %p530 = pneg %p274
        %p531 = pneg %p271
        %p532 = pneg %p295
        %p533 = pneg %p292
        %p534 = pneg %p316
        %p535 = pneg %p313
        %p536 = pneg %p342
        %p537 = pneg %p339
        %s538 = smul.u32 2, %s33
        %p539 = scmp.lt.s32.totalorder %s34, 3
        %s540 = scalar_select %p539, %s34, 3
        %p541 = scmp.lt.s32.totalorder %s538, 1
        %s542 = scalar_select %p541, %s538, 1
        %s543 = smul.addr %s542, 2
        %s544 = smul.addr %s540, 4
        %s545 = sadd.s32 %s543, %s544
        %s546 = smul.addr %s545, 8
        %s547 = scalar_lea.vmem %s0, %s546
        %s548 = smul.u32 2, %s33
        %p550 = scmp.eq.s32.totalorder %s34, 0
        // Predicated region
        $region97: #{convlstm_kth_forward.1} parent=71 // pred_check
          %p551 = pneg %p550
        $region98: #{convlstm_kth_forward.1} parent=71 // pred_check_branch
          %553 = sbr.rel (%p551) target = $region100
        $region99: #{convlstm_kth_forward.1} parent=71 // pred_region
          %vm554 = vcmask 392192
          %555 = vst.msk [vmem:[#allocation2] sm:$0xff] %vm554, 0.0
          %556 = vst.msk [vmem:[#allocation2 + $0x8] sm:$0xff] %vm554, 0.0
          %vm557 = vcmask 386048
          %558 = vst.msk [vmem:[#allocation2 + $0x10] sm:$0x3] %vm557, 0.0
          %559 = vst.msk [vmem:[#allocation2 + $0x18] sm:$0xff] %vm554, 0.0
          %560 = vst.msk [vmem:[#allocation2 + $0x20] sm:$0xff] %vm554, 0.0
          %561 = vst.msk [vmem:[#allocation2 + $0x28] sm:$0x3] %vm557, 0.0
          %562 = vst [vmem:[#allocation3] sm:$0xff] 0.0
          %563 = vst [vmem:[#allocation3 + $0x8] sm:$0xff] 0.0
          %564 = vst [vmem:[#allocation3 + $0x10] sm:$0x3] 0.0
          %565 = vst [vmem:[#allocation3 + $0x18] sm:$0xff] 0.0
          %566 = vst [vmem:[#allocation3 + $0x20] sm:$0xff] 0.0
          %567 = vst [vmem:[#allocation3 + $0x28] sm:$0x3] 0.0
          %568 = vst [vmem:[#allocation4] sm:$0xff] 0.0
          %569 = vst [vmem:[#allocation4 + $0x8] sm:$0xff] 0.0
          %570 = vst [vmem:[#allocation4 + $0x10] sm:$0x3] 0.0
          %571 = vst [vmem:[#allocation4 + $0x18] sm:$0xff] 0.0
          %572 = vst [vmem:[#allocation4 + $0x20] sm:$0xff] 0.0
          %573 = vst [vmem:[#allocation4 + $0x28] sm:$0x3] 0.0
          %574 = vst [vmem:[#allocation5] sm:$0xff] 0.0
          %575 = vst [vmem:[#allocation5 + $0x8] sm:$0xff] 0.0
          %576 = vst [vmem:[#allocation5 + $0x10] sm:$0x3] 0.0
          %577 = vst [vmem:[#allocation5 + $0x18] sm:$0xff] 0.0
          %578 = vst [vmem:[#allocation5 + $0x20] sm:$0xff] 0.0
          %579 = vst [vmem:[#allocation5 + $0x28] sm:$0x3] 0.0
          %580 = vst [vmem:[#allocation6] sm:$0xff] 0.0
          %581 = vst [vmem:[#allocation6 + $0x8] sm:$0xff] 0.0
          %582 = vst [vmem:[#allocation6 + $0x10] sm:$0x3] 0.0
          %583 = vst [vmem:[#allocation6 + $0x18] sm:$0xff] 0.0
          %584 = vst [vmem:[#allocation6 + $0x20] sm:$0xff] 0.0
          %585 = vst [vmem:[#allocation6 + $0x28] sm:$0x3] 0.0
        $region100: #{convlstm_kth_forward.1} parent=71 // pred_fallthru
          _
        %v586 = vld [vmem:[%s547] sm:$0xff]
        %v587 = vld [vmem:[%s547 + $0x8] sm:$0xff]
        %v588 = vld [vmem:[%s547 + $0x10] sm:$0xff]
        %v589 = vld [vmem:[%s547 + $0x18] sm:$0xff]
        %vm590 = vcmask 392192
        %591 = vst.msk [vmem:[#allocation2 + $0x1] sm:$0xff] %vm590, %v586
        %592 = vst.msk [vmem:[#allocation2 + $0x9] sm:$0xff] %vm590, %v587
        %593 = vst.msk [vmem:[#allocation2 + $0x19] sm:$0xff] %vm590, %v588
        %594 = vst.msk [vmem:[#allocation2 + $0x21] sm:$0xff] %vm590, %v589
        %v595 = vld [vmem:[#allocation2] sm:$0xff]
        %v596 = vld [vmem:[#allocation2 + $0x8] sm:$0xff]
        %v597 = vld [vmem:[#allocation2 + $0x18] sm:$0xff]
        %v598 = vld [vmem:[#allocation2 + $0x20] sm:$0xff]
        %v599 = vpack.c.bf16 %v596, %v595
        %v600 = vpack.c.bf16 %v598, %v597
        %v601 = vld [vmem:[#allocation7] sm:$0xff]
        %v602 = vld [vmem:[#allocation7 + $0x8] sm:$0xff]
        %v603 = vld [vmem:[#allocation7 + $0x10] sm:$0xff]
        %v604 = vld [vmem:[#allocation7 + $0x18] sm:$0xff]
        %v605 = vld [vmem:[#allocation7 + $0x20] sm:$0xff]
        %v606 = vld [vmem:[#allocation7 + $0x28] sm:$0xff]
        %v607 = vld [vmem:[#allocation7 + $0x30] sm:$0xff]
        %v608 = vld [vmem:[#allocation7 + $0x38] sm:$0xff]
        %v609 = vld [vmem:[#allocation7 + $0x40] sm:$0xff]
        %v610 = vld [vmem:[#allocation7 + $0x48] sm:$0xff]
        %v611 = vld [vmem:[#allocation7 + $0x50] sm:$0xff]
        %v612 = vld [vmem:[#allocation7 + $0x58] sm:$0xff]
        %v613 = vld [vmem:[#allocation2 + $0x1] sm:$0xff]
        %v614 = vld [vmem:[#allocation2 + $0x9] sm:$0xff]
        %v615 = vld [vmem:[#allocation2 + $0x19] sm:$0xff]
        %v616 = vld [vmem:[#allocation2 + $0x21] sm:$0xff]
        %v617 = vpack.c.bf16 %v614, %v613
        %v618 = vpack.c.bf16 %v616, %v615
        %s619 = scalar_lea.vmem [#allocation7], 96
        %v620 = vld [vmem:[%s619] sm:$0xff]
        %v621 = vld [vmem:[%s619 + $0x8] sm:$0xff]
        %v622 = vld [vmem:[%s619 + $0x10] sm:$0xff]
        %v623 = vld [vmem:[%s619 + $0x18] sm:$0xff]
        %v624 = vld [vmem:[%s619 + $0x20] sm:$0xff]
        %v625 = vld [vmem:[%s619 + $0x28] sm:$0xff]
        %v626 = vld [vmem:[%s619 + $0x30] sm:$0xff]
        %v627 = vld [vmem:[%s619 + $0x38] sm:$0xff]
        %v628 = vld [vmem:[%s619 + $0x40] sm:$0xff]
        %v629 = vld [vmem:[%s619 + $0x48] sm:$0xff]
        %v630 = vld [vmem:[%s619 + $0x50] sm:$0xff]
        %v631 = vld [vmem:[%s619 + $0x58] sm:$0xff]
        %v644 = vunpack.c.l.b16 %v620
        %v645 = vunpack.c.h.b16 %v620
        %v646 = vunpack.c.l.b16 %v621
        %v647 = vunpack.c.h.b16 %v621
        %v648 = vunpack.c.l.b16 %v622
        %v649 = vunpack.c.h.b16 %v622
        %v650 = vunpack.c.l.b16 %v623
        %v651 = vunpack.c.h.b16 %v623
        %v652 = vunpack.c.l.b16 %v624
        %v653 = vunpack.c.h.b16 %v624
        %v654 = vunpack.c.l.b16 %v625
        %v655 = vunpack.c.h.b16 %v625
        %v656 = vunpack.c.l.b16 %v626
        %v657 = vunpack.c.h.b16 %v626
        %v658 = vunpack.c.l.b16 %v627
        %v659 = vunpack.c.h.b16 %v627
        %v660 = vunpack.c.l.b16 %v628
        %v661 = vunpack.c.h.b16 %v628
        %v662 = vunpack.c.l.b16 %v629
        %v663 = vunpack.c.h.b16 %v629
        %v664 = vunpack.c.l.b16 %v630
        %v665 = vunpack.c.h.b16 %v630
        %v666 = vunpack.c.l.b16 %v631
        %v667 = vunpack.c.h.b16 %v631
        %v668 = vpack.c.b16 %v648, %v644
        %v669 = vpack.c.b16 %v649, %v645
        %v670 = vpack.c.b16 %v650, %v646
        %v671 = vpack.c.b16 %v651, %v647
        %v672 = vpack.c.b16 %v656, %v652
        %v673 = vpack.c.b16 %v657, %v653
        %v674 = vpack.c.b16 %v658, %v654
        %v675 = vpack.c.b16 %v659, %v655
        %v676 = vpack.c.b16 %v664, %v660
        %v677 = vpack.c.b16 %v665, %v661
        %v678 = vpack.c.b16 %v666, %v662
        %v679 = vpack.c.b16 %v667, %v663
        %v693 = vsel %vm590, %v617, 0
        %v696 = vsel %vm590, %v618, 0
        %698 = vmatprep.subr.bf16.mxu0 %v669
        %699 = vmatpush1.bf16.msra.mxu0 %v668
        %700 = vmatprep.subr.bf16.mxu0 %v673
        %701 = vmatpush1.bf16.msra.mxu0 %v672
        %702 = vmatprep.subr.bf16.mxu0 %v677
        %703 = vmatpush1.bf16.msra.mxu0 %v676
        %704 = vmatprep.subr.bf16.mxu0 0
        %705 = vmatpush1.bf16.msra.mxu0 0
        %706 = vmatprep.subr.bf16.mxu0 0
        %707 = vmatpush1.bf16.msra.mxu0 0
        %708 = vmatprep.subr.bf16.mxu0 0
        %709 = vmatpush1.bf16.msra.mxu0 0
        %710 = vmatprep.subr.bf16.mxu0 0
        %711 = vmatpush1.bf16.msra.mxu0 0
        %712 = vmatprep.subr.bf16.mxu0 0
        %713 = vmatpush1.bf16.msra.mxu0 0
        %714 = vmatprep.subr.bf16.mxu0 0
        %715 = vmatpush1.bf16.msra.mxu0 0
        %716 = vmatprep.subr.bf16.mxu0 0
        %717 = vmatpush1.bf16.msra.mxu0 0
        %718 = vmatprep.subr.bf16.mxu0 0
        %719 = vmatpush1.bf16.msra.mxu0 0
        %720 = vmatprep.subr.bf16.mxu0 0
        %721 = vmatpush1.bf16.msra.mxu0 0
        %722 = vmatprep.subr.bf16.mxu0 0
        %723 = vmatpush1.bf16.msra.mxu0 0
        %724 = vmatprep.subr.bf16.mxu0 0
        %725 = vmatpush1.bf16.msra.mxu0 0
        %726 = vmatprep.subr.bf16.mxu0 0
        %727 = vmatpush1.bf16.msra.mxu0 0
        %728 = vmatprep.subr.bf16.mxu0 0
        %729 = vmatpush1.bf16.msra.mxu0 0
        %730 = vmatprep.mubr.bf16.mxu0 0
        %731 = vmatmul.mubr.bf16.gmra.mrb[0].mxu0 %v693
        %v732 = vpop.f32.mrb[0].mxu0
        %v733 = vadd.f32 0.0, %v732
        %v734 = vpop.f32.mrb[0].mxu0
        %v735 = vadd.f32 0.0, %v734
        %v736 = vpop.f32.mrb[0].mxu0
        %v737 = vadd.f32 0.0, %v736
        %v738 = vpop.f32.mrb[0].mxu0
        %v739 = vadd.f32 0.0, %v738
        %740 = vmatprep.mubr.bf16.mxu0 0
        %741 = vmatmul.mubr.bf16.gmra.mrb[0].mxu0 %v696
        %v742 = vpop.f32.mrb[0].mxu0
        %v743 = vadd.f32 0.0, %v742
        %v744 = vpop.f32.mrb[0].mxu0
        %v745 = vadd.f32 0.0, %v744
        %v746 = vpop.f32.mrb[0].mxu0
        %v747 = vadd.f32 0.0, %v746
        %v748 = vpop.f32.mrb[0].mxu0
        %v749 = vadd.f32 0.0, %v748
        %750 = vdwg.mxu0
        %751 = vmatprep.subr.bf16.mxu0 %v671
        %752 = vmatpush1.bf16.msra.mxu0 %v670
        %753 = vmatprep.subr.bf16.mxu0 %v675
        %754 = vmatpush1.bf16.msra.mxu0 %v674
        %755 = vmatprep.subr.bf16.mxu0 %v679
        %756 = vmatpush1.bf16.msra.mxu0 %v678
        %757 = vmatprep.subr.bf16.mxu0 0
        %758 = vmatpush1.bf16.msra.mxu0 0
        %759 = vmatprep.subr.bf16.mxu0 0
        %760 = vmatpush1.bf16.msra.mxu0 0
        %761 = vmatprep.subr.bf16.mxu0 0
        %762 = vmatpush1.bf16.msra.mxu0 0
        %763 = vmatprep.subr.bf16.mxu0 0
        %764 = vmatpush1.bf16.msra.mxu0 0
        %765 = vmatprep.subr.bf16.mxu0 0
        %766 = vmatpush1.bf16.msra.mxu0 0
        %767 = vmatprep.subr.bf16.mxu0 0
        %768 = vmatpush1.bf16.msra.mxu0 0
        %769 = vmatprep.subr.bf16.mxu0 0
        %770 = vmatpush1.bf16.msra.mxu0 0
        %771 = vmatprep.subr.bf16.mxu0 0
        %772 = vmatpush1.bf16.msra.mxu0 0
        %773 = vmatprep.subr.bf16.mxu0 0
        %774 = vmatpush1.bf16.msra.mxu0 0
        %775 = vmatprep.subr.bf16.mxu0 0
        %776 = vmatpush1.bf16.msra.mxu0 0
        %777 = vmatprep.subr.bf16.mxu0 0
        %778 = vmatpush1.bf16.msra.mxu0 0
        %779 = vmatprep.subr.bf16.mxu0 0
        %780 = vmatpush1.bf16.msra.mxu0 0
        %781 = vmatprep.subr.bf16.mxu0 0
        %782 = vmatpush1.bf16.msra.mxu0 0
        %783 = vmatprep.mubr.bf16.mxu0 0
        %784 = vmatmul.mubr.bf16.gmra.mrb[0].mxu0 %v693
        %v785 = vpop.f32.mrb[0].mxu0
        %v786 = vadd.f32 0.0, %v785
        %v787 = vpop.f32.mrb[0].mxu0
        %v788 = vadd.f32 0.0, %v787
        %v789 = vpop.f32.mrb[0].mxu0
        %v790 = vadd.f32 0.0, %v789
        %v791 = vpop.f32.mrb[0].mxu0
        %v792 = vadd.f32 0.0, %v791
        %793 = vmatprep.mubr.bf16.mxu0 0
        %794 = vmatmul.mubr.bf16.gmra.mrb[0].mxu0 %v696
        %v795 = vpop.f32.mrb[0].mxu0
        %v796 = vadd.f32 0.0, %v795
        %v797 = vpop.f32.mrb[0].mxu0
        %v798 = vadd.f32 0.0, %v797
        %v799 = vpop.f32.mrb[0].mxu0
        %v800 = vadd.f32 0.0, %v799
        %v801 = vpop.f32.mrb[0].mxu0
        %v802 = vadd.f32 0.0, %v801
        %803 = vdwg.mxu0
        %v816 = vunpack.c.l.b16 %v601
        %v817 = vunpack.c.h.b16 %v601
        %v818 = vunpack.c.l.b16 %v602
        %v819 = vunpack.c.h.b16 %v602
        %v820 = vunpack.c.l.b16 %v603
        %v821 = vunpack.c.h.b16 %v603
        %v822 = vunpack.c.l.b16 %v604
        %v823 = vunpack.c.h.b16 %v604
        %v824 = vunpack.c.l.b16 %v605
        %v825 = vunpack.c.h.b16 %v605
        %v826 = vunpack.c.l.b16 %v606
        %v827 = vunpack.c.h.b16 %v606
        %v828 = vunpack.c.l.b16 %v607
        %v829 = vunpack.c.h.b16 %v607
        %v830 = vunpack.c.l.b16 %v608
        %v831 = vunpack.c.h.b16 %v608
        %v832 = vunpack.c.l.b16 %v609
        %v833 = vunpack.c.h.b16 %v609
        %v834 = vunpack.c.l.b16 %v610
        %v835 = vunpack.c.h.b16 %v610
        %v836 = vunpack.c.l.b16 %v611
        %v837 = vunpack.c.h.b16 %v611
        %v838 = vunpack.c.l.b16 %v612
        %v839 = vunpack.c.h.b16 %v612
        %v840 = vpack.c.b16 %v820, %v816
        %v841 = vpack.c.b16 %v821, %v817
        %v842 = vpack.c.b16 %v822, %v818
        %v843 = vpack.c.b16 %v823, %v819
        %v844 = vpack.c.b16 %v828, %v824
        %v845 = vpack.c.b16 %v829, %v825
        %v846 = vpack.c.b16 %v830, %v826
        %v847 = vpack.c.b16 %v831, %v827
        %v848 = vpack.c.b16 %v836, %v832
        %v849 = vpack.c.b16 %v837, %v833
        %v850 = vpack.c.b16 %v838, %v834
        %v851 = vpack.c.b16 %v839, %v835
        %v865 = vsel %vm590, %v599, 0
        %v868 = vsel %vm590, %v600, 0
        %870 = vmatprep.subr.bf16.mxu0 %v841
        %871 = vmatpush1.bf16.msra.mxu0 %v840
        %872 = vmatprep.subr.bf16.mxu0 %v845
        %873 = vmatpush1.bf16.msra.mxu0 %v844
        %874 = vmatprep.subr.bf16.mxu0 %v849
        %875 = vmatpush1.bf16.msra.mxu0 %v848
        %876 = vmatprep.subr.bf16.mxu0 0
        %877 = vmatpush1.bf16.msra.mxu0 0
        %878 = vmatprep.subr.bf16.mxu0 0
        %879 = vmatpush1.bf16.msra.mxu0 0
        %880 = vmatprep.subr.bf16.mxu0 0
        %881 = vmatpush1.bf16.msra.mxu0 0
        %882 = vmatprep.subr.bf16.mxu0 0
        %883 = vmatpush1.bf16.msra.mxu0 0
        %884 = vmatprep.subr.bf16.mxu0 0
        %885 = vmatpush1.bf16.msra.mxu0 0
        %886 = vmatprep.subr.bf16.mxu0 0
        %887 = vmatpush1.bf16.msra.mxu0 0
        %888 = vmatprep.subr.bf16.mxu0 0
        %889 = vmatpush1.bf16.msra.mxu0 0
        %890 = vmatprep.subr.bf16.mxu0 0
        %891 = vmatpush1.bf16.msra.mxu0 0
        %892 = vmatprep.subr.bf16.mxu0 0
        %893 = vmatpush1.bf16.msra.mxu0 0
        %894 = vmatprep.subr.bf16.mxu0 0
        %895 = vmatpush1.bf16.msra.mxu0 0
        %896 = vmatprep.subr.bf16.mxu0 0
        %897 = vmatpush1.bf16.msra.mxu0 0
        %898 = vmatprep.subr.bf16.mxu0 0
        %899 = vmatpush1.bf16.msra.mxu0 0
        %900 = vmatprep.subr.bf16.mxu0 0
        %901 = vmatpush1.bf16.msra.mxu0 0
        %902 = vmatprep.mubr.bf16.mxu0 0
        %903 = vmatmul.mubr.bf16.gmra.mrb[0].mxu0 %v865
        %v904 = vpop.f32.mrb[0].mxu0
        %v905 = vadd.f32 %v733, %v904
        %v906 = vpop.f32.mrb[0].mxu0
        %v907 = vadd.f32 %v735, %v906
        %v908 = vpop.f32.mrb[0].mxu0
        %v909 = vadd.f32 %v737, %v908
        %v910 = vpop.f32.mrb[0].mxu0
        %v911 = vadd.f32 %v739, %v910
        %912 = vmatprep.mubr.bf16.mxu0 0
        %913 = vmatmul.mubr.bf16.gmra.mrb[0].mxu0 %v868
        %v914 = vpop.f32.mrb[0].mxu0
        %v915 = vadd.f32 %v743, %v914
        %v916 = vpop.f32.mrb[0].mxu0
        %v917 = vadd.f32 %v745, %v916
        %v918 = vpop.f32.mrb[0].mxu0
        %v919 = vadd.f32 %v747, %v918
        %v920 = vpop.f32.mrb[0].mxu0
        %v921 = vadd.f32 %v749, %v920
        %922 = vdwg.mxu0
        %923 = vmatprep.subr.bf16.mxu0 %v843
        %924 = vmatpush1.bf16.msra.mxu0 %v842
        %925 = vmatprep.subr.bf16.mxu0 %v847
        %926 = vmatpush1.bf16.msra.mxu0 %v846
        %927 = vmatprep.subr.bf16.mxu0 %v851
        %928 = vmatpush1.bf16.msra.mxu0 %v850
        %929 = vmatprep.subr.bf16.mxu0 0
        %930 = vmatpush1.bf16.msra.mxu0 0
        %931 = vmatprep.subr.bf16.mxu0 0
        %932 = vmatpush1.bf16.msra.mxu0 0
        %933 = vmatprep.subr.bf16.mxu0 0
        %934 = vmatpush1.bf16.msra.mxu0 0
        %935 = vmatprep.subr.bf16.mxu0 0
        %936 = vmatpush1.bf16.msra.mxu0 0
        %937 = vmatprep.subr.bf16.mxu0 0
        %938 = vmatpush1.bf16.msra.mxu0 0
        %939 = vmatprep.subr.bf16.mxu0 0
        %940 = vmatpush1.bf16.msra.mxu0 0
        %941 = vmatprep.subr.bf16.mxu0 0
        %942 = vmatpush1.bf16.msra.mxu0 0
        %943 = vmatprep.subr.bf16.mxu0 0
        %944 = vmatpush1.bf16.msra.mxu0 0
        %945 = vmatprep.subr.bf16.mxu0 0
        %946 = vmatpush1.bf16.msra.mxu0 0
        %947 = vmatprep.subr.bf16.mxu0 0
        %948 = vmatpush1.bf16.msra.mxu0 0
        %949 = vmatprep.subr.bf16.mxu0 0
        %950 = vmatpush1.bf16.msra.mxu0 0
        %951 = vmatprep.subr.bf16.mxu0 0
        %952 = vmatpush1.bf16.msra.mxu0 0
        %953 = vmatprep.subr.bf16.mxu0 0
        %954 = vmatpush1.bf16.msra.mxu0 0
        %955 = vmatprep.mubr.bf16.mxu0 0
        %956 = vmatmul.mubr.bf16.gmra.mrb[0].mxu0 %v865
        %v957 = vpop.f32.mrb[0].mxu0
        %v958 = vadd.f32 %v786, %v957
        %v959 = vpop.f32.mrb[0].mxu0
        %v960 = vadd.f32 %v788, %v959
        %v961 = vpop.f32.mrb[0].mxu0
        %v962 = vadd.f32 %v790, %v961
        %v963 = vpop.f32.mrb[0].mxu0
        %v964 = vadd.f32 %v792, %v963
        %965 = vmatprep.mubr.bf16.mxu0 0
        %966 = vmatmul.mubr.bf16.gmra.mrb[0].mxu0 %v868
        %v967 = vpop.f32.mrb[0].mxu0
        %v968 = vadd.f32 %v796, %v967
        %v969 = vpop.f32.mrb[0].mxu0
        %v970 = vadd.f32 %v798, %v969
        %v971 = vpop.f32.mrb[0].mxu0
        %v972 = vadd.f32 %v800, %v971
        %v973 = vpop.f32.mrb[0].mxu0
        %v974 = vadd.f32 %v802, %v973
        %975 = vdwg.mxu0
        %v976 = vld [vmem:[#allocation2 + $0x2] sm:$0xff]
        %v977 = vld [vmem:[#allocation2 + $0xa] sm:$0xff]
        %v978 = vld [vmem:[#allocation2 + $0x1a] sm:$0xff]
        %v979 = vld [vmem:[#allocation2 + $0x22] sm:$0xff]
        %v980 = vpack.c.bf16 %v977, %v976
        %v981 = vpack.c.bf16 %v979, %v978
        %s982 = scalar_lea.vmem [#allocation7], 192
        %v983 = vld [vmem:[%s982] sm:$0xff]
        %v984 = vld [vmem:[%s982 + $0x8] sm:$0xff]
        %v985 = vld [vmem:[%s982 + $0x10] sm:$0xff]
        %v986 = vld [vmem:[%s982 + $0x18] sm:$0xff]
        %v987 = vld [vmem:[%s982 + $0x20] sm:$0xff]
        %v988 = vld [vmem:[%s982 + $0x28] sm:$0xff]
        %v989 = vld [vmem:[%s982 + $0x30] sm:$0xff]
        %v990 = vld [vmem:[%s982 + $0x38] sm:$0xff]
        %v991 = vld [vmem:[%s982 + $0x40] sm:$0xff]
        %v992 = vld [vmem:[%s982 + $0x48] sm:$0xff]
        %v993 = vld [vmem:[%s982 + $0x50] sm:$0xff]
        %v994 = vld [vmem:[%s982 + $0x58] sm:$0xff]
        %v1007 = vunpack.c.l.b16 %v983
        %v1008 = vunpack.c.h.b16 %v983
        %v1009 = vunpack.c.l.b16 %v984
        %v1010 = vunpack.c.h.b16 %v984
        %v1011 = vunpack.c.l.b16 %v985
        %v1012 = vunpack.c.h.b16 %v985
        %v1013 = vunpack.c.l.b16 %v986
        %v1014 = vunpack.c.h.b16 %v986
        %v1015 = vunpack.c.l.b16 %v987
        %v1016 = vunpack.c.h.b16 %v987
        %v1017 = vunpack.c.l.b16 %v988
        %v1018 = vunpack.c.h.b16 %v988
        %v1019 = vunpack.c.l.b16 %v989
        %v1020 = vunpack.c.h.b16 %v989
        %v1021 = vunpack.c.l.b16 %v990
        %v1022 = vunpack.c.h.b16 %v990
        %v1023 = vunpack.c.l.b16 %v991
        %v1024 = vunpack.c.h.b16 %v991
        %v1025 = vunpack.c.l.b16 %v992
        %v1026 = vunpack.c.h.b16 %v992
        %v1027 = vunpack.c.l.b16 %v993
        %v1028 = vunpack.c.h.b16 %v993
        %v1029 = vunpack.c.l.b16 %v994
        %v1030 = vunpack.c.h.b16 %v994
        %v1031 = vpack.c.b16 %v1011, %v1007
        %v1032 = vpack.c.b16 %v1012, %v1008
        %v1033 = vpack.c.b16 %v1013, %v1009
        %v1034 = vpack.c.b16 %v1014, %v1010
        %v1035 = vpack.c.b16 %v1019, %v1015
        %v1036 = vpack.c.b16 %v1020, %v1016
        %v1037 = vpack.c.b16 %v1021, %v1017
        %v1038 = vpack.c.b16 %v1022, %v1018
        %v1039 = vpack.c.b16 %v1027, %v1023
        %v1040 = vpack.c.b16 %v1028, %v1024
        %v1041 = vpack.c.b16 %v1029, %v1025
        %v1042 = vpack.c.b16 %v1030, %v1026
        %v1056 = vsel %vm590, %v980, 0
        %v1059 = vsel %vm590, %v981, 0
        %1061 = vmatprep.subr.bf16.mxu0 %v1032
        %1062 = vmatpush1.bf16.msra.mxu0 %v1031
        %1063 = vmatprep.subr.bf16.mxu0 %v1036
        %1064 = vmatpush1.bf16.msra.mxu0 %v1035
        %1065 = vmatprep.subr.bf16.mxu0 %v1040
        %1066 = vmatpush1.bf16.msra.mxu0 %v1039
        %1067 = vmatprep.subr.bf16.mxu0 0
        %1068 = vmatpush1.bf16.msra.mxu0 0
        %1069 = vmatprep.subr.bf16.mxu0 0
        %1070 = vmatpush1.bf16.msra.mxu0 0
        %1071 = vmatprep.subr.bf16.mxu0 0
        %1072 = vmatpush1.bf16.msra.mxu0 0
        %1073 = vmatprep.subr.bf16.mxu0 0
        %1074 = vmatpush1.bf16.msra.mxu0 0
        %1075 = vmatprep.subr.bf16.mxu0 0
        %1076 = vmatpush1.bf16.msra.mxu0 0
        %1077 = vmatprep.subr.bf16.mxu0 0
        %1078 = vmatpush1.bf16.msra.mxu0 0
        %1079 = vmatprep.subr.bf16.mxu0 0
        %1080 = vmatpush1.bf16.msra.mxu0 0
        %1081 = vmatprep.subr.bf16.mxu0 0
        %1082 = vmatpush1.bf16.msra.mxu0 0
        %1083 = vmatprep.subr.bf16.mxu0 0
        %1084 = vmatpush1.bf16.msra.mxu0 0
        %1085 = vmatprep.subr.bf16.mxu0 0
        %1086 = vmatpush1.bf16.msra.mxu0 0
        %1087 = vmatprep.subr.bf16.mxu0 0
        %1088 = vmatpush1.bf16.msra.mxu0 0
        %1089 = vmatprep.subr.bf16.mxu0 0
        %1090 = vmatpush1.bf16.msra.mxu0 0
        %1091 = vmatprep.subr.bf16.mxu0 0
        %1092 = vmatpush1.bf16.msra.mxu0 0
        %1093 = vmatprep.mubr.bf16.mxu0 0
        %1094 = vmatmul.mubr.bf16.gmra.mrb[0].mxu0 %v1056
        %v1095 = vpop.f32.mrb[0].mxu0
        %v1096 = vadd.f32 0.0, %v1095
        %v1097 = vpop.f32.mrb[0].mxu0
        %v1098 = vadd.f32 0.0, %v1097
        %v1099 = vpop.f32.mrb[0].mxu0
        %v1100 = vadd.f32 0.0, %v1099
        %v1101 = vpop.f32.mrb[0].mxu0
        %v1102 = vadd.f32 0.0, %v1101
        %1103 = vmatprep.mubr.bf16.mxu0 0
        %1104 = vmatmul.mubr.bf16.gmra.mrb[0].mxu0 %v1059
        %v1105 = vpop.f32.mrb[0].mxu0
        %v1106 = vadd.f32 0.0, %v1105
        %v1107 = vpop.f32.mrb[0].mxu0
        %v1108 = vadd.f32 0.0, %v1107
        %v1109 = vpop.f32.mrb[0].mxu0
        %v1110 = vadd.f32 0.0, %v1109
        %v1111 = vpop.f32.mrb[0].mxu0
        %v1112 = vadd.f32 0.0, %v1111
        %1113 = vdwg.mxu0
        %1114 = vmatprep.subr.bf16.mxu0 %v1034
        %1115 = vmatpush1.bf16.msra.mxu0 %v1033
        %1116 = vmatprep.subr.bf16.mxu0 %v1038
        %1117 = vmatpush1.bf16.msra.mxu0 %v1037
        %1118 = vmatprep.subr.bf16.mxu0 %v1042
        %1119 = vmatpush1.bf16.msra.mxu0 %v1041
        %1120 = vmatprep.subr.bf16.mxu0 0
        %1121 = vmatpush1.bf16.msra.mxu0 0
        %1122 = vmatprep.subr.bf16.mxu0 0
        %1123 = vmatpush1.bf16.msra.mxu0 0
        %1124 = vmatprep.subr.bf16.mxu0 0
        %1125 = vmatpush1.bf16.msra.mxu0 0
        %1126 = vmatprep.subr.bf16.mxu0 0
        %1127 = vmatpush1.bf16.msra.mxu0 0
        %1128 = vmatprep.subr.bf16.mxu0 0
        %1129 = vmatpush1.bf16.msra.mxu0 0
        %1130 = vmatprep.subr.bf16.mxu0 0
        %1131 = vmatpush1.bf16.msra.mxu0 0
        %1132 = vmatprep.subr.bf16.mxu0 0
        %1133 = vmatpush1.bf16.msra.mxu0 0
        %1134 = vmatprep.subr.bf16.mxu0 0
        %1135 = vmatpush1.bf16.msra.mxu0 0
        %1136 = vmatprep.subr.bf16.mxu0 0
        %1137 = vmatpush1.bf16.msra.mxu0 0
        %1138 = vmatprep.subr.bf16.mxu0 0
        %1139 = vmatpush1.bf16.msra.mxu0 0
        %1140 = vmatprep.subr.bf16.mxu0 0
        %1141 = vmatpush1.bf16.msra.mxu0 0
        %1142 = vmatprep.subr.bf16.mxu0 0
        %1143 = vmatpush1.bf16.msra.mxu0 0
        %1144 = vmatprep.subr.bf16.mxu0 0
        %1145 = vmatpush1.bf16.msra.mxu0 0
        %1146 = vmatprep.mubr.bf16.mxu0 0
        %1147 = vmatmul.mubr.bf16.gmra.mrb[0].mxu0 %v1056
        %v1148 = vpop.f32.mrb[0].mxu0
        %v1149 = vadd.f32 0.0, %v1148
        %v1150 = vpop.f32.mrb[0].mxu0
        %v1151 = vadd.f32 0.0, %v1150
        %v1152 = vpop.f32.mrb[0].mxu0
        %v1153 = vadd.f32 0.0, %v1152
        %v1154 = vpop.f32.mrb[0].mxu0
        %v1155 = vadd.f32 0.0, %v1154
        %1156 = vmatprep.mubr.bf16.mxu0 0
        %1157 = vmatmul.mubr.bf16.gmra.mrb[0].mxu0 %v1059
        %v1158 = vpop.f32.mrb[0].mxu0
        %v1159 = vadd.f32 0.0, %v1158
        %v1160 = vpop.f32.mrb[0].mxu0
        %v1161 = vadd.f32 0.0, %v1160
        %v1162 = vpop.f32.mrb[0].mxu0
        %v1163 = vadd.f32 0.0, %v1162
        %v1164 = vpop.f32.mrb[0].mxu0
        %v1165 = vadd.f32 0.0, %v1164
        %1166 = vdwg.mxu0
        %v1167 = vadd.f32 %v905, %v1096
        %v1168 = vadd.f32 %v907, %v1098
        %v1169 = vadd.f32 %v958, %v1149
        %v1170 = vadd.f32 %v960, %v1151
        %v1171 = vadd.f32 %v909, %v1100
        %v1172 = vadd.f32 %v911, %v1102
        %v1173 = vadd.f32 %v962, %v1153
        %v1174 = vadd.f32 %v964, %v1155
        %v1175 = vadd.f32 %v915, %v1106
        %v1176 = vadd.f32 %v917, %v1108
        %v1177 = vadd.f32 %v968, %v1159
        %v1178 = vadd.f32 %v970, %v1161
        %v1179 = vadd.f32 %v919, %v1110
        %v1180 = vadd.f32 %v921, %v1112
        %v1181 = vadd.f32 %v972, %v1163
        %v1182 = vadd.f32 %v974, %v1165
        %v1183 = vld [vmem:[#allocation3] sm:$0xff]
        %v1184 = vld [vmem:[#allocation3 + $0x8] sm:$0xff]
        %v1185 = vld [vmem:[#allocation3 + $0x18] sm:$0xff]
        %v1186 = vld [vmem:[#allocation3 + $0x20] sm:$0xff]
        %v1187 = vpack.c.bf16 %v1184, %v1183
        %v1188 = vpack.c.bf16 %v1186, %v1185
        %v1189 = vld [vmem:[%s2] sm:$0xff]
        %v1190 = vld [vmem:[%s2 + $0x8] sm:$0xff]
        %v1191 = vld [vmem:[%s2 + $0x10] sm:$0xff]
        %v1192 = vld [vmem:[%s2 + $0x18] sm:$0xff]
        %v1193 = vld [vmem:[%s2 + $0x20] sm:$0xff]
        %v1194 = vld [vmem:[%s2 + $0x28] sm:$0xff]
        %v1195 = vld [vmem:[%s2 + $0x30] sm:$0xff]
        %v1196 = vld [vmem:[%s2 + $0x38] sm:$0xff]
        %v1197 = vld [vmem:[%s2 + $0x40] sm:$0xff]
        %v1198 = vld [vmem:[%s2 + $0x48] sm:$0xff]
        %v1199 = vld [vmem:[%s2 + $0x50] sm:$0xff]
        %v1200 = vld [vmem:[%s2 + $0x58] sm:$0xff]
        %v1201 = vld [vmem:[%s2 + $0x60] sm:$0xff]
        %v1202 = vld [vmem:[%s2 + $0x68] sm:$0xff]
        %v1203 = vld [vmem:[%s2 + $0x70] sm:$0xff]
        %v1204 = vld [vmem:[%s2 + $0x78] sm:$0xff]
        %v1205 = vld [vmem:[%s2 + $0x80] sm:$0xff]
        %v1206 = vld [vmem:[%s2 + $0x88] sm:$0xff]
        %v1207 = vld [vmem:[%s2 + $0x90] sm:$0xff]
        %v1208 = vld [vmem:[%s2 + $0x98] sm:$0xff]
        %v1209 = vld [vmem:[%s2 + $0xa0] sm:$0xff]
        %v1210 = vld [vmem:[%s2 + $0xa8] sm:$0xff]
        %v1211 = vld [vmem:[%s2 + $0xb0] sm:$0xff]
        %v1212 = vld [vmem:[%s2 + $0xb8] sm:$0xff]
        %v1213 = vld [vmem:[%s2 + $0xc0] sm:$0xff]
        %v1214 = vld [vmem:[%s2 + $0xc8] sm:$0xff]
        %v1215 = vld [vmem:[%s2 + $0xd0] sm:$0xff]
        %v1216 = vld [vmem:[%s2 + $0xd8] sm:$0xff]
        %v1217 = vld [vmem:[%s2 + $0xe0] sm:$0xff]
        %v1218 = vld [vmem:[%s2 + $0xe8] sm:$0xff]
        %v1219 = vld [vmem:[%s2 + $0xf0] sm:$0xff]
        %v1220 = vld [vmem:[%s2 + $0xf8] sm:$0xff]
        %v1221 = vld [vmem:[#allocation3 + $0x1] sm:$0xff]
        %v1222 = vld [vmem:[#allocation3 + $0x9] sm:$0xff]
        %v1223 = vld [vmem:[#allocation3 + $0x19] sm:$0xff]
        %v1224 = vld [vmem:[#allocation3 + $0x21] sm:$0xff]
        %v1225 = vpack.c.bf16 %v1222, %v1221
        %v1226 = vpack.c.bf16 %v1224, %v1223
        %s1227 = scalar_lea.vmem %s2, 256
        %v1228 = vld [vmem:[%s1227] sm:$0xff]
        %v1229 = vld [vmem:[%s1227 + $0x8] sm:$0xff]
        %v1230 = vld [vmem:[%s1227 + $0x10] sm:$0xff]
        %v1231 = vld [vmem:[%s1227 + $0x18] sm:$0xff]
        %v1232 = vld [vmem:[%s1227 + $0x20] sm:$0xff]
        %v1233 = vld [vmem:[%s1227 + $0x28] sm:$0xff]
        %v1234 = vld [vmem:[%s1227 + $0x30] sm:$0xff]
        %v1235 = vld [vmem:[%s1227 + $0x38] sm:$0xff]
        %v1236 = vld [vmem:[%s1227 + $0x40] sm:$0xff]
        %v1237 = vld [vmem:[%s1227 + $0x48] sm:$0xff]
        %v1238 = vld [vmem:[%s1227 + $0x50] sm:$0xff]
        %v1239 = vld [vmem:[%s1227 + $0x58] sm:$0xff]
        %v1240 = vld [vmem:[%s1227 + $0x60] sm:$0xff]
        %v1241 = vld [vmem:[%s1227 + $0x68] sm:$0xff]
        %v1242 = vld [vmem:[%s1227 + $0x70] sm:$0xff]
        %v1243 = vld [vmem:[%s1227 + $0x78] sm:$0xff]
        %v1244 = vld [vmem:[%s1227 + $0x80] sm:$0xff]
        %v1245 = vld [vmem:[%s1227 + $0x88] sm:$0xff]
        %v1246 = vld [vmem:[%s1227 + $0x90] sm:$0xff]
        %v1247 = vld [vmem:[%s1227 + $0x98] sm:$0xff]
        %v1248 = vld [vmem:[%s1227 + $0xa0] sm:$0xff]
        %v1249 = vld [vmem:[%s1227 + $0xa8] sm:$0xff]
        %v1250 = vld [vmem:[%s1227 + $0xb0] sm:$0xff]
        %v1251 = vld [vmem:[%s1227 + $0xb8] sm:$0xff]
        %v1252 = vld [vmem:[%s1227 + $0xc0] sm:$0xff]
        %v1253 = vld [vmem:[%s1227 + $0xc8] sm:$0xff]
        %v1254 = vld [vmem:[%s1227 + $0xd0] sm:$0xff]
        %v1255 = vld [vmem:[%s1227 + $0xd8] sm:$0xff]
        %v1256 = vld [vmem:[%s1227 + $0xe0] sm:$0xff]
        %v1257 = vld [vmem:[%s1227 + $0xe8] sm:$0xff]
        %v1258 = vld [vmem:[%s1227 + $0xf0] sm:$0xff]
        %v1259 = vld [vmem:[%s1227 + $0xf8] sm:$0xff]
        %v1292 = vunpack.c.l.b16 %v1228
        %v1293 = vunpack.c.h.b16 %v1228
        %v1294 = vunpack.c.l.b16 %v1229
        %v1295 = vunpack.c.h.b16 %v1229
        %v1296 = vunpack.c.l.b16 %v1230
        %v1297 = vunpack.c.h.b16 %v1230
        %v1298 = vunpack.c.l.b16 %v1231
        %v1299 = vunpack.c.h.b16 %v1231
        %v1300 = vunpack.c.l.b16 %v1232
        %v1301 = vunpack.c.h.b16 %v1232
        %v1302 = vunpack.c.l.b16 %v1233
        %v1303 = vunpack.c.h.b16 %v1233
        %v1304 = vunpack.c.l.b16 %v1234
        %v1305 = vunpack.c.h.b16 %v1234
        %v1306 = vunpack.c.l.b16 %v1235
        %v1307 = vunpack.c.h.b16 %v1235
        %v1308 = vunpack.c.l.b16 %v1236
        %v1309 = vunpack.c.h.b16 %v1236
        %v1310 = vunpack.c.l.b16 %v1237
        %v1311 = vunpack.c.h.b16 %v1237
        %v1312 = vunpack.c.l.b16 %v1238
        %v1313 = vunpack.c.h.b16 %v1238
        %v1314 = vunpack.c.l.b16 %v1239
        %v1315 = vunpack.c.h.b16 %v1239
        %v1316 = vunpack.c.l.b16 %v1240
        %v1317 = vunpack.c.h.b16 %v1240
        %v1318 = vunpack.c.l.b16 %v1241
        %v1319 = vunpack.c.h.b16 %v1241
        %v1320 = vunpack.c.l.b16 %v1242
        %v1321 = vunpack.c.h.b16 %v1242
        %v1322 = vunpack.c.l.b16 %v1243
        %v1323 = vunpack.c.h.b16 %v1243
        %v1324 = vunpack.c.l.b16 %v1244
        %v1325 = vunpack.c.h.b16 %v1244
        %v1326 = vunpack.c.l.b16 %v1245
        %v1327 = vunpack.c.h.b16 %v1245
        %v1328 = vunpack.c.l.b16 %v1246
        %v1329 = vunpack.c.h.b16 %v1246
        %v1330 = vunpack.c.l.b16 %v1247
        %v1331 = vunpack.c.h.b16 %v1247
        %v1332 = vunpack.c.l.b16 %v1248
        %v1333 = vunpack.c.h.b16 %v1248
        %v1334 = vunpack.c.l.b16 %v1249
        %v1335 = vunpack.c.h.b16 %v1249
        %v1336 = vunpack.c.l.b16 %v1250
        %v1337 = vunpack.c.h.b16 %v1250
        %v1338 = vunpack.c.l.b16 %v1251
        %v1339 = vunpack.c.h.b16 %v1251
        %v1340 = vunpack.c.l.b16 %v1252
        %v1341 = vunpack.c.h.b16 %v1252
        %v1342 = vunpack.c.l.b16 %v1253
        %v1343 = vunpack.c.h.b16 %v1253
        %v1344 = vunpack.c.l.b16 %v1254
        %v1345 = vunpack.c.h.b16 %v1254
        %v1346 = vunpack.c.l.b16 %v1255
        %v1347 = vunpack.c.h.b16 %v1255
        %v1348 = vunpack.c.l.b16 %v1256
        %v1349 = vunpack.c.h.b16 %v1256
        %v1350 = vunpack.c.l.b16 %v1257
        %v1351 = vunpack.c.h.b16 %v1257
        %v1352 = vunpack.c.l.b16 %v1258
        %v1353 = vunpack.c.h.b16 %v1258
        %v1354 = vunpack.c.l.b16 %v1259
        %v1355 = vunpack.c.h.b16 %v1259
        %v1356 = vpack.c.b16 %v1296, %v1292
        %v1357 = vpack.c.b16 %v1297, %v1293
        %v1358 = vpack.c.b16 %v1298, %v1294
        %v1359 = vpack.c.b16 %v1299, %v1295
        %v1360 = vpack.c.b16 %v1304, %v1300
        %v1361 = vpack.c.b16 %v1305, %v1301
        %v1362 = vpack.c.b16 %v1306, %v1302
        %v1363 = vpack.c.b16 %v1307, %v1303
        %v1364 = vpack.c.b16 %v1312, %v1308
        %v1365 = vpack.c.b16 %v1313, %v1309
        %v1366 = vpack.c.b16 %v1314, %v1310
        %v1367 = vpack.c.b16 %v1315, %v1311
        %v1368 = vpack.c.b16 %v1320, %v1316
        %v1369 = vpack.c.b16 %v1321, %v1317
        %v1370 = vpack.c.b16 %v1322, %v1318
        %v1371 = vpack.c.b16 %v1323, %v1319
        %v1372 = vpack.c.b16 %v1328, %v1324
        %v1373 = vpack.c.b16 %v1329, %v1325
        %v1374 = vpack.c.b16 %v1330, %v1326
        %v1375 = vpack.c.b16 %v1331, %v1327
        %v1376 = vpack.c.b16 %v1336, %v1332
        %v1377 = vpack.c.b16 %v1337, %v1333
        %v1378 = vpack.c.b16 %v1338, %v1334
        %v1379 = vpack.c.b16 %v1339, %v1335
        %v1380 = vpack.c.b16 %v1344, %v1340
        %v1381 = vpack.c.b16 %v1345, %v1341
        %v1382 = vpack.c.b16 %v1346, %v1342
        %v1383 = vpack.c.b16 %v1347, %v1343
        %v1384 = vpack.c.b16 %v1352, %v1348
        %v1385 = vpack.c.b16 %v1353, %v1349
        %v1386 = vpack.c.b16 %v1354, %v1350
        %v1387 = vpack.c.b16 %v1355, %v1351
        %1420 = vmatprep.subr.bf16.mxu0 %v1357
        %1421 = vmatpush1.bf16.msra.mxu0 %v1356
        %1422 = vmatprep.subr.bf16.mxu0 %v1361
        %1423 = vmatpush1.bf16.msra.mxu0 %v1360
        %1424 = vmatprep.subr.bf16.mxu0 %v1365
        %1425 = vmatpush1.bf16.msra.mxu0 %v1364
        %1426 = vmatprep.subr.bf16.mxu0 %v1369
        %1427 = vmatpush1.bf16.msra.mxu0 %v1368
        %1428 = vmatprep.subr.bf16.mxu0 %v1373
        %1429 = vmatpush1.bf16.msra.mxu0 %v1372
        %1430 = vmatprep.subr.bf16.mxu0 %v1377
        %1431 = vmatpush1.bf16.msra.mxu0 %v1376
        %1432 = vmatprep.subr.bf16.mxu0 %v1381
        %1433 = vmatpush1.bf16.msra.mxu0 %v1380
        %1434 = vmatprep.subr.bf16.mxu0 %v1385
        %1435 = vmatpush1.bf16.msra.mxu0 %v1384
        %1436 = vmatprep.subr.bf16.mxu0 0
        %1437 = vmatpush1.bf16.msra.mxu0 0
        %1438 = vmatprep.subr.bf16.mxu0 0
        %1439 = vmatpush1.bf16.msra.mxu0 0
        %1440 = vmatprep.subr.bf16.mxu0 0
        %1441 = vmatpush1.bf16.msra.mxu0 0
        %1442 = vmatprep.subr.bf16.mxu0 0
        %1443 = vmatpush1.bf16.msra.mxu0 0
        %1444 = vmatprep.subr.bf16.mxu0 0
        %1445 = vmatpush1.bf16.msra.mxu0 0
        %1446 = vmatprep.subr.bf16.mxu0 0
        %1447 = vmatpush1.bf16.msra.mxu0 0
        %1448 = vmatprep.subr.bf16.mxu0 0
        %1449 = vmatpush1.bf16.msra.mxu0 0
        %1450 = vmatprep.subr.bf16.mxu0 0
        %1451 = vmatpush1.bf16.msra.mxu0 0
        %1452 = vmatprep.mubr.bf16.mxu0 0
        %1453 = vmatmul.mubr.bf16.gmra.mrb[0].mxu0 %v1225
        %v1454 = vpop.f32.mrb[0].mxu0
        %v1455 = vadd.f32 0.0, %v1454
        %v1456 = vpop.f32.mrb[0].mxu0
        %v1457 = vadd.f32 0.0, %v1456
        %v1458 = vpop.f32.mrb[0].mxu0
        %v1459 = vadd.f32 0.0, %v1458
        %v1460 = vpop.f32.mrb[0].mxu0
        %v1461 = vadd.f32 0.0, %v1460
        %1462 = vmatprep.mubr.bf16.mxu0 0
        %1463 = vmatmul.mubr.bf16.gmra.mrb[0].mxu0 %v1226
        %v1464 = vpop.f32.mrb[0].mxu0
        %v1465 = vadd.f32 0.0, %v1464
        %v1466 = vpop.f32.mrb[0].mxu0
        %v1467 = vadd.f32 0.0, %v1466
        %v1468 = vpop.f32.mrb[0].mxu0
        %v1469 = vadd.f32 0.0, %v1468
        %v1470 = vpop.f32.mrb[0].mxu0
        %v1471 = vadd.f32 0.0, %v1470
        %1472 = vdwg.mxu0
        %1473 = vmatprep.subr.bf16.mxu0 %v1359
        %1474 = vmatpush1.bf16.msra.mxu0 %v1358
        %1475 = vmatprep.subr.bf16.mxu0 %v1363
        %1476 = vmatpush1.bf16.msra.mxu0 %v1362
        %1477 = vmatprep.subr.bf16.mxu0 %v1367
        %1478 = vmatpush1.bf16.msra.mxu0 %v1366
        %1479 = vmatprep.subr.bf16.mxu0 %v1371
        %1480 = vmatpush1.bf16.msra.mxu0 %v1370
        %1481 = vmatprep.subr.bf16.mxu0 %v1375
        %1482 = vmatpush1.bf16.msra.mxu0 %v1374
        %1483 = vmatprep.subr.bf16.mxu0 %v1379
        %1484 = vmatpush1.bf16.msra.mxu0 %v1378
        %1485 = vmatprep.subr.bf16.mxu0 %v1383
        %1486 = vmatpush1.bf16.msra.mxu0 %v1382
        %1487 = vmatprep.subr.bf16.mxu0 %v1387
        %1488 = vmatpush1.bf16.msra.mxu0 %v1386
        %1489 = vmatprep.subr.bf16.mxu0 0
        %1490 = vmatpush1.bf16.msra.mxu0 0
        %1491 = vmatprep.subr.bf16.mxu0 0
        %1492 = vmatpush1.bf16.msra.mxu0 0
        %1493 = vmatprep.subr.bf16.mxu0 0
        %1494 = vmatpush1.bf16.msra.mxu0 0
        %1495 = vmatprep.subr.bf16.mxu0 0
        %1496 = vmatpush1.bf16.msra.mxu0 0
        %1497 = vmatprep.subr.bf16.mxu0 0
        %1498 = vmatpush1.bf16.msra.mxu0 0
        %1499 = vmatprep.subr.bf16.mxu0 0
        %1500 = vmatpush1.bf16.msra.mxu0 0
        %1501 = vmatprep.subr.bf16.mxu0 0
        %1502 = vmatpush1.bf16.msra.mxu0 0
        %1503 = vmatprep.subr.bf16.mxu0 0
        %1504 = vmatpush1.bf16.msra.mxu0 0
        %1505 = vmatprep.mubr.bf16.mxu0 0
        %1506 = vmatmul.mubr.bf16.gmra.mrb[0].mxu0 %v1225
        %v1507 = vpop.f32.mrb[0].mxu0
        %v1508 = vadd.f32 0.0, %v1507
        %v1509 = vpop.f32.mrb[0].mxu0
        %v1510 = vadd.f32 0.0, %v1509
        %v1511 = vpop.f32.mrb[0].mxu0
        %v1512 = vadd.f32 0.0, %v1511
        %v1513 = vpop.f32.mrb[0].mxu0
        %v1514 = vadd.f32 0.0, %v1513
        %1515 = vmatprep.mubr.bf16.mxu0 0
        %1516 = vmatmul.mubr.bf16.gmra.mrb[0].mxu0 %v1226
        %v1517 = vpop.f32.mrb[0].mxu0
        %v1518 = vadd.f32 0.0, %v1517
        %v1519 = vpop.f32.mrb[0].mxu0
        %v1520 = vadd.f32 0.0, %v1519
        %v1521 = vpop.f32.mrb[0].mxu0
        %v1522 = vadd.f32 0.0, %v1521
        %v1523 = vpop.f32.mrb[0].mxu0
        %v1524 = vadd.f32 0.0, %v1523
        %1525 = vdwg.mxu0
        %v1558 = vunpack.c.l.b16 %v1189
        %v1559 = vunpack.c.h.b16 %v1189
        %v1560 = vunpack.c.l.b16 %v1190
        %v1561 = vunpack.c.h.b16 %v1190
        %v1562 = vunpack.c.l.b16 %v1191
        %v1563 = vunpack.c.h.b16 %v1191
        %v1564 = vunpack.c.l.b16 %v1192
        %v1565 = vunpack.c.h.b16 %v1192
        %v1566 = vunpack.c.l.b16 %v1193
        %v1567 = vunpack.c.h.b16 %v1193
        %v1568 = vunpack.c.l.b16 %v1194
        %v1569 = vunpack.c.h.b16 %v1194
        %v1570 = vunpack.c.l.b16 %v1195
        %v1571 = vunpack.c.h.b16 %v1195
        %v1572 = vunpack.c.l.b16 %v1196
        %v1573 = vunpack.c.h.b16 %v1196
        %v1574 = vunpack.c.l.b16 %v1197
        %v1575 = vunpack.c.h.b16 %v1197
        %v1576 = vunpack.c.l.b16 %v1198
        %v1577 = vunpack.c.h.b16 %v1198
        %v1578 = vunpack.c.l.b16 %v1199
        %v1579 = vunpack.c.h.b16 %v1199
        %v1580 = vunpack.c.l.b16 %v1200
        %v1581 = vunpack.c.h.b16 %v1200
        %v1582 = vunpack.c.l.b16 %v1201
        %v1583 = vunpack.c.h.b16 %v1201
        %v1584 = vunpack.c.l.b16 %v1202
        %v1585 = vunpack.c.h.b16 %v1202
        %v1586 = vunpack.c.l.b16 %v1203
        %v1587 = vunpack.c.h.b16 %v1203
        %v1588 = vunpack.c.l.b16 %v1204
        %v1589 = vunpack.c.h.b16 %v1204
        %v1590 = vunpack.c.l.b16 %v1205
        %v1591 = vunpack.c.h.b16 %v1205
        %v1592 = vunpack.c.l.b16 %v1206
        %v1593 = vunpack.c.h.b16 %v1206
        %v1594 = vunpack.c.l.b16 %v1207
        %v1595 = vunpack.c.h.b16 %v1207
        %v1596 = vunpack.c.l.b16 %v1208
        %v1597 = vunpack.c.h.b16 %v1208
        %v1598 = vunpack.c.l.b16 %v1209
        %v1599 = vunpack.c.h.b16 %v1209
        %v1600 = vunpack.c.l.b16 %v1210
        %v1601 = vunpack.c.h.b16 %v1210
        %v1602 = vunpack.c.l.b16 %v1211
        %v1603 = vunpack.c.h.b16 %v1211
        %v1604 = vunpack.c.l.b16 %v1212
        %v1605 = vunpack.c.h.b16 %v1212
        %v1606 = vunpack.c.l.b16 %v1213
        %v1607 = vunpack.c.h.b16 %v1213
        %v1608 = vunpack.c.l.b16 %v1214
        %v1609 = vunpack.c.h.b16 %v1214
        %v1610 = vunpack.c.l.b16 %v1215
        %v1611 = vunpack.c.h.b16 %v1215
        %v1612 = vunpack.c.l.b16 %v1216
        %v1613 = vunpack.c.h.b16 %v1216
        %v1614 = vunpack.c.l.b16 %v1217
        %v1615 = vunpack.c.h.b16 %v1217
        %v1616 = vunpack.c.l.b16 %v1218
        %v1617 = vunpack.c.h.b16 %v1218
        %v1618 = vunpack.c.l.b16 %v1219
        %v1619 = vunpack.c.h.b16 %v1219
        %v1620 = vunpack.c.l.b16 %v1220
        %v1621 = vunpack.c.h.b16 %v1220
        %v1622 = vpack.c.b16 %v1562, %v1558
        %v1623 = vpack.c.b16 %v1563, %v1559
        %v1624 = vpack.c.b16 %v1564, %v1560
        %v1625 = vpack.c.b16 %v1565, %v1561
        %v1626 = vpack.c.b16 %v1570, %v1566
        %v1627 = vpack.c.b16 %v1571, %v1567
        %v1628 = vpack.c.b16 %v1572, %v1568
        %v1629 = vpack.c.b16 %v1573, %v1569
        %v1630 = vpack.c.b16 %v1578, %v1574
        %v1631 = vpack.c.b16 %v1579, %v1575
        %v1632 = vpack.c.b16 %v1580, %v1576
        %v1633 = vpack.c.b16 %v1581, %v1577
        %v1634 = vpack.c.b16 %v1586, %v1582
        %v1635 = vpack.c.b16 %v1587, %v1583
        %v1636 = vpack.c.b16 %v1588, %v1584
        %v1637 = vpack.c.b16 %v1589, %v1585
        %v1638 = vpack.c.b16 %v1594, %v1590
        %v1639 = vpack.c.b16 %v1595, %v1591
        %v1640 = vpack.c.b16 %v1596, %v1592
        %v1641 = vpack.c.b16 %v1597, %v1593
        %v1642 = vpack.c.b16 %v1602, %v1598
        %v1643 = vpack.c.b16 %v1603, %v1599
        %v1644 = vpack.c.b16 %v1604, %v1600
        %v1645 = vpack.c.b16 %v1605, %v1601
        %v1646 = vpack.c.b16 %v1610, %v1606
        %v1647 = vpack.c.b16 %v1611, %v1607
        %v1648 = vpack.c.b16 %v1612, %v1608
        %v1649 = vpack.c.b16 %v1613, %v1609
        %v1650 = vpack.c.b16 %v1618, %v1614
        %v1651 = vpack.c.b16 %v1619, %v1615
        %v1652 = vpack.c.b16 %v1620, %v1616
        %v1653 = vpack.c.b16 %v1621, %v1617
        %1686 = vmatprep.subr.bf16.mxu0 %v1623
        %1687 = vmatpush1.bf16.msra.mxu0 %v1622
        %1688 = vmatprep.subr.bf16.mxu0 %v1627
        %1689 = vmatpush1.bf16.msra.mxu0 %v1626
        %1690 = vmatprep.subr.bf16.mxu0 %v1631
        %1691 = vmatpush1.bf16.msra.mxu0 %v1630
        %1692 = vmatprep.subr.bf16.mxu0 %v1635
        %1693 = vmatpush1.bf16.msra.mxu0 %v1634
        %1694 = vmatprep.subr.bf16.mxu0 %v1639
        %1695 = vmatpush1.bf16.msra.mxu0 %v1638
        %1696 = vmatprep.subr.bf16.mxu0 %v1643
        %1697 = vmatpush1.bf16.msra.mxu0 %v1642
        %1698 = vmatprep.subr.bf16.mxu0 %v1647
        %1699 = vmatpush1.bf16.msra.mxu0 %v1646
        %1700 = vmatprep.subr.bf16.mxu0 %v1651
        %1701 = vmatpush1.bf16.msra.mxu0 %v1650
        %1702 = vmatprep.subr.bf16.mxu0 0
        %1703 = vmatpush1.bf16.msra.mxu0 0
        %1704 = vmatprep.subr.bf16.mxu0 0
        %1705 = vmatpush1.bf16.msra.mxu0 0
        %1706 = vmatprep.subr.bf16.mxu0 0
        %1707 = vmatpush1.bf16.msra.mxu0 0
        %1708 = vmatprep.subr.bf16.mxu0 0
        %1709 = vmatpush1.bf16.msra.mxu0 0
        %1710 = vmatprep.subr.bf16.mxu0 0
        %1711 = vmatpush1.bf16.msra.mxu0 0
        %1712 = vmatprep.subr.bf16.mxu0 0
        %1713 = vmatpush1.bf16.msra.mxu0 0
        %1714 = vmatprep.subr.bf16.mxu0 0
        %1715 = vmatpush1.bf16.msra.mxu0 0
        %1716 = vmatprep.subr.bf16.mxu0 0
        %1717 = vmatpush1.bf16.msra.mxu0 0
        %1718 = vmatprep.mubr.bf16.mxu0 0
        %1719 = vmatmul.mubr.bf16.gmra.mrb[0].mxu0 %v1187
        %v1720 = vpop.f32.mrb[0].mxu0
        %v1721 = vadd.f32 %v1455, %v1720
        %v1722 = vpop.f32.mrb[0].mxu0
        %v1723 = vadd.f32 %v1457, %v1722
        %v1724 = vpop.f32.mrb[0].mxu0
        %v1725 = vadd.f32 %v1459, %v1724
        %v1726 = vpop.f32.mrb[0].mxu0
        %v1727 = vadd.f32 %v1461, %v1726
        %1728 = vmatprep.mubr.bf16.mxu0 0
        %1729 = vmatmul.mubr.bf16.gmra.mrb[0].mxu0 %v1188
        %v1730 = vpop.f32.mrb[0].mxu0
        %v1731 = vadd.f32 %v1465, %v1730
        %v1732 = vpop.f32.mrb[0].mxu0
        %v1733 = vadd.f32 %v1467, %v1732
        %v1734 = vpop.f32.mrb[0].mxu0
        %v1735 = vadd.f32 %v1469, %v1734
        %v1736 = vpop.f32.mrb[0].mxu0
        %v1737 = vadd.f32 %v1471, %v1736
        %1738 = vdwg.mxu0
        %1739 = vmatprep.subr.bf16.mxu0 %v1625
        %1740 = vmatpush1.bf16.msra.mxu0 %v1624
        %1741 = vmatprep.subr.bf16.mxu0 %v1629
        %1742 = vmatpush1.bf16.msra.mxu0 %v1628
        %1743 = vmatprep.subr.bf16.mxu0 %v1633
        %1744 = vmatpush1.bf16.msra.mxu0 %v1632
        %1745 = vmatprep.subr.bf16.mxu0 %v1637
        %1746 = vmatpush1.bf16.msra.mxu0 %v1636
        %1747 = vmatprep.subr.bf16.mxu0 %v1641
        %1748 = vmatpush1.bf16.msra.mxu0 %v1640
        %1749 = vmatprep.subr.bf16.mxu0 %v1645
        %1750 = vmatpush1.bf16.msra.mxu0 %v1644
        %1751 = vmatprep.subr.bf16.mxu0 %v1649
        %1752 = vmatpush1.bf16.msra.mxu0 %v1648
        %1753 = vmatprep.subr.bf16.mxu0 %v1653
        %1754 = vmatpush1.bf16.msra.mxu0 %v1652
        %1755 = vmatprep.subr.bf16.mxu0 0
        %1756 = vmatpush1.bf16.msra.mxu0 0
        %1757 = vmatprep.subr.bf16.mxu0 0
        %1758 = vmatpush1.bf16.msra.mxu0 0
        %1759 = vmatprep.subr.bf16.mxu0 0
        %1760 = vmatpush1.bf16.msra.mxu0 0
        %1761 = vmatprep.subr.bf16.mxu0 0
        %1762 = vmatpush1.bf16.msra.mxu0 0
        %1763 = vmatprep.subr.bf16.mxu0 0
        %1764 = vmatpush1.bf16.msra.mxu0 0
        %1765 = vmatprep.subr.bf16.mxu0 0
        %1766 = vmatpush1.bf16.msra.mxu0 0
        %1767 = vmatprep.subr.bf16.mxu0 0
        %1768 = vmatpush1.bf16.msra.mxu0 0
        %1769 = vmatprep.subr.bf16.mxu0 0
        %1770 = vmatpush1.bf16.msra.mxu0 0
        %1771 = vmatprep.mubr.bf16.mxu0 0
        %1772 = vmatmul.mubr.bf16.gmra.mrb[0].mxu0 %v1187
        %v1773 = vpop.f32.mrb[0].mxu0
        %v1774 = vadd.f32 %v1508, %v1773
        %v1775 = vpop.f32.mrb[0].mxu0
        %v1776 = vadd.f32 %v1510, %v1775
        %v1777 = vpop.f32.mrb[0].mxu0
        %v1778 = vadd.f32 %v1512, %v1777
        %v1779 = vpop.f32.mrb[0].mxu0
        %v1780 = vadd.f32 %v1514, %v1779
        %1781 = vmatprep.mubr.bf16.mxu0 0
        %1782 = vmatmul.mubr.bf16.gmra.mrb[0].mxu0 %v1188
        %v1783 = vpop.f32.mrb[0].mxu0
        %v1784 = vadd.f32 %v1518, %v1783
        %v1785 = vpop.f32.mrb[0].mxu0
        %v1786 = vadd.f32 %v1520, %v1785
        %v1787 = vpop.f32.mrb[0].mxu0
        %v1788 = vadd.f32 %v1522, %v1787
        %v1789 = vpop.f32.mrb[0].mxu0
        %v1790 = vadd.f32 %v1524, %v1789
        %1791 = vdwg.mxu0
        %v1792 = vld [vmem:[#allocation3 + $0x2] sm:$0xff]
        %v1793 = vld [vmem:[#allocation3 + $0xa] sm:$0xff]
        %v1794 = vld [vmem:[#allocation3 + $0x1a] sm:$0xff]
        %v1795 = vld [vmem:[#allocation3 + $0x22] sm:$0xff]
        %v1796 = vpack.c.bf16 %v1793, %v1792
        %v1797 = vpack.c.bf16 %v1795, %v1794
        %s1798 = scalar_lea.vmem %s2, 512
        %v1799 = vld [vmem:[%s1798] sm:$0xff]
        %v1800 = vld [vmem:[%s1798 + $0x8] sm:$0xff]
        %v1801 = vld [vmem:[%s1798 + $0x10] sm:$0xff]
        %v1802 = vld [vmem:[%s1798 + $0x18] sm:$0xff]
        %v1803 = vld [vmem:[%s1798 + $0x20] sm:$0xff]
        %v1804 = vld [vmem:[%s1798 + $0x28] sm:$0xff]
        %v1805 = vld [vmem:[%s1798 + $0x30] sm:$0xff]
        %v1806 = vld [vmem:[%s1798 + $0x38] sm:$0xff]
        %v1807 = vld [vmem:[%s1798 + $0x40] sm:$0xff]
        %v1808 = vld [vmem:[%s1798 + $0x48] sm:$0xff]
        %v1809 = vld [vmem:[%s1798 + $0x50] sm:$0xff]
        %v1810 = vld [vmem:[%s1798 + $0x58] sm:$0xff]
        %v1811 = vld [vmem:[%s1798 + $0x60] sm:$0xff]
        %v1812 = vld [vmem:[%s1798 + $0x68] sm:$0xff]
        %v1813 = vld [vmem:[%s1798 + $0x70] sm:$0xff]
        %v1814 = vld [vmem:[%s1798 + $0x78] sm:$0xff]
        %v1815 = vld [vmem:[%s1798 + $0x80] sm:$0xff]
        %v1816 = vld [vmem:[%s1798 + $0x88] sm:$0xff]
        %v1817 = vld [vmem:[%s1798 + $0x90] sm:$0xff]
        %v1818 = vld [vmem:[%s1798 + $0x98] sm:$0xff]
        %v1819 = vld [vmem:[%s1798 + $0xa0] sm:$0xff]
        %v1820 = vld [vmem:[%s1798 + $0xa8] sm:$0xff]
        %v1821 = vld [vmem:[%s1798 + $0xb0] sm:$0xff]
        %v1822 = vld [vmem:[%s1798 + $0xb8] sm:$0xff]
        %v1823 = vld [vmem:[%s1798 + $0xc0] sm:$0xff]
        %v1824 = vld [vmem:[%s1798 + $0xc8] sm:$0xff]
        %v1825 = vld [vmem:[%s1798 + $0xd0] sm:$0xff]
        %v1826 = vld [vmem:[%s1798 + $0xd8] sm:$0xff]
        %v1827 = vld [vmem:[%s1798 + $0xe0] sm:$0xff]
        %v1828 = vld [vmem:[%s1798 + $0xe8] sm:$0xff]
        %v1829 = vld [vmem:[%s1798 + $0xf0] sm:$0xff]
        %v1830 = vld [vmem:[%s1798 + $0xf8] sm:$0xff]
        %v1863 = vunpack.c.l.b16 %v1799
        %v1864 = vunpack.c.h.b16 %v1799
        %v1865 = vunpack.c.l.b16 %v1800
        %v1866 = vunpack.c.h.b16 %v1800
        %v1867 = vunpack.c.l.b16 %v1801
        %v1868 = vunpack.c.h.b16 %v1801
        %v1869 = vunpack.c.l.b16 %v1802
        %v1870 = vunpack.c.h.b16 %v1802
        %v1871 = vunpack.c.l.b16 %v1803
        %v1872 = vunpack.c.h.b16 %v1803
        %v1873 = vunpack.c.l.b16 %v1804
        %v1874 = vunpack.c.h.b16 %v1804
        %v1875 = vunpack.c.l.b16 %v1805
        %v1876 = vunpack.c.h.b16 %v1805
        %v1877 = vunpack.c.l.b16 %v1806
        %v1878 = vunpack.c.h.b16 %v1806
        %v1879 = vunpack.c.l.b16 %v1807
        %v1880 = vunpack.c.h.b16 %v1807
        %v1881 = vunpack.c.l.b16 %v1808
        %v1882 = vunpack.c.h.b16 %v1808
        %v1883 = vunpack.c.l.b16 %v1809
        %v1884 = vunpack.c.h.b16 %v1809
        %v1885 = vunpack.c.l.b16 %v1810
        %v1886 = vunpack.c.h.b16 %v1810
        %v1887 = vunpack.c.l.b16 %v1811
        %v1888 = vunpack.c.h.b16 %v1811
        %v1889 = vunpack.c.l.b16 %v1812
        %v1890 = vunpack.c.h.b16 %v1812
        %v1891 = vunpack.c.l.b16 %v1813
        %v1892 = vunpack.c.h.b16 %v1813
        %v1893 = vunpack.c.l.b16 %v1814
        %v1894 = vunpack.c.h.b16 %v1814
        %v1895 = vunpack.c.l.b16 %v1815
        %v1896 = vunpack.c.h.b16 %v1815
        %v1897 = vunpack.c.l.b16 %v1816
        %v1898 = vunpack.c.h.b16 %v1816
        %v1899 = vunpack.c.l.b16 %v1817
        %v1900 = vunpack.c.h.b16 %v1817
        %v1901 = vunpack.c.l.b16 %v1818
        %v1902 = vunpack.c.h.b16 %v1818
        %v1903 = vunpack.c.l.b16 %v1819
        %v1904 = vunpack.c.h.b16 %v1819
        %v1905 = vunpack.c.l.b16 %v1820
        %v1906 = vunpack.c.h.b16 %v1820
        %v1907 = vunpack.c.l.b16 %v1821
        %v1908 = vunpack.c.h.b16 %v1821
        %v1909 = vunpack.c.l.b16 %v1822
        %v1910 = vunpack.c.h.b16 %v1822
        %v1911 = vunpack.c.l.b16 %v1823
        %v1912 = vunpack.c.h.b16 %v1823
        %v1913 = vunpack.c.l.b16 %v1824
        %v1914 = vunpack.c.h.b16 %v1824
        %v1915 = vunpack.c.l.b16 %v1825
        %v1916 = vunpack.c.h.b16 %v1825
        %v1917 = vunpack.c.l.b16 %v1826
        %v1918 = vunpack.c.h.b16 %v1826
        %v1919 = vunpack.c.l.b16 %v1827
        %v1920 = vunpack.c.h.b16 %v1827
        %v1921 = vunpack.c.l.b16 %v1828
        %v1922 = vunpack.c.h.b16 %v1828
        %v1923 = vunpack.c.l.b16 %v1829
        %v1924 = vunpack.c.h.b16 %v1829
        %v1925 = vunpack.c.l.b16 %v1830
        %v1926 = vunpack.c.h.b16 %v1830
        %v1927 = vpack.c.b16 %v1867, %v1863
        %v1928 = vpack.c.b16 %v1868, %v1864
        %v1929 = vpack.c.b16 %v1869, %v1865
        %v1930 = vpack.c.b16 %v1870, %v1866
        %v1931 = vpack.c.b16 %v1875, %v1871
        %v1932 = vpack.c.b16 %v1876, %v1872
        %v1933 = vpack.c.b16 %v1877, %v1873
        %v1934 = vpack.c.b16 %v1878, %v1874
        %v1935 = vpack.c.b16 %v1883, %v1879
        %v1936 = vpack.c.b16 %v1884, %v1880
        %v1937 = vpack.c.b16 %v1885, %v1881
        %v1938 = vpack.c.b16 %v1886, %v1882
        %v1939 = vpack.c.b16 %v1891, %v1887
        %v1940 = vpack.c.b16 %v1892, %v1888
        %v1941 = vpack.c.b16 %v1893, %v1889
        %v1942 = vpack.c.b16 %v1894, %v1890
        %v1943 = vpack.c.b16 %v1899, %v1895
        %v1944 = vpack.c.b16 %v1900, %v1896
        %v1945 = vpack.c.b16 %v1901, %v1897
        %v1946 = vpack.c.b16 %v1902, %v1898
        %v1947 = vpack.c.b16 %v1907, %v1903
        %v1948 = vpack.c.b16 %v1908, %v1904
        %v1949 = vpack.c.b16 %v1909, %v1905
        %v1950 = vpack.c.b16 %v1910, %v1906
        %v1951 = vpack.c.b16 %v1915, %v1911
        %v1952 = vpack.c.b16 %v1916, %v1912
        %v1953 = vpack.c.b16 %v1917, %v1913
        %v1954 = vpack.c.b16 %v1918, %v1914
        %v1955 = vpack.c.b16 %v1923, %v1919
        %v1956 = vpack.c.b16 %v1924, %v1920
        %v1957 = vpack.c.b16 %v1925, %v1921
        %v1958 = vpack.c.b16 %v1926, %v1922
        %1991 = vmatprep.subr.bf16.mxu0 %v1928
        %1992 = vmatpush1.bf16.msra.mxu0 %v1927
        %1993 = vmatprep.subr.bf16.mxu0 %v1932
        %1994 = vmatpush1.bf16.msra.mxu0 %v1931
        %1995 = vmatprep.subr.bf16.mxu0 %v1936
        %1996 = vmatpush1.bf16.msra.mxu0 %v1935
        %1997 = vmatprep.subr.bf16.mxu0 %v1940
        %1998 = vmatpush1.bf16.msra.mxu0 %v1939
        %1999 = vmatprep.subr.bf16.mxu0 %v1944
        %2000 = vmatpush1.bf16.msra.mxu0 %v1943
        %2001 = vmatprep.subr.bf16.mxu0 %v1948
        %2002 = vmatpush1.bf16.msra.mxu0 %v1947
        %2003 = vmatprep.subr.bf16.mxu0 %v1952
        %2004 = vmatpush1.bf16.msra.mxu0 %v1951
        %2005 = vmatprep.subr.bf16.mxu0 %v1956
        %2006 = vmatpush1.bf16.msra.mxu0 %v1955
        %2007 = vmatprep.subr.bf16.mxu0 0
        %2008 = vmatpush1.bf16.msra.mxu0 0
        %2009 = vmatprep.subr.bf16.mxu0 0
        %2010 = vmatpush1.bf16.msra.mxu0 0
        %2011 = vmatprep.subr.bf16.mxu0 0
        %2012 = vmatpush1.bf16.msra.mxu0 0
        %2013 = vmatprep.subr.bf16.mxu0 0
        %2014 = vmatpush1.bf16.msra.mxu0 0
        %2015 = vmatprep.subr.bf16.mxu0 0
        %2016 = vmatpush1.bf16.msra.mxu0 0
        %2017 = vmatprep.subr.bf16.mxu0 0
        %2018 = vmatpush1.bf16.msra.mxu0 0
        %2019 = vmatprep.subr.bf16.mxu0 0
        %2020 = vmatpush1.bf16.msra.mxu0 0
        %2021 = vmatprep.subr.bf16.mxu0 0
        %2022 = vmatpush1.bf16.msra.mxu0 0
        %2023 = vmatprep.mubr.bf16.mxu0 0
        %2024 = vmatmul.mubr.bf16.gmra.mrb[0].mxu0 %v1796
        %v2025 = vpop.f32.mrb[0].mxu0
        %v2026 = vadd.f32 0.0, %v2025
        %v2027 = vpop.f32.mrb[0].mxu0
        %v2028 = vadd.f32 0.0, %v2027
        %v2029 = vpop.f32.mrb[0].mxu0
        %v2030 = vadd.f32 0.0, %v2029
        %v2031 = vpop.f32.mrb[0].mxu0
        %v2032 = vadd.f32 0.0, %v2031
        %2033 = vmatprep.mubr.bf16.mxu0 0
        %2034 = vmatmul.mubr.bf16.gmra.mrb[0].mxu0 %v1797
        %v2035 = vpop.f32.mrb[0].mxu0
        %v2036 = vadd.f32 0.0, %v2035
        %v2037 = vpop.f32.mrb[0].mxu0
        %v2038 = vadd.f32 0.0, %v2037
        %v2039 = vpop.f32.mrb[0].mxu0
        %v2040 = vadd.f32 0.0, %v2039
        %v2041 = vpop.f32.mrb[0].mxu0
        %v2042 = vadd.f32 0.0, %v2041
        %2043 = vdwg.mxu0
        %2044 = vmatprep.subr.bf16.mxu0 %v1930
        %2045 = vmatpush1.bf16.msra.mxu0 %v1929
        %2046 = vmatprep.subr.bf16.mxu0 %v1934
        %2047 = vmatpush1.bf16.msra.mxu0 %v1933
        %2048 = vmatprep.subr.bf16.mxu0 %v1938
        %2049 = vmatpush1.bf16.msra.mxu0 %v1937
        %2050 = vmatprep.subr.bf16.mxu0 %v1942
        %2051 = vmatpush1.bf16.msra.mxu0 %v1941
        %2052 = vmatprep.subr.bf16.mxu0 %v1946
        %2053 = vmatpush1.bf16.msra.mxu0 %v1945
        %2054 = vmatprep.subr.bf16.mxu0 %v1950
        %2055 = vmatpush1.bf16.msra.mxu0 %v1949
        %2056 = vmatprep.subr.bf16.mxu0 %v1954
        %2057 = vmatpush1.bf16.msra.mxu0 %v1953
        %2058 = vmatprep.subr.bf16.mxu0 %v1958
        %2059 = vmatpush1.bf16.msra.mxu0 %v1957
        %2060 = vmatprep.subr.bf16.mxu0 0
        %2061 = vmatpush1.bf16.msra.mxu0 0
        %2062 = vmatprep.subr.bf16.mxu0 0
        %2063 = vmatpush1.bf16.msra.mxu0 0
        %2064 = vmatprep.subr.bf16.mxu0 0
        %2065 = vmatpush1.bf16.msra.mxu0 0
        %2066 = vmatprep.subr.bf16.mxu0 0
        %2067 = vmatpush1.bf16.msra.mxu0 0
        %2068 = vmatprep.subr.bf16.mxu0 0
        %2069 = vmatpush1.bf16.msra.mxu0 0
        %2070 = vmatprep.subr.bf16.mxu0 0
        %2071 = vmatpush1.bf16.msra.mxu0 0
        %2072 = vmatprep.subr.bf16.mxu0 0
        %2073 = vmatpush1.bf16.msra.mxu0 0
        %2074 = vmatprep.subr.bf16.mxu0 0
        %2075 = vmatpush1.bf16.msra.mxu0 0
        %2076 = vmatprep.mubr.bf16.mxu0 0
        %2077 = vmatmul.mubr.bf16.gmra.mrb[0].mxu0 %v1796
        %v2078 = vpop.f32.mrb[0].mxu0
        %v2079 = vadd.f32 0.0, %v2078
        %v2080 = vpop.f32.mrb[0].mxu0
        %v2081 = vadd.f32 0.0, %v2080
        %v2082 = vpop.f32.mrb[0].mxu0
        %v2083 = vadd.f32 0.0, %v2082
        %v2084 = vpop.f32.mrb[0].mxu0
        %v2085 = vadd.f32 0.0, %v2084
        %2086 = vmatprep.mubr.bf16.mxu0 0
        %2087 = vmatmul.mubr.bf16.gmra.mrb[0].mxu0 %v1797
        %v2088 = vpop.f32.mrb[0].mxu0
        %v2089 = vadd.f32 0.0, %v2088
        %v2090 = vpop.f32.mrb[0].mxu0
        %v2091 = vadd.f32 0.0, %v2090
        %v2092 = vpop.f32.mrb[0].mxu0
        %v2093 = vadd.f32 0.0, %v2092
        %v2094 = vpop.f32.mrb[0].mxu0
        %v2095 = vadd.f32 0.0, %v2094
        %2096 = vdwg.mxu0
        %v2097 = vadd.f32 %v1721, %v2026
        %v2098 = vadd.f32 %v1723, %v2028
        %v2099 = vadd.f32 %v1774, %v2079
        %v2100 = vadd.f32 %v1776, %v2081
        %v2101 = vadd.f32 %v1725, %v2030
        %v2102 = vadd.f32 %v1727, %v2032
        %v2103 = vadd.f32 %v1778, %v2083
        %v2104 = vadd.f32 %v1780, %v2085
        %v2105 = vadd.f32 %v1731, %v2036
        %v2106 = vadd.f32 %v1733, %v2038
        %v2107 = vadd.f32 %v1784, %v2089
        %v2108 = vadd.f32 %v1786, %v2091
        %v2109 = vadd.f32 %v1735, %v2040
        %v2110 = vadd.f32 %v1737, %v2042
        %v2111 = vadd.f32 %v1788, %v2093
        %v2112 = vadd.f32 %v1790, %v2095
        %v2113 = vadd.f32 %v1167, %v2097
        %v2114 = vadd.f32 %v1168, %v2098
        %v2115 = vadd.f32 %v1169, %v2099
        %v2116 = vadd.f32 %v1170, %v2100
        %v2117 = vadd.f32 %v1171, %v2101
        %v2118 = vadd.f32 %v1172, %v2102
        %v2119 = vadd.f32 %v1173, %v2103
        %v2120 = vadd.f32 %v1174, %v2104
        %v2121 = vadd.f32 %v1175, %v2105
        %v2122 = vadd.f32 %v1176, %v2106
        %v2123 = vadd.f32 %v1177, %v2107
        %v2124 = vadd.f32 %v1178, %v2108
        %v2125 = vadd.f32 %v1179, %v2109
        %v2126 = vadd.f32 %v1180, %v2110
        %v2127 = vadd.f32 %v1181, %v2111
        %v2128 = vadd.f32 %v1182, %v2112
        %v2129 = vld [vmem:[#allocation13] sm:$0xf]
        %v2131 = vlaneseq
        %v2132 = vshrl.u32 %v2131, 7
        %v2133 = vsub.s32 0, %v2132
        %v2134 = vrot.slane %v2129, %v2133
        %v2135 = vlaneseq
        %v2136 = vshrl.u32 %v2135, 7
        %v2137 = vsub.s32 1, %v2136
        %v2138 = vrot.slane %v2129, %v2137
        %v2139 = vlaneseq
        %v2140 = vshrl.u32 %v2139, 7
        %v2141 = vsub.s32 2, %v2140
        %v2142 = vrot.slane %v2129, %v2141
        %v2143 = vlaneseq
        %v2144 = vshrl.u32 %v2143, 7
        %v2145 = vsub.s32 3, %v2144
        %v2146 = vrot.slane %v2129, %v2145
        %v2151 = vadd.f32 %v2113, %v2134
        %v2152 = vadd.f32 %v2114, %v2138
        %v2153 = vadd.f32 %v2115, %v2142
        %v2154 = vadd.f32 %v2116, %v2146
        %v2155 = vadd.f32 %v2117, %v2134
        %v2156 = vadd.f32 %v2118, %v2138
        %v2157 = vadd.f32 %v2119, %v2142
        %v2158 = vadd.f32 %v2120, %v2146
        %v2159 = vadd.f32 %v2121, %v2134
        %v2160 = vadd.f32 %v2122, %v2138
        %v2161 = vadd.f32 %v2123, %v2142
        %v2162 = vadd.f32 %v2124, %v2146
        %v2163 = vadd.f32 %v2125, %v2134
        %v2164 = vadd.f32 %v2126, %v2138
        %v2165 = vadd.f32 %v2127, %v2142
        %v2166 = vadd.f32 %v2128, %v2146
        %v2167 = vld [vmem:[#allocation4] sm:$0xff]
        %v2168 = vld [vmem:[#allocation4 + $0x8] sm:$0xff]
        %v2169 = vld [vmem:[#allocation4 + $0x18] sm:$0xff]
        %v2170 = vld [vmem:[#allocation4 + $0x20] sm:$0xff]
        %v2171 = vpack.c.bf16 %v2168, %v2167
        %v2172 = vpack.c.bf16 %v2170, %v2169
        %v2173 = vld [vmem:[#allocation10] sm:$0xff]
        %v2174 = vld [vmem:[#allocation10 + $0x8] sm:$0xff]
        %v2175 = vld [vmem:[#allocation10 + $0x10] sm:$0xff]
        %v2176 = vld [vmem:[#allocation10 + $0x18] sm:$0xff]
        %v2177 = vld [vmem:[#allocation10 + $0x20] sm:$0xff]
        %v2178 = vld [vmem:[#allocation10 + $0x28] sm:$0xff]
        %v2179 = vld [vmem:[#allocation10 + $0x30] sm:$0xff]
        %v2180 = vld [vmem:[#allocation10 + $0x38] sm:$0xff]
        %v2181 = vld [vmem:[#allocation10 + $0x40] sm:$0xff]
        %v2182 = vld [vmem:[#allocation10 + $0x48] sm:$0xff]
        %v2183 = vld [vmem:[#allocation10 + $0x50] sm:$0xff]
        %v2184 = vld [vmem:[#allocation10 + $0x58] sm:$0xff]
        %v2185 = vld [vmem:[#allocation10 + $0x60] sm:$0xff]
        %v2186 = vld [vmem:[#allocation10 + $0x68] sm:$0xff]
        %v2187 = vld [vmem:[#allocation10 + $0x70] sm:$0xff]
        %v2188 = vld [vmem:[#allocation10 + $0x78] sm:$0xff]
        %v2189 = vld [vmem:[#allocation4 + $0x1] sm:$0xff]
        %v2190 = vld [vmem:[#allocation4 + $0x9] sm:$0xff]
        %v2191 = vld [vmem:[#allocation4 + $0x19] sm:$0xff]
        %v2192 = vld [vmem:[#allocation4 + $0x21] sm:$0xff]
        %v2193 = vpack.c.bf16 %v2190, %v2189
        %v2194 = vpack.c.bf16 %v2192, %v2191
        %s2195 = scalar_lea.vmem [#allocation10], 128
        %v2196 = vld [vmem:[%s2195] sm:$0xff]
        %v2197 = vld [vmem:[%s2195 + $0x8] sm:$0xff]
        %v2198 = vld [vmem:[%s2195 + $0x10] sm:$0xff]
        %v2199 = vld [vmem:[%s2195 + $0x18] sm:$0xff]
        %v2200 = vld [vmem:[%s2195 + $0x20] sm:$0xff]
        %v2201 = vld [vmem:[%s2195 + $0x28] sm:$0xff]
        %v2202 = vld [vmem:[%s2195 + $0x30] sm:$0xff]
        %v2203 = vld [vmem:[%s2195 + $0x38] sm:$0xff]
        %v2204 = vld [vmem:[%s2195 + $0x40] sm:$0xff]
        %v2205 = vld [vmem:[%s2195 + $0x48] sm:$0xff]
        %v2206 = vld [vmem:[%s2195 + $0x50] sm:$0xff]
        %v2207 = vld [vmem:[%s2195 + $0x58] sm:$0xff]
        %v2208 = vld [vmem:[%s2195 + $0x60] sm:$0xff]
        %v2209 = vld [vmem:[%s2195 + $0x68] sm:$0xff]
        %v2210 = vld [vmem:[%s2195 + $0x70] sm:$0xff]
        %v2211 = vld [vmem:[%s2195 + $0x78] sm:$0xff]
        %v2228 = vunpack.c.l.b16 %v2196
        %v2229 = vunpack.c.h.b16 %v2196
        %v2230 = vunpack.c.l.b16 %v2197
        %v2231 = vunpack.c.h.b16 %v2197
        %v2232 = vunpack.c.l.b16 %v2198
        %v2233 = vunpack.c.h.b16 %v2198
        %v2234 = vunpack.c.l.b16 %v2199
        %v2235 = vunpack.c.h.b16 %v2199
        %v2236 = vunpack.c.l.b16 %v2200
        %v2237 = vunpack.c.h.b16 %v2200
        %v2238 = vunpack.c.l.b16 %v2201
        %v2239 = vunpack.c.h.b16 %v2201
        %v2240 = vunpack.c.l.b16 %v2202
        %v2241 = vunpack.c.h.b16 %v2202
        %v2242 = vunpack.c.l.b16 %v2203
        %v2243 = vunpack.c.h.b16 %v2203
        %v2244 = vunpack.c.l.b16 %v2204
        %v2245 = vunpack.c.h.b16 %v2204
        %v2246 = vunpack.c.l.b16 %v2205
        %v2247 = vunpack.c.h.b16 %v2205
        %v2248 = vunpack.c.l.b16 %v2206
        %v2249 = vunpack.c.h.b16 %v2206
        %v2250 = vunpack.c.l.b16 %v2207
        %v2251 = vunpack.c.h.b16 %v2207
        %v2252 = vunpack.c.l.b16 %v2208
        %v2253 = vunpack.c.h.b16 %v2208
        %v2254 = vunpack.c.l.b16 %v2209
        %v2255 = vunpack.c.h.b16 %v2209
        %v2256 = vunpack.c.l.b16 %v2210
        %v2257 = vunpack.c.h.b16 %v2210
        %v2258 = vunpack.c.l.b16 %v2211
        %v2259 = vunpack.c.h.b16 %v2211
        %v2260 = vpack.c.b16 %v2230, %v2228
        %v2261 = vpack.c.b16 %v2231, %v2229
        %v2262 = vpack.c.b16 %v2234, %v2232
        %v2263 = vpack.c.b16 %v2235, %v2233
        %v2264 = vpack.c.b16 %v2238, %v2236
        %v2265 = vpack.c.b16 %v2239, %v2237
        %v2266 = vpack.c.b16 %v2242, %v2240
        %v2267 = vpack.c.b16 %v2243, %v2241
        %v2268 = vpack.c.b16 %v2246, %v2244
        %v2269 = vpack.c.b16 %v2247, %v2245
        %v2270 = vpack.c.b16 %v2250, %v2248
        %v2271 = vpack.c.b16 %v2251, %v2249
        %v2272 = vpack.c.b16 %v2254, %v2252
        %v2273 = vpack.c.b16 %v2255, %v2253
        %v2274 = vpack.c.b16 %v2258, %v2256
        %v2275 = vpack.c.b16 %v2259, %v2257
        %2292 = vmatprep.subr.bf16.mxu0 %v2261
        %2293 = vmatpush1.bf16.msra.mxu0 %v2260
        %2294 = vmatprep.subr.bf16.mxu0 %v2263
        %2295 = vmatpush1.bf16.msra.mxu0 %v2262
        %2296 = vmatprep.subr.bf16.mxu0 %v2265
        %2297 = vmatpush1.bf16.msra.mxu0 %v2264
        %2298 = vmatprep.subr.bf16.mxu0 %v2267
        %2299 = vmatpush1.bf16.msra.mxu0 %v2266
        %2300 = vmatprep.subr.bf16.mxu0 %v2269
        %2301 = vmatpush1.bf16.msra.mxu0 %v2268
        %2302 = vmatprep.subr.bf16.mxu0 %v2271
        %2303 = vmatpush1.bf16.msra.mxu0 %v2270
        %2304 = vmatprep.subr.bf16.mxu0 %v2273
        %2305 = vmatpush1.bf16.msra.mxu0 %v2272
        %2306 = vmatprep.subr.bf16.mxu0 %v2275
        %2307 = vmatpush1.bf16.msra.mxu0 %v2274
        %2308 = vmatprep.subr.bf16.mxu0 0
        %2309 = vmatpush1.bf16.msra.mxu0 0
        %2310 = vmatprep.subr.bf16.mxu0 0
        %2311 = vmatpush1.bf16.msra.mxu0 0
        %2312 = vmatprep.subr.bf16.mxu0 0
        %2313 = vmatpush1.bf16.msra.mxu0 0
        %2314 = vmatprep.subr.bf16.mxu0 0
        %2315 = vmatpush1.bf16.msra.mxu0 0
        %2316 = vmatprep.subr.bf16.mxu0 0
        %2317 = vmatpush1.bf16.msra.mxu0 0
        %2318 = vmatprep.subr.bf16.mxu0 0
        %2319 = vmatpush1.bf16.msra.mxu0 0
        %2320 = vmatprep.subr.bf16.mxu0 0
        %2321 = vmatpush1.bf16.msra.mxu0 0
        %2322 = vmatprep.subr.bf16.mxu0 0
        %2323 = vmatpush1.bf16.msra.mxu0 0
        %2324 = vmatprep.mubr.bf16.mxu0 0
        %2325 = vmatmul.mubr.bf16.gmra.mrb[0].mxu0 %v2193
        %v2326 = vpop.f32.mrb[0].mxu0
        %v2327 = vadd.f32 0.0, %v2326
        %v2328 = vpop.f32.mrb[0].mxu0
        %v2329 = vadd.f32 0.0, %v2328
        %v2330 = vpop.f32.mrb[0].mxu0
        %v2331 = vadd.f32 0.0, %v2330
        %v2332 = vpop.f32.mrb[0].mxu0
        %v2333 = vadd.f32 0.0, %v2332
        %2334 = vmatprep.mubr.bf16.mxu0 0
        %2335 = vmatmul.mubr.bf16.gmra.mrb[0].mxu0 %v2194
        %v2336 = vpop.f32.mrb[0].mxu0
        %v2337 = vadd.f32 0.0, %v2336
        %v2338 = vpop.f32.mrb[0].mxu0
        %v2339 = vadd.f32 0.0, %v2338
        %v2340 = vpop.f32.mrb[0].mxu0
        %v2341 = vadd.f32 0.0, %v2340
        %v2342 = vpop.f32.mrb[0].mxu0
        %v2343 = vadd.f32 0.0, %v2342
        %2344 = vdwg.mxu0
        %v2361 = vunpack.c.l.b16 %v2173
        %v2362 = vunpack.c.h.b16 %v2173
        %v2363 = vunpack.c.l.b16 %v2174
        %v2364 = vunpack.c.h.b16 %v2174
        %v2365 = vunpack.c.l.b16 %v2175
        %v2366 = vunpack.c.h.b16 %v2175
        %v2367 = vunpack.c.l.b16 %v2176
        %v2368 = vunpack.c.h.b16 %v2176
        %v2369 = vunpack.c.l.b16 %v2177
        %v2370 = vunpack.c.h.b16 %v2177
        %v2371 = vunpack.c.l.b16 %v2178
        %v2372 = vunpack.c.h.b16 %v2178
        %v2373 = vunpack.c.l.b16 %v2179
        %v2374 = vunpack.c.h.b16 %v2179
        %v2375 = vunpack.c.l.b16 %v2180
        %v2376 = vunpack.c.h.b16 %v2180
        %v2377 = vunpack.c.l.b16 %v2181
        %v2378 = vunpack.c.h.b16 %v2181
        %v2379 = vunpack.c.l.b16 %v2182
        %v2380 = vunpack.c.h.b16 %v2182
        %v2381 = vunpack.c.l.b16 %v2183
        %v2382 = vunpack.c.h.b16 %v2183
        %v2383 = vunpack.c.l.b16 %v2184
        %v2384 = vunpack.c.h.b16 %v2184
        %v2385 = vunpack.c.l.b16 %v2185
        %v2386 = vunpack.c.h.b16 %v2185
        %v2387 = vunpack.c.l.b16 %v2186
        %v2388 = vunpack.c.h.b16 %v2186
        %v2389 = vunpack.c.l.b16 %v2187
        %v2390 = vunpack.c.h.b16 %v2187
        %v2391 = vunpack.c.l.b16 %v2188
        %v2392 = vunpack.c.h.b16 %v2188
        %v2393 = vpack.c.b16 %v2363, %v2361
        %v2394 = vpack.c.b16 %v2364, %v2362
        %v2395 = vpack.c.b16 %v2367, %v2365
        %v2396 = vpack.c.b16 %v2368, %v2366
        %v2397 = vpack.c.b16 %v2371, %v2369
        %v2398 = vpack.c.b16 %v2372, %v2370
        %v2399 = vpack.c.b16 %v2375, %v2373
        %v2400 = vpack.c.b16 %v2376, %v2374
        %v2401 = vpack.c.b16 %v2379, %v2377
        %v2402 = vpack.c.b16 %v2380, %v2378
        %v2403 = vpack.c.b16 %v2383, %v2381
        %v2404 = vpack.c.b16 %v2384, %v2382
        %v2405 = vpack.c.b16 %v2387, %v2385
        %v2406 = vpack.c.b16 %v2388, %v2386
        %v2407 = vpack.c.b16 %v2391, %v2389
        %v2408 = vpack.c.b16 %v2392, %v2390
        %2425 = vmatprep.subr.bf16.mxu0 %v2394
        %2426 = vmatpush1.bf16.msra.mxu0 %v2393
        %2427 = vmatprep.subr.bf16.mxu0 %v2396
        %2428 = vmatpush1.bf16.msra.mxu0 %v2395
        %2429 = vmatprep.subr.bf16.mxu0 %v2398
        %2430 = vmatpush1.bf16.msra.mxu0 %v2397
        %2431 = vmatprep.subr.bf16.mxu0 %v2400
        %2432 = vmatpush1.bf16.msra.mxu0 %v2399
        %2433 = vmatprep.subr.bf16.mxu0 %v2402
        %2434 = vmatpush1.bf16.msra.mxu0 %v2401
        %2435 = vmatprep.subr.bf16.mxu0 %v2404
        %2436 = vmatpush1.bf16.msra.mxu0 %v2403
        %2437 = vmatprep.subr.bf16.mxu0 %v2406
        %2438 = vmatpush1.bf16.msra.mxu0 %v2405
        %2439 = vmatprep.subr.bf16.mxu0 %v2408
        %2440 = vmatpush1.bf16.msra.mxu0 %v2407
        %2441 = vmatprep.subr.bf16.mxu0 0
        %2442 = vmatpush1.bf16.msra.mxu0 0
        %2443 = vmatprep.subr.bf16.mxu0 0
        %2444 = vmatpush1.bf16.msra.mxu0 0
        %2445 = vmatprep.subr.bf16.mxu0 0
        %2446 = vmatpush1.bf16.msra.mxu0 0
        %2447 = vmatprep.subr.bf16.mxu0 0
        %2448 = vmatpush1.bf16.msra.mxu0 0
        %2449 = vmatprep.subr.bf16.mxu0 0
        %2450 = vmatpush1.bf16.msra.mxu0 0
        %2451 = vmatprep.subr.bf16.mxu0 0
        %2452 = vmatpush1.bf16.msra.mxu0 0
        %2453 = vmatprep.subr.bf16.mxu0 0
        %2454 = vmatpush1.bf16.msra.mxu0 0
        %2455 = vmatprep.subr.bf16.mxu0 0
        %2456 = vmatpush1.bf16.msra.mxu0 0
        %2457 = vmatprep.mubr.bf16.mxu0 0
        %2458 = vmatmul.mubr.bf16.gmra.mrb[0].mxu0 %v2171
        %v2459 = vpop.f32.mrb[0].mxu0
        %v2460 = vadd.f32 %v2327, %v2459
        %v2461 = vpop.f32.mrb[0].mxu0
        %v2462 = vadd.f32 %v2329, %v2461
        %v2463 = vpop.f32.mrb[0].mxu0
        %v2464 = vadd.f32 %v2331, %v2463
        %v2465 = vpop.f32.mrb[0].mxu0
        %v2466 = vadd.f32 %v2333, %v2465
        %2467 = vmatprep.mubr.bf16.mxu0 0
        %2468 = vmatmul.mubr.bf16.gmra.mrb[0].mxu0 %v2172
        %v2469 = vpop.f32.mrb[0].mxu0
        %v2470 = vadd.f32 %v2337, %v2469
        %v2471 = vpop.f32.mrb[0].mxu0
        %v2472 = vadd.f32 %v2339, %v2471
        %v2473 = vpop.f32.mrb[0].mxu0
        %v2474 = vadd.f32 %v2341, %v2473
        %v2475 = vpop.f32.mrb[0].mxu0
        %v2476 = vadd.f32 %v2343, %v2475
        %2477 = vdwg.mxu0
        %v2478 = vld [vmem:[#allocation4 + $0x2] sm:$0xff]
        %v2479 = vld [vmem:[#allocation4 + $0xa] sm:$0xff]
        %v2480 = vld [vmem:[#allocation4 + $0x1a] sm:$0xff]
        %v2481 = vld [vmem:[#allocation4 + $0x22] sm:$0xff]
        %v2482 = vpack.c.bf16 %v2479, %v2478
        %v2483 = vpack.c.bf16 %v2481, %v2480
        %s2484 = scalar_lea.vmem [#allocation10], 256
        %v2485 = vld [vmem:[%s2484] sm:$0xff]
        %v2486 = vld [vmem:[%s2484 + $0x8] sm:$0xff]
        %v2487 = vld [vmem:[%s2484 + $0x10] sm:$0xff]
        %v2488 = vld [vmem:[%s2484 + $0x18] sm:$0xff]
        %v2489 = vld [vmem:[%s2484 + $0x20] sm:$0xff]
        %v2490 = vld [vmem:[%s2484 + $0x28] sm:$0xff]
        %v2491 = vld [vmem:[%s2484 + $0x30] sm:$0xff]
        %v2492 = vld [vmem:[%s2484 + $0x38] sm:$0xff]
        %v2493 = vld [vmem:[%s2484 + $0x40] sm:$0xff]
        %v2494 = vld [vmem:[%s2484 + $0x48] sm:$0xff]
        %v2495 = vld [vmem:[%s2484 + $0x50] sm:$0xff]
        %v2496 = vld [vmem:[%s2484 + $0x58] sm:$0xff]
        %v2497 = vld [vmem:[%s2484 + $0x60] sm:$0xff]
        %v2498 = vld [vmem:[%s2484 + $0x68] sm:$0xff]
        %v2499 = vld [vmem:[%s2484 + $0x70] sm:$0xff]
        %v2500 = vld [vmem:[%s2484 + $0x78] sm:$0xff]
        %v2517 = vunpack.c.l.b16 %v2485
        %v2518 = vunpack.c.h.b16 %v2485
        %v2519 = vunpack.c.l.b16 %v2486
        %v2520 = vunpack.c.h.b16 %v2486
        %v2521 = vunpack.c.l.b16 %v2487
        %v2522 = vunpack.c.h.b16 %v2487
        %v2523 = vunpack.c.l.b16 %v2488
        %v2524 = vunpack.c.h.b16 %v2488
        %v2525 = vunpack.c.l.b16 %v2489
        %v2526 = vunpack.c.h.b16 %v2489
        %v2527 = vunpack.c.l.b16 %v2490
        %v2528 = vunpack.c.h.b16 %v2490
        %v2529 = vunpack.c.l.b16 %v2491
        %v2530 = vunpack.c.h.b16 %v2491
        %v2531 = vunpack.c.l.b16 %v2492
        %v2532 = vunpack.c.h.b16 %v2492
        %v2533 = vunpack.c.l.b16 %v2493
        %v2534 = vunpack.c.h.b16 %v2493
        %v2535 = vunpack.c.l.b16 %v2494
        %v2536 = vunpack.c.h.b16 %v2494
        %v2537 = vunpack.c.l.b16 %v2495
        %v2538 = vunpack.c.h.b16 %v2495
        %v2539 = vunpack.c.l.b16 %v2496
        %v2540 = vunpack.c.h.b16 %v2496
        %v2541 = vunpack.c.l.b16 %v2497
        %v2542 = vunpack.c.h.b16 %v2497
        %v2543 = vunpack.c.l.b16 %v2498
        %v2544 = vunpack.c.h.b16 %v2498
        %v2545 = vunpack.c.l.b16 %v2499
        %v2546 = vunpack.c.h.b16 %v2499
        %v2547 = vunpack.c.l.b16 %v2500
        %v2548 = vunpack.c.h.b16 %v2500
        %v2549 = vpack.c.b16 %v2519, %v2517
        %v2550 = vpack.c.b16 %v2520, %v2518
        %v2551 = vpack.c.b16 %v2523, %v2521
        %v2552 = vpack.c.b16 %v2524, %v2522
        %v2553 = vpack.c.b16 %v2527, %v2525
        %v2554 = vpack.c.b16 %v2528, %v2526
        %v2555 = vpack.c.b16 %v2531, %v2529
        %v2556 = vpack.c.b16 %v2532, %v2530
        %v2557 = vpack.c.b16 %v2535, %v2533
        %v2558 = vpack.c.b16 %v2536, %v2534
        %v2559 = vpack.c.b16 %v2539, %v2537
        %v2560 = vpack.c.b16 %v2540, %v2538
        %v2561 = vpack.c.b16 %v2543, %v2541
        %v2562 = vpack.c.b16 %v2544, %v2542
        %v2563 = vpack.c.b16 %v2547, %v2545
        %v2564 = vpack.c.b16 %v2548, %v2546
        %2581 = vmatprep.subr.bf16.mxu0 %v2550
        %2582 = vmatpush1.bf16.msra.mxu0 %v2549
        %2583 = vmatprep.subr.bf16.mxu0 %v2552
        %2584 = vmatpush1.bf16.msra.mxu0 %v2551
        %2585 = vmatprep.subr.bf16.mxu0 %v2554
        %2586 = vmatpush1.bf16.msra.mxu0 %v2553
        %2587 = vmatprep.subr.bf16.mxu0 %v2556
        %2588 = vmatpush1.bf16.msra.mxu0 %v2555
        %2589 = vmatprep.subr.bf16.mxu0 %v2558
        %2590 = vmatpush1.bf16.msra.mxu0 %v2557
        %2591 = vmatprep.subr.bf16.mxu0 %v2560
        %2592 = vmatpush1.bf16.msra.mxu0 %v2559
        %2593 = vmatprep.subr.bf16.mxu0 %v2562
        %2594 = vmatpush1.bf16.msra.mxu0 %v2561
        %2595 = vmatprep.subr.bf16.mxu0 %v2564
        %2596 = vmatpush1.bf16.msra.mxu0 %v2563
        %2597 = vmatprep.subr.bf16.mxu0 0
        %2598 = vmatpush1.bf16.msra.mxu0 0
        %2599 = vmatprep.subr.bf16.mxu0 0
        %2600 = vmatpush1.bf16.msra.mxu0 0
        %2601 = vmatprep.subr.bf16.mxu0 0
        %2602 = vmatpush1.bf16.msra.mxu0 0
        %2603 = vmatprep.subr.bf16.mxu0 0
        %2604 = vmatpush1.bf16.msra.mxu0 0
        %2605 = vmatprep.subr.bf16.mxu0 0
        %2606 = vmatpush1.bf16.msra.mxu0 0
        %2607 = vmatprep.subr.bf16.mxu0 0
        %2608 = vmatpush1.bf16.msra.mxu0 0
        %2609 = vmatprep.subr.bf16.mxu0 0
        %2610 = vmatpush1.bf16.msra.mxu0 0
        %2611 = vmatprep.subr.bf16.mxu0 0
        %2612 = vmatpush1.bf16.msra.mxu0 0
        %2613 = vmatprep.mubr.bf16.mxu0 0
        %2614 = vmatmul.mubr.bf16.gmra.mrb[0].mxu0 %v2482
        %v2615 = vpop.f32.mrb[0].mxu0
        %v2616 = vadd.f32 0.0, %v2615
        %v2617 = vpop.f32.mrb[0].mxu0
        %v2618 = vadd.f32 0.0, %v2617
        %v2619 = vpop.f32.mrb[0].mxu0
        %v2620 = vadd.f32 0.0, %v2619
        %v2621 = vpop.f32.mrb[0].mxu0
        %v2622 = vadd.f32 0.0, %v2621
        %2623 = vmatprep.mubr.bf16.mxu0 0
        %2624 = vmatmul.mubr.bf16.gmra.mrb[0].mxu0 %v2483
        %v2625 = vpop.f32.mrb[0].mxu0
        %v2626 = vadd.f32 0.0, %v2625
        %v2627 = vpop.f32.mrb[0].mxu0
        %v2628 = vadd.f32 0.0, %v2627
        %v2629 = vpop.f32.mrb[0].mxu0
        %v2630 = vadd.f32 0.0, %v2629
        %v2631 = vpop.f32.mrb[0].mxu0
        %v2632 = vadd.f32 0.0, %v2631
        %2633 = vdwg.mxu0
        %v2634 = vadd.f32 %v2460, %v2616
        %v2635 = vadd.f32 %v2462, %v2618
        %v2636 = vadd.f32 %v2464, %v2620
        %v2637 = vadd.f32 %v2466, %v2622
        %v2638 = vadd.f32 %v2470, %v2626
        %v2639 = vadd.f32 %v2472, %v2628
        %v2640 = vadd.f32 %v2474, %v2630
        %v2641 = vadd.f32 %v2476, %v2632
        %v2642 = vadd.f32 %v2151, %v2634
        %v2643 = vadd.f32 %v2155, %v2636
        %v2644 = vadd.f32 %v2159, %v2638
        %v2645 = vadd.f32 %v2163, %v2640
        %v2646 = vxor.u32 %v2642, 2147483648
        %v2647 = vxor.u32 %v2643, 2147483648
        %v2648 = vxor.u32 %v2644, 2147483648
        %v2649 = vxor.u32 %v2645, 2147483648
        %v2650 = vmul.f32 %v2646, 1.442695
        %v2651 = vpow.pop %v2650
        %v2652 = vmul.f32 %v2647, 1.442695
        %v2653 = vpow.pop %v2652
        %v2654 = vmul.f32 %v2648, 1.442695
        %v2655 = vpow.pop %v2654
        %v2656 = vmul.f32 %v2649, 1.442695
        %v2657 = vpow.pop %v2656
        %v2658 = vadd.f32 %v2651, 1.0
        %v2659 = vadd.f32 %v2653, 1.0
        %v2660 = vadd.f32 %v2655, 1.0
        %v2661 = vadd.f32 %v2657, 1.0
        %v2662 = vrcp.pop %v2658
        %v2663 = vmul.f32 1.0, %v2662
        %v2664 = vrcp.pop %v2659
        %v2665 = vmul.f32 1.0, %v2664
        %v2666 = vrcp.pop %v2660
        %v2667 = vmul.f32 1.0, %v2666
        %v2668 = vrcp.pop %v2661
        %v2669 = vmul.f32 1.0, %v2668
        %v2670 = vadd.f32 %v2152, %v2635
        %v2671 = vadd.f32 %v2156, %v2637
        %v2672 = vadd.f32 %v2160, %v2639
        %v2673 = vadd.f32 %v2164, %v2641
        %v2674 = vxor.u32 %v2670, 2147483648
        %v2675 = vxor.u32 %v2671, 2147483648
        %v2676 = vxor.u32 %v2672, 2147483648
        %v2677 = vxor.u32 %v2673, 2147483648
        %v2678 = vmul.f32 %v2674, 1.442695
        %v2679 = vpow.pop %v2678
        %v2680 = vmul.f32 %v2675, 1.442695
        %v2681 = vpow.pop %v2680
        %v2682 = vmul.f32 %v2676, 1.442695
        %v2683 = vpow.pop %v2682
        %v2684 = vmul.f32 %v2677, 1.442695
        %v2685 = vpow.pop %v2684
        %v2686 = vadd.f32 %v2679, 1.0
        %v2687 = vadd.f32 %v2681, 1.0
        %v2688 = vadd.f32 %v2683, 1.0
        %v2689 = vadd.f32 %v2685, 1.0
        %v2690 = vrcp.pop %v2686
        %v2691 = vmul.f32 1.0, %v2690
        %v2692 = vrcp.pop %v2687
        %v2693 = vmul.f32 1.0, %v2692
        %v2694 = vrcp.pop %v2688
        %v2695 = vmul.f32 1.0, %v2694
        %v2696 = vrcp.pop %v2689
        %v2697 = vmul.f32 1.0, %v2696
        %v2698 = vtanh.pop %v2153
        %v2699 = vtanh.pop %v2157
        %v2700 = vtanh.pop %v2161
        %v2701 = vtanh.pop %v2165
        %v2702 = vmul.f32 %v2691, %v2189
        %v2703 = vmul.f32 %v2693, %v2190
        %v2704 = vmul.f32 %v2695, %v2191
        %v2705 = vmul.f32 %v2697, %v2192
        %v2706 = vmul.f32 %v2663, %v2698
        %v2707 = vmul.f32 %v2665, %v2699
        %v2708 = vmul.f32 %v2667, %v2700
        %v2709 = vmul.f32 %v2669, %v2701
        %v2710 = vadd.f32 %v2702, %v2706
        %v2711 = vadd.f32 %v2703, %v2707
        %v2712 = vadd.f32 %v2704, %v2708
        %v2713 = vadd.f32 %v2705, %v2709
        %2714 = vst [vmem:[#allocation4 + $0x1] sm:$0xff] %v2710
        %2715 = vst [vmem:[#allocation4 + $0x9] sm:$0xff] %v2711
        %2716 = vst [vmem:[#allocation4 + $0x19] sm:$0xff] %v2712
        %2717 = vst [vmem:[#allocation4 + $0x21] sm:$0xff] %v2713
        %v2718 = vld [vmem:[#allocation4] sm:$0xff]
        %v2719 = vld [vmem:[#allocation4 + $0x8] sm:$0xff]
        %v2720 = vld [vmem:[#allocation4 + $0x18] sm:$0xff]
        %v2721 = vld [vmem:[#allocation4 + $0x20] sm:$0xff]
        %v2722 = vpack.c.bf16 %v2719, %v2718
        %v2723 = vpack.c.bf16 %v2721, %v2720
        %v2724 = vld [vmem:[#allocation12] sm:$0xf]
        %v2725 = vld [vmem:[#allocation12 + $0x4] sm:$0xf]
        %v2726 = vld [vmem:[#allocation12 + $0x8] sm:$0xf]
        %v2727 = vld [vmem:[#allocation12 + $0xc] sm:$0xf]
        %v2728 = vld [vmem:[#allocation12 + $0x10] sm:$0xf]
        %v2729 = vld [vmem:[#allocation12 + $0x14] sm:$0xf]
        %v2730 = vld [vmem:[#allocation12 + $0x18] sm:$0xf]
        %v2731 = vld [vmem:[#allocation12 + $0x1c] sm:$0xf]
        %v2732 = vld [vmem:[#allocation12 + $0x20] sm:$0xf]
        %v2733 = vld [vmem:[#allocation12 + $0x24] sm:$0xf]
        %v2734 = vld [vmem:[#allocation12 + $0x28] sm:$0xf]
        %v2735 = vld [vmem:[#allocation12 + $0x2c] sm:$0xf]
        %v2736 = vld [vmem:[#allocation12 + $0x30] sm:$0xf]
        %v2737 = vld [vmem:[#allocation12 + $0x34] sm:$0xf]
        %v2738 = vld [vmem:[#allocation12 + $0x38] sm:$0xf]
        %v2739 = vld [vmem:[#allocation12 + $0x3c] sm:$0xf]
        %v2740 = vld [vmem:[#allocation4 + $0x1] sm:$0xff]
        %v2741 = vld [vmem:[#allocation4 + $0x9] sm:$0xff]
        %v2742 = vld [vmem:[#allocation4 + $0x19] sm:$0xff]
        %v2743 = vld [vmem:[#allocation4 + $0x21] sm:$0xff]
        %v2744 = vpack.c.bf16 %v2741, %v2740
        %v2745 = vpack.c.bf16 %v2743, %v2742
        %s2746 = scalar_lea.vmem [#allocation12], 64
        %v2747 = vld [vmem:[%s2746] sm:$0xf]
        %v2748 = vld [vmem:[%s2746 + $0x4] sm:$0xf]
        %v2749 = vld [vmem:[%s2746 + $0x8] sm:$0xf]
        %v2750 = vld [vmem:[%s2746 + $0xc] sm:$0xf]
        %v2751 = vld [vmem:[%s2746 + $0x10] sm:$0xf]
        %v2752 = vld [vmem:[%s2746 + $0x14] sm:$0xf]
        %v2753 = vld [vmem:[%s2746 + $0x18] sm:$0xf]
        %v2754 = vld [vmem:[%s2746 + $0x1c] sm:$0xf]
        %v2755 = vld [vmem:[%s2746 + $0x20] sm:$0xf]
        %v2756 = vld [vmem:[%s2746 + $0x24] sm:$0xf]
        %v2757 = vld [vmem:[%s2746 + $0x28] sm:$0xf]
        %v2758 = vld [vmem:[%s2746 + $0x2c] sm:$0xf]
        %v2759 = vld [vmem:[%s2746 + $0x30] sm:$0xf]
        %v2760 = vld [vmem:[%s2746 + $0x34] sm:$0xf]
        %v2761 = vld [vmem:[%s2746 + $0x38] sm:$0xf]
        %v2762 = vld [vmem:[%s2746 + $0x3c] sm:$0xf]
        %v2779 = vunpack.c.l.b16 %v2747
        %v2780 = vunpack.c.l.b16 %v2748
        %v2781 = vunpack.c.l.b16 %v2749
        %v2782 = vunpack.c.l.b16 %v2750
        %v2783 = vunpack.c.l.b16 %v2751
        %v2784 = vunpack.c.l.b16 %v2752
        %v2785 = vunpack.c.l.b16 %v2753
        %v2786 = vunpack.c.l.b16 %v2754
        %v2787 = vunpack.c.l.b16 %v2755
        %v2788 = vunpack.c.l.b16 %v2756
        %v2789 = vunpack.c.l.b16 %v2757
        %v2790 = vunpack.c.l.b16 %v2758
        %v2791 = vunpack.c.l.b16 %v2759
        %v2792 = vunpack.c.l.b16 %v2760
        %v2793 = vunpack.c.l.b16 %v2761
        %v2794 = vunpack.c.l.b16 %v2762
        %v2795 = vpack.c.b16 %v2780, %v2779
        %v2796 = vpack.c.b16 %v2782, %v2781
        %v2797 = vpack.c.b16 %v2784, %v2783
        %v2798 = vpack.c.b16 %v2786, %v2785
        %v2799 = vpack.c.b16 %v2788, %v2787
        %v2800 = vpack.c.b16 %v2790, %v2789
        %v2801 = vpack.c.b16 %v2792, %v2791
        %v2802 = vpack.c.b16 %v2794, %v2793
        %2811 = vmatprep.subr.bf16.mxu0 0
        %2812 = vmatpush1.bf16.msra.mxu0 %v2795
        %2813 = vmatprep.subr.bf16.mxu0 0
        %2814 = vmatpush1.bf16.msra.mxu0 %v2796
        %2815 = vmatprep.subr.bf16.mxu0 0
        %2816 = vmatpush1.bf16.msra.mxu0 %v2797
        %2817 = vmatprep.subr.bf16.mxu0 0
        %2818 = vmatpush1.bf16.msra.mxu0 %v2798
        %2819 = vmatprep.subr.bf16.mxu0 0
        %2820 = vmatpush1.bf16.msra.mxu0 %v2799
        %2821 = vmatprep.subr.bf16.mxu0 0
        %2822 = vmatpush1.bf16.msra.mxu0 %v2800
        %2823 = vmatprep.subr.bf16.mxu0 0
        %2824 = vmatpush1.bf16.msra.mxu0 %v2801
        %2825 = vmatprep.subr.bf16.mxu0 0
        %2826 = vmatpush1.bf16.msra.mxu0 %v2802
        %2827 = vmatprep.subr.bf16.mxu0 0
        %2828 = vmatpush1.bf16.msra.mxu0 0
        %2829 = vmatprep.subr.bf16.mxu0 0
        %2830 = vmatpush1.bf16.msra.mxu0 0
        %2831 = vmatprep.subr.bf16.mxu0 0
        %2832 = vmatpush1.bf16.msra.mxu0 0
        %2833 = vmatprep.subr.bf16.mxu0 0
        %2834 = vmatpush1.bf16.msra.mxu0 0
        %2835 = vmatprep.subr.bf16.mxu0 0
        %2836 = vmatpush1.bf16.msra.mxu0 0
        %2837 = vmatprep.subr.bf16.mxu0 0
        %2838 = vmatpush1.bf16.msra.mxu0 0
        %2839 = vmatprep.subr.bf16.mxu0 0
        %2840 = vmatpush1.bf16.msra.mxu0 0
        %2841 = vmatprep.subr.bf16.mxu0 0
        %2842 = vmatpush1.bf16.msra.mxu0 0
        %2843 = vmatprep.mubr.bf16.mxu0 0
        %2844 = vmatmul.mubr.bf16.gmra.mrb[0].mxu0 %v2744
        %v2845 = vpop.f32.mrb[0].mxu0
        %v2846 = vadd.f32 0.0, %v2845
        %v2847 = vpop.f32.mrb[0].mxu0
        %v2848 = vpop.f32.mrb[0].mxu0
        %v2849 = vadd.f32 0.0, %v2848
        %v2850 = vpop.f32.mrb[0].mxu0
        %2851 = vmatprep.mubr.bf16.mxu0 0
        %2852 = vmatmul.mubr.bf16.gmra.mrb[0].mxu0 %v2745
        %v2853 = vpop.f32.mrb[0].mxu0
        %v2854 = vadd.f32 0.0, %v2853
        %v2855 = vpop.f32.mrb[0].mxu0
        %v2856 = vpop.f32.mrb[0].mxu0
        %v2857 = vadd.f32 0.0, %v2856
        %v2858 = vpop.f32.mrb[0].mxu0
        %2859 = vdwg.mxu0
        %v2876 = vunpack.c.l.b16 %v2724
        %v2877 = vunpack.c.l.b16 %v2725
        %v2878 = vunpack.c.l.b16 %v2726
        %v2879 = vunpack.c.l.b16 %v2727
        %v2880 = vunpack.c.l.b16 %v2728
        %v2881 = vunpack.c.l.b16 %v2729
        %v2882 = vunpack.c.l.b16 %v2730
        %v2883 = vunpack.c.l.b16 %v2731
        %v2884 = vunpack.c.l.b16 %v2732
        %v2885 = vunpack.c.l.b16 %v2733
        %v2886 = vunpack.c.l.b16 %v2734
        %v2887 = vunpack.c.l.b16 %v2735
        %v2888 = vunpack.c.l.b16 %v2736
        %v2889 = vunpack.c.l.b16 %v2737
        %v2890 = vunpack.c.l.b16 %v2738
        %v2891 = vunpack.c.l.b16 %v2739
        %v2892 = vpack.c.b16 %v2877, %v2876
        %v2893 = vpack.c.b16 %v2879, %v2878
        %v2894 = vpack.c.b16 %v2881, %v2880
        %v2895 = vpack.c.b16 %v2883, %v2882
        %v2896 = vpack.c.b16 %v2885, %v2884
        %v2897 = vpack.c.b16 %v2887, %v2886
        %v2898 = vpack.c.b16 %v2889, %v2888
        %v2899 = vpack.c.b16 %v2891, %v2890
        %2908 = vmatprep.subr.bf16.mxu0 0
        %2909 = vmatpush1.bf16.msra.mxu0 %v2892
        %2910 = vmatprep.subr.bf16.mxu0 0
        %2911 = vmatpush1.bf16.msra.mxu0 %v2893
        %2912 = vmatprep.subr.bf16.mxu0 0
        %2913 = vmatpush1.bf16.msra.mxu0 %v2894
        %2914 = vmatprep.subr.bf16.mxu0 0
        %2915 = vmatpush1.bf16.msra.mxu0 %v2895
        %2916 = vmatprep.subr.bf16.mxu0 0
        %2917 = vmatpush1.bf16.msra.mxu0 %v2896
        %2918 = vmatprep.subr.bf16.mxu0 0
        %2919 = vmatpush1.bf16.msra.mxu0 %v2897
        %2920 = vmatprep.subr.bf16.mxu0 0
        %2921 = vmatpush1.bf16.msra.mxu0 %v2898
        %2922 = vmatprep.subr.bf16.mxu0 0
        %2923 = vmatpush1.bf16.msra.mxu0 %v2899
        %2924 = vmatprep.subr.bf16.mxu0 0
        %2925 = vmatpush1.bf16.msra.mxu0 0
        %2926 = vmatprep.subr.bf16.mxu0 0
        %2927 = vmatpush1.bf16.msra.mxu0 0
        %2928 = vmatprep.subr.bf16.mxu0 0
        %2929 = vmatpush1.bf16.msra.mxu0 0
        %2930 = vmatprep.subr.bf16.mxu0 0
        %2931 = vmatpush1.bf16.msra.mxu0 0
        %2932 = vmatprep.subr.bf16.mxu0 0
        %2933 = vmatpush1.bf16.msra.mxu0 0
        %2934 = vmatprep.subr.bf16.mxu0 0
        %2935 = vmatpush1.bf16.msra.mxu0 0
        %2936 = vmatprep.subr.bf16.mxu0 0
        %2937 = vmatpush1.bf16.msra.mxu0 0
        %2938 = vmatprep.subr.bf16.mxu0 0
        %2939 = vmatpush1.bf16.msra.mxu0 0
        %2940 = vmatprep.mubr.bf16.mxu0 0
        %2941 = vmatmul.mubr.bf16.gmra.mrb[0].mxu0 %v2722
        %v2942 = vpop.f32.mrb[0].mxu0
        %v2943 = vadd.f32 %v2846, %v2942
        %v2944 = vpop.f32.mrb[0].mxu0
        %v2945 = vpop.f32.mrb[0].mxu0
        %v2946 = vadd.f32 %v2849, %v2945
        %v2947 = vpop.f32.mrb[0].mxu0
        %2948 = vmatprep.mubr.bf16.mxu0 0
        %2949 = vmatmul.mubr.bf16.gmra.mrb[0].mxu0 %v2723
        %v2950 = vpop.f32.mrb[0].mxu0
        %v2951 = vadd.f32 %v2854, %v2950
        %v2952 = vpop.f32.mrb[0].mxu0
        %v2953 = vpop.f32.mrb[0].mxu0
        %v2954 = vadd.f32 %v2857, %v2953
        %v2955 = vpop.f32.mrb[0].mxu0
        %2956 = vdwg.mxu0
        %v2957 = vld [vmem:[#allocation4 + $0x2] sm:$0xff]
        %v2958 = vld [vmem:[#allocation4 + $0xa] sm:$0xff]
        %v2959 = vld [vmem:[#allocation4 + $0x1a] sm:$0xff]
        %v2960 = vld [vmem:[#allocation4 + $0x22] sm:$0xff]
        %v2961 = vpack.c.bf16 %v2958, %v2957
        %v2962 = vpack.c.bf16 %v2960, %v2959
        %s2963 = scalar_lea.vmem [#allocation12], 128
        %v2964 = vld [vmem:[%s2963] sm:$0xf]
        %v2965 = vld [vmem:[%s2963 + $0x4] sm:$0xf]
        %v2966 = vld [vmem:[%s2963 + $0x8] sm:$0xf]
        %v2967 = vld [vmem:[%s2963 + $0xc] sm:$0xf]
        %v2968 = vld [vmem:[%s2963 + $0x10] sm:$0xf]
        %v2969 = vld [vmem:[%s2963 + $0x14] sm:$0xf]
        %v2970 = vld [vmem:[%s2963 + $0x18] sm:$0xf]
        %v2971 = vld [vmem:[%s2963 + $0x1c] sm:$0xf]
        %v2972 = vld [vmem:[%s2963 + $0x20] sm:$0xf]
        %v2973 = vld [vmem:[%s2963 + $0x24] sm:$0xf]
        %v2974 = vld [vmem:[%s2963 + $0x28] sm:$0xf]
        %v2975 = vld [vmem:[%s2963 + $0x2c] sm:$0xf]
        %v2976 = vld [vmem:[%s2963 + $0x30] sm:$0xf]
        %v2977 = vld [vmem:[%s2963 + $0x34] sm:$0xf]
        %v2978 = vld [vmem:[%s2963 + $0x38] sm:$0xf]
        %v2979 = vld [vmem:[%s2963 + $0x3c] sm:$0xf]
        %v2996 = vunpack.c.l.b16 %v2964
        %v2997 = vunpack.c.l.b16 %v2965
        %v2998 = vunpack.c.l.b16 %v2966
        %v2999 = vunpack.c.l.b16 %v2967
        %v3000 = vunpack.c.l.b16 %v2968
        %v3001 = vunpack.c.l.b16 %v2969
        %v3002 = vunpack.c.l.b16 %v2970
        %v3003 = vunpack.c.l.b16 %v2971
        %v3004 = vunpack.c.l.b16 %v2972
        %v3005 = vunpack.c.l.b16 %v2973
        %v3006 = vunpack.c.l.b16 %v2974
        %v3007 = vunpack.c.l.b16 %v2975
        %v3008 = vunpack.c.l.b16 %v2976
        %v3009 = vunpack.c.l.b16 %v2977
        %v3010 = vunpack.c.l.b16 %v2978
        %v3011 = vunpack.c.l.b16 %v2979
        %v3012 = vpack.c.b16 %v2997, %v2996
        %v3013 = vpack.c.b16 %v2999, %v2998
        %v3014 = vpack.c.b16 %v3001, %v3000
        %v3015 = vpack.c.b16 %v3003, %v3002
        %v3016 = vpack.c.b16 %v3005, %v3004
        %v3017 = vpack.c.b16 %v3007, %v3006
        %v3018 = vpack.c.b16 %v3009, %v3008
        %v3019 = vpack.c.b16 %v3011, %v3010
        %3028 = vmatprep.subr.bf16.mxu0 0
        %3029 = vmatpush1.bf16.msra.mxu0 %v3012
        %3030 = vmatprep.subr.bf16.mxu0 0
        %3031 = vmatpush1.bf16.msra.mxu0 %v3013
        %3032 = vmatprep.subr.bf16.mxu0 0
        %3033 = vmatpush1.bf16.msra.mxu0 %v3014
        %3034 = vmatprep.subr.bf16.mxu0 0
        %3035 = vmatpush1.bf16.msra.mxu0 %v3015
        %3036 = vmatprep.subr.bf16.mxu0 0
        %3037 = vmatpush1.bf16.msra.mxu0 %v3016
        %3038 = vmatprep.subr.bf16.mxu0 0
        %3039 = vmatpush1.bf16.msra.mxu0 %v3017
        %3040 = vmatprep.subr.bf16.mxu0 0
        %3041 = vmatpush1.bf16.msra.mxu0 %v3018
        %3042 = vmatprep.subr.bf16.mxu0 0
        %3043 = vmatpush1.bf16.msra.mxu0 %v3019
        %3044 = vmatprep.subr.bf16.mxu0 0
        %3045 = vmatpush1.bf16.msra.mxu0 0
        %3046 = vmatprep.subr.bf16.mxu0 0
        %3047 = vmatpush1.bf16.msra.mxu0 0
        %3048 = vmatprep.subr.bf16.mxu0 0
        %3049 = vmatpush1.bf16.msra.mxu0 0
        %3050 = vmatprep.subr.bf16.mxu0 0
        %3051 = vmatpush1.bf16.msra.mxu0 0
        %3052 = vmatprep.subr.bf16.mxu0 0
        %3053 = vmatpush1.bf16.msra.mxu0 0
        %3054 = vmatprep.subr.bf16.mxu0 0
        %3055 = vmatpush1.bf16.msra.mxu0 0
        %3056 = vmatprep.subr.bf16.mxu0 0
        %3057 = vmatpush1.bf16.msra.mxu0 0
        %3058 = vmatprep.subr.bf16.mxu0 0
        %3059 = vmatpush1.bf16.msra.mxu0 0
        %3060 = vmatprep.mubr.bf16.mxu0 0
        %3061 = vmatmul.mubr.bf16.gmra.mrb[0].mxu0 %v2961
        %v3062 = vpop.f32.mrb[0].mxu0
        %v3063 = vadd.f32 0.0, %v3062
        %v3064 = vpop.f32.mrb[0].mxu0
        %v3065 = vpop.f32.mrb[0].mxu0
        %v3066 = vadd.f32 0.0, %v3065
        %v3067 = vpop.f32.mrb[0].mxu0
        %3068 = vmatprep.mubr.bf16.mxu0 0
        %3069 = vmatmul.mubr.bf16.gmra.mrb[0].mxu0 %v2962
        %v3070 = vpop.f32.mrb[0].mxu0
        %v3071 = vadd.f32 0.0, %v3070
        %v3072 = vpop.f32.mrb[0].mxu0
        %v3073 = vpop.f32.mrb[0].mxu0
        %v3074 = vadd.f32 0.0, %v3073
        %v3075 = vpop.f32.mrb[0].mxu0
        %3076 = vdwg.mxu0
        %v3077 = vadd.f32 %v2943, %v3063
        %v3078 = vadd.f32 %v2946, %v3066
        %v3079 = vadd.f32 %v2951, %v3071
        %v3080 = vadd.f32 %v2954, %v3074
        %v3081 = vadd.f32 %v2154, %v3077
        %v3082 = vadd.f32 %v2158, %v3078
        %v3083 = vadd.f32 %v2162, %v3079
        %v3084 = vadd.f32 %v2166, %v3080
        %v3085 = vxor.u32 %v3081, 2147483648
        %v3086 = vxor.u32 %v3082, 2147483648
        %v3087 = vxor.u32 %v3083, 2147483648
        %v3088 = vxor.u32 %v3084, 2147483648
        %v3089 = vmul.f32 %v3085, 1.442695
        %v3090 = vpow.pop %v3089
        %v3091 = vmul.f32 %v3086, 1.442695
        %v3092 = vpow.pop %v3091
        %v3093 = vmul.f32 %v3087, 1.442695
        %v3094 = vpow.pop %v3093
        %v3095 = vmul.f32 %v3088, 1.442695
        %v3096 = vpow.pop %v3095
        %v3097 = vadd.f32 %v3090, 1.0
        %v3098 = vadd.f32 %v3092, 1.0
        %v3099 = vadd.f32 %v3094, 1.0
        %v3100 = vadd.f32 %v3096, 1.0
        %v3101 = vrcp.pop %v3097
        %v3102 = vmul.f32 1.0, %v3101
        %v3103 = vrcp.pop %v3098
        %v3104 = vmul.f32 1.0, %v3103
        %v3105 = vrcp.pop %v3099
        %v3106 = vmul.f32 1.0, %v3105
        %v3107 = vrcp.pop %v3100
        %v3108 = vmul.f32 1.0, %v3107
        %v3109 = vtanh.pop %v2710
        %v3110 = vtanh.pop %v2711
        %v3111 = vtanh.pop %v2712
        %v3112 = vtanh.pop %v2713
        %v3113 = vmul.f32 %v3102, %v3109
        %v3114 = vmul.f32 %v3104, %v3110
        %v3115 = vmul.f32 %v3106, %v3111
        %v3116 = vmul.f32 %v3108, %v3112
        %3117 = vst [vmem:[#allocation3 + $0x1] sm:$0xff] %v3113
        %3118 = vst [vmem:[#allocation3 + $0x9] sm:$0xff] %v3114
        %3119 = vst [vmem:[#allocation3 + $0x19] sm:$0xff] %v3115
        %3120 = vst [vmem:[#allocation3 + $0x21] sm:$0xff] %v3116
        %v3121 = vld [vmem:[#allocation3] sm:$0xff]
        %v3122 = vld [vmem:[#allocation3 + $0x8] sm:$0xff]
        %v3123 = vld [vmem:[#allocation3 + $0x18] sm:$0xff]
        %v3124 = vld [vmem:[#allocation3 + $0x20] sm:$0xff]
        %v3125 = vpack.c.bf16 %v3122, %v3121
        %v3126 = vpack.c.bf16 %v3124, %v3123
        %v3127 = vld [vmem:[%s6] sm:$0xff]
        %v3128 = vld [vmem:[%s6 + $0x8] sm:$0xff]
        %v3129 = vld [vmem:[%s6 + $0x10] sm:$0xff]
        %v3130 = vld [vmem:[%s6 + $0x18] sm:$0xff]
        %v3131 = vld [vmem:[%s6 + $0x20] sm:$0xff]
        %v3132 = vld [vmem:[%s6 + $0x28] sm:$0xff]
        %v3133 = vld [vmem:[%s6 + $0x30] sm:$0xff]
        %v3134 = vld [vmem:[%s6 + $0x38] sm:$0xff]
        %v3135 = vld [vmem:[%s6 + $0x40] sm:$0xff]
        %v3136 = vld [vmem:[%s6 + $0x48] sm:$0xff]
        %v3137 = vld [vmem:[%s6 + $0x50] sm:$0xff]
        %v3138 = vld [vmem:[%s6 + $0x58] sm:$0xff]
        %v3139 = vld [vmem:[%s6 + $0x60] sm:$0xff]
        %v3140 = vld [vmem:[%s6 + $0x68] sm:$0xff]
        %v3141 = vld [vmem:[%s6 + $0x70] sm:$0xff]
        %v3142 = vld [vmem:[%s6 + $0x78] sm:$0xff]
        %v3143 = vld [vmem:[%s6 + $0x80] sm:$0xff]
        %v3144 = vld [vmem:[%s6 + $0x88] sm:$0xff]
        %v3145 = vld [vmem:[%s6 + $0x90] sm:$0xff]
        %v3146 = vld [vmem:[%s6 + $0x98] sm:$0xff]
        %v3147 = vld [vmem:[%s6 + $0xa0] sm:$0xff]
        %v3148 = vld [vmem:[%s6 + $0xa8] sm:$0xff]
        %v3149 = vld [vmem:[%s6 + $0xb0] sm:$0xff]
        %v3150 = vld [vmem:[%s6 + $0xb8] sm:$0xff]
        %v3151 = vld [vmem:[%s6 + $0xc0] sm:$0xff]
        %v3152 = vld [vmem:[%s6 + $0xc8] sm:$0xff]
        %v3153 = vld [vmem:[%s6 + $0xd0] sm:$0xff]
        %v3154 = vld [vmem:[%s6 + $0xd8] sm:$0xff]
        %v3155 = vld [vmem:[%s6 + $0xe0] sm:$0xff]
        %v3156 = vld [vmem:[%s6 + $0xe8] sm:$0xff]
        %v3157 = vld [vmem:[%s6 + $0xf0] sm:$0xff]
        %v3158 = vld [vmem:[%s6 + $0xf8] sm:$0xff]
        %v3159 = vld [vmem:[#allocation3 + $0x1] sm:$0xff]
        %v3160 = vld [vmem:[#allocation3 + $0x9] sm:$0xff]
        %v3161 = vld [vmem:[#allocation3 + $0x19] sm:$0xff]
        %v3162 = vld [vmem:[#allocation3 + $0x21] sm:$0xff]
        %v3163 = vpack.c.bf16 %v3160, %v3159
        %v3164 = vpack.c.bf16 %v3162, %v3161
        %s3165 = scalar_lea.vmem %s6, 256
        %v3166 = vld [vmem:[%s3165] sm:$0xff]
        %v3167 = vld [vmem:[%s3165 + $0x8] sm:$0xff]
        %v3168 = vld [vmem:[%s3165 + $0x10] sm:$0xff]
        %v3169 = vld [vmem:[%s3165 + $0x18] sm:$0xff]
        %v3170 = vld [vmem:[%s3165 + $0x20] sm:$0xff]
        %v3171 = vld [vmem:[%s3165 + $0x28] sm:$0xff]
        %v3172 = vld [vmem:[%s3165 + $0x30] sm:$0xff]
        %v3173 = vld [vmem:[%s3165 + $0x38] sm:$0xff]
        %v3174 = vld [vmem:[%s3165 + $0x40] sm:$0xff]
        %v3175 = vld [vmem:[%s3165 + $0x48] sm:$0xff]
        %v3176 = vld [vmem:[%s3165 + $0x50] sm:$0xff]
        %v3177 = vld [vmem:[%s3165 + $0x58] sm:$0xff]
        %v3178 = vld [vmem:[%s3165 + $0x60] sm:$0xff]
        %v3179 = vld [vmem:[%s3165 + $0x68] sm:$0xff]
        %v3180 = vld [vmem:[%s3165 + $0x70] sm:$0xff]
        %v3181 = vld [vmem:[%s3165 + $0x78] sm:$0xff]
        %v3182 = vld [vmem:[%s3165 + $0x80] sm:$0xff]
        %v3183 = vld [vmem:[%s3165 + $0x88] sm:$0xff]
        %v3184 = vld [vmem:[%s3165 + $0x90] sm:$0xff]
        %v3185 = vld [vmem:[%s3165 + $0x98] sm:$0xff]
        %v3186 = vld [vmem:[%s3165 + $0xa0] sm:$0xff]
        %v3187 = vld [vmem:[%s3165 + $0xa8] sm:$0xff]
        %v3188 = vld [vmem:[%s3165 + $0xb0] sm:$0xff]
        %v3189 = vld [vmem:[%s3165 + $0xb8] sm:$0xff]
        %v3190 = vld [vmem:[%s3165 + $0xc0] sm:$0xff]
        %v3191 = vld [vmem:[%s3165 + $0xc8] sm:$0xff]
        %v3192 = vld [vmem:[%s3165 + $0xd0] sm:$0xff]
        %v3193 = vld [vmem:[%s3165 + $0xd8] sm:$0xff]
        %v3194 = vld [vmem:[%s3165 + $0xe0] sm:$0xff]
        %v3195 = vld [vmem:[%s3165 + $0xe8] sm:$0xff]
        %v3196 = vld [vmem:[%s3165 + $0xf0] sm:$0xff]
        %v3197 = vld [vmem:[%s3165 + $0xf8] sm:$0xff]
        %v3230 = vunpack.c.l.b16 %v3166
        %v3231 = vunpack.c.h.b16 %v3166
        %v3232 = vunpack.c.l.b16 %v3167
        %v3233 = vunpack.c.h.b16 %v3167
        %v3234 = vunpack.c.l.b16 %v3168
        %v3235 = vunpack.c.h.b16 %v3168
        %v3236 = vunpack.c.l.b16 %v3169
        %v3237 = vunpack.c.h.b16 %v3169
        %v3238 = vunpack.c.l.b16 %v3170
        %v3239 = vunpack.c.h.b16 %v3170
        %v3240 = vunpack.c.l.b16 %v3171
        %v3241 = vunpack.c.h.b16 %v3171
        %v3242 = vunpack.c.l.b16 %v3172
        %v3243 = vunpack.c.h.b16 %v3172
        %v3244 = vunpack.c.l.b16 %v3173
        %v3245 = vunpack.c.h.b16 %v3173
        %v3246 = vunpack.c.l.b16 %v3174
        %v3247 = vunpack.c.h.b16 %v3174
        %v3248 = vunpack.c.l.b16 %v3175
        %v3249 = vunpack.c.h.b16 %v3175
        %v3250 = vunpack.c.l.b16 %v3176
        %v3251 = vunpack.c.h.b16 %v3176
        %v3252 = vunpack.c.l.b16 %v3177
        %v3253 = vunpack.c.h.b16 %v3177
        %v3254 = vunpack.c.l.b16 %v3178
        %v3255 = vunpack.c.h.b16 %v3178
        %v3256 = vunpack.c.l.b16 %v3179
        %v3257 = vunpack.c.h.b16 %v3179
        %v3258 = vunpack.c.l.b16 %v3180
        %v3259 = vunpack.c.h.b16 %v3180
        %v3260 = vunpack.c.l.b16 %v3181
        %v3261 = vunpack.c.h.b16 %v3181
        %v3262 = vunpack.c.l.b16 %v3182
        %v3263 = vunpack.c.h.b16 %v3182
        %v3264 = vunpack.c.l.b16 %v3183
        %v3265 = vunpack.c.h.b16 %v3183
        %v3266 = vunpack.c.l.b16 %v3184
        %v3267 = vunpack.c.h.b16 %v3184
        %v3268 = vunpack.c.l.b16 %v3185
        %v3269 = vunpack.c.h.b16 %v3185
        %v3270 = vunpack.c.l.b16 %v3186
        %v3271 = vunpack.c.h.b16 %v3186
        %v3272 = vunpack.c.l.b16 %v3187
        %v3273 = vunpack.c.h.b16 %v3187
        %v3274 = vunpack.c.l.b16 %v3188
        %v3275 = vunpack.c.h.b16 %v3188
        %v3276 = vunpack.c.l.b16 %v3189
        %v3277 = vunpack.c.h.b16 %v3189
        %v3278 = vunpack.c.l.b16 %v3190
        %v3279 = vunpack.c.h.b16 %v3190
        %v3280 = vunpack.c.l.b16 %v3191
        %v3281 = vunpack.c.h.b16 %v3191
        %v3282 = vunpack.c.l.b16 %v3192
        %v3283 = vunpack.c.h.b16 %v3192
        %v3284 = vunpack.c.l.b16 %v3193
        %v3285 = vunpack.c.h.b16 %v3193
        %v3286 = vunpack.c.l.b16 %v3194
        %v3287 = vunpack.c.h.b16 %v3194
        %v3288 = vunpack.c.l.b16 %v3195
        %v3289 = vunpack.c.h.b16 %v3195
        %v3290 = vunpack.c.l.b16 %v3196
        %v3291 = vunpack.c.h.b16 %v3196
        %v3292 = vunpack.c.l.b16 %v3197
        %v3293 = vunpack.c.h.b16 %v3197
        %v3294 = vpack.c.b16 %v3234, %v3230
        %v3295 = vpack.c.b16 %v3235, %v3231
        %v3296 = vpack.c.b16 %v3236, %v3232
        %v3297 = vpack.c.b16 %v3237, %v3233
        %v3298 = vpack.c.b16 %v3242, %v3238
        %v3299 = vpack.c.b16 %v3243, %v3239
        %v3300 = vpack.c.b16 %v3244, %v3240
        %v3301 = vpack.c.b16 %v3245, %v3241
        %v3302 = vpack.c.b16 %v3250, %v3246
        %v3303 = vpack.c.b16 %v3251, %v3247
        %v3304 = vpack.c.b16 %v3252, %v3248
        %v3305 = vpack.c.b16 %v3253, %v3249
        %v3306 = vpack.c.b16 %v3258, %v3254
        %v3307 = vpack.c.b16 %v3259, %v3255
        %v3308 = vpack.c.b16 %v3260, %v3256
        %v3309 = vpack.c.b16 %v3261, %v3257
        %v3310 = vpack.c.b16 %v3266, %v3262
        %v3311 = vpack.c.b16 %v3267, %v3263
        %v3312 = vpack.c.b16 %v3268, %v3264
        %v3313 = vpack.c.b16 %v3269, %v3265
        %v3314 = vpack.c.b16 %v3274, %v3270
        %v3315 = vpack.c.b16 %v3275, %v3271
        %v3316 = vpack.c.b16 %v3276, %v3272
        %v3317 = vpack.c.b16 %v3277, %v3273
        %v3318 = vpack.c.b16 %v3282, %v3278
        %v3319 = vpack.c.b16 %v3283, %v3279
        %v3320 = vpack.c.b16 %v3284, %v3280
        %v3321 = vpack.c.b16 %v3285, %v3281
        %v3322 = vpack.c.b16 %v3290, %v3286
        %v3323 = vpack.c.b16 %v3291, %v3287
        %v3324 = vpack.c.b16 %v3292, %v3288
        %v3325 = vpack.c.b16 %v3293, %v3289
        %3358 = vmatprep.subr.bf16.mxu0 %v3295
        %3359 = vmatpush1.bf16.msra.mxu0 %v3294
        %3360 = vmatprep.subr.bf16.mxu0 %v3299
        %3361 = vmatpush1.bf16.msra.mxu0 %v3298
        %3362 = vmatprep.subr.bf16.mxu0 %v3303
        %3363 = vmatpush1.bf16.msra.mxu0 %v3302
        %3364 = vmatprep.subr.bf16.mxu0 %v3307
        %3365 = vmatpush1.bf16.msra.mxu0 %v3306
        %3366 = vmatprep.subr.bf16.mxu0 %v3311
        %3367 = vmatpush1.bf16.msra.mxu0 %v3310
        %3368 = vmatprep.subr.bf16.mxu0 %v3315
        %3369 = vmatpush1.bf16.msra.mxu0 %v3314
        %3370 = vmatprep.subr.bf16.mxu0 %v3319
        %3371 = vmatpush1.bf16.msra.mxu0 %v3318
        %3372 = vmatprep.subr.bf16.mxu0 %v3323
        %3373 = vmatpush1.bf16.msra.mxu0 %v3322
        %3374 = vmatprep.subr.bf16.mxu0 0
        %3375 = vmatpush1.bf16.msra.mxu0 0
        %3376 = vmatprep.subr.bf16.mxu0 0
        %3377 = vmatpush1.bf16.msra.mxu0 0
        %3378 = vmatprep.subr.bf16.mxu0 0
        %3379 = vmatpush1.bf16.msra.mxu0 0
        %3380 = vmatprep.subr.bf16.mxu0 0
        %3381 = vmatpush1.bf16.msra.mxu0 0
        %3382 = vmatprep.subr.bf16.mxu0 0
        %3383 = vmatpush1.bf16.msra.mxu0 0
        %3384 = vmatprep.subr.bf16.mxu0 0
        %3385 = vmatpush1.bf16.msra.mxu0 0
        %3386 = vmatprep.subr.bf16.mxu0 0
        %3387 = vmatpush1.bf16.msra.mxu0 0
        %3388 = vmatprep.subr.bf16.mxu0 0
        %3389 = vmatpush1.bf16.msra.mxu0 0
        %3390 = vmatprep.mubr.bf16.mxu0 0
        %3391 = vmatmul.mubr.bf16.gmra.mrb[0].mxu0 %v3163
        %v3392 = vpop.f32.mrb[0].mxu0
        %v3393 = vadd.f32 0.0, %v3392
        %v3394 = vpop.f32.mrb[0].mxu0
        %v3395 = vadd.f32 0.0, %v3394
        %v3396 = vpop.f32.mrb[0].mxu0
        %v3397 = vadd.f32 0.0, %v3396
        %v3398 = vpop.f32.mrb[0].mxu0
        %v3399 = vadd.f32 0.0, %v3398
        %3400 = vmatprep.mubr.bf16.mxu0 0
        %3401 = vmatmul.mubr.bf16.gmra.mrb[0].mxu0 %v3164
        %v3402 = vpop.f32.mrb[0].mxu0
        %v3403 = vadd.f32 0.0, %v3402
        %v3404 = vpop.f32.mrb[0].mxu0
        %v3405 = vadd.f32 0.0, %v3404
        %v3406 = vpop.f32.mrb[0].mxu0
        %v3407 = vadd.f32 0.0, %v3406
        %v3408 = vpop.f32.mrb[0].mxu0
        %v3409 = vadd.f32 0.0, %v3408
        %3410 = vdwg.mxu0
        %3411 = vmatprep.subr.bf16.mxu0 %v3297
        %3412 = vmatpush1.bf16.msra.mxu0 %v3296
        %3413 = vmatprep.subr.bf16.mxu0 %v3301
        %3414 = vmatpush1.bf16.msra.mxu0 %v3300
        %3415 = vmatprep.subr.bf16.mxu0 %v3305
        %3416 = vmatpush1.bf16.msra.mxu0 %v3304
        %3417 = vmatprep.subr.bf16.mxu0 %v3309
        %3418 = vmatpush1.bf16.msra.mxu0 %v3308
        %3419 = vmatprep.subr.bf16.mxu0 %v3313
        %3420 = vmatpush1.bf16.msra.mxu0 %v3312
        %3421 = vmatprep.subr.bf16.mxu0 %v3317
        %3422 = vmatpush1.bf16.msra.mxu0 %v3316
        %3423 = vmatprep.subr.bf16.mxu0 %v3321
        %3424 = vmatpush1.bf16.msra.mxu0 %v3320
        %3425 = vmatprep.subr.bf16.mxu0 %v3325
        %3426 = vmatpush1.bf16.msra.mxu0 %v3324
        %3427 = vmatprep.subr.bf16.mxu0 0
        %3428 = vmatpush1.bf16.msra.mxu0 0
        %3429 = vmatprep.subr.bf16.mxu0 0
        %3430 = vmatpush1.bf16.msra.mxu0 0
        %3431 = vmatprep.subr.bf16.mxu0 0
        %3432 = vmatpush1.bf16.msra.mxu0 0
        %3433 = vmatprep.subr.bf16.mxu0 0
        %3434 = vmatpush1.bf16.msra.mxu0 0
        %3435 = vmatprep.subr.bf16.mxu0 0
        %3436 = vmatpush1.bf16.msra.mxu0 0
        %3437 = vmatprep.subr.bf16.mxu0 0
        %3438 = vmatpush1.bf16.msra.mxu0 0
        %3439 = vmatprep.subr.bf16.mxu0 0
        %3440 = vmatpush1.bf16.msra.mxu0 0
        %3441 = vmatprep.subr.bf16.mxu0 0
        %3442 = vmatpush1.bf16.msra.mxu0 0
        %3443 = vmatprep.mubr.bf16.mxu0 0
        %3444 = vmatmul.mubr.bf16.gmra.mrb[0].mxu0 %v3163
        %v3445 = vpop.f32.mrb[0].mxu0
        %v3446 = vadd.f32 0.0, %v3445
        %v3447 = vpop.f32.mrb[0].mxu0
        %v3448 = vadd.f32 0.0, %v3447
        %v3449 = vpop.f32.mrb[0].mxu0
        %v3450 = vadd.f32 0.0, %v3449
        %v3451 = vpop.f32.mrb[0].mxu0
        %v3452 = vadd.f32 0.0, %v3451
        %3453 = vmatprep.mubr.bf16.mxu0 0
        %3454 = vmatmul.mubr.bf16.gmra.mrb[0].mxu0 %v3164
        %v3455 = vpop.f32.mrb[0].mxu0
        %v3456 = vadd.f32 0.0, %v3455
        %v3457 = vpop.f32.mrb[0].mxu0
        %v3458 = vadd.f32 0.0, %v3457
        %v3459 = vpop.f32.mrb[0].mxu0
        %v3460 = vadd.f32 0.0, %v3459
        %v3461 = vpop.f32.mrb[0].mxu0
        %v3462 = vadd.f32 0.0, %v3461
        %3463 = vdwg.mxu0
        %v3496 = vunpack.c.l.b16 %v3127
        %v3497 = vunpack.c.h.b16 %v3127
        %v3498 = vunpack.c.l.b16 %v3128
        %v3499 = vunpack.c.h.b16 %v3128
        %v3500 = vunpack.c.l.b16 %v3129
        %v3501 = vunpack.c.h.b16 %v3129
        %v3502 = vunpack.c.l.b16 %v3130
        %v3503 = vunpack.c.h.b16 %v3130
        %v3504 = vunpack.c.l.b16 %v3131
        %v3505 = vunpack.c.h.b16 %v3131
        %v3506 = vunpack.c.l.b16 %v3132
        %v3507 = vunpack.c.h.b16 %v3132
        %v3508 = vunpack.c.l.b16 %v3133
        %v3509 = vunpack.c.h.b16 %v3133
        %v3510 = vunpack.c.l.b16 %v3134
        %v3511 = vunpack.c.h.b16 %v3134
        %v3512 = vunpack.c.l.b16 %v3135
        %v3513 = vunpack.c.h.b16 %v3135
        %v3514 = vunpack.c.l.b16 %v3136
        %v3515 = vunpack.c.h.b16 %v3136
        %v3516 = vunpack.c.l.b16 %v3137
        %v3517 = vunpack.c.h.b16 %v3137
        %v3518 = vunpack.c.l.b16 %v3138
        %v3519 = vunpack.c.h.b16 %v3138
        %v3520 = vunpack.c.l.b16 %v3139
        %v3521 = vunpack.c.h.b16 %v3139
        %v3522 = vunpack.c.l.b16 %v3140
        %v3523 = vunpack.c.h.b16 %v3140
        %v3524 = vunpack.c.l.b16 %v3141
        %v3525 = vunpack.c.h.b16 %v3141
        %v3526 = vunpack.c.l.b16 %v3142
        %v3527 = vunpack.c.h.b16 %v3142
        %v3528 = vunpack.c.l.b16 %v3143
        %v3529 = vunpack.c.h.b16 %v3143
        %v3530 = vunpack.c.l.b16 %v3144
        %v3531 = vunpack.c.h.b16 %v3144
        %v3532 = vunpack.c.l.b16 %v3145
        %v3533 = vunpack.c.h.b16 %v3145
        %v3534 = vunpack.c.l.b16 %v3146
        %v3535 = vunpack.c.h.b16 %v3146
        %v3536 = vunpack.c.l.b16 %v3147
        %v3537 = vunpack.c.h.b16 %v3147
        %v3538 = vunpack.c.l.b16 %v3148
        %v3539 = vunpack.c.h.b16 %v3148
        %v3540 = vunpack.c.l.b16 %v3149
        %v3541 = vunpack.c.h.b16 %v3149
        %v3542 = vunpack.c.l.b16 %v3150
        %v3543 = vunpack.c.h.b16 %v3150
        %v3544 = vunpack.c.l.b16 %v3151
        %v3545 = vunpack.c.h.b16 %v3151
        %v3546 = vunpack.c.l.b16 %v3152
        %v3547 = vunpack.c.h.b16 %v3152
        %v3548 = vunpack.c.l.b16 %v3153
        %v3549 = vunpack.c.h.b16 %v3153
        %v3550 = vunpack.c.l.b16 %v3154
        %v3551 = vunpack.c.h.b16 %v3154
        %v3552 = vunpack.c.l.b16 %v3155
        %v3553 = vunpack.c.h.b16 %v3155
        %v3554 = vunpack.c.l.b16 %v3156
        %v3555 = vunpack.c.h.b16 %v3156
        %v3556 = vunpack.c.l.b16 %v3157
        %v3557 = vunpack.c.h.b16 %v3157
        %v3558 = vunpack.c.l.b16 %v3158
        %v3559 = vunpack.c.h.b16 %v3158
        %v3560 = vpack.c.b16 %v3500, %v3496
        %v3561 = vpack.c.b16 %v3501, %v3497
        %v3562 = vpack.c.b16 %v3502, %v3498
        %v3563 = vpack.c.b16 %v3503, %v3499
        %v3564 = vpack.c.b16 %v3508, %v3504
        %v3565 = vpack.c.b16 %v3509, %v3505
        %v3566 = vpack.c.b16 %v3510, %v3506
        %v3567 = vpack.c.b16 %v3511, %v3507
        %v3568 = vpack.c.b16 %v3516, %v3512
        %v3569 = vpack.c.b16 %v3517, %v3513
        %v3570 = vpack.c.b16 %v3518, %v3514
        %v3571 = vpack.c.b16 %v3519, %v3515
        %v3572 = vpack.c.b16 %v3524, %v3520
        %v3573 = vpack.c.b16 %v3525, %v3521
        %v3574 = vpack.c.b16 %v3526, %v3522
        %v3575 = vpack.c.b16 %v3527, %v3523
        %v3576 = vpack.c.b16 %v3532, %v3528
        %v3577 = vpack.c.b16 %v3533, %v3529
        %v3578 = vpack.c.b16 %v3534, %v3530
        %v3579 = vpack.c.b16 %v3535, %v3531
        %v3580 = vpack.c.b16 %v3540, %v3536
        %v3581 = vpack.c.b16 %v3541, %v3537
        %v3582 = vpack.c.b16 %v3542, %v3538
        %v3583 = vpack.c.b16 %v3543, %v3539
        %v3584 = vpack.c.b16 %v3548, %v3544
        %v3585 = vpack.c.b16 %v3549, %v3545
        %v3586 = vpack.c.b16 %v3550, %v3546
        %v3587 = vpack.c.b16 %v3551, %v3547
        %v3588 = vpack.c.b16 %v3556, %v3552
        %v3589 = vpack.c.b16 %v3557, %v3553
        %v3590 = vpack.c.b16 %v3558, %v3554
        %v3591 = vpack.c.b16 %v3559, %v3555
        %3624 = vmatprep.subr.bf16.mxu0 %v3561
        %3625 = vmatpush1.bf16.msra.mxu0 %v3560
        %3626 = vmatprep.subr.bf16.mxu0 %v3565
        %3627 = vmatpush1.bf16.msra.mxu0 %v3564
        %3628 = vmatprep.subr.bf16.mxu0 %v3569
        %3629 = vmatpush1.bf16.msra.mxu0 %v3568
        %3630 = vmatprep.subr.bf16.mxu0 %v3573
        %3631 = vmatpush1.bf16.msra.mxu0 %v3572
        %3632 = vmatprep.subr.bf16.mxu0 %v3577
        %3633 = vmatpush1.bf16.msra.mxu0 %v3576
        %3634 = vmatprep.subr.bf16.mxu0 %v3581
        %3635 = vmatpush1.bf16.msra.mxu0 %v3580
        %3636 = vmatprep.subr.bf16.mxu0 %v3585
        %3637 = vmatpush1.bf16.msra.mxu0 %v3584
        %3638 = vmatprep.subr.bf16.mxu0 %v3589
        %3639 = vmatpush1.bf16.msra.mxu0 %v3588
        %3640 = vmatprep.subr.bf16.mxu0 0
        %3641 = vmatpush1.bf16.msra.mxu0 0
        %3642 = vmatprep.subr.bf16.mxu0 0
        %3643 = vmatpush1.bf16.msra.mxu0 0
        %3644 = vmatprep.subr.bf16.mxu0 0
        %3645 = vmatpush1.bf16.msra.mxu0 0
        %3646 = vmatprep.subr.bf16.mxu0 0
        %3647 = vmatpush1.bf16.msra.mxu0 0
        %3648 = vmatprep.subr.bf16.mxu0 0
        %3649 = vmatpush1.bf16.msra.mxu0 0
        %3650 = vmatprep.subr.bf16.mxu0 0
        %3651 = vmatpush1.bf16.msra.mxu0 0
        %3652 = vmatprep.subr.bf16.mxu0 0
        %3653 = vmatpush1.bf16.msra.mxu0 0
        %3654 = vmatprep.subr.bf16.mxu0 0
        %3655 = vmatpush1.bf16.msra.mxu0 0
        %3656 = vmatprep.mubr.bf16.mxu0 0
        %3657 = vmatmul.mubr.bf16.gmra.mrb[0].mxu0 %v3125
        %v3658 = vpop.f32.mrb[0].mxu0
        %v3659 = vadd.f32 %v3393, %v3658
        %v3660 = vpop.f32.mrb[0].mxu0
        %v3661 = vadd.f32 %v3395, %v3660
        %v3662 = vpop.f32.mrb[0].mxu0
        %v3663 = vadd.f32 %v3397, %v3662
        %v3664 = vpop.f32.mrb[0].mxu0
        %v3665 = vadd.f32 %v3399, %v3664
        %3666 = vmatprep.mubr.bf16.mxu0 0
        %3667 = vmatmul.mubr.bf16.gmra.mrb[0].mxu0 %v3126
        %v3668 = vpop.f32.mrb[0].mxu0
        %v3669 = vadd.f32 %v3403, %v3668
        %v3670 = vpop.f32.mrb[0].mxu0
        %v3671 = vadd.f32 %v3405, %v3670
        %v3672 = vpop.f32.mrb[0].mxu0
        %v3673 = vadd.f32 %v3407, %v3672
        %v3674 = vpop.f32.mrb[0].mxu0
        %v3675 = vadd.f32 %v3409, %v3674
        %3676 = vdwg.mxu0
        %3677 = vmatprep.subr.bf16.mxu0 %v3563
        %3678 = vmatpush1.bf16.msra.mxu0 %v3562
        %3679 = vmatprep.subr.bf16.mxu0 %v3567
        %3680 = vmatpush1.bf16.msra.mxu0 %v3566
        %3681 = vmatprep.subr.bf16.mxu0 %v3571
        %3682 = vmatpush1.bf16.msra.mxu0 %v3570
        %3683 = vmatprep.subr.bf16.mxu0 %v3575
        %3684 = vmatpush1.bf16.msra.mxu0 %v3574
        %3685 = vmatprep.subr.bf16.mxu0 %v3579
        %3686 = vmatpush1.bf16.msra.mxu0 %v3578
        %3687 = vmatprep.subr.bf16.mxu0 %v3583
        %3688 = vmatpush1.bf16.msra.mxu0 %v3582
        %3689 = vmatprep.subr.bf16.mxu0 %v3587
        %3690 = vmatpush1.bf16.msra.mxu0 %v3586
        %3691 = vmatprep.subr.bf16.mxu0 %v3591
        %3692 = vmatpush1.bf16.msra.mxu0 %v3590
        %3693 = vmatprep.subr.bf16.mxu0 0
        %3694 = vmatpush1.bf16.msra.mxu0 0
        %3695 = vmatprep.subr.bf16.mxu0 0
        %3696 = vmatpush1.bf16.msra.mxu0 0
        %3697 = vmatprep.subr.bf16.mxu0 0
        %3698 = vmatpush1.bf16.msra.mxu0 0
        %3699 = vmatprep.subr.bf16.mxu0 0
        %3700 = vmatpush1.bf16.msra.mxu0 0
        %3701 = vmatprep.subr.bf16.mxu0 0
        %3702 = vmatpush1.bf16.msra.mxu0 0
        %3703 = vmatprep.subr.bf16.mxu0 0
        %3704 = vmatpush1.bf16.msra.mxu0 0
        %3705 = vmatprep.subr.bf16.mxu0 0
        %3706 = vmatpush1.bf16.msra.mxu0 0
        %3707 = vmatprep.subr.bf16.mxu0 0
        %3708 = vmatpush1.bf16.msra.mxu0 0
        %3709 = vmatprep.mubr.bf16.mxu0 0
        %3710 = vmatmul.mubr.bf16.gmra.mrb[0].mxu0 %v3125
        %v3711 = vpop.f32.mrb[0].mxu0
        %v3712 = vadd.f32 %v3446, %v3711
        %v3713 = vpop.f32.mrb[0].mxu0
        %v3714 = vadd.f32 %v3448, %v3713
        %v3715 = vpop.f32.mrb[0].mxu0
        %v3716 = vadd.f32 %v3450, %v3715
        %v3717 = vpop.f32.mrb[0].mxu0
        %v3718 = vadd.f32 %v3452, %v3717
        %3719 = vmatprep.mubr.bf16.mxu0 0
        %3720 = vmatmul.mubr.bf16.gmra.mrb[0].mxu0 %v3126
        %v3721 = vpop.f32.mrb[0].mxu0
        %v3722 = vadd.f32 %v3456, %v3721
        %v3723 = vpop.f32.mrb[0].mxu0
        %v3724 = vadd.f32 %v3458, %v3723
        %v3725 = vpop.f32.mrb[0].mxu0
        %v3726 = vadd.f32 %v3460, %v3725
        %v3727 = vpop.f32.mrb[0].mxu0
        %v3728 = vadd.f32 %v3462, %v3727
        %3729 = vdwg.mxu0
        %v3730 = vld [vmem:[#allocation3 + $0x2] sm:$0xff]
        %v3731 = vld [vmem:[#allocation3 + $0xa] sm:$0xff]
        %v3732 = vld [vmem:[#allocation3 + $0x1a] sm:$0xff]
        %v3733 = vld [vmem:[#allocation3 + $0x22] sm:$0xff]
        %v3734 = vpack.c.bf16 %v3731, %v3730
        %v3735 = vpack.c.bf16 %v3733, %v3732
        %s3736 = scalar_lea.vmem %s6, 512
        %v3737 = vld [vmem:[%s3736] sm:$0xff]
        %v3738 = vld [vmem:[%s3736 + $0x8] sm:$0xff]
        %v3739 = vld [vmem:[%s3736 + $0x10] sm:$0xff]
        %v3740 = vld [vmem:[%s3736 + $0x18] sm:$0xff]
        %v3741 = vld [vmem:[%s3736 + $0x20] sm:$0xff]
        %v3742 = vld [vmem:[%s3736 + $0x28] sm:$0xff]
        %v3743 = vld [vmem:[%s3736 + $0x30] sm:$0xff]
        %v3744 = vld [vmem:[%s3736 + $0x38] sm:$0xff]
        %v3745 = vld [vmem:[%s3736 + $0x40] sm:$0xff]
        %v3746 = vld [vmem:[%s3736 + $0x48] sm:$0xff]
        %v3747 = vld [vmem:[%s3736 + $0x50] sm:$0xff]
        %v3748 = vld [vmem:[%s3736 + $0x58] sm:$0xff]
        %v3749 = vld [vmem:[%s3736 + $0x60] sm:$0xff]
        %v3750 = vld [vmem:[%s3736 + $0x68] sm:$0xff]
        %v3751 = vld [vmem:[%s3736 + $0x70] sm:$0xff]
        %v3752 = vld [vmem:[%s3736 + $0x78] sm:$0xff]
        %v3753 = vld [vmem:[%s3736 + $0x80] sm:$0xff]
        %v3754 = vld [vmem:[%s3736 + $0x88] sm:$0xff]
        %v3755 = vld [vmem:[%s3736 + $0x90] sm:$0xff]
        %v3756 = vld [vmem:[%s3736 + $0x98] sm:$0xff]
        %v3757 = vld [vmem:[%s3736 + $0xa0] sm:$0xff]
        %v3758 = vld [vmem:[%s3736 + $0xa8] sm:$0xff]
        %v3759 = vld [vmem:[%s3736 + $0xb0] sm:$0xff]
        %v3760 = vld [vmem:[%s3736 + $0xb8] sm:$0xff]
        %v3761 = vld [vmem:[%s3736 + $0xc0] sm:$0xff]
        %v3762 = vld [vmem:[%s3736 + $0xc8] sm:$0xff]
        %v3763 = vld [vmem:[%s3736 + $0xd0] sm:$0xff]
        %v3764 = vld [vmem:[%s3736 + $0xd8] sm:$0xff]
        %v3765 = vld [vmem:[%s3736 + $0xe0] sm:$0xff]
        %v3766 = vld [vmem:[%s3736 + $0xe8] sm:$0xff]
        %v3767 = vld [vmem:[%s3736 + $0xf0] sm:$0xff]
        %v3768 = vld [vmem:[%s3736 + $0xf8] sm:$0xff]
        %v3801 = vunpack.c.l.b16 %v3737
        %v3802 = vunpack.c.h.b16 %v3737
        %v3803 = vunpack.c.l.b16 %v3738
        %v3804 = vunpack.c.h.b16 %v3738
        %v3805 = vunpack.c.l.b16 %v3739
        %v3806 = vunpack.c.h.b16 %v3739
        %v3807 = vunpack.c.l.b16 %v3740
        %v3808 = vunpack.c.h.b16 %v3740
        %v3809 = vunpack.c.l.b16 %v3741
        %v3810 = vunpack.c.h.b16 %v3741
        %v3811 = vunpack.c.l.b16 %v3742
        %v3812 = vunpack.c.h.b16 %v3742
        %v3813 = vunpack.c.l.b16 %v3743
        %v3814 = vunpack.c.h.b16 %v3743
        %v3815 = vunpack.c.l.b16 %v3744
        %v3816 = vunpack.c.h.b16 %v3744
        %v3817 = vunpack.c.l.b16 %v3745
        %v3818 = vunpack.c.h.b16 %v3745
        %v3819 = vunpack.c.l.b16 %v3746
        %v3820 = vunpack.c.h.b16 %v3746
        %v3821 = vunpack.c.l.b16 %v3747
        %v3822 = vunpack.c.h.b16 %v3747
        %v3823 = vunpack.c.l.b16 %v3748
        %v3824 = vunpack.c.h.b16 %v3748
        %v3825 = vunpack.c.l.b16 %v3749
        %v3826 = vunpack.c.h.b16 %v3749
        %v3827 = vunpack.c.l.b16 %v3750
        %v3828 = vunpack.c.h.b16 %v3750
        %v3829 = vunpack.c.l.b16 %v3751
        %v3830 = vunpack.c.h.b16 %v3751
        %v3831 = vunpack.c.l.b16 %v3752
        %v3832 = vunpack.c.h.b16 %v3752
        %v3833 = vunpack.c.l.b16 %v3753
        %v3834 = vunpack.c.h.b16 %v3753
        %v3835 = vunpack.c.l.b16 %v3754
        %v3836 = vunpack.c.h.b16 %v3754
        %v3837 = vunpack.c.l.b16 %v3755
        %v3838 = vunpack.c.h.b16 %v3755
        %v3839 = vunpack.c.l.b16 %v3756
        %v3840 = vunpack.c.h.b16 %v3756
        %v3841 = vunpack.c.l.b16 %v3757
        %v3842 = vunpack.c.h.b16 %v3757
        %v3843 = vunpack.c.l.b16 %v3758
        %v3844 = vunpack.c.h.b16 %v3758
        %v3845 = vunpack.c.l.b16 %v3759
        %v3846 = vunpack.c.h.b16 %v3759
        %v3847 = vunpack.c.l.b16 %v3760
        %v3848 = vunpack.c.h.b16 %v3760
        %v3849 = vunpack.c.l.b16 %v3761
        %v3850 = vunpack.c.h.b16 %v3761
        %v3851 = vunpack.c.l.b16 %v3762
        %v3852 = vunpack.c.h.b16 %v3762
        %v3853 = vunpack.c.l.b16 %v3763
        %v3854 = vunpack.c.h.b16 %v3763
        %v3855 = vunpack.c.l.b16 %v3764
        %v3856 = vunpack.c.h.b16 %v3764
        %v3857 = vunpack.c.l.b16 %v3765
        %v3858 = vunpack.c.h.b16 %v3765
        %v3859 = vunpack.c.l.b16 %v3766
        %v3860 = vunpack.c.h.b16 %v3766
        %v3861 = vunpack.c.l.b16 %v3767
        %v3862 = vunpack.c.h.b16 %v3767
        %v3863 = vunpack.c.l.b16 %v3768
        %v3864 = vunpack.c.h.b16 %v3768
        %v3865 = vpack.c.b16 %v3805, %v3801
        %v3866 = vpack.c.b16 %v3806, %v3802
        %v3867 = vpack.c.b16 %v3807, %v3803
        %v3868 = vpack.c.b16 %v3808, %v3804
        %v3869 = vpack.c.b16 %v3813, %v3809
        %v3870 = vpack.c.b16 %v3814, %v3810
        %v3871 = vpack.c.b16 %v3815, %v3811
        %v3872 = vpack.c.b16 %v3816, %v3812
        %v3873 = vpack.c.b16 %v3821, %v3817
        %v3874 = vpack.c.b16 %v3822, %v3818
        %v3875 = vpack.c.b16 %v3823, %v3819
        %v3876 = vpack.c.b16 %v3824, %v3820
        %v3877 = vpack.c.b16 %v3829, %v3825
        %v3878 = vpack.c.b16 %v3830, %v3826
        %v3879 = vpack.c.b16 %v3831, %v3827
        %v3880 = vpack.c.b16 %v3832, %v3828
        %v3881 = vpack.c.b16 %v3837, %v3833
        %v3882 = vpack.c.b16 %v3838, %v3834
        %v3883 = vpack.c.b16 %v3839, %v3835
        %v3884 = vpack.c.b16 %v3840, %v3836
        %v3885 = vpack.c.b16 %v3845, %v3841
        %v3886 = vpack.c.b16 %v3846, %v3842
        %v3887 = vpack.c.b16 %v3847, %v3843
        %v3888 = vpack.c.b16 %v3848, %v3844
        %v3889 = vpack.c.b16 %v3853, %v3849
        %v3890 = vpack.c.b16 %v3854, %v3850
        %v3891 = vpack.c.b16 %v3855, %v3851
        %v3892 = vpack.c.b16 %v3856, %v3852
        %v3893 = vpack.c.b16 %v3861, %v3857
        %v3894 = vpack.c.b16 %v3862, %v3858
        %v3895 = vpack.c.b16 %v3863, %v3859
        %v3896 = vpack.c.b16 %v3864, %v3860
        %3929 = vmatprep.subr.bf16.mxu0 %v3866
        %3930 = vmatpush1.bf16.msra.mxu0 %v3865
        %3931 = vmatprep.subr.bf16.mxu0 %v3870
        %3932 = vmatpush1.bf16.msra.mxu0 %v3869
        %3933 = vmatprep.subr.bf16.mxu0 %v3874
        %3934 = vmatpush1.bf16.msra.mxu0 %v3873
        %3935 = vmatprep.subr.bf16.mxu0 %v3878
        %3936 = vmatpush1.bf16.msra.mxu0 %v3877
        %3937 = vmatprep.subr.bf16.mxu0 %v3882
        %3938 = vmatpush1.bf16.msra.mxu0 %v3881
        %3939 = vmatprep.subr.bf16.mxu0 %v3886
        %3940 = vmatpush1.bf16.msra.mxu0 %v3885
        %3941 = vmatprep.subr.bf16.mxu0 %v3890
        %3942 = vmatpush1.bf16.msra.mxu0 %v3889
        %3943 = vmatprep.subr.bf16.mxu0 %v3894
        %3944 = vmatpush1.bf16.msra.mxu0 %v3893
        %3945 = vmatprep.subr.bf16.mxu0 0
        %3946 = vmatpush1.bf16.msra.mxu0 0
        %3947 = vmatprep.subr.bf16.mxu0 0
        %3948 = vmatpush1.bf16.msra.mxu0 0
        %3949 = vmatprep.subr.bf16.mxu0 0
        %3950 = vmatpush1.bf16.msra.mxu0 0
        %3951 = vmatprep.subr.bf16.mxu0 0
        %3952 = vmatpush1.bf16.msra.mxu0 0
        %3953 = vmatprep.subr.bf16.mxu0 0
        %3954 = vmatpush1.bf16.msra.mxu0 0
        %3955 = vmatprep.subr.bf16.mxu0 0
        %3956 = vmatpush1.bf16.msra.mxu0 0
        %3957 = vmatprep.subr.bf16.mxu0 0
        %3958 = vmatpush1.bf16.msra.mxu0 0
        %3959 = vmatprep.subr.bf16.mxu0 0
        %3960 = vmatpush1.bf16.msra.mxu0 0
        %3961 = vmatprep.mubr.bf16.mxu0 0
        %3962 = vmatmul.mubr.bf16.gmra.mrb[0].mxu0 %v3734
        %v3963 = vpop.f32.mrb[0].mxu0
        %v3964 = vadd.f32 0.0, %v3963
        %v3965 = vpop.f32.mrb[0].mxu0
        %v3966 = vadd.f32 0.0, %v3965
        %v3967 = vpop.f32.mrb[0].mxu0
        %v3968 = vadd.f32 0.0, %v3967
        %v3969 = vpop.f32.mrb[0].mxu0
        %v3970 = vadd.f32 0.0, %v3969
        %3971 = vmatprep.mubr.bf16.mxu0 0
        %3972 = vmatmul.mubr.bf16.gmra.mrb[0].mxu0 %v3735
        %v3973 = vpop.f32.mrb[0].mxu0
        %v3974 = vadd.f32 0.0, %v3973
        %v3975 = vpop.f32.mrb[0].mxu0
        %v3976 = vadd.f32 0.0, %v3975
        %v3977 = vpop.f32.mrb[0].mxu0
        %v3978 = vadd.f32 0.0, %v3977
        %v3979 = vpop.f32.mrb[0].mxu0
        %v3980 = vadd.f32 0.0, %v3979
        %3981 = vdwg.mxu0
        %3982 = vmatprep.subr.bf16.mxu0 %v3868
        %3983 = vmatpush1.bf16.msra.mxu0 %v3867
        %3984 = vmatprep.subr.bf16.mxu0 %v3872
        %3985 = vmatpush1.bf16.msra.mxu0 %v3871
        %3986 = vmatprep.subr.bf16.mxu0 %v3876
        %3987 = vmatpush1.bf16.msra.mxu0 %v3875
        %3988 = vmatprep.subr.bf16.mxu0 %v3880
        %3989 = vmatpush1.bf16.msra.mxu0 %v3879
        %3990 = vmatprep.subr.bf16.mxu0 %v3884
        %3991 = vmatpush1.bf16.msra.mxu0 %v3883
        %3992 = vmatprep.subr.bf16.mxu0 %v3888
        %3993 = vmatpush1.bf16.msra.mxu0 %v3887
        %3994 = vmatprep.subr.bf16.mxu0 %v3892
        %3995 = vmatpush1.bf16.msra.mxu0 %v3891
        %3996 = vmatprep.subr.bf16.mxu0 %v3896
        %3997 = vmatpush1.bf16.msra.mxu0 %v3895
        %3998 = vmatprep.subr.bf16.mxu0 0
        %3999 = vmatpush1.bf16.msra.mxu0 0
        %4000 = vmatprep.subr.bf16.mxu0 0
        %4001 = vmatpush1.bf16.msra.mxu0 0
        %4002 = vmatprep.subr.bf16.mxu0 0
        %4003 = vmatpush1.bf16.msra.mxu0 0
        %4004 = vmatprep.subr.bf16.mxu0 0
        %4005 = vmatpush1.bf16.msra.mxu0 0
        %4006 = vmatprep.subr.bf16.mxu0 0
        %4007 = vmatpush1.bf16.msra.mxu0 0
        %4008 = vmatprep.subr.bf16.mxu0 0
        %4009 = vmatpush1.bf16.msra.mxu0 0
        %4010 = vmatprep.subr.bf16.mxu0 0
        %4011 = vmatpush1.bf16.msra.mxu0 0
        %4012 = vmatprep.subr.bf16.mxu0 0
        %4013 = vmatpush1.bf16.msra.mxu0 0
        %4014 = vmatprep.mubr.bf16.mxu0 0
        %4015 = vmatmul.mubr.bf16.gmra.mrb[0].mxu0 %v3734
        %v4016 = vpop.f32.mrb[0].mxu0
        %v4017 = vadd.f32 0.0, %v4016
        %v4018 = vpop.f32.mrb[0].mxu0
        %v4019 = vadd.f32 0.0, %v4018
        %v4020 = vpop.f32.mrb[0].mxu0
        %v4021 = vadd.f32 0.0, %v4020
        %v4022 = vpop.f32.mrb[0].mxu0
        %v4023 = vadd.f32 0.0, %v4022
        %4024 = vmatprep.mubr.bf16.mxu0 0
        %4025 = vmatmul.mubr.bf16.gmra.mrb[0].mxu0 %v3735
        %v4026 = vpop.f32.mrb[0].mxu0
        %v4027 = vadd.f32 0.0, %v4026
        %v4028 = vpop.f32.mrb[0].mxu0
        %v4029 = vadd.f32 0.0, %v4028
        %v4030 = vpop.f32.mrb[0].mxu0
        %v4031 = vadd.f32 0.0, %v4030
        %v4032 = vpop.f32.mrb[0].mxu0
        %v4033 = vadd.f32 0.0, %v4032
        %4034 = vdwg.mxu0
        %v4035 = vadd.f32 %v3659, %v3964
        %v4036 = vadd.f32 %v3661, %v3966
        %v4037 = vadd.f32 %v3712, %v4017
        %v4038 = vadd.f32 %v3714, %v4019
        %v4039 = vadd.f32 %v3663, %v3968
        %v4040 = vadd.f32 %v3665, %v3970
        %v4041 = vadd.f32 %v3716, %v4021
        %v4042 = vadd.f32 %v3718, %v4023
        %v4043 = vadd.f32 %v3669, %v3974
        %v4044 = vadd.f32 %v3671, %v3976
        %v4045 = vadd.f32 %v3722, %v4027
        %v4046 = vadd.f32 %v3724, %v4029
        %v4047 = vadd.f32 %v3673, %v3978
        %v4048 = vadd.f32 %v3675, %v3980
        %v4049 = vadd.f32 %v3726, %v4031
        %v4050 = vadd.f32 %v3728, %v4033
        %v4051 = vld [vmem:[#allocation5] sm:$0xff]
        %v4052 = vld [vmem:[#allocation5 + $0x8] sm:$0xff]
        %v4053 = vld [vmem:[#allocation5 + $0x18] sm:$0xff]
        %v4054 = vld [vmem:[#allocation5 + $0x20] sm:$0xff]
        %v4055 = vpack.c.bf16 %v4052, %v4051
        %v4056 = vpack.c.bf16 %v4054, %v4053
        %v4057 = vld [vmem:[%s7] sm:$0xff]
        %v4058 = vld [vmem:[%s7 + $0x8] sm:$0xff]
        %v4059 = vld [vmem:[%s7 + $0x10] sm:$0xff]
        %v4060 = vld [vmem:[%s7 + $0x18] sm:$0xff]
        %v4061 = vld [vmem:[%s7 + $0x20] sm:$0xff]
        %v4062 = vld [vmem:[%s7 + $0x28] sm:$0xff]
        %v4063 = vld [vmem:[%s7 + $0x30] sm:$0xff]
        %v4064 = vld [vmem:[%s7 + $0x38] sm:$0xff]
        %v4065 = vld [vmem:[%s7 + $0x40] sm:$0xff]
        %v4066 = vld [vmem:[%s7 + $0x48] sm:$0xff]
        %v4067 = vld [vmem:[%s7 + $0x50] sm:$0xff]
        %v4068 = vld [vmem:[%s7 + $0x58] sm:$0xff]
        %v4069 = vld [vmem:[%s7 + $0x60] sm:$0xff]
        %v4070 = vld [vmem:[%s7 + $0x68] sm:$0xff]
        %v4071 = vld [vmem:[%s7 + $0x70] sm:$0xff]
        %v4072 = vld [vmem:[%s7 + $0x78] sm:$0xff]
        %v4073 = vld [vmem:[%s7 + $0x80] sm:$0xff]
        %v4074 = vld [vmem:[%s7 + $0x88] sm:$0xff]
        %v4075 = vld [vmem:[%s7 + $0x90] sm:$0xff]
        %v4076 = vld [vmem:[%s7 + $0x98] sm:$0xff]
        %v4077 = vld [vmem:[%s7 + $0xa0] sm:$0xff]
        %v4078 = vld [vmem:[%s7 + $0xa8] sm:$0xff]
        %v4079 = vld [vmem:[%s7 + $0xb0] sm:$0xff]
        %v4080 = vld [vmem:[%s7 + $0xb8] sm:$0xff]
        %v4081 = vld [vmem:[%s7 + $0xc0] sm:$0xff]
        %v4082 = vld [vmem:[%s7 + $0xc8] sm:$0xff]
        %v4083 = vld [vmem:[%s7 + $0xd0] sm:$0xff]
        %v4084 = vld [vmem:[%s7 + $0xd8] sm:$0xff]
        %v4085 = vld [vmem:[%s7 + $0xe0] sm:$0xff]
        %v4086 = vld [vmem:[%s7 + $0xe8] sm:$0xff]
        %v4087 = vld [vmem:[%s7 + $0xf0] sm:$0xff]
        %v4088 = vld [vmem:[%s7 + $0xf8] sm:$0xff]
        %v4089 = vld [vmem:[#allocation5 + $0x1] sm:$0xff]
        %v4090 = vld [vmem:[#allocation5 + $0x9] sm:$0xff]
        %v4091 = vld [vmem:[#allocation5 + $0x19] sm:$0xff]
        %v4092 = vld [vmem:[#allocation5 + $0x21] sm:$0xff]
        %v4093 = vpack.c.bf16 %v4090, %v4089
        %v4094 = vpack.c.bf16 %v4092, %v4091
        %s4095 = scalar_lea.vmem %s7, 256
        %v4096 = vld [vmem:[%s4095] sm:$0xff]
        %v4097 = vld [vmem:[%s4095 + $0x8] sm:$0xff]
        %v4098 = vld [vmem:[%s4095 + $0x10] sm:$0xff]
        %v4099 = vld [vmem:[%s4095 + $0x18] sm:$0xff]
        %v4100 = vld [vmem:[%s4095 + $0x20] sm:$0xff]
        %v4101 = vld [vmem:[%s4095 + $0x28] sm:$0xff]
        %v4102 = vld [vmem:[%s4095 + $0x30] sm:$0xff]
        %v4103 = vld [vmem:[%s4095 + $0x38] sm:$0xff]
        %v4104 = vld [vmem:[%s4095 + $0x40] sm:$0xff]
        %v4105 = vld [vmem:[%s4095 + $0x48] sm:$0xff]
        %v4106 = vld [vmem:[%s4095 + $0x50] sm:$0xff]
        %v4107 = vld [vmem:[%s4095 + $0x58] sm:$0xff]
        %v4108 = vld [vmem:[%s4095 + $0x60] sm:$0xff]
        %v4109 = vld [vmem:[%s4095 + $0x68] sm:$0xff]
        %v4110 = vld [vmem:[%s4095 + $0x70] sm:$0xff]
        %v4111 = vld [vmem:[%s4095 + $0x78] sm:$0xff]
        %v4112 = vld [vmem:[%s4095 + $0x80] sm:$0xff]
        %v4113 = vld [vmem:[%s4095 + $0x88] sm:$0xff]
        %v4114 = vld [vmem:[%s4095 + $0x90] sm:$0xff]
        %v4115 = vld [vmem:[%s4095 + $0x98] sm:$0xff]
        %v4116 = vld [vmem:[%s4095 + $0xa0] sm:$0xff]
        %v4117 = vld [vmem:[%s4095 + $0xa8] sm:$0xff]
        %v4118 = vld [vmem:[%s4095 + $0xb0] sm:$0xff]
        %v4119 = vld [vmem:[%s4095 + $0xb8] sm:$0xff]
        %v4120 = vld [vmem:[%s4095 + $0xc0] sm:$0xff]
        %v4121 = vld [vmem:[%s4095 + $0xc8] sm:$0xff]
        %v4122 = vld [vmem:[%s4095 + $0xd0] sm:$0xff]
        %v4123 = vld [vmem:[%s4095 + $0xd8] sm:$0xff]
        %v4124 = vld [vmem:[%s4095 + $0xe0] sm:$0xff]
        %v4125 = vld [vmem:[%s4095 + $0xe8] sm:$0xff]
        %v4126 = vld [vmem:[%s4095 + $0xf0] sm:$0xff]
        %v4127 = vld [vmem:[%s4095 + $0xf8] sm:$0xff]
        %v4160 = vunpack.c.l.b16 %v4096
        %v4161 = vunpack.c.h.b16 %v4096
        %v4162 = vunpack.c.l.b16 %v4097
        %v4163 = vunpack.c.h.b16 %v4097
        %v4164 = vunpack.c.l.b16 %v4098
        %v4165 = vunpack.c.h.b16 %v4098
        %v4166 = vunpack.c.l.b16 %v4099
        %v4167 = vunpack.c.h.b16 %v4099
        %v4168 = vunpack.c.l.b16 %v4100
        %v4169 = vunpack.c.h.b16 %v4100
        %v4170 = vunpack.c.l.b16 %v4101
        %v4171 = vunpack.c.h.b16 %v4101
        %v4172 = vunpack.c.l.b16 %v4102
        %v4173 = vunpack.c.h.b16 %v4102
        %v4174 = vunpack.c.l.b16 %v4103
        %v4175 = vunpack.c.h.b16 %v4103
        %v4176 = vunpack.c.l.b16 %v4104
        %v4177 = vunpack.c.h.b16 %v4104
        %v4178 = vunpack.c.l.b16 %v4105
        %v4179 = vunpack.c.h.b16 %v4105
        %v4180 = vunpack.c.l.b16 %v4106
        %v4181 = vunpack.c.h.b16 %v4106
        %v4182 = vunpack.c.l.b16 %v4107
        %v4183 = vunpack.c.h.b16 %v4107
        %v4184 = vunpack.c.l.b16 %v4108
        %v4185 = vunpack.c.h.b16 %v4108
        %v4186 = vunpack.c.l.b16 %v4109
        %v4187 = vunpack.c.h.b16 %v4109
        %v4188 = vunpack.c.l.b16 %v4110
        %v4189 = vunpack.c.h.b16 %v4110
        %v4190 = vunpack.c.l.b16 %v4111
        %v4191 = vunpack.c.h.b16 %v4111
        %v4192 = vunpack.c.l.b16 %v4112
        %v4193 = vunpack.c.h.b16 %v4112
        %v4194 = vunpack.c.l.b16 %v4113
        %v4195 = vunpack.c.h.b16 %v4113
        %v4196 = vunpack.c.l.b16 %v4114
        %v4197 = vunpack.c.h.b16 %v4114
        %v4198 = vunpack.c.l.b16 %v4115
        %v4199 = vunpack.c.h.b16 %v4115
        %v4200 = vunpack.c.l.b16 %v4116
        %v4201 = vunpack.c.h.b16 %v4116
        %v4202 = vunpack.c.l.b16 %v4117
        %v4203 = vunpack.c.h.b16 %v4117
        %v4204 = vunpack.c.l.b16 %v4118
        %v4205 = vunpack.c.h.b16 %v4118
        %v4206 = vunpack.c.l.b16 %v4119
        %v4207 = vunpack.c.h.b16 %v4119
        %v4208 = vunpack.c.l.b16 %v4120
        %v4209 = vunpack.c.h.b16 %v4120
        %v4210 = vunpack.c.l.b16 %v4121
        %v4211 = vunpack.c.h.b16 %v4121
        %v4212 = vunpack.c.l.b16 %v4122
        %v4213 = vunpack.c.h.b16 %v4122
        %v4214 = vunpack.c.l.b16 %v4123
        %v4215 = vunpack.c.h.b16 %v4123
        %v4216 = vunpack.c.l.b16 %v4124
        %v4217 = vunpack.c.h.b16 %v4124
        %v4218 = vunpack.c.l.b16 %v4125
        %v4219 = vunpack.c.h.b16 %v4125
        %v4220 = vunpack.c.l.b16 %v4126
        %v4221 = vunpack.c.h.b16 %v4126
        %v4222 = vunpack.c.l.b16 %v4127
        %v4223 = vunpack.c.h.b16 %v4127
        %v4224 = vpack.c.b16 %v4164, %v4160
        %v4225 = vpack.c.b16 %v4165, %v4161
        %v4226 = vpack.c.b16 %v4166, %v4162
        %v4227 = vpack.c.b16 %v4167, %v4163
        %v4228 = vpack.c.b16 %v4172, %v4168
        %v4229 = vpack.c.b16 %v4173, %v4169
        %v4230 = vpack.c.b16 %v4174, %v4170
        %v4231 = vpack.c.b16 %v4175, %v4171
        %v4232 = vpack.c.b16 %v4180, %v4176
        %v4233 = vpack.c.b16 %v4181, %v4177
        %v4234 = vpack.c.b16 %v4182, %v4178
        %v4235 = vpack.c.b16 %v4183, %v4179
        %v4236 = vpack.c.b16 %v4188, %v4184
        %v4237 = vpack.c.b16 %v4189, %v4185
        %v4238 = vpack.c.b16 %v4190, %v4186
        %v4239 = vpack.c.b16 %v4191, %v4187
        %v4240 = vpack.c.b16 %v4196, %v4192
        %v4241 = vpack.c.b16 %v4197, %v4193
        %v4242 = vpack.c.b16 %v4198, %v4194
        %v4243 = vpack.c.b16 %v4199, %v4195
        %v4244 = vpack.c.b16 %v4204, %v4200
        %v4245 = vpack.c.b16 %v4205, %v4201
        %v4246 = vpack.c.b16 %v4206, %v4202
        %v4247 = vpack.c.b16 %v4207, %v4203
        %v4248 = vpack.c.b16 %v4212, %v4208
        %v4249 = vpack.c.b16 %v4213, %v4209
        %v4250 = vpack.c.b16 %v4214, %v4210
        %v4251 = vpack.c.b16 %v4215, %v4211
        %v4252 = vpack.c.b16 %v4220, %v4216
        %v4253 = vpack.c.b16 %v4221, %v4217
        %v4254 = vpack.c.b16 %v4222, %v4218
        %v4255 = vpack.c.b16 %v4223, %v4219
        %4288 = vmatprep.subr.bf16.mxu0 %v4225
        %4289 = vmatpush1.bf16.msra.mxu0 %v4224
        %4290 = vmatprep.subr.bf16.mxu0 %v4229
        %4291 = vmatpush1.bf16.msra.mxu0 %v4228
        %4292 = vmatprep.subr.bf16.mxu0 %v4233
        %4293 = vmatpush1.bf16.msra.mxu0 %v4232
        %4294 = vmatprep.subr.bf16.mxu0 %v4237
        %4295 = vmatpush1.bf16.msra.mxu0 %v4236
        %4296 = vmatprep.subr.bf16.mxu0 %v4241
        %4297 = vmatpush1.bf16.msra.mxu0 %v4240
        %4298 = vmatprep.subr.bf16.mxu0 %v4245
        %4299 = vmatpush1.bf16.msra.mxu0 %v4244
        %4300 = vmatprep.subr.bf16.mxu0 %v4249
        %4301 = vmatpush1.bf16.msra.mxu0 %v4248
        %4302 = vmatprep.subr.bf16.mxu0 %v4253
        %4303 = vmatpush1.bf16.msra.mxu0 %v4252
        %4304 = vmatprep.subr.bf16.mxu0 0
        %4305 = vmatpush1.bf16.msra.mxu0 0
        %4306 = vmatprep.subr.bf16.mxu0 0
        %4307 = vmatpush1.bf16.msra.mxu0 0
        %4308 = vmatprep.subr.bf16.mxu0 0
        %4309 = vmatpush1.bf16.msra.mxu0 0
        %4310 = vmatprep.subr.bf16.mxu0 0
        %4311 = vmatpush1.bf16.msra.mxu0 0
        %4312 = vmatprep.subr.bf16.mxu0 0
        %4313 = vmatpush1.bf16.msra.mxu0 0
        %4314 = vmatprep.subr.bf16.mxu0 0
        %4315 = vmatpush1.bf16.msra.mxu0 0
        %4316 = vmatprep.subr.bf16.mxu0 0
        %4317 = vmatpush1.bf16.msra.mxu0 0
        %4318 = vmatprep.subr.bf16.mxu0 0
        %4319 = vmatpush1.bf16.msra.mxu0 0
        %4320 = vmatprep.mubr.bf16.mxu0 0
        %4321 = vmatmul.mubr.bf16.gmra.mrb[0].mxu0 %v4093
        %v4322 = vpop.f32.mrb[0].mxu0
        %v4323 = vadd.f32 0.0, %v4322
        %v4324 = vpop.f32.mrb[0].mxu0
        %v4325 = vadd.f32 0.0, %v4324
        %v4326 = vpop.f32.mrb[0].mxu0
        %v4327 = vadd.f32 0.0, %v4326
        %v4328 = vpop.f32.mrb[0].mxu0
        %v4329 = vadd.f32 0.0, %v4328
        %4330 = vmatprep.mubr.bf16.mxu0 0
        %4331 = vmatmul.mubr.bf16.gmra.mrb[0].mxu0 %v4094
        %v4332 = vpop.f32.mrb[0].mxu0
        %v4333 = vadd.f32 0.0, %v4332
        %v4334 = vpop.f32.mrb[0].mxu0
        %v4335 = vadd.f32 0.0, %v4334
        %v4336 = vpop.f32.mrb[0].mxu0
        %v4337 = vadd.f32 0.0, %v4336
        %v4338 = vpop.f32.mrb[0].mxu0
        %v4339 = vadd.f32 0.0, %v4338
        %4340 = vdwg.mxu0
        %4341 = vmatprep.subr.bf16.mxu0 %v4227
        %4342 = vmatpush1.bf16.msra.mxu0 %v4226
        %4343 = vmatprep.subr.bf16.mxu0 %v4231
        %4344 = vmatpush1.bf16.msra.mxu0 %v4230
        %4345 = vmatprep.subr.bf16.mxu0 %v4235
        %4346 = vmatpush1.bf16.msra.mxu0 %v4234
        %4347 = vmatprep.subr.bf16.mxu0 %v4239
        %4348 = vmatpush1.bf16.msra.mxu0 %v4238
        %4349 = vmatprep.subr.bf16.mxu0 %v4243
        %4350 = vmatpush1.bf16.msra.mxu0 %v4242
        %4351 = vmatprep.subr.bf16.mxu0 %v4247
        %4352 = vmatpush1.bf16.msra.mxu0 %v4246
        %4353 = vmatprep.subr.bf16.mxu0 %v4251
        %4354 = vmatpush1.bf16.msra.mxu0 %v4250
        %4355 = vmatprep.subr.bf16.mxu0 %v4255
        %4356 = vmatpush1.bf16.msra.mxu0 %v4254
        %4357 = vmatprep.subr.bf16.mxu0 0
        %4358 = vmatpush1.bf16.msra.mxu0 0
        %4359 = vmatprep.subr.bf16.mxu0 0
        %4360 = vmatpush1.bf16.msra.mxu0 0
        %4361 = vmatprep.subr.bf16.mxu0 0
        %4362 = vmatpush1.bf16.msra.mxu0 0
        %4363 = vmatprep.subr.bf16.mxu0 0
        %4364 = vmatpush1.bf16.msra.mxu0 0
        %4365 = vmatprep.subr.bf16.mxu0 0
        %4366 = vmatpush1.bf16.msra.mxu0 0
        %4367 = vmatprep.subr.bf16.mxu0 0
        %4368 = vmatpush1.bf16.msra.mxu0 0
        %4369 = vmatprep.subr.bf16.mxu0 0
        %4370 = vmatpush1.bf16.msra.mxu0 0
        %4371 = vmatprep.subr.bf16.mxu0 0
        %4372 = vmatpush1.bf16.msra.mxu0 0
        %4373 = vmatprep.mubr.bf16.mxu0 0
        %4374 = vmatmul.mubr.bf16.gmra.mrb[0].mxu0 %v4093
        %v4375 = vpop.f32.mrb[0].mxu0
        %v4376 = vadd.f32 0.0, %v4375
        %v4377 = vpop.f32.mrb[0].mxu0
        %v4378 = vadd.f32 0.0, %v4377
        %v4379 = vpop.f32.mrb[0].mxu0
        %v4380 = vadd.f32 0.0, %v4379
        %v4381 = vpop.f32.mrb[0].mxu0
        %v4382 = vadd.f32 0.0, %v4381
        %4383 = vmatprep.mubr.bf16.mxu0 0
        %4384 = vmatmul.mubr.bf16.gmra.mrb[0].mxu0 %v4094
        %v4385 = vpop.f32.mrb[0].mxu0
        %v4386 = vadd.f32 0.0, %v4385
        %v4387 = vpop.f32.mrb[0].mxu0
        %v4388 = vadd.f32 0.0, %v4387
        %v4389 = vpop.f32.mrb[0].mxu0
        %v4390 = vadd.f32 0.0, %v4389
        %v4391 = vpop.f32.mrb[0].mxu0
        %v4392 = vadd.f32 0.0, %v4391
        %4393 = vdwg.mxu0
        %v4426 = vunpack.c.l.b16 %v4057
        %v4427 = vunpack.c.h.b16 %v4057
        %v4428 = vunpack.c.l.b16 %v4058
        %v4429 = vunpack.c.h.b16 %v4058
        %v4430 = vunpack.c.l.b16 %v4059
        %v4431 = vunpack.c.h.b16 %v4059
        %v4432 = vunpack.c.l.b16 %v4060
        %v4433 = vunpack.c.h.b16 %v4060
        %v4434 = vunpack.c.l.b16 %v4061
        %v4435 = vunpack.c.h.b16 %v4061
        %v4436 = vunpack.c.l.b16 %v4062
        %v4437 = vunpack.c.h.b16 %v4062
        %v4438 = vunpack.c.l.b16 %v4063
        %v4439 = vunpack.c.h.b16 %v4063
        %v4440 = vunpack.c.l.b16 %v4064
        %v4441 = vunpack.c.h.b16 %v4064
        %v4442 = vunpack.c.l.b16 %v4065
        %v4443 = vunpack.c.h.b16 %v4065
        %v4444 = vunpack.c.l.b16 %v4066
        %v4445 = vunpack.c.h.b16 %v4066
        %v4446 = vunpack.c.l.b16 %v4067
        %v4447 = vunpack.c.h.b16 %v4067
        %v4448 = vunpack.c.l.b16 %v4068
        %v4449 = vunpack.c.h.b16 %v4068
        %v4450 = vunpack.c.l.b16 %v4069
        %v4451 = vunpack.c.h.b16 %v4069
        %v4452 = vunpack.c.l.b16 %v4070
        %v4453 = vunpack.c.h.b16 %v4070
        %v4454 = vunpack.c.l.b16 %v4071
        %v4455 = vunpack.c.h.b16 %v4071
        %v4456 = vunpack.c.l.b16 %v4072
        %v4457 = vunpack.c.h.b16 %v4072
        %v4458 = vunpack.c.l.b16 %v4073
        %v4459 = vunpack.c.h.b16 %v4073
        %v4460 = vunpack.c.l.b16 %v4074
        %v4461 = vunpack.c.h.b16 %v4074
        %v4462 = vunpack.c.l.b16 %v4075
        %v4463 = vunpack.c.h.b16 %v4075
        %v4464 = vunpack.c.l.b16 %v4076
        %v4465 = vunpack.c.h.b16 %v4076
        %v4466 = vunpack.c.l.b16 %v4077
        %v4467 = vunpack.c.h.b16 %v4077
        %v4468 = vunpack.c.l.b16 %v4078
        %v4469 = vunpack.c.h.b16 %v4078
        %v4470 = vunpack.c.l.b16 %v4079
        %v4471 = vunpack.c.h.b16 %v4079
        %v4472 = vunpack.c.l.b16 %v4080
        %v4473 = vunpack.c.h.b16 %v4080
        %v4474 = vunpack.c.l.b16 %v4081
        %v4475 = vunpack.c.h.b16 %v4081
        %v4476 = vunpack.c.l.b16 %v4082
        %v4477 = vunpack.c.h.b16 %v4082
        %v4478 = vunpack.c.l.b16 %v4083
        %v4479 = vunpack.c.h.b16 %v4083
        %v4480 = vunpack.c.l.b16 %v4084
        %v4481 = vunpack.c.h.b16 %v4084
        %v4482 = vunpack.c.l.b16 %v4085
        %v4483 = vunpack.c.h.b16 %v4085
        %v4484 = vunpack.c.l.b16 %v4086
        %v4485 = vunpack.c.h.b16 %v4086
        %v4486 = vunpack.c.l.b16 %v4087
        %v4487 = vunpack.c.h.b16 %v4087
        %v4488 = vunpack.c.l.b16 %v4088
        %v4489 = vunpack.c.h.b16 %v4088
        %v4490 = vpack.c.b16 %v4430, %v4426
        %v4491 = vpack.c.b16 %v4431, %v4427
        %v4492 = vpack.c.b16 %v4432, %v4428
        %v4493 = vpack.c.b16 %v4433, %v4429
        %v4494 = vpack.c.b16 %v4438, %v4434
        %v4495 = vpack.c.b16 %v4439, %v4435
        %v4496 = vpack.c.b16 %v4440, %v4436
        %v4497 = vpack.c.b16 %v4441, %v4437
        %v4498 = vpack.c.b16 %v4446, %v4442
        %v4499 = vpack.c.b16 %v4447, %v4443
        %v4500 = vpack.c.b16 %v4448, %v4444
        %v4501 = vpack.c.b16 %v4449, %v4445
        %v4502 = vpack.c.b16 %v4454, %v4450
        %v4503 = vpack.c.b16 %v4455, %v4451
        %v4504 = vpack.c.b16 %v4456, %v4452
        %v4505 = vpack.c.b16 %v4457, %v4453
        %v4506 = vpack.c.b16 %v4462, %v4458
        %v4507 = vpack.c.b16 %v4463, %v4459
        %v4508 = vpack.c.b16 %v4464, %v4460
        %v4509 = vpack.c.b16 %v4465, %v4461
        %v4510 = vpack.c.b16 %v4470, %v4466
        %v4511 = vpack.c.b16 %v4471, %v4467
        %v4512 = vpack.c.b16 %v4472, %v4468
        %v4513 = vpack.c.b16 %v4473, %v4469
        %v4514 = vpack.c.b16 %v4478, %v4474
        %v4515 = vpack.c.b16 %v4479, %v4475
        %v4516 = vpack.c.b16 %v4480, %v4476
        %v4517 = vpack.c.b16 %v4481, %v4477
        %v4518 = vpack.c.b16 %v4486, %v4482
        %v4519 = vpack.c.b16 %v4487, %v4483
        %v4520 = vpack.c.b16 %v4488, %v4484
        %v4521 = vpack.c.b16 %v4489, %v4485
        %4554 = vmatprep.subr.bf16.mxu0 %v4491
        %4555 = vmatpush1.bf16.msra.mxu0 %v4490
        %4556 = vmatprep.subr.bf16.mxu0 %v4495
        %4557 = vmatpush1.bf16.msra.mxu0 %v4494
        %4558 = vmatprep.subr.bf16.mxu0 %v4499
        %4559 = vmatpush1.bf16.msra.mxu0 %v4498
        %4560 = vmatprep.subr.bf16.mxu0 %v4503
        %4561 = vmatpush1.bf16.msra.mxu0 %v4502
        %4562 = vmatprep.subr.bf16.mxu0 %v4507
        %4563 = vmatpush1.bf16.msra.mxu0 %v4506
        %4564 = vmatprep.subr.bf16.mxu0 %v4511
        %4565 = vmatpush1.bf16.msra.mxu0 %v4510
        %4566 = vmatprep.subr.bf16.mxu0 %v4515
        %4567 = vmatpush1.bf16.msra.mxu0 %v4514
        %4568 = vmatprep.subr.bf16.mxu0 %v4519
        %4569 = vmatpush1.bf16.msra.mxu0 %v4518
        %4570 = vmatprep.subr.bf16.mxu0 0
        %4571 = vmatpush1.bf16.msra.mxu0 0
        %4572 = vmatprep.subr.bf16.mxu0 0
        %4573 = vmatpush1.bf16.msra.mxu0 0
        %4574 = vmatprep.subr.bf16.mxu0 0
        %4575 = vmatpush1.bf16.msra.mxu0 0
        %4576 = vmatprep.subr.bf16.mxu0 0
        %4577 = vmatpush1.bf16.msra.mxu0 0
        %4578 = vmatprep.subr.bf16.mxu0 0
        %4579 = vmatpush1.bf16.msra.mxu0 0
        %4580 = vmatprep.subr.bf16.mxu0 0
        %4581 = vmatpush1.bf16.msra.mxu0 0
        %4582 = vmatprep.subr.bf16.mxu0 0
        %4583 = vmatpush1.bf16.msra.mxu0 0
        %4584 = vmatprep.subr.bf16.mxu0 0
        %4585 = vmatpush1.bf16.msra.mxu0 0
        %4586 = vmatprep.mubr.bf16.mxu0 0
        %4587 = vmatmul.mubr.bf16.gmra.mrb[0].mxu0 %v4055
        %v4588 = vpop.f32.mrb[0].mxu0
        %v4589 = vadd.f32 %v4323, %v4588
        %v4590 = vpop.f32.mrb[0].mxu0
        %v4591 = vadd.f32 %v4325, %v4590
        %v4592 = vpop.f32.mrb[0].mxu0
        %v4593 = vadd.f32 %v4327, %v4592
        %v4594 = vpop.f32.mrb[0].mxu0
        %v4595 = vadd.f32 %v4329, %v4594
        %4596 = vmatprep.mubr.bf16.mxu0 0
        %4597 = vmatmul.mubr.bf16.gmra.mrb[0].mxu0 %v4056
        %v4598 = vpop.f32.mrb[0].mxu0
        %v4599 = vadd.f32 %v4333, %v4598
        %v4600 = vpop.f32.mrb[0].mxu0
        %v4601 = vadd.f32 %v4335, %v4600
        %v4602 = vpop.f32.mrb[0].mxu0
        %v4603 = vadd.f32 %v4337, %v4602
        %v4604 = vpop.f32.mrb[0].mxu0
        %v4605 = vadd.f32 %v4339, %v4604
        %4606 = vdwg.mxu0
        %4607 = vmatprep.subr.bf16.mxu0 %v4493
        %4608 = vmatpush1.bf16.msra.mxu0 %v4492
        %4609 = vmatprep.subr.bf16.mxu0 %v4497
        %4610 = vmatpush1.bf16.msra.mxu0 %v4496
        %4611 = vmatprep.subr.bf16.mxu0 %v4501
        %4612 = vmatpush1.bf16.msra.mxu0 %v4500
        %4613 = vmatprep.subr.bf16.mxu0 %v4505
        %4614 = vmatpush1.bf16.msra.mxu0 %v4504
        %4615 = vmatprep.subr.bf16.mxu0 %v4509
        %4616 = vmatpush1.bf16.msra.mxu0 %v4508
        %4617 = vmatprep.subr.bf16.mxu0 %v4513
        %4618 = vmatpush1.bf16.msra.mxu0 %v4512
        %4619 = vmatprep.subr.bf16.mxu0 %v4517
        %4620 = vmatpush1.bf16.msra.mxu0 %v4516
        %4621 = vmatprep.subr.bf16.mxu0 %v4521
        %4622 = vmatpush1.bf16.msra.mxu0 %v4520
        %4623 = vmatprep.subr.bf16.mxu0 0
        %4624 = vmatpush1.bf16.msra.mxu0 0
        %4625 = vmatprep.subr.bf16.mxu0 0
        %4626 = vmatpush1.bf16.msra.mxu0 0
        %4627 = vmatprep.subr.bf16.mxu0 0
        %4628 = vmatpush1.bf16.msra.mxu0 0
        %4629 = vmatprep.subr.bf16.mxu0 0
        %4630 = vmatpush1.bf16.msra.mxu0 0
        %4631 = vmatprep.subr.bf16.mxu0 0
        %4632 = vmatpush1.bf16.msra.mxu0 0
        %4633 = vmatprep.subr.bf16.mxu0 0
        %4634 = vmatpush1.bf16.msra.mxu0 0
        %4635 = vmatprep.subr.bf16.mxu0 0
        %4636 = vmatpush1.bf16.msra.mxu0 0
        %4637 = vmatprep.subr.bf16.mxu0 0
        %4638 = vmatpush1.bf16.msra.mxu0 0
        %4639 = vmatprep.mubr.bf16.mxu0 0
        %4640 = vmatmul.mubr.bf16.gmra.mrb[0].mxu0 %v4055
        %v4641 = vpop.f32.mrb[0].mxu0
        %v4642 = vadd.f32 %v4376, %v4641
        %v4643 = vpop.f32.mrb[0].mxu0
        %v4644 = vadd.f32 %v4378, %v4643
        %v4645 = vpop.f32.mrb[0].mxu0
        %v4646 = vadd.f32 %v4380, %v4645
        %v4647 = vpop.f32.mrb[0].mxu0
        %v4648 = vadd.f32 %v4382, %v4647
        %4649 = vmatprep.mubr.bf16.mxu0 0
        %4650 = vmatmul.mubr.bf16.gmra.mrb[0].mxu0 %v4056
        %v4651 = vpop.f32.mrb[0].mxu0
        %v4652 = vadd.f32 %v4386, %v4651
        %v4653 = vpop.f32.mrb[0].mxu0
        %v4654 = vadd.f32 %v4388, %v4653
        %v4655 = vpop.f32.mrb[0].mxu0
        %v4656 = vadd.f32 %v4390, %v4655
        %v4657 = vpop.f32.mrb[0].mxu0
        %v4658 = vadd.f32 %v4392, %v4657
        %4659 = vdwg.mxu0
        %v4660 = vld [vmem:[#allocation5 + $0x2] sm:$0xff]
        %v4661 = vld [vmem:[#allocation5 + $0xa] sm:$0xff]
        %v4662 = vld [vmem:[#allocation5 + $0x1a] sm:$0xff]
        %v4663 = vld [vmem:[#allocation5 + $0x22] sm:$0xff]
        %v4664 = vpack.c.bf16 %v4661, %v4660
        %v4665 = vpack.c.bf16 %v4663, %v4662
        %s4666 = scalar_lea.vmem %s7, 512
        %v4667 = vld [vmem:[%s4666] sm:$0xff]
        %v4668 = vld [vmem:[%s4666 + $0x8] sm:$0xff]
        %v4669 = vld [vmem:[%s4666 + $0x10] sm:$0xff]
        %v4670 = vld [vmem:[%s4666 + $0x18] sm:$0xff]
        %v4671 = vld [vmem:[%s4666 + $0x20] sm:$0xff]
        %v4672 = vld [vmem:[%s4666 + $0x28] sm:$0xff]
        %v4673 = vld [vmem:[%s4666 + $0x30] sm:$0xff]
        %v4674 = vld [vmem:[%s4666 + $0x38] sm:$0xff]
        %v4675 = vld [vmem:[%s4666 + $0x40] sm:$0xff]
        %v4676 = vld [vmem:[%s4666 + $0x48] sm:$0xff]
        %v4677 = vld [vmem:[%s4666 + $0x50] sm:$0xff]
        %v4678 = vld [vmem:[%s4666 + $0x58] sm:$0xff]
        %v4679 = vld [vmem:[%s4666 + $0x60] sm:$0xff]
        %v4680 = vld [vmem:[%s4666 + $0x68] sm:$0xff]
        %v4681 = vld [vmem:[%s4666 + $0x70] sm:$0xff]
        %v4682 = vld [vmem:[%s4666 + $0x78] sm:$0xff]
        %v4683 = vld [vmem:[%s4666 + $0x80] sm:$0xff]
        %v4684 = vld [vmem:[%s4666 + $0x88] sm:$0xff]
        %v4685 = vld [vmem:[%s4666 + $0x90] sm:$0xff]
        %v4686 = vld [vmem:[%s4666 + $0x98] sm:$0xff]
        %v4687 = vld [vmem:[%s4666 + $0xa0] sm:$0xff]
        %v4688 = vld [vmem:[%s4666 + $0xa8] sm:$0xff]
        %v4689 = vld [vmem:[%s4666 + $0xb0] sm:$0xff]
        %v4690 = vld [vmem:[%s4666 + $0xb8] sm:$0xff]
        %v4691 = vld [vmem:[%s4666 + $0xc0] sm:$0xff]
        %v4692 = vld [vmem:[%s4666 + $0xc8] sm:$0xff]
        %v4693 = vld [vmem:[%s4666 + $0xd0] sm:$0xff]
        %v4694 = vld [vmem:[%s4666 + $0xd8] sm:$0xff]
        %v4695 = vld [vmem:[%s4666 + $0xe0] sm:$0xff]
        %v4696 = vld [vmem:[%s4666 + $0xe8] sm:$0xff]
        %v4697 = vld [vmem:[%s4666 + $0xf0] sm:$0xff]
        %v4698 = vld [vmem:[%s4666 + $0xf8] sm:$0xff]
        %v4731 = vunpack.c.l.b16 %v4667
        %v4732 = vunpack.c.h.b16 %v4667
        %v4733 = vunpack.c.l.b16 %v4668
        %v4734 = vunpack.c.h.b16 %v4668
        %v4735 = vunpack.c.l.b16 %v4669
        %v4736 = vunpack.c.h.b16 %v4669
        %v4737 = vunpack.c.l.b16 %v4670
        %v4738 = vunpack.c.h.b16 %v4670
        %v4739 = vunpack.c.l.b16 %v4671
        %v4740 = vunpack.c.h.b16 %v4671
        %v4741 = vunpack.c.l.b16 %v4672
        %v4742 = vunpack.c.h.b16 %v4672
        %v4743 = vunpack.c.l.b16 %v4673
        %v4744 = vunpack.c.h.b16 %v4673
        %v4745 = vunpack.c.l.b16 %v4674
        %v4746 = vunpack.c.h.b16 %v4674
        %v4747 = vunpack.c.l.b16 %v4675
        %v4748 = vunpack.c.h.b16 %v4675
        %v4749 = vunpack.c.l.b16 %v4676
        %v4750 = vunpack.c.h.b16 %v4676
        %v4751 = vunpack.c.l.b16 %v4677
        %v4752 = vunpack.c.h.b16 %v4677
        %v4753 = vunpack.c.l.b16 %v4678
        %v4754 = vunpack.c.h.b16 %v4678
        %v4755 = vunpack.c.l.b16 %v4679
        %v4756 = vunpack.c.h.b16 %v4679
        %v4757 = vunpack.c.l.b16 %v4680
        %v4758 = vunpack.c.h.b16 %v4680
        %v4759 = vunpack.c.l.b16 %v4681
        %v4760 = vunpack.c.h.b16 %v4681
        %v4761 = vunpack.c.l.b16 %v4682
        %v4762 = vunpack.c.h.b16 %v4682
        %v4763 = vunpack.c.l.b16 %v4683
        %v4764 = vunpack.c.h.b16 %v4683
        %v4765 = vunpack.c.l.b16 %v4684
        %v4766 = vunpack.c.h.b16 %v4684
        %v4767 = vunpack.c.l.b16 %v4685
        %v4768 = vunpack.c.h.b16 %v4685
        %v4769 = vunpack.c.l.b16 %v4686
        %v4770 = vunpack.c.h.b16 %v4686
        %v4771 = vunpack.c.l.b16 %v4687
        %v4772 = vunpack.c.h.b16 %v4687
        %v4773 = vunpack.c.l.b16 %v4688
        %v4774 = vunpack.c.h.b16 %v4688
        %v4775 = vunpack.c.l.b16 %v4689
        %v4776 = vunpack.c.h.b16 %v4689
        %v4777 = vunpack.c.l.b16 %v4690
        %v4778 = vunpack.c.h.b16 %v4690
        %v4779 = vunpack.c.l.b16 %v4691
        %v4780 = vunpack.c.h.b16 %v4691
        %v4781 = vunpack.c.l.b16 %v4692
        %v4782 = vunpack.c.h.b16 %v4692
        %v4783 = vunpack.c.l.b16 %v4693
        %v4784 = vunpack.c.h.b16 %v4693
        %v4785 = vunpack.c.l.b16 %v4694
        %v4786 = vunpack.c.h.b16 %v4694
        %v4787 = vunpack.c.l.b16 %v4695
        %v4788 = vunpack.c.h.b16 %v4695
        %v4789 = vunpack.c.l.b16 %v4696
        %v4790 = vunpack.c.h.b16 %v4696
        %v4791 = vunpack.c.l.b16 %v4697
        %v4792 = vunpack.c.h.b16 %v4697
        %v4793 = vunpack.c.l.b16 %v4698
        %v4794 = vunpack.c.h.b16 %v4698
        %v4795 = vpack.c.b16 %v4735, %v4731
        %v4796 = vpack.c.b16 %v4736, %v4732
        %v4797 = vpack.c.b16 %v4737, %v4733
        %v4798 = vpack.c.b16 %v4738, %v4734
        %v4799 = vpack.c.b16 %v4743, %v4739
        %v4800 = vpack.c.b16 %v4744, %v4740
        %v4801 = vpack.c.b16 %v4745, %v4741
        %v4802 = vpack.c.b16 %v4746, %v4742
        %v4803 = vpack.c.b16 %v4751, %v4747
        %v4804 = vpack.c.b16 %v4752, %v4748
        %v4805 = vpack.c.b16 %v4753, %v4749
        %v4806 = vpack.c.b16 %v4754, %v4750
        %v4807 = vpack.c.b16 %v4759, %v4755
        %v4808 = vpack.c.b16 %v4760, %v4756
        %v4809 = vpack.c.b16 %v4761, %v4757
        %v4810 = vpack.c.b16 %v4762, %v4758
        %v4811 = vpack.c.b16 %v4767, %v4763
        %v4812 = vpack.c.b16 %v4768, %v4764
        %v4813 = vpack.c.b16 %v4769, %v4765
        %v4814 = vpack.c.b16 %v4770, %v4766
        %v4815 = vpack.c.b16 %v4775, %v4771
        %v4816 = vpack.c.b16 %v4776, %v4772
        %v4817 = vpack.c.b16 %v4777, %v4773
        %v4818 = vpack.c.b16 %v4778, %v4774
        %v4819 = vpack.c.b16 %v4783, %v4779
        %v4820 = vpack.c.b16 %v4784, %v4780
        %v4821 = vpack.c.b16 %v4785, %v4781
        %v4822 = vpack.c.b16 %v4786, %v4782
        %v4823 = vpack.c.b16 %v4791, %v4787
        %v4824 = vpack.c.b16 %v4792, %v4788
        %v4825 = vpack.c.b16 %v4793, %v4789
        %v4826 = vpack.c.b16 %v4794, %v4790
        %4859 = vmatprep.subr.bf16.mxu0 %v4796
        %4860 = vmatpush1.bf16.msra.mxu0 %v4795
        %4861 = vmatprep.subr.bf16.mxu0 %v4800
        %4862 = vmatpush1.bf16.msra.mxu0 %v4799
        %4863 = vmatprep.subr.bf16.mxu0 %v4804
        %4864 = vmatpush1.bf16.msra.mxu0 %v4803
        %4865 = vmatprep.subr.bf16.mxu0 %v4808
        %4866 = vmatpush1.bf16.msra.mxu0 %v4807
        %4867 = vmatprep.subr.bf16.mxu0 %v4812
        %4868 = vmatpush1.bf16.msra.mxu0 %v4811
        %4869 = vmatprep.subr.bf16.mxu0 %v4816
        %4870 = vmatpush1.bf16.msra.mxu0 %v4815
        %4871 = vmatprep.subr.bf16.mxu0 %v4820
        %4872 = vmatpush1.bf16.msra.mxu0 %v4819
        %4873 = vmatprep.subr.bf16.mxu0 %v4824
        %4874 = vmatpush1.bf16.msra.mxu0 %v4823
        %4875 = vmatprep.subr.bf16.mxu0 0
        %4876 = vmatpush1.bf16.msra.mxu0 0
        %4877 = vmatprep.subr.bf16.mxu0 0
        %4878 = vmatpush1.bf16.msra.mxu0 0
        %4879 = vmatprep.subr.bf16.mxu0 0
        %4880 = vmatpush1.bf16.msra.mxu0 0
        %4881 = vmatprep.subr.bf16.mxu0 0
        %4882 = vmatpush1.bf16.msra.mxu0 0
        %4883 = vmatprep.subr.bf16.mxu0 0
        %4884 = vmatpush1.bf16.msra.mxu0 0
        %4885 = vmatprep.subr.bf16.mxu0 0
        %4886 = vmatpush1.bf16.msra.mxu0 0
        %4887 = vmatprep.subr.bf16.mxu0 0
        %4888 = vmatpush1.bf16.msra.mxu0 0
        %4889 = vmatprep.subr.bf16.mxu0 0
        %4890 = vmatpush1.bf16.msra.mxu0 0
        %4891 = vmatprep.mubr.bf16.mxu0 0
        %4892 = vmatmul.mubr.bf16.gmra.mrb[0].mxu0 %v4664
        %v4893 = vpop.f32.mrb[0].mxu0
        %v4894 = vadd.f32 0.0, %v4893
        %v4895 = vpop.f32.mrb[0].mxu0
        %v4896 = vadd.f32 0.0, %v4895
        %v4897 = vpop.f32.mrb[0].mxu0
        %v4898 = vadd.f32 0.0, %v4897
        %v4899 = vpop.f32.mrb[0].mxu0
        %v4900 = vadd.f32 0.0, %v4899
        %4901 = vmatprep.mubr.bf16.mxu0 0
        %4902 = vmatmul.mubr.bf16.gmra.mrb[0].mxu0 %v4665
        %v4903 = vpop.f32.mrb[0].mxu0
        %v4904 = vadd.f32 0.0, %v4903
        %v4905 = vpop.f32.mrb[0].mxu0
        %v4906 = vadd.f32 0.0, %v4905
        %v4907 = vpop.f32.mrb[0].mxu0
        %v4908 = vadd.f32 0.0, %v4907
        %v4909 = vpop.f32.mrb[0].mxu0
        %v4910 = vadd.f32 0.0, %v4909
        %4911 = vdwg.mxu0
        %4912 = vmatprep.subr.bf16.mxu0 %v4798
        %4913 = vmatpush1.bf16.msra.mxu0 %v4797
        %4914 = vmatprep.subr.bf16.mxu0 %v4802
        %4915 = vmatpush1.bf16.msra.mxu0 %v4801
        %4916 = vmatprep.subr.bf16.mxu0 %v4806
        %4917 = vmatpush1.bf16.msra.mxu0 %v4805
        %4918 = vmatprep.subr.bf16.mxu0 %v4810
        %4919 = vmatpush1.bf16.msra.mxu0 %v4809
        %4920 = vmatprep.subr.bf16.mxu0 %v4814
        %4921 = vmatpush1.bf16.msra.mxu0 %v4813
        %4922 = vmatprep.subr.bf16.mxu0 %v4818
        %4923 = vmatpush1.bf16.msra.mxu0 %v4817
        %4924 = vmatprep.subr.bf16.mxu0 %v4822
        %4925 = vmatpush1.bf16.msra.mxu0 %v4821
        %4926 = vmatprep.subr.bf16.mxu0 %v4826
        %4927 = vmatpush1.bf16.msra.mxu0 %v4825
        %4928 = vmatprep.subr.bf16.mxu0 0
        %4929 = vmatpush1.bf16.msra.mxu0 0
        %4930 = vmatprep.subr.bf16.mxu0 0
        %4931 = vmatpush1.bf16.msra.mxu0 0
        %4932 = vmatprep.subr.bf16.mxu0 0
        %4933 = vmatpush1.bf16.msra.mxu0 0
        %4934 = vmatprep.subr.bf16.mxu0 0
        %4935 = vmatpush1.bf16.msra.mxu0 0
        %4936 = vmatprep.subr.bf16.mxu0 0
        %4937 = vmatpush1.bf16.msra.mxu0 0
        %4938 = vmatprep.subr.bf16.mxu0 0
        %4939 = vmatpush1.bf16.msra.mxu0 0
        %4940 = vmatprep.subr.bf16.mxu0 0
        %4941 = vmatpush1.bf16.msra.mxu0 0
        %4942 = vmatprep.subr.bf16.mxu0 0
        %4943 = vmatpush1.bf16.msra.mxu0 0
        %4944 = vmatprep.mubr.bf16.mxu0 0
        %4945 = vmatmul.mubr.bf16.gmra.mrb[0].mxu0 %v4664
        %v4946 = vpop.f32.mrb[0].mxu0
        %v4947 = vadd.f32 0.0, %v4946
        %v4948 = vpop.f32.mrb[0].mxu0
        %v4949 = vadd.f32 0.0, %v4948
        %v4950 = vpop.f32.mrb[0].mxu0
        %v4951 = vadd.f32 0.0, %v4950
        %v4952 = vpop.f32.mrb[0].mxu0
        %v4953 = vadd.f32 0.0, %v4952
        %4954 = vmatprep.mubr.bf16.mxu0 0
        %4955 = vmatmul.mubr.bf16.gmra.mrb[0].mxu0 %v4665
        %v4956 = vpop.f32.mrb[0].mxu0
        %v4957 = vadd.f32 0.0, %v4956
        %v4958 = vpop.f32.mrb[0].mxu0
        %v4959 = vadd.f32 0.0, %v4958
        %v4960 = vpop.f32.mrb[0].mxu0
        %v4961 = vadd.f32 0.0, %v4960
        %v4962 = vpop.f32.mrb[0].mxu0
        %v4963 = vadd.f32 0.0, %v4962
        %4964 = vdwg.mxu0
        %v4965 = vadd.f32 %v4589, %v4894
        %v4966 = vadd.f32 %v4591, %v4896
        %v4967 = vadd.f32 %v4642, %v4947
        %v4968 = vadd.f32 %v4644, %v4949
        %v4969 = vadd.f32 %v4593, %v4898
        %v4970 = vadd.f32 %v4595, %v4900
        %v4971 = vadd.f32 %v4646, %v4951
        %v4972 = vadd.f32 %v4648, %v4953
        %v4973 = vadd.f32 %v4599, %v4904
        %v4974 = vadd.f32 %v4601, %v4906
        %v4975 = vadd.f32 %v4652, %v4957
        %v4976 = vadd.f32 %v4654, %v4959
        %v4977 = vadd.f32 %v4603, %v4908
        %v4978 = vadd.f32 %v4605, %v4910
        %v4979 = vadd.f32 %v4656, %v4961
        %v4980 = vadd.f32 %v4658, %v4963
        %v4981 = vadd.f32 %v4035, %v4965
        %v4982 = vadd.f32 %v4036, %v4966
        %v4983 = vadd.f32 %v4037, %v4967
        %v4984 = vadd.f32 %v4038, %v4968
        %v4985 = vadd.f32 %v4039, %v4969
        %v4986 = vadd.f32 %v4040, %v4970
        %v4987 = vadd.f32 %v4041, %v4971
        %v4988 = vadd.f32 %v4042, %v4972
        %v4989 = vadd.f32 %v4043, %v4973
        %v4990 = vadd.f32 %v4044, %v4974
        %v4991 = vadd.f32 %v4045, %v4975
        %v4992 = vadd.f32 %v4046, %v4976
        %v4993 = vadd.f32 %v4047, %v4977
        %v4994 = vadd.f32 %v4048, %v4978
        %v4995 = vadd.f32 %v4049, %v4979
        %v4996 = vadd.f32 %v4050, %v4980
        %v4997 = vld [vmem:[%s10] sm:$0xf]
        %v4999 = vlaneseq
        %v5000 = vshrl.u32 %v4999, 7
        %v5001 = vsub.s32 0, %v5000
        %v5002 = vrot.slane %v4997, %v5001
        %v5003 = vlaneseq
        %v5004 = vshrl.u32 %v5003, 7
        %v5005 = vsub.s32 1, %v5004
        %v5006 = vrot.slane %v4997, %v5005
        %v5007 = vlaneseq
        %v5008 = vshrl.u32 %v5007, 7
        %v5009 = vsub.s32 2, %v5008
        %v5010 = vrot.slane %v4997, %v5009
        %v5011 = vlaneseq
        %v5012 = vshrl.u32 %v5011, 7
        %v5013 = vsub.s32 3, %v5012
        %v5014 = vrot.slane %v4997, %v5013
        %v5019 = vadd.f32 %v4981, %v5002
        %v5020 = vadd.f32 %v4982, %v5006
        %v5021 = vadd.f32 %v4983, %v5010
        %v5022 = vadd.f32 %v4984, %v5014
        %v5023 = vadd.f32 %v4985, %v5002
        %v5024 = vadd.f32 %v4986, %v5006
        %v5025 = vadd.f32 %v4987, %v5010
        %v5026 = vadd.f32 %v4988, %v5014
        %v5027 = vadd.f32 %v4989, %v5002
        %v5028 = vadd.f32 %v4990, %v5006
        %v5029 = vadd.f32 %v4991, %v5010
        %v5030 = vadd.f32 %v4992, %v5014
        %v5031 = vadd.f32 %v4993, %v5002
        %v5032 = vadd.f32 %v4994, %v5006
        %v5033 = vadd.f32 %v4995, %v5010
        %v5034 = vadd.f32 %v4996, %v5014
        %v5035 = vld [vmem:[#allocation6] sm:$0xff]
        %v5036 = vld [vmem:[#allocation6 + $0x8] sm:$0xff]
        %v5037 = vld [vmem:[#allocation6 + $0x18] sm:$0xff]
        %v5038 = vld [vmem:[#allocation6 + $0x20] sm:$0xff]
        %v5039 = vpack.c.bf16 %v5036, %v5035
        %v5040 = vpack.c.bf16 %v5038, %v5037
        %v5041 = vld [vmem:[#allocation15] sm:$0xff]
        %v5042 = vld [vmem:[#allocation15 + $0x8] sm:$0xff]
        %v5043 = vld [vmem:[#allocation15 + $0x10] sm:$0xff]
        %v5044 = vld [vmem:[#allocation15 + $0x18] sm:$0xff]
        %v5045 = vld [vmem:[#allocation15 + $0x20] sm:$0xff]
        %v5046 = vld [vmem:[#allocation15 + $0x28] sm:$0xff]
        %v5047 = vld [vmem:[#allocation15 + $0x30] sm:$0xff]
        %v5048 = vld [vmem:[#allocation15 + $0x38] sm:$0xff]
        %v5049 = vld [vmem:[#allocation15 + $0x40] sm:$0xff]
        %v5050 = vld [vmem:[#allocation15 + $0x48] sm:$0xff]
        %v5051 = vld [vmem:[#allocation15 + $0x50] sm:$0xff]
        %v5052 = vld [vmem:[#allocation15 + $0x58] sm:$0xff]
        %v5053 = vld [vmem:[#allocation15 + $0x60] sm:$0xff]
        %v5054 = vld [vmem:[#allocation15 + $0x68] sm:$0xff]
        %v5055 = vld [vmem:[#allocation15 + $0x70] sm:$0xff]
        %v5056 = vld [vmem:[#allocation15 + $0x78] sm:$0xff]
        %v5057 = vld [vmem:[#allocation6 + $0x1] sm:$0xff]
        %v5058 = vld [vmem:[#allocation6 + $0x9] sm:$0xff]
        %v5059 = vld [vmem:[#allocation6 + $0x19] sm:$0xff]
        %v5060 = vld [vmem:[#allocation6 + $0x21] sm:$0xff]
        %v5061 = vpack.c.bf16 %v5058, %v5057
        %v5062 = vpack.c.bf16 %v5060, %v5059
        %s5063 = scalar_lea.vmem [#allocation15], 128
        %v5064 = vld [vmem:[%s5063] sm:$0xff]
        %v5065 = vld [vmem:[%s5063 + $0x8] sm:$0xff]
        %v5066 = vld [vmem:[%s5063 + $0x10] sm:$0xff]
        %v5067 = vld [vmem:[%s5063 + $0x18] sm:$0xff]
        %v5068 = vld [vmem:[%s5063 + $0x20] sm:$0xff]
        %v5069 = vld [vmem:[%s5063 + $0x28] sm:$0xff]
        %v5070 = vld [vmem:[%s5063 + $0x30] sm:$0xff]
        %v5071 = vld [vmem:[%s5063 + $0x38] sm:$0xff]
        %v5072 = vld [vmem:[%s5063 + $0x40] sm:$0xff]
        %v5073 = vld [vmem:[%s5063 + $0x48] sm:$0xff]
        %v5074 = vld [vmem:[%s5063 + $0x50] sm:$0xff]
        %v5075 = vld [vmem:[%s5063 + $0x58] sm:$0xff]
        %v5076 = vld [vmem:[%s5063 + $0x60] sm:$0xff]
        %v5077 = vld [vmem:[%s5063 + $0x68] sm:$0xff]
        %v5078 = vld [vmem:[%s5063 + $0x70] sm:$0xff]
        %v5079 = vld [vmem:[%s5063 + $0x78] sm:$0xff]
        %v5096 = vunpack.c.l.b16 %v5064
        %v5097 = vunpack.c.h.b16 %v5064
        %v5098 = vunpack.c.l.b16 %v5065
        %v5099 = vunpack.c.h.b16 %v5065
        %v5100 = vunpack.c.l.b16 %v5066
        %v5101 = vunpack.c.h.b16 %v5066
        %v5102 = vunpack.c.l.b16 %v5067
        %v5103 = vunpack.c.h.b16 %v5067
        %v5104 = vunpack.c.l.b16 %v5068
        %v5105 = vunpack.c.h.b16 %v5068
        %v5106 = vunpack.c.l.b16 %v5069
        %v5107 = vunpack.c.h.b16 %v5069
        %v5108 = vunpack.c.l.b16 %v5070
        %v5109 = vunpack.c.h.b16 %v5070
        %v5110 = vunpack.c.l.b16 %v5071
        %v5111 = vunpack.c.h.b16 %v5071
        %v5112 = vunpack.c.l.b16 %v5072
        %v5113 = vunpack.c.h.b16 %v5072
        %v5114 = vunpack.c.l.b16 %v5073
        %v5115 = vunpack.c.h.b16 %v5073
        %v5116 = vunpack.c.l.b16 %v5074
        %v5117 = vunpack.c.h.b16 %v5074
        %v5118 = vunpack.c.l.b16 %v5075
        %v5119 = vunpack.c.h.b16 %v5075
        %v5120 = vunpack.c.l.b16 %v5076
        %v5121 = vunpack.c.h.b16 %v5076
        %v5122 = vunpack.c.l.b16 %v5077
        %v5123 = vunpack.c.h.b16 %v5077
        %v5124 = vunpack.c.l.b16 %v5078
        %v5125 = vunpack.c.h.b16 %v5078
        %v5126 = vunpack.c.l.b16 %v5079
        %v5127 = vunpack.c.h.b16 %v5079
        %v5128 = vpack.c.b16 %v5098, %v5096
        %v5129 = vpack.c.b16 %v5099, %v5097
        %v5130 = vpack.c.b16 %v5102, %v5100
        %v5131 = vpack.c.b16 %v5103, %v5101
        %v5132 = vpack.c.b16 %v5106, %v5104
        %v5133 = vpack.c.b16 %v5107, %v5105
        %v5134 = vpack.c.b16 %v5110, %v5108
        %v5135 = vpack.c.b16 %v5111, %v5109
        %v5136 = vpack.c.b16 %v5114, %v5112
        %v5137 = vpack.c.b16 %v5115, %v5113
        %v5138 = vpack.c.b16 %v5118, %v5116
        %v5139 = vpack.c.b16 %v5119, %v5117
        %v5140 = vpack.c.b16 %v5122, %v5120
        %v5141 = vpack.c.b16 %v5123, %v5121
        %v5142 = vpack.c.b16 %v5126, %v5124
        %v5143 = vpack.c.b16 %v5127, %v5125
        %5160 = vmatprep.subr.bf16.mxu0 %v5129
        %5161 = vmatpush1.bf16.msra.mxu0 %v5128
        %5162 = vmatprep.subr.bf16.mxu0 %v5131
        %5163 = vmatpush1.bf16.msra.mxu0 %v5130
        %5164 = vmatprep.subr.bf16.mxu0 %v5133
        %5165 = vmatpush1.bf16.msra.mxu0 %v5132
        %5166 = vmatprep.subr.bf16.mxu0 %v5135
        %5167 = vmatpush1.bf16.msra.mxu0 %v5134
        %5168 = vmatprep.subr.bf16.mxu0 %v5137
        %5169 = vmatpush1.bf16.msra.mxu0 %v5136
        %5170 = vmatprep.subr.bf16.mxu0 %v5139
        %5171 = vmatpush1.bf16.msra.mxu0 %v5138
        %5172 = vmatprep.subr.bf16.mxu0 %v5141
        %5173 = vmatpush1.bf16.msra.mxu0 %v5140
        %5174 = vmatprep.subr.bf16.mxu0 %v5143
        %5175 = vmatpush1.bf16.msra.mxu0 %v5142
        %5176 = vmatprep.subr.bf16.mxu0 0
        %5177 = vmatpush1.bf16.msra.mxu0 0
        %5178 = vmatprep.subr.bf16.mxu0 0
        %5179 = vmatpush1.bf16.msra.mxu0 0
        %5180 = vmatprep.subr.bf16.mxu0 0
        %5181 = vmatpush1.bf16.msra.mxu0 0
        %5182 = vmatprep.subr.bf16.mxu0 0
        %5183 = vmatpush1.bf16.msra.mxu0 0
        %5184 = vmatprep.subr.bf16.mxu0 0
        %5185 = vmatpush1.bf16.msra.mxu0 0
        %5186 = vmatprep.subr.bf16.mxu0 0
        %5187 = vmatpush1.bf16.msra.mxu0 0
        %5188 = vmatprep.subr.bf16.mxu0 0
        %5189 = vmatpush1.bf16.msra.mxu0 0
        %5190 = vmatprep.subr.bf16.mxu0 0
        %5191 = vmatpush1.bf16.msra.mxu0 0
        %5192 = vmatprep.mubr.bf16.mxu0 0
        %5193 = vmatmul.mubr.bf16.gmra.mrb[0].mxu0 %v5061
        %v5194 = vpop.f32.mrb[0].mxu0
        %v5195 = vadd.f32 0.0, %v5194
        %v5196 = vpop.f32.mrb[0].mxu0
        %v5197 = vadd.f32 0.0, %v5196
        %v5198 = vpop.f32.mrb[0].mxu0
        %v5199 = vadd.f32 0.0, %v5198
        %v5200 = vpop.f32.mrb[0].mxu0
        %v5201 = vadd.f32 0.0, %v5200
        %5202 = vmatprep.mubr.bf16.mxu0 0
        %5203 = vmatmul.mubr.bf16.gmra.mrb[0].mxu0 %v5062
        %v5204 = vpop.f32.mrb[0].mxu0
        %v5205 = vadd.f32 0.0, %v5204
        %v5206 = vpop.f32.mrb[0].mxu0
        %v5207 = vadd.f32 0.0, %v5206
        %v5208 = vpop.f32.mrb[0].mxu0
        %v5209 = vadd.f32 0.0, %v5208
        %v5210 = vpop.f32.mrb[0].mxu0
        %v5211 = vadd.f32 0.0, %v5210
        %5212 = vdwg.mxu0
        %v5229 = vunpack.c.l.b16 %v5041
        %v5230 = vunpack.c.h.b16 %v5041
        %v5231 = vunpack.c.l.b16 %v5042
        %v5232 = vunpack.c.h.b16 %v5042
        %v5233 = vunpack.c.l.b16 %v5043
        %v5234 = vunpack.c.h.b16 %v5043
        %v5235 = vunpack.c.l.b16 %v5044
        %v5236 = vunpack.c.h.b16 %v5044
        %v5237 = vunpack.c.l.b16 %v5045
        %v5238 = vunpack.c.h.b16 %v5045
        %v5239 = vunpack.c.l.b16 %v5046
        %v5240 = vunpack.c.h.b16 %v5046
        %v5241 = vunpack.c.l.b16 %v5047
        %v5242 = vunpack.c.h.b16 %v5047
        %v5243 = vunpack.c.l.b16 %v5048
        %v5244 = vunpack.c.h.b16 %v5048
        %v5245 = vunpack.c.l.b16 %v5049
        %v5246 = vunpack.c.h.b16 %v5049
        %v5247 = vunpack.c.l.b16 %v5050
        %v5248 = vunpack.c.h.b16 %v5050
        %v5249 = vunpack.c.l.b16 %v5051
        %v5250 = vunpack.c.h.b16 %v5051
        %v5251 = vunpack.c.l.b16 %v5052
        %v5252 = vunpack.c.h.b16 %v5052
        %v5253 = vunpack.c.l.b16 %v5053
        %v5254 = vunpack.c.h.b16 %v5053
        %v5255 = vunpack.c.l.b16 %v5054
        %v5256 = vunpack.c.h.b16 %v5054
        %v5257 = vunpack.c.l.b16 %v5055
        %v5258 = vunpack.c.h.b16 %v5055
        %v5259 = vunpack.c.l.b16 %v5056
        %v5260 = vunpack.c.h.b16 %v5056
        %v5261 = vpack.c.b16 %v5231, %v5229
        %v5262 = vpack.c.b16 %v5232, %v5230
        %v5263 = vpack.c.b16 %v5235, %v5233
        %v5264 = vpack.c.b16 %v5236, %v5234
        %v5265 = vpack.c.b16 %v5239, %v5237
        %v5266 = vpack.c.b16 %v5240, %v5238
        %v5267 = vpack.c.b16 %v5243, %v5241
        %v5268 = vpack.c.b16 %v5244, %v5242
        %v5269 = vpack.c.b16 %v5247, %v5245
        %v5270 = vpack.c.b16 %v5248, %v5246
        %v5271 = vpack.c.b16 %v5251, %v5249
        %v5272 = vpack.c.b16 %v5252, %v5250
        %v5273 = vpack.c.b16 %v5255, %v5253
        %v5274 = vpack.c.b16 %v5256, %v5254
        %v5275 = vpack.c.b16 %v5259, %v5257
        %v5276 = vpack.c.b16 %v5260, %v5258
        %5293 = vmatprep.subr.bf16.mxu0 %v5262
        %5294 = vmatpush1.bf16.msra.mxu0 %v5261
        %5295 = vmatprep.subr.bf16.mxu0 %v5264
        %5296 = vmatpush1.bf16.msra.mxu0 %v5263
        %5297 = vmatprep.subr.bf16.mxu0 %v5266
        %5298 = vmatpush1.bf16.msra.mxu0 %v5265
        %5299 = vmatprep.subr.bf16.mxu0 %v5268
        %5300 = vmatpush1.bf16.msra.mxu0 %v5267
        %5301 = vmatprep.subr.bf16.mxu0 %v5270
        %5302 = vmatpush1.bf16.msra.mxu0 %v5269
        %5303 = vmatprep.subr.bf16.mxu0 %v5272
        %5304 = vmatpush1.bf16.msra.mxu0 %v5271
        %5305 = vmatprep.subr.bf16.mxu0 %v5274
        %5306 = vmatpush1.bf16.msra.mxu0 %v5273
        %5307 = vmatprep.subr.bf16.mxu0 %v5276
        %5308 = vmatpush1.bf16.msra.mxu0 %v5275
        %5309 = vmatprep.subr.bf16.mxu0 0
        %5310 = vmatpush1.bf16.msra.mxu0 0
        %5311 = vmatprep.subr.bf16.mxu0 0
        %5312 = vmatpush1.bf16.msra.mxu0 0
        %5313 = vmatprep.subr.bf16.mxu0 0
        %5314 = vmatpush1.bf16.msra.mxu0 0
        %5315 = vmatprep.subr.bf16.mxu0 0
        %5316 = vmatpush1.bf16.msra.mxu0 0
        %5317 = vmatprep.subr.bf16.mxu0 0
        %5318 = vmatpush1.bf16.msra.mxu0 0
        %5319 = vmatprep.subr.bf16.mxu0 0
        %5320 = vmatpush1.bf16.msra.mxu0 0
        %5321 = vmatprep.subr.bf16.mxu0 0
        %5322 = vmatpush1.bf16.msra.mxu0 0
        %5323 = vmatprep.subr.bf16.mxu0 0
        %5324 = vmatpush1.bf16.msra.mxu0 0
        %5325 = vmatprep.mubr.bf16.mxu0 0
        %5326 = vmatmul.mubr.bf16.gmra.mrb[0].mxu0 %v5039
        %v5327 = vpop.f32.mrb[0].mxu0
        %v5328 = vadd.f32 %v5195, %v5327
        %v5329 = vpop.f32.mrb[0].mxu0
        %v5330 = vadd.f32 %v5197, %v5329
        %v5331 = vpop.f32.mrb[0].mxu0
        %v5332 = vadd.f32 %v5199, %v5331
        %v5333 = vpop.f32.mrb[0].mxu0
        %v5334 = vadd.f32 %v5201, %v5333
        %5335 = vmatprep.mubr.bf16.mxu0 0
        %5336 = vmatmul.mubr.bf16.gmra.mrb[0].mxu0 %v5040
        %v5337 = vpop.f32.mrb[0].mxu0
        %v5338 = vadd.f32 %v5205, %v5337
        %v5339 = vpop.f32.mrb[0].mxu0
        %v5340 = vadd.f32 %v5207, %v5339
        %v5341 = vpop.f32.mrb[0].mxu0
        %v5342 = vadd.f32 %v5209, %v5341
        %v5343 = vpop.f32.mrb[0].mxu0
        %v5344 = vadd.f32 %v5211, %v5343
        %5345 = vdwg.mxu0
        %v5346 = vld [vmem:[#allocation6 + $0x2] sm:$0xff]
        %v5347 = vld [vmem:[#allocation6 + $0xa] sm:$0xff]
        %v5348 = vld [vmem:[#allocation6 + $0x1a] sm:$0xff]
        %v5349 = vld [vmem:[#allocation6 + $0x22] sm:$0xff]
        %v5350 = vpack.c.bf16 %v5347, %v5346
        %v5351 = vpack.c.bf16 %v5349, %v5348
        %s5352 = scalar_lea.vmem [#allocation15], 256
        %v5353 = vld [vmem:[%s5352] sm:$0xff]
        %v5354 = vld [vmem:[%s5352 + $0x8] sm:$0xff]
        %v5355 = vld [vmem:[%s5352 + $0x10] sm:$0xff]
        %v5356 = vld [vmem:[%s5352 + $0x18] sm:$0xff]
        %v5357 = vld [vmem:[%s5352 + $0x20] sm:$0xff]
        %v5358 = vld [vmem:[%s5352 + $0x28] sm:$0xff]
        %v5359 = vld [vmem:[%s5352 + $0x30] sm:$0xff]
        %v5360 = vld [vmem:[%s5352 + $0x38] sm:$0xff]
        %v5361 = vld [vmem:[%s5352 + $0x40] sm:$0xff]
        %v5362 = vld [vmem:[%s5352 + $0x48] sm:$0xff]
        %v5363 = vld [vmem:[%s5352 + $0x50] sm:$0xff]
        %v5364 = vld [vmem:[%s5352 + $0x58] sm:$0xff]
        %v5365 = vld [vmem:[%s5352 + $0x60] sm:$0xff]
        %v5366 = vld [vmem:[%s5352 + $0x68] sm:$0xff]
        %v5367 = vld [vmem:[%s5352 + $0x70] sm:$0xff]
        %v5368 = vld [vmem:[%s5352 + $0x78] sm:$0xff]
        %v5385 = vunpack.c.l.b16 %v5353
        %v5386 = vunpack.c.h.b16 %v5353
        %v5387 = vunpack.c.l.b16 %v5354
        %v5388 = vunpack.c.h.b16 %v5354
        %v5389 = vunpack.c.l.b16 %v5355
        %v5390 = vunpack.c.h.b16 %v5355
        %v5391 = vunpack.c.l.b16 %v5356
        %v5392 = vunpack.c.h.b16 %v5356
        %v5393 = vunpack.c.l.b16 %v5357
        %v5394 = vunpack.c.h.b16 %v5357
        %v5395 = vunpack.c.l.b16 %v5358
        %v5396 = vunpack.c.h.b16 %v5358
        %v5397 = vunpack.c.l.b16 %v5359
        %v5398 = vunpack.c.h.b16 %v5359
        %v5399 = vunpack.c.l.b16 %v5360
        %v5400 = vunpack.c.h.b16 %v5360
        %v5401 = vunpack.c.l.b16 %v5361
        %v5402 = vunpack.c.h.b16 %v5361
        %v5403 = vunpack.c.l.b16 %v5362
        %v5404 = vunpack.c.h.b16 %v5362
        %v5405 = vunpack.c.l.b16 %v5363
        %v5406 = vunpack.c.h.b16 %v5363
        %v5407 = vunpack.c.l.b16 %v5364
        %v5408 = vunpack.c.h.b16 %v5364
        %v5409 = vunpack.c.l.b16 %v5365
        %v5410 = vunpack.c.h.b16 %v5365
        %v5411 = vunpack.c.l.b16 %v5366
        %v5412 = vunpack.c.h.b16 %v5366
        %v5413 = vunpack.c.l.b16 %v5367
        %v5414 = vunpack.c.h.b16 %v5367
        %v5415 = vunpack.c.l.b16 %v5368
        %v5416 = vunpack.c.h.b16 %v5368
        %v5417 = vpack.c.b16 %v5387, %v5385
        %v5418 = vpack.c.b16 %v5388, %v5386
        %v5419 = vpack.c.b16 %v5391, %v5389
        %v5420 = vpack.c.b16 %v5392, %v5390
        %v5421 = vpack.c.b16 %v5395, %v5393
        %v5422 = vpack.c.b16 %v5396, %v5394
        %v5423 = vpack.c.b16 %v5399, %v5397
        %v5424 = vpack.c.b16 %v5400, %v5398
        %v5425 = vpack.c.b16 %v5403, %v5401
        %v5426 = vpack.c.b16 %v5404, %v5402
        %v5427 = vpack.c.b16 %v5407, %v5405
        %v5428 = vpack.c.b16 %v5408, %v5406
        %v5429 = vpack.c.b16 %v5411, %v5409
        %v5430 = vpack.c.b16 %v5412, %v5410
        %v5431 = vpack.c.b16 %v5415, %v5413
        %v5432 = vpack.c.b16 %v5416, %v5414
        %5449 = vmatprep.subr.bf16.mxu0 %v5418
        %5450 = vmatpush1.bf16.msra.mxu0 %v5417
        %5451 = vmatprep.subr.bf16.mxu0 %v5420
        %5452 = vmatpush1.bf16.msra.mxu0 %v5419
        %5453 = vmatprep.subr.bf16.mxu0 %v5422
        %5454 = vmatpush1.bf16.msra.mxu0 %v5421
        %5455 = vmatprep.subr.bf16.mxu0 %v5424
        %5456 = vmatpush1.bf16.msra.mxu0 %v5423
        %5457 = vmatprep.subr.bf16.mxu0 %v5426
        %5458 = vmatpush1.bf16.msra.mxu0 %v5425
        %5459 = vmatprep.subr.bf16.mxu0 %v5428
        %5460 = vmatpush1.bf16.msra.mxu0 %v5427
        %5461 = vmatprep.subr.bf16.mxu0 %v5430
        %5462 = vmatpush1.bf16.msra.mxu0 %v5429
        %5463 = vmatprep.subr.bf16.mxu0 %v5432
        %5464 = vmatpush1.bf16.msra.mxu0 %v5431
        %5465 = vmatprep.subr.bf16.mxu0 0
        %5466 = vmatpush1.bf16.msra.mxu0 0
        %5467 = vmatprep.subr.bf16.mxu0 0
        %5468 = vmatpush1.bf16.msra.mxu0 0
        %5469 = vmatprep.subr.bf16.mxu0 0
        %5470 = vmatpush1.bf16.msra.mxu0 0
        %5471 = vmatprep.subr.bf16.mxu0 0
        %5472 = vmatpush1.bf16.msra.mxu0 0
        %5473 = vmatprep.subr.bf16.mxu0 0
        %5474 = vmatpush1.bf16.msra.mxu0 0
        %5475 = vmatprep.subr.bf16.mxu0 0
        %5476 = vmatpush1.bf16.msra.mxu0 0
        %5477 = vmatprep.subr.bf16.mxu0 0
        %5478 = vmatpush1.bf16.msra.mxu0 0
        %5479 = vmatprep.subr.bf16.mxu0 0
        %5480 = vmatpush1.bf16.msra.mxu0 0
        %5481 = vmatprep.mubr.bf16.mxu0 0
        %5482 = vmatmul.mubr.bf16.gmra.mrb[0].mxu0 %v5350
        %v5483 = vpop.f32.mrb[0].mxu0
        %v5484 = vadd.f32 0.0, %v5483
        %v5485 = vpop.f32.mrb[0].mxu0
        %v5486 = vadd.f32 0.0, %v5485
        %v5487 = vpop.f32.mrb[0].mxu0
        %v5488 = vadd.f32 0.0, %v5487
        %v5489 = vpop.f32.mrb[0].mxu0
        %v5490 = vadd.f32 0.0, %v5489
        %5491 = vmatprep.mubr.bf16.mxu0 0
        %5492 = vmatmul.mubr.bf16.gmra.mrb[0].mxu0 %v5351
        %v5493 = vpop.f32.mrb[0].mxu0
        %v5494 = vadd.f32 0.0, %v5493
        %v5495 = vpop.f32.mrb[0].mxu0
        %v5496 = vadd.f32 0.0, %v5495
        %v5497 = vpop.f32.mrb[0].mxu0
        %v5498 = vadd.f32 0.0, %v5497
        %v5499 = vpop.f32.mrb[0].mxu0
        %v5500 = vadd.f32 0.0, %v5499
        %5501 = vdwg.mxu0
        %v5502 = vadd.f32 %v5328, %v5484
        %v5503 = vadd.f32 %v5330, %v5486
        %v5504 = vadd.f32 %v5332, %v5488
        %v5505 = vadd.f32 %v5334, %v5490
        %v5506 = vadd.f32 %v5338, %v5494
        %v5507 = vadd.f32 %v5340, %v5496
        %v5508 = vadd.f32 %v5342, %v5498
        %v5509 = vadd.f32 %v5344, %v5500
        %v5510 = vadd.f32 %v5019, %v5502
        %v5511 = vadd.f32 %v5023, %v5504
        %v5512 = vadd.f32 %v5027, %v5506
        %v5513 = vadd.f32 %v5031, %v5508
        %v5514 = vxor.u32 %v5510, 2147483648
        %v5515 = vxor.u32 %v5511, 2147483648
        %v5516 = vxor.u32 %v5512, 2147483648
        %v5517 = vxor.u32 %v5513, 2147483648
        %v5518 = vmul.f32 %v5514, 1.442695
        %v5519 = vpow.pop %v5518
        %v5520 = vmul.f32 %v5515, 1.442695
        %v5521 = vpow.pop %v5520
        %v5522 = vmul.f32 %v5516, 1.442695
        %v5523 = vpow.pop %v5522
        %v5524 = vmul.f32 %v5517, 1.442695
        %v5525 = vpow.pop %v5524
        %v5526 = vadd.f32 %v5519, 1.0
        %v5527 = vadd.f32 %v5521, 1.0
        %v5528 = vadd.f32 %v5523, 1.0
        %v5529 = vadd.f32 %v5525, 1.0
        %v5530 = vrcp.pop %v5526
        %v5531 = vmul.f32 1.0, %v5530
        %v5532 = vrcp.pop %v5527
        %v5533 = vmul.f32 1.0, %v5532
        %v5534 = vrcp.pop %v5528
        %v5535 = vmul.f32 1.0, %v5534
        %v5536 = vrcp.pop %v5529
        %v5537 = vmul.f32 1.0, %v5536
        %v5538 = vadd.f32 %v5020, %v5503
        %v5539 = vadd.f32 %v5024, %v5505
        %v5540 = vadd.f32 %v5028, %v5507
        %v5541 = vadd.f32 %v5032, %v5509
        %v5542 = vxor.u32 %v5538, 2147483648
        %v5543 = vxor.u32 %v5539, 2147483648
        %v5544 = vxor.u32 %v5540, 2147483648
        %v5545 = vxor.u32 %v5541, 2147483648
        %v5546 = vmul.f32 %v5542, 1.442695
        %v5547 = vpow.pop %v5546
        %v5548 = vmul.f32 %v5543, 1.442695
        %v5549 = vpow.pop %v5548
        %v5550 = vmul.f32 %v5544, 1.442695
        %v5551 = vpow.pop %v5550
        %v5552 = vmul.f32 %v5545, 1.442695
        %v5553 = vpow.pop %v5552
        %v5554 = vadd.f32 %v5547, 1.0
        %v5555 = vadd.f32 %v5549, 1.0
        %v5556 = vadd.f32 %v5551, 1.0
        %v5557 = vadd.f32 %v5553, 1.0
        %v5558 = vrcp.pop %v5554
        %v5559 = vmul.f32 1.0, %v5558
        %v5560 = vrcp.pop %v5555
        %v5561 = vmul.f32 1.0, %v5560
        %v5562 = vrcp.pop %v5556
        %v5563 = vmul.f32 1.0, %v5562
        %v5564 = vrcp.pop %v5557
        %v5565 = vmul.f32 1.0, %v5564
        %v5566 = vtanh.pop %v5021
        %v5567 = vtanh.pop %v5025
        %v5568 = vtanh.pop %v5029
        %v5569 = vtanh.pop %v5033
        %v5570 = vmul.f32 %v5559, %v5057
        %v5571 = vmul.f32 %v5561, %v5058
        %v5572 = vmul.f32 %v5563, %v5059
        %v5573 = vmul.f32 %v5565, %v5060
        %v5574 = vmul.f32 %v5531, %v5566
        %v5575 = vmul.f32 %v5533, %v5567
        %v5576 = vmul.f32 %v5535, %v5568
        %v5577 = vmul.f32 %v5537, %v5569
        %v5578 = vadd.f32 %v5570, %v5574
        %v5579 = vadd.f32 %v5571, %v5575
        %v5580 = vadd.f32 %v5572, %v5576
        %v5581 = vadd.f32 %v5573, %v5577
        %5582 = vst [vmem:[#allocation6 + $0x1] sm:$0xff] %v5578
        %5583 = vst [vmem:[#allocation6 + $0x9] sm:$0xff] %v5579
        %5584 = vst [vmem:[#allocation6 + $0x19] sm:$0xff] %v5580
        %5585 = vst [vmem:[#allocation6 + $0x21] sm:$0xff] %v5581
        %v5586 = vld [vmem:[#allocation6] sm:$0xff]
        %v5587 = vld [vmem:[#allocation6 + $0x8] sm:$0xff]
        %v5588 = vld [vmem:[#allocation6 + $0x18] sm:$0xff]
        %v5589 = vld [vmem:[#allocation6 + $0x20] sm:$0xff]
        %v5590 = vpack.c.bf16 %v5587, %v5586
        %v5591 = vpack.c.bf16 %v5589, %v5588
        %v5592 = vld [vmem:[#allocation16] sm:$0xf]
        %v5593 = vld [vmem:[#allocation16 + $0x4] sm:$0xf]
        %v5594 = vld [vmem:[#allocation16 + $0x8] sm:$0xf]
        %v5595 = vld [vmem:[#allocation16 + $0xc] sm:$0xf]
        %v5596 = vld [vmem:[#allocation16 + $0x10] sm:$0xf]
        %v5597 = vld [vmem:[#allocation16 + $0x14] sm:$0xf]
        %v5598 = vld [vmem:[#allocation16 + $0x18] sm:$0xf]
        %v5599 = vld [vmem:[#allocation16 + $0x1c] sm:$0xf]
        %v5600 = vld [vmem:[#allocation16 + $0x20] sm:$0xf]
        %v5601 = vld [vmem:[#allocation16 + $0x24] sm:$0xf]
        %v5602 = vld [vmem:[#allocation16 + $0x28] sm:$0xf]
        %v5603 = vld [vmem:[#allocation16 + $0x2c] sm:$0xf]
        %v5604 = vld [vmem:[#allocation16 + $0x30] sm:$0xf]
        %v5605 = vld [vmem:[#allocation16 + $0x34] sm:$0xf]
        %v5606 = vld [vmem:[#allocation16 + $0x38] sm:$0xf]
        %v5607 = vld [vmem:[#allocation16 + $0x3c] sm:$0xf]
        %v5608 = vld [vmem:[#allocation6 + $0x1] sm:$0xff]
        %v5609 = vld [vmem:[#allocation6 + $0x9] sm:$0xff]
        %v5610 = vld [vmem:[#allocation6 + $0x19] sm:$0xff]
        %v5611 = vld [vmem:[#allocation6 + $0x21] sm:$0xff]
        %v5612 = vpack.c.bf16 %v5609, %v5608
        %v5613 = vpack.c.bf16 %v5611, %v5610
        %s5614 = scalar_lea.vmem [#allocation16], 64
        %v5615 = vld [vmem:[%s5614] sm:$0xf]
        %v5616 = vld [vmem:[%s5614 + $0x4] sm:$0xf]
        %v5617 = vld [vmem:[%s5614 + $0x8] sm:$0xf]
        %v5618 = vld [vmem:[%s5614 + $0xc] sm:$0xf]
        %v5619 = vld [vmem:[%s5614 + $0x10] sm:$0xf]
        %v5620 = vld [vmem:[%s5614 + $0x14] sm:$0xf]
        %v5621 = vld [vmem:[%s5614 + $0x18] sm:$0xf]
        %v5622 = vld [vmem:[%s5614 + $0x1c] sm:$0xf]
        %v5623 = vld [vmem:[%s5614 + $0x20] sm:$0xf]
        %v5624 = vld [vmem:[%s5614 + $0x24] sm:$0xf]
        %v5625 = vld [vmem:[%s5614 + $0x28] sm:$0xf]
        %v5626 = vld [vmem:[%s5614 + $0x2c] sm:$0xf]
        %v5627 = vld [vmem:[%s5614 + $0x30] sm:$0xf]
        %v5628 = vld [vmem:[%s5614 + $0x34] sm:$0xf]
        %v5629 = vld [vmem:[%s5614 + $0x38] sm:$0xf]
        %v5630 = vld [vmem:[%s5614 + $0x3c] sm:$0xf]
        %v5647 = vunpack.c.l.b16 %v5615
        %v5648 = vunpack.c.l.b16 %v5616
        %v5649 = vunpack.c.l.b16 %v5617
        %v5650 = vunpack.c.l.b16 %v5618
        %v5651 = vunpack.c.l.b16 %v5619
        %v5652 = vunpack.c.l.b16 %v5620
        %v5653 = vunpack.c.l.b16 %v5621
        %v5654 = vunpack.c.l.b16 %v5622
        %v5655 = vunpack.c.l.b16 %v5623
        %v5656 = vunpack.c.l.b16 %v5624
        %v5657 = vunpack.c.l.b16 %v5625
        %v5658 = vunpack.c.l.b16 %v5626
        %v5659 = vunpack.c.l.b16 %v5627
        %v5660 = vunpack.c.l.b16 %v5628
        %v5661 = vunpack.c.l.b16 %v5629
        %v5662 = vunpack.c.l.b16 %v5630
        %v5663 = vpack.c.b16 %v5648, %v5647
        %v5664 = vpack.c.b16 %v5650, %v5649
        %v5665 = vpack.c.b16 %v5652, %v5651
        %v5666 = vpack.c.b16 %v5654, %v5653
        %v5667 = vpack.c.b16 %v5656, %v5655
        %v5668 = vpack.c.b16 %v5658, %v5657
        %v5669 = vpack.c.b16 %v5660, %v5659
        %v5670 = vpack.c.b16 %v5662, %v5661
        %5679 = vmatprep.subr.bf16.mxu0 0
        %5680 = vmatpush1.bf16.msra.mxu0 %v5663
        %5681 = vmatprep.subr.bf16.mxu0 0
        %5682 = vmatpush1.bf16.msra.mxu0 %v5664
        %5683 = vmatprep.subr.bf16.mxu0 0
        %5684 = vmatpush1.bf16.msra.mxu0 %v5665
        %5685 = vmatprep.subr.bf16.mxu0 0
        %5686 = vmatpush1.bf16.msra.mxu0 %v5666
        %5687 = vmatprep.subr.bf16.mxu0 0
        %5688 = vmatpush1.bf16.msra.mxu0 %v5667
        %5689 = vmatprep.subr.bf16.mxu0 0
        %5690 = vmatpush1.bf16.msra.mxu0 %v5668
        %5691 = vmatprep.subr.bf16.mxu0 0
        %5692 = vmatpush1.bf16.msra.mxu0 %v5669
        %5693 = vmatprep.subr.bf16.mxu0 0
        %5694 = vmatpush1.bf16.msra.mxu0 %v5670
        %5695 = vmatprep.subr.bf16.mxu0 0
        %5696 = vmatpush1.bf16.msra.mxu0 0
        %5697 = vmatprep.subr.bf16.mxu0 0
        %5698 = vmatpush1.bf16.msra.mxu0 0
        %5699 = vmatprep.subr.bf16.mxu0 0
        %5700 = vmatpush1.bf16.msra.mxu0 0
        %5701 = vmatprep.subr.bf16.mxu0 0
        %5702 = vmatpush1.bf16.msra.mxu0 0
        %5703 = vmatprep.subr.bf16.mxu0 0
        %5704 = vmatpush1.bf16.msra.mxu0 0
        %5705 = vmatprep.subr.bf16.mxu0 0
        %5706 = vmatpush1.bf16.msra.mxu0 0
        %5707 = vmatprep.subr.bf16.mxu0 0
        %5708 = vmatpush1.bf16.msra.mxu0 0
        %5709 = vmatprep.subr.bf16.mxu0 0
        %5710 = vmatpush1.bf16.msra.mxu0 0
        %5711 = vmatprep.mubr.bf16.mxu0 0
        %5712 = vmatmul.mubr.bf16.gmra.mrb[0].mxu0 %v5612
        %v5713 = vpop.f32.mrb[0].mxu0
        %v5714 = vadd.f32 0.0, %v5713
        %v5715 = vpop.f32.mrb[0].mxu0
        %v5716 = vpop.f32.mrb[0].mxu0
        %v5717 = vadd.f32 0.0, %v5716
        %v5718 = vpop.f32.mrb[0].mxu0
        %5719 = vmatprep.mubr.bf16.mxu0 0
        %5720 = vmatmul.mubr.bf16.gmra.mrb[0].mxu0 %v5613
        %v5721 = vpop.f32.mrb[0].mxu0
        %v5722 = vadd.f32 0.0, %v5721
        %v5723 = vpop.f32.mrb[0].mxu0
        %v5724 = vpop.f32.mrb[0].mxu0
        %v5725 = vadd.f32 0.0, %v5724
        %v5726 = vpop.f32.mrb[0].mxu0
        %5727 = vdwg.mxu0
        %v5744 = vunpack.c.l.b16 %v5592
        %v5745 = vunpack.c.l.b16 %v5593
        %v5746 = vunpack.c.l.b16 %v5594
        %v5747 = vunpack.c.l.b16 %v5595
        %v5748 = vunpack.c.l.b16 %v5596
        %v5749 = vunpack.c.l.b16 %v5597
        %v5750 = vunpack.c.l.b16 %v5598
        %v5751 = vunpack.c.l.b16 %v5599
        %v5752 = vunpack.c.l.b16 %v5600
        %v5753 = vunpack.c.l.b16 %v5601
        %v5754 = vunpack.c.l.b16 %v5602
        %v5755 = vunpack.c.l.b16 %v5603
        %v5756 = vunpack.c.l.b16 %v5604
        %v5757 = vunpack.c.l.b16 %v5605
        %v5758 = vunpack.c.l.b16 %v5606
        %v5759 = vunpack.c.l.b16 %v5607
        %v5760 = vpack.c.b16 %v5745, %v5744
        %v5761 = vpack.c.b16 %v5747, %v5746
        %v5762 = vpack.c.b16 %v5749, %v5748
        %v5763 = vpack.c.b16 %v5751, %v5750
        %v5764 = vpack.c.b16 %v5753, %v5752
        %v5765 = vpack.c.b16 %v5755, %v5754
        %v5766 = vpack.c.b16 %v5757, %v5756
        %v5767 = vpack.c.b16 %v5759, %v5758
        %5776 = vmatprep.subr.bf16.mxu0 0
        %5777 = vmatpush1.bf16.msra.mxu0 %v5760
        %5778 = vmatprep.subr.bf16.mxu0 0
        %5779 = vmatpush1.bf16.msra.mxu0 %v5761
        %5780 = vmatprep.subr.bf16.mxu0 0
        %5781 = vmatpush1.bf16.msra.mxu0 %v5762
        %5782 = vmatprep.subr.bf16.mxu0 0
        %5783 = vmatpush1.bf16.msra.mxu0 %v5763
        %5784 = vmatprep.subr.bf16.mxu0 0
        %5785 = vmatpush1.bf16.msra.mxu0 %v5764
        %5786 = vmatprep.subr.bf16.mxu0 0
        %5787 = vmatpush1.bf16.msra.mxu0 %v5765
        %5788 = vmatprep.subr.bf16.mxu0 0
        %5789 = vmatpush1.bf16.msra.mxu0 %v5766
        %5790 = vmatprep.subr.bf16.mxu0 0
        %5791 = vmatpush1.bf16.msra.mxu0 %v5767
        %5792 = vmatprep.subr.bf16.mxu0 0
        %5793 = vmatpush1.bf16.msra.mxu0 0
        %5794 = vmatprep.subr.bf16.mxu0 0
        %5795 = vmatpush1.bf16.msra.mxu0 0
        %5796 = vmatprep.subr.bf16.mxu0 0
        %5797 = vmatpush1.bf16.msra.mxu0 0
        %5798 = vmatprep.subr.bf16.mxu0 0
        %5799 = vmatpush1.bf16.msra.mxu0 0
        %5800 = vmatprep.subr.bf16.mxu0 0
        %5801 = vmatpush1.bf16.msra.mxu0 0
        %5802 = vmatprep.subr.bf16.mxu0 0
        %5803 = vmatpush1.bf16.msra.mxu0 0
        %5804 = vmatprep.subr.bf16.mxu0 0
        %5805 = vmatpush1.bf16.msra.mxu0 0
        %5806 = vmatprep.subr.bf16.mxu0 0
        %5807 = vmatpush1.bf16.msra.mxu0 0
        %5808 = vmatprep.mubr.bf16.mxu0 0
        %5809 = vmatmul.mubr.bf16.gmra.mrb[0].mxu0 %v5590
        %v5810 = vpop.f32.mrb[0].mxu0
        %v5811 = vadd.f32 %v5714, %v5810
        %v5812 = vpop.f32.mrb[0].mxu0
        %v5813 = vpop.f32.mrb[0].mxu0
        %v5814 = vadd.f32 %v5717, %v5813
        %v5815 = vpop.f32.mrb[0].mxu0
        %5816 = vmatprep.mubr.bf16.mxu0 0
        %5817 = vmatmul.mubr.bf16.gmra.mrb[0].mxu0 %v5591
        %v5818 = vpop.f32.mrb[0].mxu0
        %v5819 = vadd.f32 %v5722, %v5818
        %v5820 = vpop.f32.mrb[0].mxu0
        %v5821 = vpop.f32.mrb[0].mxu0
        %v5822 = vadd.f32 %v5725, %v5821
        %v5823 = vpop.f32.mrb[0].mxu0
        %5824 = vdwg.mxu0
        %v5825 = vld [vmem:[#allocation6 + $0x2] sm:$0xff]
        %v5826 = vld [vmem:[#allocation6 + $0xa] sm:$0xff]
        %v5827 = vld [vmem:[#allocation6 + $0x1a] sm:$0xff]
        %v5828 = vld [vmem:[#allocation6 + $0x22] sm:$0xff]
        %v5829 = vpack.c.bf16 %v5826, %v5825
        %v5830 = vpack.c.bf16 %v5828, %v5827
        %s5831 = scalar_lea.vmem [#allocation16], 128
        %v5832 = vld [vmem:[%s5831] sm:$0xf]
        %v5833 = vld [vmem:[%s5831 + $0x4] sm:$0xf]
        %v5834 = vld [vmem:[%s5831 + $0x8] sm:$0xf]
        %v5835 = vld [vmem:[%s5831 + $0xc] sm:$0xf]
        %v5836 = vld [vmem:[%s5831 + $0x10] sm:$0xf]
        %v5837 = vld [vmem:[%s5831 + $0x14] sm:$0xf]
        %v5838 = vld [vmem:[%s5831 + $0x18] sm:$0xf]
        %v5839 = vld [vmem:[%s5831 + $0x1c] sm:$0xf]
        %v5840 = vld [vmem:[%s5831 + $0x20] sm:$0xf]
        %v5841 = vld [vmem:[%s5831 + $0x24] sm:$0xf]
        %v5842 = vld [vmem:[%s5831 + $0x28] sm:$0xf]
        %v5843 = vld [vmem:[%s5831 + $0x2c] sm:$0xf]
        %v5844 = vld [vmem:[%s5831 + $0x30] sm:$0xf]
        %v5845 = vld [vmem:[%s5831 + $0x34] sm:$0xf]
        %v5846 = vld [vmem:[%s5831 + $0x38] sm:$0xf]
        %v5847 = vld [vmem:[%s5831 + $0x3c] sm:$0xf]
        %v5864 = vunpack.c.l.b16 %v5832
        %v5865 = vunpack.c.l.b16 %v5833
        %v5866 = vunpack.c.l.b16 %v5834
        %v5867 = vunpack.c.l.b16 %v5835
        %v5868 = vunpack.c.l.b16 %v5836
        %v5869 = vunpack.c.l.b16 %v5837
        %v5870 = vunpack.c.l.b16 %v5838
        %v5871 = vunpack.c.l.b16 %v5839
        %v5872 = vunpack.c.l.b16 %v5840
        %v5873 = vunpack.c.l.b16 %v5841
        %v5874 = vunpack.c.l.b16 %v5842
        %v5875 = vunpack.c.l.b16 %v5843
        %v5876 = vunpack.c.l.b16 %v5844
        %v5877 = vunpack.c.l.b16 %v5845
        %v5878 = vunpack.c.l.b16 %v5846
        %v5879 = vunpack.c.l.b16 %v5847
        %v5880 = vpack.c.b16 %v5865, %v5864
        %v5881 = vpack.c.b16 %v5867, %v5866
        %v5882 = vpack.c.b16 %v5869, %v5868
        %v5883 = vpack.c.b16 %v5871, %v5870
        %v5884 = vpack.c.b16 %v5873, %v5872
        %v5885 = vpack.c.b16 %v5875, %v5874
        %v5886 = vpack.c.b16 %v5877, %v5876
        %v5887 = vpack.c.b16 %v5879, %v5878
        %5896 = vmatprep.subr.bf16.mxu0 0
        %5897 = vmatpush1.bf16.msra.mxu0 %v5880
        %5898 = vmatprep.subr.bf16.mxu0 0
        %5899 = vmatpush1.bf16.msra.mxu0 %v5881
        %5900 = vmatprep.subr.bf16.mxu0 0
        %5901 = vmatpush1.bf16.msra.mxu0 %v5882
        %5902 = vmatprep.subr.bf16.mxu0 0
        %5903 = vmatpush1.bf16.msra.mxu0 %v5883
        %5904 = vmatprep.subr.bf16.mxu0 0
        %5905 = vmatpush1.bf16.msra.mxu0 %v5884
        %5906 = vmatprep.subr.bf16.mxu0 0
        %5907 = vmatpush1.bf16.msra.mxu0 %v5885
        %5908 = vmatprep.subr.bf16.mxu0 0
        %5909 = vmatpush1.bf16.msra.mxu0 %v5886
        %5910 = vmatprep.subr.bf16.mxu0 0
        %5911 = vmatpush1.bf16.msra.mxu0 %v5887
        %5912 = vmatprep.subr.bf16.mxu0 0
        %5913 = vmatpush1.bf16.msra.mxu0 0
        %5914 = vmatprep.subr.bf16.mxu0 0
        %5915 = vmatpush1.bf16.msra.mxu0 0
        %5916 = vmatprep.subr.bf16.mxu0 0
        %5917 = vmatpush1.bf16.msra.mxu0 0
        %5918 = vmatprep.subr.bf16.mxu0 0
        %5919 = vmatpush1.bf16.msra.mxu0 0
        %5920 = vmatprep.subr.bf16.mxu0 0
        %5921 = vmatpush1.bf16.msra.mxu0 0
        %5922 = vmatprep.subr.bf16.mxu0 0
        %5923 = vmatpush1.bf16.msra.mxu0 0
        %5924 = vmatprep.subr.bf16.mxu0 0
        %5925 = vmatpush1.bf16.msra.mxu0 0
        %5926 = vmatprep.subr.bf16.mxu0 0
        %5927 = vmatpush1.bf16.msra.mxu0 0
        %5928 = vmatprep.mubr.bf16.mxu0 0
        %5929 = vmatmul.mubr.bf16.gmra.mrb[0].mxu0 %v5829
        %v5930 = vpop.f32.mrb[0].mxu0
        %v5931 = vadd.f32 0.0, %v5930
        %v5932 = vpop.f32.mrb[0].mxu0
        %v5933 = vpop.f32.mrb[0].mxu0
        %v5934 = vadd.f32 0.0, %v5933
        %v5935 = vpop.f32.mrb[0].mxu0
        %5936 = vmatprep.mubr.bf16.mxu0 0
        %5937 = vmatmul.mubr.bf16.gmra.mrb[0].mxu0 %v5830
        %v5938 = vpop.f32.mrb[0].mxu0
        %v5939 = vadd.f32 0.0, %v5938
        %v5940 = vpop.f32.mrb[0].mxu0
        %v5941 = vpop.f32.mrb[0].mxu0
        %v5942 = vadd.f32 0.0, %v5941
        %v5943 = vpop.f32.mrb[0].mxu0
        %5944 = vdwg.mxu0
        %v5945 = vadd.f32 %v5811, %v5931
        %v5946 = vadd.f32 %v5814, %v5934
        %v5947 = vadd.f32 %v5819, %v5939
        %v5948 = vadd.f32 %v5822, %v5942
        %v5949 = vadd.f32 %v5022, %v5945
        %v5950 = vadd.f32 %v5026, %v5946
        %v5951 = vadd.f32 %v5030, %v5947
        %v5952 = vadd.f32 %v5034, %v5948
        %v5953 = vxor.u32 %v5949, 2147483648
        %v5954 = vxor.u32 %v5950, 2147483648
        %v5955 = vxor.u32 %v5951, 2147483648
        %v5956 = vxor.u32 %v5952, 2147483648
        %v5957 = vmul.f32 %v5953, 1.442695
        %v5958 = vpow.pop %v5957
        %v5959 = vmul.f32 %v5954, 1.442695
        %v5960 = vpow.pop %v5959
        %v5961 = vmul.f32 %v5955, 1.442695
        %v5962 = vpow.pop %v5961
        %v5963 = vmul.f32 %v5956, 1.442695
        %v5964 = vpow.pop %v5963
        %v5965 = vadd.f32 %v5958, 1.0
        %v5966 = vadd.f32 %v5960, 1.0
        %v5967 = vadd.f32 %v5962, 1.0
        %v5968 = vadd.f32 %v5964, 1.0
        %v5969 = vrcp.pop %v5965
        %v5970 = vmul.f32 1.0, %v5969
        %v5971 = vrcp.pop %v5966
        %v5972 = vmul.f32 1.0, %v5971
        %v5973 = vrcp.pop %v5967
        %v5974 = vmul.f32 1.0, %v5973
        %v5975 = vrcp.pop %v5968
        %v5976 = vmul.f32 1.0, %v5975
        %v5977 = vtanh.pop %v5578
        %v5978 = vtanh.pop %v5579
        %v5979 = vtanh.pop %v5580
        %v5980 = vtanh.pop %v5581
        %v5981 = vmul.f32 %v5970, %v5977
        %v5982 = vmul.f32 %v5972, %v5978
        %v5983 = vmul.f32 %v5974, %v5979
        %v5984 = vmul.f32 %v5976, %v5980
        %5985 = vst [vmem:[#allocation5 + $0x1] sm:$0xff] %v5981
        %5986 = vst [vmem:[#allocation5 + $0x9] sm:$0xff] %v5982
        %5987 = vst [vmem:[#allocation5 + $0x19] sm:$0xff] %v5983
        %5988 = vst [vmem:[#allocation5 + $0x21] sm:$0xff] %v5984
        %p5989 = scmp.eq.s32.totalorder %s34, 3
        // Predicated region
        $region101: #{convlstm_kth_forward.1} parent=71 // pred_check
          %p5990 = pneg %p5989
        $region102: #{convlstm_kth_forward.1} parent=71 // pred_check_branch
          %5992 = sbr.rel (%p5990) target = $region104
        $region103: #{convlstm_kth_forward.1} parent=71 // pred_region
          %v5993 = vld [vmem:[%s12] sm:$0x1]
          %v5995 = vlaneseq
          %v5996 = vshrl.u32 %v5995, 7
          %v5997 = vsub.s32 0, %v5996
          %v5998 = vrot.slane %v5993, %v5997
          %v6002 = vrot.slane %v5981, 1
          %v6003 = vrot.slane %v5983, 1
          %v6006 = vmax.f32 %v5981, %v6002
          %v6007 = vmax.f32 %v5983, %v6003
          %v6008 = vrot.slane %v5981, 2
          %v6009 = vrot.slane %v5983, 2
          %v6012 = vmax.f32 %v6006, %v6008
          %v6013 = vmax.f32 %v6007, %v6009
          %v6016 = vrot.slane %v6013, 7
          %vm6017 = vcmask 1041409
          %v6018 = vsel %vm6017, %v6016, %v6012
          %6019 = vrot.lane.b32.xlu0 %v6018, 16
          %v6020 = vpop.permute.xlu0 %6019
          %vm6022 = vcmask 130048
          %v6023 = vsel %vm6022, -1e+30, %v6020
          %v6024 = vsel %vm6022, %v6020, -1e+30
          %6027 = vrot.lane.b32.xlu0 %v6023, 120
          %v6028 = vpop.permute.xlu0 %6027
          %6029 = vrot.lane.b32.xlu0 %v6024, 120
          %v6030 = vpop.permute.xlu0 %6029
          %vm6031 = vcmask 982016
          %v6032 = vsel %vm6031, %v6028, %v6030
          %v6034 = vmax.f32 %v6023, %v6032
          %6035 = vrot.lane.b32.xlu0 %v6023, 112
          %v6036 = vpop.permute.xlu0 %6035
          %6037 = vrot.lane.b32.xlu0 %v6024, 112
          %v6038 = vpop.permute.xlu0 %6037
          %vm6039 = vcmask 916480
          %v6040 = vsel %vm6039, %v6036, %v6038
          %v6042 = vmax.f32 %v6034, %v6040
          %6043 = vrot.lane.b32.xlu0 %v6023, 104
          %v6044 = vpop.permute.xlu0 %6043
          %6045 = vrot.lane.b32.xlu0 %v6024, 104
          %v6046 = vpop.permute.xlu0 %6045
          %vm6047 = vcmask 850944
          %v6048 = vsel %vm6047, %v6044, %v6046
          %v6050 = vmax.f32 %v6042, %v6048
          %6051 = vrot.lane.b32.xlu0 %v6023, 96
          %v6052 = vpop.permute.xlu0 %6051
          %6053 = vrot.lane.b32.xlu0 %v6024, 96
          %v6054 = vpop.permute.xlu0 %6053
          %vm6055 = vcmask 785408
          %v6056 = vsel %vm6055, %v6052, %v6054
          %v6058 = vmax.f32 %v6050, %v6056
          %v6059 = vld [vmem:[%s11] sm:$0xff]
          %v6060 = vld [vmem:[%s11 + $0x8] sm:$0xff]
          %v6061 = vld [vmem:[%s11 + $0x10] sm:$0xff]
          %v6062 = vld [vmem:[%s11 + $0x18] sm:$0xff]
          %v6063 = vld [vmem:[%s11 + $0x20] sm:$0xff]
          %v6064 = vld [vmem:[%s11 + $0x28] sm:$0xff]
          %v6065 = vld [vmem:[%s11 + $0x30] sm:$0xff]
          %v6066 = vld [vmem:[%s11 + $0x38] sm:$0xff]
          %v6067 = vld [vmem:[%s11 + $0x40] sm:$0xff]
          %v6068 = vld [vmem:[%s11 + $0x48] sm:$0xff]
          %v6069 = vld [vmem:[%s11 + $0x50] sm:$0xff]
          %v6070 = vld [vmem:[%s11 + $0x58] sm:$0xff]
          %v6071 = vld [vmem:[%s11 + $0x60] sm:$0xff]
          %v6072 = vld [vmem:[%s11 + $0x68] sm:$0xff]
          %v6073 = vld [vmem:[%s11 + $0x70] sm:$0xff]
          %v6074 = vld [vmem:[%s11 + $0x78] sm:$0xff]
          %6075 = vmatprep.subr.mxu0 0.0
          %6076 = vmatpush1.msra.mxu0 %v6059
          %6077 = vmatprep.subr.mxu0 0.0
          %6078 = vmatpush1.msra.mxu0 %v6060
          %6079 = vmatprep.subr.mxu0 0.0
          %6080 = vmatpush1.msra.mxu0 %v6061
          %6081 = vmatprep.subr.mxu0 0.0
          %6082 = vmatpush1.msra.mxu0 %v6062
          %6083 = vmatprep.subr.mxu0 0.0
          %6084 = vmatpush1.msra.mxu0 %v6063
          %6085 = vmatprep.subr.mxu0 0.0
          %6086 = vmatpush1.msra.mxu0 %v6064
          %6087 = vmatprep.subr.mxu0 0.0
          %6088 = vmatpush1.msra.mxu0 %v6065
          %6089 = vmatprep.subr.mxu0 0.0
          %6090 = vmatpush1.msra.mxu0 %v6066
          %6091 = vmatprep.subr.mxu0 0.0
          %6092 = vmatpush1.msra.mxu0 %v6067
          %6093 = vmatprep.subr.mxu0 0.0
          %6094 = vmatpush1.msra.mxu0 %v6068
          %6095 = vmatprep.subr.mxu0 0.0
          %6096 = vmatpush1.msra.mxu0 %v6069
          %6097 = vmatprep.subr.mxu0 0.0
          %6098 = vmatpush1.msra.mxu0 %v6070
          %6099 = vmatprep.subr.mxu0 0.0
          %6100 = vmatpush1.msra.mxu0 %v6071
          %6101 = vmatprep.subr.mxu0 0.0
          %6102 = vmatpush1.msra.mxu0 %v6072
          %6103 = vmatprep.subr.mxu0 0.0
          %6104 = vmatpush1.msra.mxu0 %v6073
          %6105 = vmatprep.subr.mxu0 0.0
          %6106 = vmatpush1.msra.mxu0 %v6074
          %6107 = vmatprep.subr.mxu0 0.0
          %6108 = vmatpush1.msra.mxu0 0.0
          %6109 = vmatprep.subr.mxu0 0.0
          %6110 = vmatpush1.msra.mxu0 0.0
          %6111 = vmatprep.subr.mxu0 0.0
          %6112 = vmatpush1.msra.mxu0 0.0
          %6113 = vmatprep.subr.mxu0 0.0
          %6114 = vmatpush1.msra.mxu0 0.0
          %6115 = vmatprep.subr.mxu0 0.0
          %6116 = vmatpush1.msra.mxu0 0.0
          %6117 = vmatprep.subr.mxu0 0.0
          %6118 = vmatpush1.msra.mxu0 0.0
          %6119 = vmatprep.subr.mxu0 0.0
          %6120 = vmatpush1.msra.mxu0 0.0
          %6121 = vmatprep.subr.mxu0 0.0
          %6122 = vmatpush1.msra.mxu0 0.0
          %6123 = vmatprep.subr.mxu0 0.0
          %6124 = vmatpush1.msra.mxu0 0.0
          %6125 = vmatprep.subr.mxu0 0.0
          %6126 = vmatpush1.msra.mxu0 0.0
          %6127 = vmatprep.subr.mxu0 0.0
          %6128 = vmatpush1.msra.mxu0 0.0
          %6129 = vmatprep.subr.mxu0 0.0
          %6130 = vmatpush1.msra.mxu0 0.0
          %6131 = vmatprep.subr.mxu0 0.0
          %6132 = vmatpush1.msra.mxu0 0.0
          %6133 = vmatprep.subr.mxu0 0.0
          %6134 = vmatpush1.msra.mxu0 0.0
          %6135 = vmatprep.subr.mxu0 0.0
          %6136 = vmatpush1.msra.mxu0 0.0
          %6137 = vmatprep.subr.mxu0 0.0
          %6138 = vmatpush1.msra.mxu0 0.0
          %6139 = vmatprep.mubr.f32.mxu0 0.0
          %6140 = vmatmul.mubr.f32.gmra.mrb[0].mxu0 %v6058
          %v6141 = vpop.f32.mrb[0].mxu0
          %v6142 = vadd.f32 0.0, %v6141
          %v6143 = vpop.f32.mrb[0].mxu0
          %6144 = vdwg.mxu0
          %v6145 = vadd.f32 %v5998, %v6142
          %v6146 = vrot.slane %v5981, 3
          %v6147 = vrot.slane %v5983, 3
          %v6150 = vmax.f32 %v6012, %v6146
          %v6151 = vmax.f32 %v6013, %v6147
          %v6152 = vrot.slane %v5981, 4
          %v6153 = vrot.slane %v5983, 4
          %v6156 = vmax.f32 %v6150, %v6152
          %v6157 = vmax.f32 %v6151, %v6153
          %v6160 = vrot.slane %v6157, 7
          %v6161 = vsel %vm6017, %v6160, %v6156
          %6162 = vrot.lane.b32.xlu0 %v6161, 16
          %v6163 = vpop.permute.xlu0 %6162
          %v6165 = vsel %vm6022, -1e+30, %v6163
          %v6166 = vsel %vm6022, %v6163, -1e+30
          %6169 = vrot.lane.b32.xlu0 %v6165, 120
          %v6170 = vpop.permute.xlu0 %6169
          %6171 = vrot.lane.b32.xlu0 %v6166, 120
          %v6172 = vpop.permute.xlu0 %6171
          %v6173 = vsel %vm6031, %v6170, %v6172
          %v6175 = vmax.f32 %v6165, %v6173
          %6176 = vrot.lane.b32.xlu0 %v6165, 112
          %v6177 = vpop.permute.xlu0 %6176
          %6178 = vrot.lane.b32.xlu0 %v6166, 112
          %v6179 = vpop.permute.xlu0 %6178
          %v6180 = vsel %vm6039, %v6177, %v6179
          %v6182 = vmax.f32 %v6175, %v6180
          %6183 = vrot.lane.b32.xlu0 %v6165, 104
          %v6184 = vpop.permute.xlu0 %6183
          %6185 = vrot.lane.b32.xlu0 %v6166, 104
          %v6186 = vpop.permute.xlu0 %6185
          %v6187 = vsel %vm6047, %v6184, %v6186
          %v6189 = vmax.f32 %v6182, %v6187
          %6190 = vrot.lane.b32.xlu0 %v6165, 96
          %v6191 = vpop.permute.xlu0 %6190
          %6192 = vrot.lane.b32.xlu0 %v6166, 96
          %v6193 = vpop.permute.xlu0 %6192
          %v6194 = vsel %vm6055, %v6191, %v6193
          %v6196 = vmax.f32 %v6189, %v6194
          %s6197 = scalar_lea.vmem %s11, 128
          %v6198 = vld [vmem:[%s6197] sm:$0xff]
          %v6199 = vld [vmem:[%s6197 + $0x8] sm:$0xff]
          %v6200 = vld [vmem:[%s6197 + $0x10] sm:$0xff]
          %v6201 = vld [vmem:[%s6197 + $0x18] sm:$0xff]
          %v6202 = vld [vmem:[%s6197 + $0x20] sm:$0xff]
          %v6203 = vld [vmem:[%s6197 + $0x28] sm:$0xff]
          %v6204 = vld [vmem:[%s6197 + $0x30] sm:$0xff]
          %v6205 = vld [vmem:[%s6197 + $0x38] sm:$0xff]
          %v6206 = vld [vmem:[%s6197 + $0x40] sm:$0xff]
          %v6207 = vld [vmem:[%s6197 + $0x48] sm:$0xff]
          %v6208 = vld [vmem:[%s6197 + $0x50] sm:$0xff]
          %v6209 = vld [vmem:[%s6197 + $0x58] sm:$0xff]
          %v6210 = vld [vmem:[%s6197 + $0x60] sm:$0xff]
          %v6211 = vld [vmem:[%s6197 + $0x68] sm:$0xff]
          %v6212 = vld [vmem:[%s6197 + $0x70] sm:$0xff]
          %v6213 = vld [vmem:[%s6197 + $0x78] sm:$0xff]
          %6214 = vmatprep.subr.mxu0 0.0
          %6215 = vmatpush1.msra.mxu0 %v6198
          %6216 = vmatprep.subr.mxu0 0.0
          %6217 = vmatpush1.msra.mxu0 %v6199
          %6218 = vmatprep.subr.mxu0 0.0
          %6219 = vmatpush1.msra.mxu0 %v6200
          %6220 = vmatprep.subr.mxu0 0.0
          %6221 = vmatpush1.msra.mxu0 %v6201
          %6222 = vmatprep.subr.mxu0 0.0
          %6223 = vmatpush1.msra.mxu0 %v6202
          %6224 = vmatprep.subr.mxu0 0.0
          %6225 = vmatpush1.msra.mxu0 %v6203
          %6226 = vmatprep.subr.mxu0 0.0
          %6227 = vmatpush1.msra.mxu0 %v6204
          %6228 = vmatprep.subr.mxu0 0.0
          %6229 = vmatpush1.msra.mxu0 %v6205
          %6230 = vmatprep.subr.mxu0 0.0
          %6231 = vmatpush1.msra.mxu0 %v6206
          %6232 = vmatprep.subr.mxu0 0.0
          %6233 = vmatpush1.msra.mxu0 %v6207
          %6234 = vmatprep.subr.mxu0 0.0
          %6235 = vmatpush1.msra.mxu0 %v6208
          %6236 = vmatprep.subr.mxu0 0.0
          %6237 = vmatpush1.msra.mxu0 %v6209
          %6238 = vmatprep.subr.mxu0 0.0
          %6239 = vmatpush1.msra.mxu0 %v6210
          %6240 = vmatprep.subr.mxu0 0.0
          %6241 = vmatpush1.msra.mxu0 %v6211
          %6242 = vmatprep.subr.mxu0 0.0
          %6243 = vmatpush1.msra.mxu0 %v6212
          %6244 = vmatprep.subr.mxu0 0.0
          %6245 = vmatpush1.msra.mxu0 %v6213
          %6246 = vmatprep.subr.mxu0 0.0
          %6247 = vmatpush1.msra.mxu0 0.0
          %6248 = vmatprep.subr.mxu0 0.0
          %6249 = vmatpush1.msra.mxu0 0.0
          %6250 = vmatprep.subr.mxu0 0.0
          %6251 = vmatpush1.msra.mxu0 0.0
          %6252 = vmatprep.subr.mxu0 0.0
          %6253 = vmatpush1.msra.mxu0 0.0
          %6254 = vmatprep.subr.mxu0 0.0
          %6255 = vmatpush1.msra.mxu0 0.0
          %6256 = vmatprep.subr.mxu0 0.0
          %6257 = vmatpush1.msra.mxu0 0.0
          %6258 = vmatprep.subr.mxu0 0.0
          %6259 = vmatpush1.msra.mxu0 0.0
          %6260 = vmatprep.subr.mxu0 0.0
          %6261 = vmatpush1.msra.mxu0 0.0
          %6262 = vmatprep.subr.mxu0 0.0
          %6263 = vmatpush1.msra.mxu0 0.0
          %6264 = vmatprep.subr.mxu0 0.0
          %6265 = vmatpush1.msra.mxu0 0.0
          %6266 = vmatprep.subr.mxu0 0.0
          %6267 = vmatpush1.msra.mxu0 0.0
          %6268 = vmatprep.subr.mxu0 0.0
          %6269 = vmatpush1.msra.mxu0 0.0
          %6270 = vmatprep.subr.mxu0 0.0
          %6271 = vmatpush1.msra.mxu0 0.0
          %6272 = vmatprep.subr.mxu0 0.0
          %6273 = vmatpush1.msra.mxu0 0.0
          %6274 = vmatprep.subr.mxu0 0.0
          %6275 = vmatpush1.msra.mxu0 0.0
          %6276 = vmatprep.subr.mxu0 0.0
          %6277 = vmatpush1.msra.mxu0 0.0
          %6278 = vmatprep.mubr.f32.mxu0 0.0
          %6279 = vmatmul.mubr.f32.gmra.mrb[0].mxu0 %v6196
          %v6280 = vpop.f32.mrb[0].mxu0
          %v6281 = vadd.f32 0.0, %v6280
          %v6282 = vpop.f32.mrb[0].mxu0
          %6283 = vdwg.mxu0
          %v6284 = vadd.f32 %v6145, %v6281
          %v6285 = vrot.slane %v6156, 2
          %v6286 = vrot.slane %v6157, 1
          %v6287 = vsel %vm6017, %v6286, %v6285
          %6288 = vrot.lane.b32.xlu0 %v6287, 16
          %v6289 = vpop.permute.xlu0 %6288
          %v6291 = vsel %vm6022, -1e+30, %v6289
          %v6292 = vsel %vm6022, %v6289, -1e+30
          %6295 = vrot.lane.b32.xlu0 %v6291, 120
          %v6296 = vpop.permute.xlu0 %6295
          %6297 = vrot.lane.b32.xlu0 %v6292, 120
          %v6298 = vpop.permute.xlu0 %6297
          %v6299 = vsel %vm6031, %v6296, %v6298
          %v6301 = vmax.f32 %v6291, %v6299
          %6302 = vrot.lane.b32.xlu0 %v6291, 112
          %v6303 = vpop.permute.xlu0 %6302
          %6304 = vrot.lane.b32.xlu0 %v6292, 112
          %v6305 = vpop.permute.xlu0 %6304
          %v6306 = vsel %vm6039, %v6303, %v6305
          %v6308 = vmax.f32 %v6301, %v6306
          %6309 = vrot.lane.b32.xlu0 %v6291, 104
          %v6310 = vpop.permute.xlu0 %6309
          %6311 = vrot.lane.b32.xlu0 %v6292, 104
          %v6312 = vpop.permute.xlu0 %6311
          %v6313 = vsel %vm6047, %v6310, %v6312
          %v6315 = vmax.f32 %v6308, %v6313
          %6316 = vrot.lane.b32.xlu0 %v6291, 96
          %v6317 = vpop.permute.xlu0 %6316
          %6318 = vrot.lane.b32.xlu0 %v6292, 96
          %v6319 = vpop.permute.xlu0 %6318
          %v6320 = vsel %vm6055, %v6317, %v6319
          %v6322 = vmax.f32 %v6315, %v6320
          %s6323 = scalar_lea.vmem %s11, 256
          %v6324 = vld [vmem:[%s6323] sm:$0xff]
          %v6325 = vld [vmem:[%s6323 + $0x8] sm:$0xff]
          %v6326 = vld [vmem:[%s6323 + $0x10] sm:$0xff]
          %v6327 = vld [vmem:[%s6323 + $0x18] sm:$0xff]
          %v6328 = vld [vmem:[%s6323 + $0x20] sm:$0xff]
          %v6329 = vld [vmem:[%s6323 + $0x28] sm:$0xff]
          %v6330 = vld [vmem:[%s6323 + $0x30] sm:$0xff]
          %v6331 = vld [vmem:[%s6323 + $0x38] sm:$0xff]
          %v6332 = vld [vmem:[%s6323 + $0x40] sm:$0xff]
          %v6333 = vld [vmem:[%s6323 + $0x48] sm:$0xff]
          %v6334 = vld [vmem:[%s6323 + $0x50] sm:$0xff]
          %v6335 = vld [vmem:[%s6323 + $0x58] sm:$0xff]
          %v6336 = vld [vmem:[%s6323 + $0x60] sm:$0xff]
          %v6337 = vld [vmem:[%s6323 + $0x68] sm:$0xff]
          %v6338 = vld [vmem:[%s6323 + $0x70] sm:$0xff]
          %v6339 = vld [vmem:[%s6323 + $0x78] sm:$0xff]
          %6340 = vmatprep.subr.mxu0 0.0
          %6341 = vmatpush1.msra.mxu0 %v6324
          %6342 = vmatprep.subr.mxu0 0.0
          %6343 = vmatpush1.msra.mxu0 %v6325
          %6344 = vmatprep.subr.mxu0 0.0
          %6345 = vmatpush1.msra.mxu0 %v6326
          %6346 = vmatprep.subr.mxu0 0.0
          %6347 = vmatpush1.msra.mxu0 %v6327
          %6348 = vmatprep.subr.mxu0 0.0
          %6349 = vmatpush1.msra.mxu0 %v6328
          %6350 = vmatprep.subr.mxu0 0.0
          %6351 = vmatpush1.msra.mxu0 %v6329
          %6352 = vmatprep.subr.mxu0 0.0
          %6353 = vmatpush1.msra.mxu0 %v6330
          %6354 = vmatprep.subr.mxu0 0.0
          %6355 = vmatpush1.msra.mxu0 %v6331
          %6356 = vmatprep.subr.mxu0 0.0
          %6357 = vmatpush1.msra.mxu0 %v6332
          %6358 = vmatprep.subr.mxu0 0.0
          %6359 = vmatpush1.msra.mxu0 %v6333
          %6360 = vmatprep.subr.mxu0 0.0
          %6361 = vmatpush1.msra.mxu0 %v6334
          %6362 = vmatprep.subr.mxu0 0.0
          %6363 = vmatpush1.msra.mxu0 %v6335
          %6364 = vmatprep.subr.mxu0 0.0
          %6365 = vmatpush1.msra.mxu0 %v6336
          %6366 = vmatprep.subr.mxu0 0.0
          %6367 = vmatpush1.msra.mxu0 %v6337
          %6368 = vmatprep.subr.mxu0 0.0
          %6369 = vmatpush1.msra.mxu0 %v6338
          %6370 = vmatprep.subr.mxu0 0.0
          %6371 = vmatpush1.msra.mxu0 %v6339
          %6372 = vmatprep.subr.mxu0 0.0
          %6373 = vmatpush1.msra.mxu0 0.0
          %6374 = vmatprep.subr.mxu0 0.0
          %6375 = vmatpush1.msra.mxu0 0.0
          %6376 = vmatprep.subr.mxu0 0.0
          %6377 = vmatpush1.msra.mxu0 0.0
          %6378 = vmatprep.subr.mxu0 0.0
          %6379 = vmatpush1.msra.mxu0 0.0
          %6380 = vmatprep.subr.mxu0 0.0
          %6381 = vmatpush1.msra.mxu0 0.0
          %6382 = vmatprep.subr.mxu0 0.0
          %6383 = vmatpush1.msra.mxu0 0.0
          %6384 = vmatprep.subr.mxu0 0.0
          %6385 = vmatpush1.msra.mxu0 0.0
          %6386 = vmatprep.subr.mxu0 0.0
          %6387 = vmatpush1.msra.mxu0 0.0
          %6388 = vmatprep.subr.mxu0 0.0
          %6389 = vmatpush1.msra.mxu0 0.0
          %6390 = vmatprep.subr.mxu0 0.0
          %6391 = vmatpush1.msra.mxu0 0.0
          %6392 = vmatprep.subr.mxu0 0.0
          %6393 = vmatpush1.msra.mxu0 0.0
          %6394 = vmatprep.subr.mxu0 0.0
          %6395 = vmatpush1.msra.mxu0 0.0
          %6396 = vmatprep.subr.mxu0 0.0
          %6397 = vmatpush1.msra.mxu0 0.0
          %6398 = vmatprep.subr.mxu0 0.0
          %6399 = vmatpush1.msra.mxu0 0.0
          %6400 = vmatprep.subr.mxu0 0.0
          %6401 = vmatpush1.msra.mxu0 0.0
          %6402 = vmatprep.subr.mxu0 0.0
          %6403 = vmatpush1.msra.mxu0 0.0
          %6404 = vmatprep.mubr.f32.mxu0 0.0
          %6405 = vmatmul.mubr.f32.gmra.mrb[0].mxu0 %v6322
          %v6406 = vpop.f32.mrb[0].mxu0
          %v6407 = vadd.f32 0.0, %v6406
          %v6408 = vpop.f32.mrb[0].mxu0
          %6409 = vdwg.mxu0
          %v6410 = vadd.f32 %v6284, %v6407
          %v6413 = vrot.slane %v5982, 4
          %v6414 = vrot.slane %v5984, 4
          %v6417 = vmax.f32 %v6150, %v6413
          %v6418 = vmax.f32 %v6151, %v6414
          %v6421 = vrot.slane %v6417, 4
          %v6422 = vrot.slane %v6418, 3
          %v6423 = vsel %vm6017, %v6422, %v6421
          %6424 = vrot.lane.b32.xlu0 %v6423, 16
          %v6425 = vpop.permute.xlu0 %6424
          %v6427 = vsel %vm6022, -1e+30, %v6425
          %v6428 = vsel %vm6022, %v6425, -1e+30
          %6431 = vrot.lane.b32.xlu0 %v6427, 120
          %v6432 = vpop.permute.xlu0 %6431
          %6433 = vrot.lane.b32.xlu0 %v6428, 120
          %v6434 = vpop.permute.xlu0 %6433
          %v6435 = vsel %vm6031, %v6432, %v6434
          %v6437 = vmax.f32 %v6427, %v6435
          %6438 = vrot.lane.b32.xlu0 %v6427, 112
          %v6439 = vpop.permute.xlu0 %6438
          %6440 = vrot.lane.b32.xlu0 %v6428, 112
          %v6441 = vpop.permute.xlu0 %6440
          %v6442 = vsel %vm6039, %v6439, %v6441
          %v6444 = vmax.f32 %v6437, %v6442
          %6445 = vrot.lane.b32.xlu0 %v6427, 104
          %v6446 = vpop.permute.xlu0 %6445
          %6447 = vrot.lane.b32.xlu0 %v6428, 104
          %v6448 = vpop.permute.xlu0 %6447
          %v6449 = vsel %vm6047, %v6446, %v6448
          %v6451 = vmax.f32 %v6444, %v6449
          %6452 = vrot.lane.b32.xlu0 %v6427, 96
          %v6453 = vpop.permute.xlu0 %6452
          %6454 = vrot.lane.b32.xlu0 %v6428, 96
          %v6455 = vpop.permute.xlu0 %6454
          %v6456 = vsel %vm6055, %v6453, %v6455
          %v6458 = vmax.f32 %v6451, %v6456
          %s6459 = scalar_lea.vmem %s11, 384
          %v6460 = vld [vmem:[%s6459] sm:$0xff]
          %v6461 = vld [vmem:[%s6459 + $0x8] sm:$0xff]
          %v6462 = vld [vmem:[%s6459 + $0x10] sm:$0xff]
          %v6463 = vld [vmem:[%s6459 + $0x18] sm:$0xff]
          %v6464 = vld [vmem:[%s6459 + $0x20] sm:$0xff]
          %v6465 = vld [vmem:[%s6459 + $0x28] sm:$0xff]
          %v6466 = vld [vmem:[%s6459 + $0x30] sm:$0xff]
          %v6467 = vld [vmem:[%s6459 + $0x38] sm:$0xff]
          %v6468 = vld [vmem:[%s6459 + $0x40] sm:$0xff]
          %v6469 = vld [vmem:[%s6459 + $0x48] sm:$0xff]
          %v6470 = vld [vmem:[%s6459 + $0x50] sm:$0xff]
          %v6471 = vld [vmem:[%s6459 + $0x58] sm:$0xff]
          %v6472 = vld [vmem:[%s6459 + $0x60] sm:$0xff]
          %v6473 = vld [vmem:[%s6459 + $0x68] sm:$0xff]
          %v6474 = vld [vmem:[%s6459 + $0x70] sm:$0xff]
          %v6475 = vld [vmem:[%s6459 + $0x78] sm:$0xff]
          %6476 = vmatprep.subr.mxu0 0.0
          %6477 = vmatpush1.msra.mxu0 %v6460
          %6478 = vmatprep.subr.mxu0 0.0
          %6479 = vmatpush1.msra.mxu0 %v6461
          %6480 = vmatprep.subr.mxu0 0.0
          %6481 = vmatpush1.msra.mxu0 %v6462
          %6482 = vmatprep.subr.mxu0 0.0
          %6483 = vmatpush1.msra.mxu0 %v6463
          %6484 = vmatprep.subr.mxu0 0.0
          %6485 = vmatpush1.msra.mxu0 %v6464
          %6486 = vmatprep.subr.mxu0 0.0
          %6487 = vmatpush1.msra.mxu0 %v6465
          %6488 = vmatprep.subr.mxu0 0.0
          %6489 = vmatpush1.msra.mxu0 %v6466
          %6490 = vmatprep.subr.mxu0 0.0
          %6491 = vmatpush1.msra.mxu0 %v6467
          %6492 = vmatprep.subr.mxu0 0.0
          %6493 = vmatpush1.msra.mxu0 %v6468
          %6494 = vmatprep.subr.mxu0 0.0
          %6495 = vmatpush1.msra.mxu0 %v6469
          %6496 = vmatprep.subr.mxu0 0.0
          %6497 = vmatpush1.msra.mxu0 %v6470
          %6498 = vmatprep.subr.mxu0 0.0
          %6499 = vmatpush1.msra.mxu0 %v6471
          %6500 = vmatprep.subr.mxu0 0.0
          %6501 = vmatpush1.msra.mxu0 %v6472
          %6502 = vmatprep.subr.mxu0 0.0
          %6503 = vmatpush1.msra.mxu0 %v6473
          %6504 = vmatprep.subr.mxu0 0.0
          %6505 = vmatpush1.msra.mxu0 %v6474
          %6506 = vmatprep.subr.mxu0 0.0
          %6507 = vmatpush1.msra.mxu0 %v6475
          %6508 = vmatprep.subr.mxu0 0.0
          %6509 = vmatpush1.msra.mxu0 0.0
          %6510 = vmatprep.subr.mxu0 0.0
          %6511 = vmatpush1.msra.mxu0 0.0
          %6512 = vmatprep.subr.mxu0 0.0
          %6513 = vmatpush1.msra.mxu0 0.0
          %6514 = vmatprep.subr.mxu0 0.0
          %6515 = vmatpush1.msra.mxu0 0.0
          %6516 = vmatprep.subr.mxu0 0.0
          %6517 = vmatpush1.msra.mxu0 0.0
          %6518 = vmatprep.subr.mxu0 0.0
          %6519 = vmatpush1.msra.mxu0 0.0
          %6520 = vmatprep.subr.mxu0 0.0
          %6521 = vmatpush1.msra.mxu0 0.0
          %6522 = vmatprep.subr.mxu0 0.0
          %6523 = vmatpush1.msra.mxu0 0.0
          %6524 = vmatprep.subr.mxu0 0.0
          %6525 = vmatpush1.msra.mxu0 0.0
          %6526 = vmatprep.subr.mxu0 0.0
          %6527 = vmatpush1.msra.mxu0 0.0
          %6528 = vmatprep.subr.mxu0 0.0
          %6529 = vmatpush1.msra.mxu0 0.0
          %6530 = vmatprep.subr.mxu0 0.0
          %6531 = vmatpush1.msra.mxu0 0.0
          %6532 = vmatprep.subr.mxu0 0.0
          %6533 = vmatpush1.msra.mxu0 0.0
          %6534 = vmatprep.subr.mxu0 0.0
          %6535 = vmatpush1.msra.mxu0 0.0
          %6536 = vmatprep.subr.mxu0 0.0
          %6537 = vmatpush1.msra.mxu0 0.0
          %6538 = vmatprep.subr.mxu0 0.0
          %6539 = vmatpush1.msra.mxu0 0.0
          %6540 = vmatprep.mubr.f32.mxu0 0.0
          %6541 = vmatmul.mubr.f32.gmra.mrb[0].mxu0 %v6458
          %v6542 = vpop.f32.mrb[0].mxu0
          %v6543 = vadd.f32 0.0, %v6542
          %v6544 = vpop.f32.mrb[0].mxu0
          %6545 = vdwg.mxu0
          %v6546 = vadd.f32 %v6410, %v6543
          %v6547 = vrot.slane %v5982, 2
          %v6548 = vrot.slane %v5984, 2
          %v6551 = vmax.f32 %v6006, %v6547
          %v6552 = vmax.f32 %v6007, %v6548
          %v6553 = vrot.slane %v5982, 3
          %v6554 = vrot.slane %v5984, 3
          %v6557 = vmax.f32 %v6551, %v6553
          %v6558 = vmax.f32 %v6552, %v6554
          %v6559 = vmax.f32 %v6557, %v6413
          %v6560 = vmax.f32 %v6558, %v6414
          %v6563 = vrot.slane %v6559, 6
          %v6564 = vrot.slane %v6560, 5
          %v6565 = vsel %vm6017, %v6564, %v6563
          %6566 = vrot.lane.b32.xlu0 %v6565, 16
          %v6567 = vpop.permute.xlu0 %6566
          %v6569 = vsel %vm6022, -1e+30, %v6567
          %v6570 = vsel %vm6022, %v6567, -1e+30
          %6573 = vrot.lane.b32.xlu0 %v6569, 120
          %v6574 = vpop.permute.xlu0 %6573
          %6575 = vrot.lane.b32.xlu0 %v6570, 120
          %v6576 = vpop.permute.xlu0 %6575
          %v6577 = vsel %vm6031, %v6574, %v6576
          %v6579 = vmax.f32 %v6569, %v6577
          %6580 = vrot.lane.b32.xlu0 %v6569, 112
          %v6581 = vpop.permute.xlu0 %6580
          %6582 = vrot.lane.b32.xlu0 %v6570, 112
          %v6583 = vpop.permute.xlu0 %6582
          %v6584 = vsel %vm6039, %v6581, %v6583
          %v6586 = vmax.f32 %v6579, %v6584
          %6587 = vrot.lane.b32.xlu0 %v6569, 104
          %v6588 = vpop.permute.xlu0 %6587
          %6589 = vrot.lane.b32.xlu0 %v6570, 104
          %v6590 = vpop.permute.xlu0 %6589
          %v6591 = vsel %vm6047, %v6588, %v6590
          %v6593 = vmax.f32 %v6586, %v6591
          %6594 = vrot.lane.b32.xlu0 %v6569, 96
          %v6595 = vpop.permute.xlu0 %6594
          %6596 = vrot.lane.b32.xlu0 %v6570, 96
          %v6597 = vpop.permute.xlu0 %6596
          %v6598 = vsel %vm6055, %v6595, %v6597
          %v6600 = vmax.f32 %v6593, %v6598
          %s6601 = scalar_lea.vmem %s11, 512
          %v6602 = vld [vmem:[%s6601] sm:$0xff]
          %v6603 = vld [vmem:[%s6601 + $0x8] sm:$0xff]
          %v6604 = vld [vmem:[%s6601 + $0x10] sm:$0xff]
          %v6605 = vld [vmem:[%s6601 + $0x18] sm:$0xff]
          %v6606 = vld [vmem:[%s6601 + $0x20] sm:$0xff]
          %v6607 = vld [vmem:[%s6601 + $0x28] sm:$0xff]
          %v6608 = vld [vmem:[%s6601 + $0x30] sm:$0xff]
          %v6609 = vld [vmem:[%s6601 + $0x38] sm:$0xff]
          %v6610 = vld [vmem:[%s6601 + $0x40] sm:$0xff]
          %v6611 = vld [vmem:[%s6601 + $0x48] sm:$0xff]
          %v6612 = vld [vmem:[%s6601 + $0x50] sm:$0xff]
          %v6613 = vld [vmem:[%s6601 + $0x58] sm:$0xff]
          %v6614 = vld [vmem:[%s6601 + $0x60] sm:$0xff]
          %v6615 = vld [vmem:[%s6601 + $0x68] sm:$0xff]
          %v6616 = vld [vmem:[%s6601 + $0x70] sm:$0xff]
          %v6617 = vld [vmem:[%s6601 + $0x78] sm:$0xff]
          %6618 = vmatprep.subr.mxu0 0.0
          %6619 = vmatpush1.msra.mxu0 %v6602
          %6620 = vmatprep.subr.mxu0 0.0
          %6621 = vmatpush1.msra.mxu0 %v6603
          %6622 = vmatprep.subr.mxu0 0.0
          %6623 = vmatpush1.msra.mxu0 %v6604
          %6624 = vmatprep.subr.mxu0 0.0
          %6625 = vmatpush1.msra.mxu0 %v6605
          %6626 = vmatprep.subr.mxu0 0.0
          %6627 = vmatpush1.msra.mxu0 %v6606
          %6628 = vmatprep.subr.mxu0 0.0
          %6629 = vmatpush1.msra.mxu0 %v6607
          %6630 = vmatprep.subr.mxu0 0.0
          %6631 = vmatpush1.msra.mxu0 %v6608
          %6632 = vmatprep.subr.mxu0 0.0
          %6633 = vmatpush1.msra.mxu0 %v6609
          %6634 = vmatprep.subr.mxu0 0.0
          %6635 = vmatpush1.msra.mxu0 %v6610
          %6636 = vmatprep.subr.mxu0 0.0
          %6637 = vmatpush1.msra.mxu0 %v6611
          %6638 = vmatprep.subr.mxu0 0.0
          %6639 = vmatpush1.msra.mxu0 %v6612
          %6640 = vmatprep.subr.mxu0 0.0
          %6641 = vmatpush1.msra.mxu0 %v6613
          %6642 = vmatprep.subr.mxu0 0.0
          %6643 = vmatpush1.msra.mxu0 %v6614
          %6644 = vmatprep.subr.mxu0 0.0
          %6645 = vmatpush1.msra.mxu0 %v6615
          %6646 = vmatprep.subr.mxu0 0.0
          %6647 = vmatpush1.msra.mxu0 %v6616
          %6648 = vmatprep.subr.mxu0 0.0
          %6649 = vmatpush1.msra.mxu0 %v6617
          %6650 = vmatprep.subr.mxu0 0.0
          %6651 = vmatpush1.msra.mxu0 0.0
          %6652 = vmatprep.subr.mxu0 0.0
          %6653 = vmatpush1.msra.mxu0 0.0
          %6654 = vmatprep.subr.mxu0 0.0
          %6655 = vmatpush1.msra.mxu0 0.0
          %6656 = vmatprep.subr.mxu0 0.0
          %6657 = vmatpush1.msra.mxu0 0.0
          %6658 = vmatprep.subr.mxu0 0.0
          %6659 = vmatpush1.msra.mxu0 0.0
          %6660 = vmatprep.subr.mxu0 0.0
          %6661 = vmatpush1.msra.mxu0 0.0
          %6662 = vmatprep.subr.mxu0 0.0
          %6663 = vmatpush1.msra.mxu0 0.0
          %6664 = vmatprep.subr.mxu0 0.0
          %6665 = vmatpush1.msra.mxu0 0.0
          %6666 = vmatprep.subr.mxu0 0.0
          %6667 = vmatpush1.msra.mxu0 0.0
          %6668 = vmatprep.subr.mxu0 0.0
          %6669 = vmatpush1.msra.mxu0 0.0
          %6670 = vmatprep.subr.mxu0 0.0
          %6671 = vmatpush1.msra.mxu0 0.0
          %6672 = vmatprep.subr.mxu0 0.0
          %6673 = vmatpush1.msra.mxu0 0.0
          %6674 = vmatprep.subr.mxu0 0.0
          %6675 = vmatpush1.msra.mxu0 0.0
          %6676 = vmatprep.subr.mxu0 0.0
          %6677 = vmatpush1.msra.mxu0 0.0
          %6678 = vmatprep.subr.mxu0 0.0
          %6679 = vmatpush1.msra.mxu0 0.0
          %6680 = vmatprep.subr.mxu0 0.0
          %6681 = vmatpush1.msra.mxu0 0.0
          %6682 = vmatprep.mubr.f32.mxu0 0.0
          %6683 = vmatmul.mubr.f32.gmra.mrb[0].mxu0 %v6600
          %v6684 = vpop.f32.mrb[0].mxu0
          %v6685 = vadd.f32 0.0, %v6684
          %v6686 = vpop.f32.mrb[0].mxu0
          %6687 = vdwg.mxu0
          %v6688 = vadd.f32 %v6546, %v6685
          %v6689 = vrot.slane %v5982, 1
          %v6690 = vrot.slane %v5984, 1
          %v6693 = vmax.f32 %v5982, %v6689
          %v6694 = vmax.f32 %v5984, %v6690
          %v6695 = vmax.f32 %v6693, %v6547
          %v6696 = vmax.f32 %v6694, %v6548
          %v6697 = vmax.f32 %v6695, %v6553
          %v6698 = vmax.f32 %v6696, %v6554
          %v6699 = vmax.f32 %v6697, %v6413
          %v6700 = vmax.f32 %v6698, %v6414
          %v6703 = vrot.slane %v6700, 7
          %v6704 = vsel %vm6017, %v6703, %v6699
          %6705 = vrot.lane.b32.xlu0 %v6704, 16
          %v6706 = vpop.permute.xlu0 %6705
          %v6708 = vsel %vm6022, -1e+30, %v6706
          %v6709 = vsel %vm6022, %v6706, -1e+30
          %6712 = vrot.lane.b32.xlu0 %v6708, 120
          %v6713 = vpop.permute.xlu0 %6712
          %6714 = vrot.lane.b32.xlu0 %v6709, 120
          %v6715 = vpop.permute.xlu0 %6714
          %v6716 = vsel %vm6031, %v6713, %v6715
          %v6718 = vmax.f32 %v6708, %v6716
          %6719 = vrot.lane.b32.xlu0 %v6708, 112
          %v6720 = vpop.permute.xlu0 %6719
          %6721 = vrot.lane.b32.xlu0 %v6709, 112
          %v6722 = vpop.permute.xlu0 %6721
          %v6723 = vsel %vm6039, %v6720, %v6722
          %v6725 = vmax.f32 %v6718, %v6723
          %6726 = vrot.lane.b32.xlu0 %v6708, 104
          %v6727 = vpop.permute.xlu0 %6726
          %6728 = vrot.lane.b32.xlu0 %v6709, 104
          %v6729 = vpop.permute.xlu0 %6728
          %v6730 = vsel %vm6047, %v6727, %v6729
          %v6732 = vmax.f32 %v6725, %v6730
          %6733 = vrot.lane.b32.xlu0 %v6708, 96
          %v6734 = vpop.permute.xlu0 %6733
          %6735 = vrot.lane.b32.xlu0 %v6709, 96
          %v6736 = vpop.permute.xlu0 %6735
          %v6737 = vsel %vm6055, %v6734, %v6736
          %v6739 = vmax.f32 %v6732, %v6737
          %s6740 = scalar_lea.vmem %s11, 640
          %v6741 = vld [vmem:[%s6740] sm:$0xff]
          %v6742 = vld [vmem:[%s6740 + $0x8] sm:$0xff]
          %v6743 = vld [vmem:[%s6740 + $0x10] sm:$0xff]
          %v6744 = vld [vmem:[%s6740 + $0x18] sm:$0xff]
          %v6745 = vld [vmem:[%s6740 + $0x20] sm:$0xff]
          %v6746 = vld [vmem:[%s6740 + $0x28] sm:$0xff]
          %v6747 = vld [vmem:[%s6740 + $0x30] sm:$0xff]
          %v6748 = vld [vmem:[%s6740 + $0x38] sm:$0xff]
          %v6749 = vld [vmem:[%s6740 + $0x40] sm:$0xff]
          %v6750 = vld [vmem:[%s6740 + $0x48] sm:$0xff]
          %v6751 = vld [vmem:[%s6740 + $0x50] sm:$0xff]
          %v6752 = vld [vmem:[%s6740 + $0x58] sm:$0xff]
          %v6753 = vld [vmem:[%s6740 + $0x60] sm:$0xff]
          %v6754 = vld [vmem:[%s6740 + $0x68] sm:$0xff]
          %v6755 = vld [vmem:[%s6740 + $0x70] sm:$0xff]
          %v6756 = vld [vmem:[%s6740 + $0x78] sm:$0xff]
          %6757 = vmatprep.subr.mxu0 0.0
          %6758 = vmatpush1.msra.mxu0 %v6741
          %6759 = vmatprep.subr.mxu0 0.0
          %6760 = vmatpush1.msra.mxu0 %v6742
          %6761 = vmatprep.subr.mxu0 0.0
          %6762 = vmatpush1.msra.mxu0 %v6743
          %6763 = vmatprep.subr.mxu0 0.0
          %6764 = vmatpush1.msra.mxu0 %v6744
          %6765 = vmatprep.subr.mxu0 0.0
          %6766 = vmatpush1.msra.mxu0 %v6745
          %6767 = vmatprep.subr.mxu0 0.0
          %6768 = vmatpush1.msra.mxu0 %v6746
          %6769 = vmatprep.subr.mxu0 0.0
          %6770 = vmatpush1.msra.mxu0 %v6747
          %6771 = vmatprep.subr.mxu0 0.0
          %6772 = vmatpush1.msra.mxu0 %v6748
          %6773 = vmatprep.subr.mxu0 0.0
          %6774 = vmatpush1.msra.mxu0 %v6749
          %6775 = vmatprep.subr.mxu0 0.0
          %6776 = vmatpush1.msra.mxu0 %v6750
          %6777 = vmatprep.subr.mxu0 0.0
          %6778 = vmatpush1.msra.mxu0 %v6751
          %6779 = vmatprep.subr.mxu0 0.0
          %6780 = vmatpush1.msra.mxu0 %v6752
          %6781 = vmatprep.subr.mxu0 0.0
          %6782 = vmatpush1.msra.mxu0 %v6753
          %6783 = vmatprep.subr.mxu0 0.0
          %6784 = vmatpush1.msra.mxu0 %v6754
          %6785 = vmatprep.subr.mxu0 0.0
          %6786 = vmatpush1.msra.mxu0 %v6755
          %6787 = vmatprep.subr.mxu0 0.0
          %6788 = vmatpush1.msra.mxu0 %v6756
          %6789 = vmatprep.subr.mxu0 0.0
          %6790 = vmatpush1.msra.mxu0 0.0
          %6791 = vmatprep.subr.mxu0 0.0
          %6792 = vmatpush1.msra.mxu0 0.0
          %6793 = vmatprep.subr.mxu0 0.0
          %6794 = vmatpush1.msra.mxu0 0.0
          %6795 = vmatprep.subr.mxu0 0.0
          %6796 = vmatpush1.msra.mxu0 0.0
          %6797 = vmatprep.subr.mxu0 0.0
          %6798 = vmatpush1.msra.mxu0 0.0
          %6799 = vmatprep.subr.mxu0 0.0
          %6800 = vmatpush1.msra.mxu0 0.0
          %6801 = vmatprep.subr.mxu0 0.0
          %6802 = vmatpush1.msra.mxu0 0.0
          %6803 = vmatprep.subr.mxu0 0.0
          %6804 = vmatpush1.msra.mxu0 0.0
          %6805 = vmatprep.subr.mxu0 0.0
          %6806 = vmatpush1.msra.mxu0 0.0
          %6807 = vmatprep.subr.mxu0 0.0
          %6808 = vmatpush1.msra.mxu0 0.0
          %6809 = vmatprep.subr.mxu0 0.0
          %6810 = vmatpush1.msra.mxu0 0.0
          %6811 = vmatprep.subr.mxu0 0.0
          %6812 = vmatpush1.msra.mxu0 0.0
          %6813 = vmatprep.subr.mxu0 0.0
          %6814 = vmatpush1.msra.mxu0 0.0
          %6815 = vmatprep.subr.mxu0 0.0
          %6816 = vmatpush1.msra.mxu0 0.0
          %6817 = vmatprep.subr.mxu0 0.0
          %6818 = vmatpush1.msra.mxu0 0.0
          %6819 = vmatprep.subr.mxu0 0.0
          %6820 = vmatpush1.msra.mxu0 0.0
          %6821 = vmatprep.mubr.f32.mxu0 0.0
          %6822 = vmatmul.mubr.f32.gmra.mrb[0].mxu0 %v6739
          %v6823 = vpop.f32.mrb[0].mxu0
          %v6824 = vadd.f32 0.0, %v6823
          %v6825 = vpop.f32.mrb[0].mxu0
          %6826 = vdwg.mxu0
          %v6827 = vadd.f32 %v6688, %v6824
          %v6828 = vrot.slane %v6699, 2
          %v6829 = vrot.slane %v6700, 1
          %v6830 = vsel %vm6017, %v6829, %v6828
          %6831 = vrot.lane.b32.xlu0 %v6830, 16
          %v6832 = vpop.permute.xlu0 %6831
          %v6834 = vsel %vm6022, -1e+30, %v6832
          %v6835 = vsel %vm6022, %v6832, -1e+30
          %6838 = vrot.lane.b32.xlu0 %v6834, 120
          %v6839 = vpop.permute.xlu0 %6838
          %6840 = vrot.lane.b32.xlu0 %v6835, 120
          %v6841 = vpop.permute.xlu0 %6840
          %v6842 = vsel %vm6031, %v6839, %v6841
          %v6844 = vmax.f32 %v6834, %v6842
          %6845 = vrot.lane.b32.xlu0 %v6834, 112
          %v6846 = vpop.permute.xlu0 %6845
          %6847 = vrot.lane.b32.xlu0 %v6835, 112
          %v6848 = vpop.permute.xlu0 %6847
          %v6849 = vsel %vm6039, %v6846, %v6848
          %v6851 = vmax.f32 %v6844, %v6849
          %6852 = vrot.lane.b32.xlu0 %v6834, 104
          %v6853 = vpop.permute.xlu0 %6852
          %6854 = vrot.lane.b32.xlu0 %v6835, 104
          %v6855 = vpop.permute.xlu0 %6854
          %v6856 = vsel %vm6047, %v6853, %v6855
          %v6858 = vmax.f32 %v6851, %v6856
          %6859 = vrot.lane.b32.xlu0 %v6834, 96
          %v6860 = vpop.permute.xlu0 %6859
          %6861 = vrot.lane.b32.xlu0 %v6835, 96
          %v6862 = vpop.permute.xlu0 %6861
          %v6863 = vsel %vm6055, %v6860, %v6862
          %v6865 = vmax.f32 %v6858, %v6863
          %s6866 = scalar_lea.vmem %s11, 768
          %v6867 = vld [vmem:[%s6866] sm:$0xff]
          %v6868 = vld [vmem:[%s6866 + $0x8] sm:$0xff]
          %v6869 = vld [vmem:[%s6866 + $0x10] sm:$0xff]
          %v6870 = vld [vmem:[%s6866 + $0x18] sm:$0xff]
          %v6871 = vld [vmem:[%s6866 + $0x20] sm:$0xff]
          %v6872 = vld [vmem:[%s6866 + $0x28] sm:$0xff]
          %v6873 = vld [vmem:[%s6866 + $0x30] sm:$0xff]
          %v6874 = vld [vmem:[%s6866 + $0x38] sm:$0xff]
          %v6875 = vld [vmem:[%s6866 + $0x40] sm:$0xff]
          %v6876 = vld [vmem:[%s6866 + $0x48] sm:$0xff]
          %v6877 = vld [vmem:[%s6866 + $0x50] sm:$0xff]
          %v6878 = vld [vmem:[%s6866 + $0x58] sm:$0xff]
          %v6879 = vld [vmem:[%s6866 + $0x60] sm:$0xff]
          %v6880 = vld [vmem:[%s6866 + $0x68] sm:$0xff]
          %v6881 = vld [vmem:[%s6866 + $0x70] sm:$0xff]
          %v6882 = vld [vmem:[%s6866 + $0x78] sm:$0xff]
          %6883 = vmatprep.subr.mxu0 0.0
          %6884 = vmatpush1.msra.mxu0 %v6867
          %6885 = vmatprep.subr.mxu0 0.0
          %6886 = vmatpush1.msra.mxu0 %v6868
          %6887 = vmatprep.subr.mxu0 0.0
          %6888 = vmatpush1.msra.mxu0 %v6869
          %6889 = vmatprep.subr.mxu0 0.0
          %6890 = vmatpush1.msra.mxu0 %v6870
          %6891 = vmatprep.subr.mxu0 0.0
          %6892 = vmatpush1.msra.mxu0 %v6871
          %6893 = vmatprep.subr.mxu0 0.0
          %6894 = vmatpush1.msra.mxu0 %v6872
          %6895 = vmatprep.subr.mxu0 0.0
          %6896 = vmatpush1.msra.mxu0 %v6873
          %6897 = vmatprep.subr.mxu0 0.0
          %6898 = vmatpush1.msra.mxu0 %v6874
          %6899 = vmatprep.subr.mxu0 0.0
          %6900 = vmatpush1.msra.mxu0 %v6875
          %6901 = vmatprep.subr.mxu0 0.0
          %6902 = vmatpush1.msra.mxu0 %v6876
          %6903 = vmatprep.subr.mxu0 0.0
          %6904 = vmatpush1.msra.mxu0 %v6877
          %6905 = vmatprep.subr.mxu0 0.0
          %6906 = vmatpush1.msra.mxu0 %v6878
          %6907 = vmatprep.subr.mxu0 0.0
          %6908 = vmatpush1.msra.mxu0 %v6879
          %6909 = vmatprep.subr.mxu0 0.0
          %6910 = vmatpush1.msra.mxu0 %v6880
          %6911 = vmatprep.subr.mxu0 0.0
          %6912 = vmatpush1.msra.mxu0 %v6881
          %6913 = vmatprep.subr.mxu0 0.0
          %6914 = vmatpush1.msra.mxu0 %v6882
          %6915 = vmatprep.subr.mxu0 0.0
          %6916 = vmatpush1.msra.mxu0 0.0
          %6917 = vmatprep.subr.mxu0 0.0
          %6918 = vmatpush1.msra.mxu0 0.0
          %6919 = vmatprep.subr.mxu0 0.0
          %6920 = vmatpush1.msra.mxu0 0.0
          %6921 = vmatprep.subr.mxu0 0.0
          %6922 = vmatpush1.msra.mxu0 0.0
          %6923 = vmatprep.subr.mxu0 0.0
          %6924 = vmatpush1.msra.mxu0 0.0
          %6925 = vmatprep.subr.mxu0 0.0
          %6926 = vmatpush1.msra.mxu0 0.0
          %6927 = vmatprep.subr.mxu0 0.0
          %6928 = vmatpush1.msra.mxu0 0.0
          %6929 = vmatprep.subr.mxu0 0.0
          %6930 = vmatpush1.msra.mxu0 0.0
          %6931 = vmatprep.subr.mxu0 0.0
          %6932 = vmatpush1.msra.mxu0 0.0
          %6933 = vmatprep.subr.mxu0 0.0
          %6934 = vmatpush1.msra.mxu0 0.0
          %6935 = vmatprep.subr.mxu0 0.0
          %6936 = vmatpush1.msra.mxu0 0.0
          %6937 = vmatprep.subr.mxu0 0.0
          %6938 = vmatpush1.msra.mxu0 0.0
          %6939 = vmatprep.subr.mxu0 0.0
          %6940 = vmatpush1.msra.mxu0 0.0
          %6941 = vmatprep.subr.mxu0 0.0
          %6942 = vmatpush1.msra.mxu0 0.0
          %6943 = vmatprep.subr.mxu0 0.0
          %6944 = vmatpush1.msra.mxu0 0.0
          %6945 = vmatprep.subr.mxu0 0.0
          %6946 = vmatpush1.msra.mxu0 0.0
          %6947 = vmatprep.mubr.f32.mxu0 0.0
          %6948 = vmatmul.mubr.f32.gmra.mrb[0].mxu0 %v6865
          %v6949 = vpop.f32.mrb[0].mxu0
          %v6950 = vadd.f32 0.0, %v6949
          %v6951 = vpop.f32.mrb[0].mxu0
          %6952 = vdwg.mxu0
          %v6953 = vadd.f32 %v6827, %v6950
          %v6956 = vrot.slane %v6697, 4
          %v6957 = vrot.slane %v6698, 3
          %v6958 = vsel %vm6017, %v6957, %v6956
          %6959 = vrot.lane.b32.xlu0 %v6958, 16
          %v6960 = vpop.permute.xlu0 %6959
          %v6962 = vsel %vm6022, -1e+30, %v6960
          %v6963 = vsel %vm6022, %v6960, -1e+30
          %6966 = vrot.lane.b32.xlu0 %v6962, 120
          %v6967 = vpop.permute.xlu0 %6966
          %6968 = vrot.lane.b32.xlu0 %v6963, 120
          %v6969 = vpop.permute.xlu0 %6968
          %v6970 = vsel %vm6031, %v6967, %v6969
          %v6972 = vmax.f32 %v6962, %v6970
          %6973 = vrot.lane.b32.xlu0 %v6962, 112
          %v6974 = vpop.permute.xlu0 %6973
          %6975 = vrot.lane.b32.xlu0 %v6963, 112
          %v6976 = vpop.permute.xlu0 %6975
          %v6977 = vsel %vm6039, %v6974, %v6976
          %v6979 = vmax.f32 %v6972, %v6977
          %6980 = vrot.lane.b32.xlu0 %v6962, 104
          %v6981 = vpop.permute.xlu0 %6980
          %6982 = vrot.lane.b32.xlu0 %v6963, 104
          %v6983 = vpop.permute.xlu0 %6982
          %v6984 = vsel %vm6047, %v6981, %v6983
          %v6986 = vmax.f32 %v6979, %v6984
          %6987 = vrot.lane.b32.xlu0 %v6962, 96
          %v6988 = vpop.permute.xlu0 %6987
          %6989 = vrot.lane.b32.xlu0 %v6963, 96
          %v6990 = vpop.permute.xlu0 %6989
          %v6991 = vsel %vm6055, %v6988, %v6990
          %v6993 = vmax.f32 %v6986, %v6991
          %s6994 = scalar_lea.vmem %s11, 896
          %v6995 = vld [vmem:[%s6994] sm:$0xff]
          %v6996 = vld [vmem:[%s6994 + $0x8] sm:$0xff]
          %v6997 = vld [vmem:[%s6994 + $0x10] sm:$0xff]
          %v6998 = vld [vmem:[%s6994 + $0x18] sm:$0xff]
          %v6999 = vld [vmem:[%s6994 + $0x20] sm:$0xff]
          %v7000 = vld [vmem:[%s6994 + $0x28] sm:$0xff]
          %v7001 = vld [vmem:[%s6994 + $0x30] sm:$0xff]
          %v7002 = vld [vmem:[%s6994 + $0x38] sm:$0xff]
          %v7003 = vld [vmem:[%s6994 + $0x40] sm:$0xff]
          %v7004 = vld [vmem:[%s6994 + $0x48] sm:$0xff]
          %v7005 = vld [vmem:[%s6994 + $0x50] sm:$0xff]
          %v7006 = vld [vmem:[%s6994 + $0x58] sm:$0xff]
          %v7007 = vld [vmem:[%s6994 + $0x60] sm:$0xff]
          %v7008 = vld [vmem:[%s6994 + $0x68] sm:$0xff]
          %v7009 = vld [vmem:[%s6994 + $0x70] sm:$0xff]
          %v7010 = vld [vmem:[%s6994 + $0x78] sm:$0xff]
          %7011 = vmatprep.subr.mxu0 0.0
          %7012 = vmatpush1.msra.mxu0 %v6995
          %7013 = vmatprep.subr.mxu0 0.0
          %7014 = vmatpush1.msra.mxu0 %v6996
          %7015 = vmatprep.subr.mxu0 0.0
          %7016 = vmatpush1.msra.mxu0 %v6997
          %7017 = vmatprep.subr.mxu0 0.0
          %7018 = vmatpush1.msra.mxu0 %v6998
          %7019 = vmatprep.subr.mxu0 0.0
          %7020 = vmatpush1.msra.mxu0 %v6999
          %7021 = vmatprep.subr.mxu0 0.0
          %7022 = vmatpush1.msra.mxu0 %v7000
          %7023 = vmatprep.subr.mxu0 0.0
          %7024 = vmatpush1.msra.mxu0 %v7001
          %7025 = vmatprep.subr.mxu0 0.0
          %7026 = vmatpush1.msra.mxu0 %v7002
          %7027 = vmatprep.subr.mxu0 0.0
          %7028 = vmatpush1.msra.mxu0 %v7003
          %7029 = vmatprep.subr.mxu0 0.0
          %7030 = vmatpush1.msra.mxu0 %v7004
          %7031 = vmatprep.subr.mxu0 0.0
          %7032 = vmatpush1.msra.mxu0 %v7005
          %7033 = vmatprep.subr.mxu0 0.0
          %7034 = vmatpush1.msra.mxu0 %v7006
          %7035 = vmatprep.subr.mxu0 0.0
          %7036 = vmatpush1.msra.mxu0 %v7007
          %7037 = vmatprep.subr.mxu0 0.0
          %7038 = vmatpush1.msra.mxu0 %v7008
          %7039 = vmatprep.subr.mxu0 0.0
          %7040 = vmatpush1.msra.mxu0 %v7009
          %7041 = vmatprep.subr.mxu0 0.0
          %7042 = vmatpush1.msra.mxu0 %v7010
          %7043 = vmatprep.subr.mxu0 0.0
          %7044 = vmatpush1.msra.mxu0 0.0
          %7045 = vmatprep.subr.mxu0 0.0
          %7046 = vmatpush1.msra.mxu0 0.0
          %7047 = vmatprep.subr.mxu0 0.0
          %7048 = vmatpush1.msra.mxu0 0.0
          %7049 = vmatprep.subr.mxu0 0.0
          %7050 = vmatpush1.msra.mxu0 0.0
          %7051 = vmatprep.subr.mxu0 0.0
          %7052 = vmatpush1.msra.mxu0 0.0
          %7053 = vmatprep.subr.mxu0 0.0
          %7054 = vmatpush1.msra.mxu0 0.0
          %7055 = vmatprep.subr.mxu0 0.0
          %7056 = vmatpush1.msra.mxu0 0.0
          %7057 = vmatprep.subr.mxu0 0.0
          %7058 = vmatpush1.msra.mxu0 0.0
          %7059 = vmatprep.subr.mxu0 0.0
          %7060 = vmatpush1.msra.mxu0 0.0
          %7061 = vmatprep.subr.mxu0 0.0
          %7062 = vmatpush1.msra.mxu0 0.0
          %7063 = vmatprep.subr.mxu0 0.0
          %7064 = vmatpush1.msra.mxu0 0.0
          %7065 = vmatprep.subr.mxu0 0.0
          %7066 = vmatpush1.msra.mxu0 0.0
          %7067 = vmatprep.subr.mxu0 0.0
          %7068 = vmatpush1.msra.mxu0 0.0
          %7069 = vmatprep.subr.mxu0 0.0
          %7070 = vmatpush1.msra.mxu0 0.0
          %7071 = vmatprep.subr.mxu0 0.0
          %7072 = vmatpush1.msra.mxu0 0.0
          %7073 = vmatprep.subr.mxu0 0.0
          %7074 = vmatpush1.msra.mxu0 0.0
          %7075 = vmatprep.mubr.f32.mxu0 0.0
          %7076 = vmatmul.mubr.f32.gmra.mrb[0].mxu0 %v6993
          %v7077 = vpop.f32.mrb[0].mxu0
          %v7078 = vadd.f32 0.0, %v7077
          %v7079 = vpop.f32.mrb[0].mxu0
          %7080 = vdwg.mxu0
          %v7081 = vadd.f32 %v6953, %v7078
          %vm7082 = vcmask 41984
          %7083 = vst.msk [vmem:[#allocation18] sm:$0x3] %vm7082, %v7081
        $region104: #{convlstm_kth_forward.1} parent=71 // pred_fallthru
          _
        // Predicated region
        $region105: #{convlstm_kth_forward.1} parent=71 // pred_check
          %p7084 = pneg %p339
        $region106: #{convlstm_kth_forward.1} parent=71 // pred_check_branch
          %7086 = sbr.rel (%p7084) target = $region108
        $region107: #{convlstm_kth_forward.1} parent=71 // pred_region
          %s7088 = ssub.s32 32, 32
          %7089 = vsyncadd [#allocation9], %s7088
          %s7090 = smul.addr %s33, 32
          %s7091 = scalar_lea.hbm %s13, %s7090
          %s7093 = sshll.u32 [#allocation18], 4
          %s7094 = int_to_ptr.vmem [resolvable:$true] %s7093
          %7096 = dma.vmem_to_hbm [thread:$0]  %s7094, 32, %s7091, [#allocation9]
        $region108: #{convlstm_kth_forward.1} parent=71 // pred_fallthru
          _
        // Predicated region
        $region109: #{convlstm_kth_forward.1} parent=71 // pred_check
          %p7097 = pneg %p339
        $region110: #{convlstm_kth_forward.1} parent=71 // pred_check_branch
          %7099 = sbr.rel (%p7097) target = $region112
        $region111: #{convlstm_kth_forward.1} parent=71 // pred_region
          %7100 = dma.done [#allocation9], 32
        $region112: #{convlstm_kth_forward.1} parent=71 // pred_fallthru
          _
      $region72: #{convlstm_kth_forward.1} parent=5 // pred_fallthru
        _
      %p7101 = scmp.le.s32.totalorder 2, %s24
      // Predicated region
      $region113: #{convlstm_kth_forward.1} parent=5 // pred_check
        %p7102 = pneg %p7101
      $region114: #{convlstm_kth_forward.1} parent=5 // pred_check_branch
        %7104 = sbr.rel (%p7102) target = $region116
      $region115: #{convlstm_kth_forward.1} parent=5 // pred_region
        %s7105 = ssub.s32 %s24, 2
      $region116: #{convlstm_kth_forward.1} parent=5 // pred_fallthru
        _
    $region6: #{convlstm_kth_forward.1} parent=1 // loop_footer
      %s28 = sadd.s32 1, %s24
    $region7: #{convlstm_kth_forward.1} parent=1 // loop_footer_branch
      %23 = sbr.rel target = $region3
    $region8: #{convlstm_kth_forward.1} parent=1 // loop_exit
      _
    %7106 = vsyncpa [#allocation8], 1
    %s7107 = scalar_lea.sflag [#allocation8], 1
    %7108 = vsyncpa %s7107, 1
    %7109 = vsyncpa [#allocation11], 1
    %7110 = vsyncpa [#allocation14], 1
    %7111 = vsyncpa [#allocation17], 1
    %7112 = vsyncpa [#allocation9], 1
    %s7113 = scalar_lea.sflag [#allocation9], 1
    %7114 = vsyncpa %s7113, 1

</llo_original>
